<compile_context>
chip_gen: v7x
topology: tpu7x:2x2x1
jax: 0.10.0
libtpu: 0.0.40
codegen_flags: <defaults>
</compile_context>

<pallas_src>
import functools
import math

import jax
import jax.numpy as jnp
from jax.experimental import pallas as pl
from jax.experimental.pallas import tpu as pltpu

EMB = 24                               # embedding dim of the autoencoder
_VMEM_LIMIT = 32 * 1024 * 1024         # explicit scoped-VMEM limit (safe on v5e/v6e/v7x)


def _round_up(x, m):
    return ((x + m - 1) // m) * m


def _pick_tile(m, cap):
    """Lane-axis tile: multiple of 128, >=2 grid steps when m allows (v7x has 2 TCs)."""
    if m <= 128:
        return _round_up(m, 8)
    half = _round_up(m, 128) // 2
    return max(128, min(cap, (half // 128) * 128))


# ----------------------------------------------------------------------------
# In-kernel activation helpers (all applied on the f32 accumulator)
# ----------------------------------------------------------------------------
_SQRT_2_OVER_PI = 0.7978845608028654


def _gelu_tanh(x):
    # tanh-form GELU: the transcendental goes to the EUP slot.
    # TODO(synk): torch.nn.GELU defaults to the exact erf form; tanh approx differs ~1e-3.
    return 0.5 * x * (1.0 + jnp.tanh(_SQRT_2_OVER_PI * (x + 0.044715 * x * x * x)))


def _apply_act(x, act):
    if act == "relu":
        return jnp.maximum(x, 0.0)
    if act == "gelu":
        return _gelu_tanh(x)
    if act == "sigmoid":
        return jax.nn.sigmoid(x)
    return x


# ----------------------------------------------------------------------------
# Pallas kernel 1: lane-dense GEMM   out = act(W @ cols + b)
#   wT   : (N, K)      bf16   (N = Cout-like, small; resident in VMEM)
#   bias : (N, 1)      f32
#   cols : (K, M_pad)  bf16   (M = Ho*Wo*B, batch minor -> dense lanes)
#   out  : (N, M_pad)  bf16 or f32
# Grid tiles M; tm is a multiple of 128 (or the full small extent).
# ----------------------------------------------------------------------------
def _gemm_kernel(w_ref, b_ref, c_ref, o_ref, *, act):
    acc = jnp.dot(w_ref[...], c_ref[...], preferred_element_type=jnp.float32)
    acc = acc + b_ref[...]                       # (N,1) broadcasts over lanes
    o_ref[...] = _apply_act(acc, act).astype(o_ref.dtype)


def gemm_bias_act(wT, bias, cols, *, act, out_dtype, tm_cap=2048):
    n, k = wT.shape
    k2, m = cols.shape
    assert k == k2
    tm = _pick_tile(m, tm_cap)
    m_pad = _round_up(m, tm)
    if m_pad != m:
        cols = jnp.pad(cols, ((0, 0), (0, m_pad - m)))
    out = pl.pallas_call(
        functools.partial(_gemm_kernel, act=act),
        out_shape=jax.ShapeDtypeStruct((n, m_pad), out_dtype),
        grid_spec=pltpu.PrefetchScalarGridSpec(
            num_scalar_prefetch=0,
            grid=(m_pad // tm,),
            in_specs=[pl.BlockSpec((n, k), lambda i: (0, 0)),      # weights resident
                      pl.BlockSpec((n, 1), lambda i: (0, 0)),      # bias resident
                      pl.BlockSpec((k, tm), lambda i: (0, i))],    # M-tiled patches
            out_specs=pl.BlockSpec((n, tm), lambda i: (0, i))),
        compiler_params=pltpu.CompilerParams(
            dimension_semantics=("parallel",),
            vmem_limit_bytes=_VMEM_LIMIT),
    )(wT, bias, cols)
    return out[:, :m] if m_pad != m else out


# ----------------------------------------------------------------------------
# Pallas kernel 2: fused tail (transposed layout, batch on lanes)
#   z (1568, TB) = enc2 output viewed per-image-flattened (rows = (ci, y, x))
#   enc3 GEMM -> LayerNorm(24) -> dec1 ConvT(1x1->7x7)+GELU -> d1 (1568, TB)
#   fc1(24->32)+GELU -> fc2(32->10) -> logits (10, TB)
# Everything stays resident in VMEM; grid tiles the batch (lane) axis.
# ----------------------------------------------------------------------------
def _tail_kernel(z_ref, w3_ref, b3_ref, g_ref, beta_ref,
                 wd1_ref, bd1_ref, wf1_ref, bf1_ref, wf2_ref, bf2_ref,
                 d1_ref, logit_ref):
    e = jnp.dot(w3_ref[...], z_ref[...], preferred_element_type=jnp.float32)
    e = e + b3_ref[...]                                            # (24, TB)

    # LayerNorm over the 24 channels (sublane axis) -- stats via tiny MXU dots.
    ones = jnp.full((1, EMB), 1.0 / EMB, dtype=jnp.float32)
    mean = jnp.dot(ones, e, preferred_element_type=jnp.float32)    # (1, TB)
    ctr = e - mean
    var = jnp.dot(ones, ctr * ctr, preferred_element_type=jnp.float32)
    emb = ctr * jax.lax.rsqrt(var + 1e-5) * g_ref[...] + beta_ref[...]
    emb16 = emb.astype(jnp.bfloat16)

    d1 = jnp.dot(wd1_ref[...], emb16, preferred_element_type=jnp.float32) + bd1_ref[...]
    d1_ref[...] = _gelu_tanh(d1).astype(d1_ref.dtype)              # (1568, TB) lane-dense

    z1 = _gelu_tanh(jnp.dot(wf1_ref[...], emb16,
                            preferred_element_type=jnp.float32) + bf1_ref[...])
    logit_ref[...] = (jnp.dot(wf2_ref[...], z1.astype(jnp.bfloat16),
                              preferred_element_type=jnp.float32)
                      + bf2_ref[...]).astype(logit_ref.dtype)


def tail_fused(z, p):
    """z: (1568, B) bf16.  Returns (d1 (1568,B) bf16, logits (10,B) f32)."""
    kdim, b = z.shape
    tb = _pick_tile(b, 512)
    b_pad = _round_up(b, tb)
    if b_pad != b:
        z = jnp.pad(z, ((0, 0), (0, b_pad - b)))

    def resident(shape):
        return pl.BlockSpec(shape, lambda i: (0, 0))

    d1, logits = pl.pallas_call(
        _tail_kernel,
        out_shape=(jax.ShapeDtypeStruct((kdim, b_pad), jnp.bfloat16),
                   jax.ShapeDtypeStruct((10, b_pad), jnp.float32)),
        grid_spec=pltpu.PrefetchScalarGridSpec(
            num_scalar_prefetch=0,
            grid=(b_pad // tb,),
            in_specs=[pl.BlockSpec((kdim, tb), lambda i: (0, i)),
                      resident((EMB, kdim)), resident((EMB, 1)),
                      resident((EMB, 1)), resident((EMB, 1)),
                      resident((kdim, EMB)), resident((kdim, 1)),
                      resident((32, EMB)), resident((32, 1)),
                      resident((10, 32)), resident((10, 1))],
            out_specs=[pl.BlockSpec((kdim, tb), lambda i: (0, i)),
                       pl.BlockSpec((10, tb), lambda i: (0, i))]),
        compiler_params=pltpu.CompilerParams(
            dimension_semantics=("parallel",),
            vmem_limit_bytes=_VMEM_LIMIT),
    )(z, p["enc3_w"], p["enc3_b"], p["ln_g"], p["ln_b"],
      p["dec1_w"], p["dec1_b"], p["fc1_w"], p["fc1_b"], p["fc2_w"], p["fc2_b"])
    if b_pad != b:
        d1, logits = d1[:, :b], logits[:, :b]
    return d1, logits


# ----------------------------------------------------------------------------
# Plain-JAX glue: patch extraction feeding the lane-dense GEMM kernel.
# All activations are kept in (C, H, W, B) layout (batch minor) so consecutive
# layers never need an HBM transpose.
# ----------------------------------------------------------------------------
def conv_gemm(x, wT, bias, *, kernel, stride, padding, act, out_dtype):
    """Conv2d as one GEMM.  x: (Cin, H, W, B) -> (Cout, Ho, Wo, B)."""
    cin, h, w, b = x.shape
    cout = wT.shape[0]
    ho = (h + 2 * padding - kernel) // stride + 1
    wo = (w + 2 * padding - kernel) // stride + 1
    xp = jnp.pad(x, ((0, 0), (padding, padding), (padding, padding), (0, 0)))
    planes = [xp[:, i:i + stride * ho:stride, j:j + stride * wo:stride, :]
              for i in range(kernel) for j in range(kernel)]
    # TODO(synk): the (k*k*Cin, M) patch matrix is still materialized in HBM; a fully
    # fused in-kernel patch gather would cut this layer's traffic by another ~2-3x.
    cols = jnp.stack(planes, axis=0).astype(jnp.bfloat16)        # (k*k, Cin, Ho, Wo, B)
    cols = cols.reshape(kernel * kernel * cin, ho * wo * b)      # K order (ki, kj, ci)
    out = gemm_bias_act(wT, bias, cols, act=act, out_dtype=out_dtype)
    return out.reshape(cout, ho, wo, b)


def convt2x_gemm(x, wT, bias, *, act, out_dtype):
    """ConvTranspose2d(k=3,s=2,p=1,op=1) in sub-pixel form (no zero-upsampling).

    x: (Cin, H, W, B) -> (Cout, 2H, 2W, B).  One GEMM over the 2x2 neighborhood of
    the ORIGINAL input produces all 4 sub-pixel phases; interleave afterwards.
    """
    cin, h, w, b = x.shape
    cout = wT.shape[0] // 4
    xp = jnp.pad(x, ((0, 0), (0, 1), (0, 1), (0, 0)))            # high-pad H, W by 1
    planes = [xp[:, p1:p1 + h, p2:p2 + w, :] for p1 in (0, 1) for p2 in (0, 1)]
    cols = jnp.stack(planes, axis=0).astype(jnp.bfloat16)        # (4, Cin, H, W, B)
    cols = cols.reshape(4 * cin, h * w * b)                      # K order (p1, p2, ci)
    out = gemm_bias_act(wT, bias, cols, act=act, out_dtype=out_dtype)  # (4*Cout, H*W*B)
    out = out.reshape(2, 2, cout, h, w, b)                       # (rh, rw, co, y, x, b)
    out = jnp.transpose(out, (2, 3, 0, 4, 1, 5))                 # (co, y, rh, x, rw, b)
    return out.reshape(cout, 2 * h, 2 * w, b)


# ----------------------------------------------------------------------------
# Parameter init (torch layouts, deterministic) + one-time GEMM-ready re-layout
# ----------------------------------------------------------------------------
def init_params(key):
    keys = iter(jax.random.split(key, 32))

    def conv_p(cout, cin, k):
        bound = 1.0 / math.sqrt(cin * k * k)
        w = jax.random.uniform(next(keys), (cout, cin, k, k), jnp.float32, -bound, bound)
        b = jax.random.uniform(next(keys), (cout,), jnp.float32, -bound, bound)
        return w, b

    def convt_p(cin, cout, k):
        bound = 1.0 / math.sqrt(cout * k * k)   # torch fan_in uses weight.size(1)
        w = jax.random.uniform(next(keys), (cin, cout, k, k), jnp.float32, -bound, bound)
        b = jax.random.uniform(next(keys), (cout,), jnp.float32, -bound, bound)
        return w, b

    def lin_p(cin, cout):
        bound = 1.0 / math.sqrt(cin)
        w = jax.random.uniform(next(keys), (cout, cin), jnp.float32, -bound, bound)
        b = jax.random.uniform(next(keys), (cout,), jnp.float32, -bound, bound)
        return w, b

    return {
        "enc1": conv_p(16, 1, 3),
        "enc2": conv_p(32, 16, 3),
        "enc3": conv_p(EMB, 32, 7),
        "ln_g": jnp.ones((EMB,), jnp.float32),
        "ln_b": jnp.zeros((EMB,), jnp.float32),
        "dec1": convt_p(EMB, 32, 7),
        "dec2": convt_p(32, 16, 3),
        "dec3": convt_p(16, 1, 3),
        "fc1": lin_p(EMB, 32),
        "fc2": lin_p(32, 10),
    }


def _conv_wT(w):
    """torch Conv2d weight (Cout,Cin,KH,KW) -> (Cout, KH*KW*Cin) bf16, K order (ki,kj,ci)."""
    co, ci, kh, kw = w.shape
    return jnp.transpose(w, (0, 2, 3, 1)).reshape(co, kh * kw * ci).astype(jnp.bfloat16)


def _subpixel_wT(w_t):
    """torch ConvTranspose2d weight (Cin,Cout,3,3), s=2/p=1/op=1 -> sub-pixel GEMM weight
    (4*Cout, 4*Cin) with rows ordered (rh, rw, co) and cols ordered (p1, p2, ci):
      y[2u+rh, 2v+rw, co] = sum_{p1,p2,ci} x[u+p1, v+p2, ci] * W[(rh,rw,co),(p1,p2,ci)]
    valid taps map to the original kernel as (r,p) -> (0,0):1 (1,0):2 (1,1):0.
    """
    ci, co, kh, kw = w_t.shape
    hmap = {(0, 0): 1, (1, 0): 2, (1, 1): 0}
    big = jnp.zeros((2, 2, co, 2, 2, ci), jnp.float32)
    for rh in (0, 1):
        for p1 in (0, 1):
            if (rh, p1) not in hmap:
                continue
            hi = hmap[(rh, p1)]
            for rw in (0, 1):
                for p2 in (0, 1):
                    if (rw, p2) not in hmap:
                        continue
                    wi = hmap[(rw, p2)]
                    big = big.at[rh, rw, :, p1, p2, :].set(jnp.transpose(w_t[:, :, hi, wi]))
    return big.reshape(4 * co, 4 * ci).astype(jnp.bfloat16)


def prepare_params(raw):
    """One-time re-layout of torch-style params into GEMM-ready bf16/f32 tensors."""
    w1, b1 = raw["enc1"]
    w2, b2 = raw["enc2"]
    w3, b3 = raw["enc3"]
    wd1, bd1 = raw["dec1"]
    wd2, bd2 = raw["dec2"]
    wd3, bd3 = raw["dec3"]
    wf1, bf1 = raw["fc1"]
    wf2, bf2 = raw["fc2"]

    def col(v):
        return v.reshape(-1, 1).astype(jnp.float32)

    return {
        "enc1_wT": _conv_wT(w1), "enc1_b": col(b1),
        "enc2_wT": _conv_wT(w2), "enc2_b": col(b2),
        # enc3: 7x7 conv on a 7x7 map == dense (1568 -> 24) GEMM, cols ordered (ci, y, x)
        "enc3_w": w3.reshape(EMB, 32 * 49).astype(jnp.bfloat16), "enc3_b": col(b3),
        "ln_g": col(raw["ln_g"]), "ln_b": col(raw["ln_b"]),
        # dec1: ConvT on 1x1 spatial, k=7 == dense (24 -> 1568) GEMM, rows ordered (co, y, x)
        "dec1_w": jnp.transpose(wd1, (1, 2, 3, 0)).reshape(32 * 49, EMB).astype(jnp.bfloat16),
        "dec1_b": col(jnp.repeat(bd1, 49)),
        "dec2_wT": _subpixel_wT(wd2), "dec2_b": col(jnp.tile(bd2, 4)),
        "dec3_wT": _subpixel_wT(wd3), "dec3_b": col(jnp.tile(bd3, 4)),
        "fc1_w": wf1.astype(jnp.bfloat16), "fc1_b": col(bf1),
        "fc2_w": wf2.astype(jnp.bfloat16), "fc2_b": col(bf2),
    }


# ----------------------------------------------------------------------------
# Forward pass (matches Autoencoder.forward)
# ----------------------------------------------------------------------------
def autoencoder_forward(params, x_nchw):
    p = params
    bsz = x_nchw.shape[0]
    x = jnp.transpose(x_nchw, (1, 2, 3, 0))                      # (1, 28, 28, B), batch minor

    # encoder front (ReLU fused into the GEMM epilogue, bf16 outputs)
    h1 = conv_gemm(x, p["enc1_wT"], p["enc1_b"], kernel=3, stride=2, padding=1,
                   act="relu", out_dtype=jnp.bfloat16)           # (16, 14, 14, B)
    h2 = conv_gemm(h1, p["enc2_wT"], p["enc2_b"], kernel=3, stride=2, padding=1,
                   act="relu", out_dtype=jnp.bfloat16)           # (32,  7,  7, B)

    # fused tail: enc3 -> LayerNorm -> dec1(+GELU) and fc1(+GELU) -> fc2
    z = h2.reshape(32 * 49, bsz)                                 # (1568, B): plain reshape, no transpose
    d1, logits_t = tail_fused(z, p)                              # (1568,B) bf16, (10,B) f32
    d1 = d1.reshape(32, 7, 7, bsz)                               # rows were (co, y, x)

    # decoder (sub-pixel transposed convs, activations fused)
    d2 = convt2x_gemm(d1, p["dec2_wT"], p["dec2_b"], act="gelu",
                      out_dtype=jnp.bfloat16)                    # (16, 14, 14, B)
    d3 = convt2x_gemm(d2, p["dec3_wT"], p["dec3_b"], act="sigmoid",
                      out_dtype=jnp.float32)                     # ( 1, 28, 28, B)

    decoded = jnp.transpose(d3, (3, 0, 1, 2))                    # (B, 1, 28, 28)
    logits = jnp.transpose(logits_t)                             # (B, 10)
    return decoded, logits


# ----------------------------------------------------------------------------
if __name__ == "__main__":
    key = jax.random.PRNGKey(0)
    k_in, k_par = jax.random.split(key)
    # MNIST-like input implied by the architecture (28x28 -> 1x1 embedding)
    x = jax.random.uniform(k_in, (2, 1, 28, 28), jnp.float32)
    raw_params = init_params(k_par)
    params = prepare_params(raw_params)      # one-time GEMM-ready weight layout

    fwd = jax.jit(autoencoder_forward)
    decoded, logits = fwd(params, x)
    jax.block_until_ready((decoded, logits))

    assert decoded.shape == (2, 1, 28, 28) and decoded.dtype == jnp.float32
    assert logits.shape == (2, 10) and logits.dtype == jnp.float32
    print("KERNEL_OK")
</pallas_src>

<mosaic_0001>
module attributes {stable_mosaic.version = 11 : i64} {
  func.func @_gemm_kernel(%arg0: i32, %arg1: memref<16x9xbf16, #tpu.memory_space<vmem>>, %arg2: memref<16x1xf32, #tpu.memory_space<vmem>>, %arg3: memref<9x256xbf16, #tpu.memory_space<vmem>>, %arg4: memref<16x256xbf16, #tpu.memory_space<vmem>>) attributes {dimension_semantics = [#tpu.dimension_semantics<parallel>], iteration_bounds = array<i64: 2>, scalar_prefetch = 0 : i64, scratch_operands = 0 : i64, tpu.core_type = #tpu.core_type<tc>, window_params = [{pipeline_mode = #tpu.pipeline_mode<synchronous>, transform_indices = @transform_0, window_bounds = array<i64: 16, 9>}, {pipeline_mode = #tpu.pipeline_mode<synchronous>, transform_indices = @transform_1, window_bounds = array<i64: 16, 1>}, {transform_indices = @transform_2, window_bounds = array<i64: 9, 256>}, {transform_indices = @transform_3, window_bounds = array<i64: 16, 256>}]} {
    %c0 = arith.constant 0 : index
    %c0_0 = arith.constant 0 : index
    %0 = vector.load %arg1[%c0, %c0_0] : memref<16x9xbf16, #tpu.memory_space<vmem>>, vector<16x9xbf16>
    %c0_1 = arith.constant 0 : index
    %c0_2 = arith.constant 0 : index
    %1 = vector.load %arg3[%c0_1, %c0_2] : memref<9x256xbf16, #tpu.memory_space<vmem>>, vector<9x256xbf16>
    %cst = arith.constant dense<0.000000e+00> : vector<16x256xf32>
    %2 = tpu.matmul %0, %1, %cst {dimension_numbers = #tpu.dot_dimension_numbers<[1], [0], [0], [1], [0, 0, 1, 1], [], []>} : vector<16x9xbf16>, vector<9x256xbf16>, vector<16x256xf32> -> vector<16x256xf32>
    %c0_3 = arith.constant 0 : index
    %c0_4 = arith.constant 0 : index
    %3 = vector.load %arg2[%c0_3, %c0_4] : memref<16x1xf32, #tpu.memory_space<vmem>>, vector<16x1xf32>
    %4 = vector.broadcast %3 : vector<16x1xf32> to vector<16x256xf32>
    %5 = arith.addf %2, %4 : vector<16x256xf32>
    %cst_5 = arith.constant 0.000000e+00 : f32
    %6 = vector.broadcast %cst_5 : f32 to vector<16x256xf32>
    %7 = arith.maximumf %5, %6 : vector<16x256xf32>
    %8 = arith.truncf %7 : vector<16x256xf32> to vector<16x256xbf16>
    %c0_6 = arith.constant 0 : index
    %c0_7 = arith.constant 0 : index
    %9 = vector.load %arg4[%c0_6, %c0_7] : memref<16x256xbf16, #tpu.memory_space<vmem>>, vector<16x256xbf16>
    tpu.vector_store %arg4[%c0_6, %c0_7], %8 {strides = array<i32>} : memref<16x256xbf16, #tpu.memory_space<vmem>>, vector<16x256xbf16>,
    return
  }
  func.func @transform_0(%arg0: i32) -> (i32, i32) {
    %c0_i32 = arith.constant 0 : i32
    %c0_i32_0 = arith.constant 0 : i32
    %c0_i32_1 = arith.constant 0 : i32
    return %c0_i32, %c0_i32_0 : i32, i32
  }
  func.func @transform_1(%arg0: i32) -> (i32, i32) {
    %c0_i32 = arith.constant 0 : i32
    %c0_i32_0 = arith.constant 0 : i32
    %c0_i32_1 = arith.constant 0 : i32
    return %c0_i32, %c0_i32_0 : i32, i32
  }
  func.func @transform_2(%arg0: i32) -> (i32, i32) {
    %c0_i32 = arith.constant 0 : i32
    %c0_i32_0 = arith.constant 0 : i32
    return %c0_i32, %arg0 : i32, i32
  }
  func.func @transform_3(%arg0: i32) -> (i32, i32) {
    %c0_i32 = arith.constant 0 : i32
    %c0_i32_0 = arith.constant 0 : i32
    return %c0_i32, %arg0 : i32, i32
  }
}

module attributes {stable_mosaic.version = 11 : i64} {
  func.func @_gemm_kernel(%arg0: i32, %arg1: memref<32x144xbf16, #tpu.memory_space<vmem>>, %arg2: memref<32x1xf32, #tpu.memory_space<vmem>>, %arg3: memref<144x104xbf16, #tpu.memory_space<vmem>>, %arg4: memref<32x104xbf16, #tpu.memory_space<vmem>>) attributes {dimension_semantics = [#tpu.dimension_semantics<parallel>], iteration_bounds = array<i64: 1>, scalar_prefetch = 0 : i64, scratch_operands = 0 : i64, tpu.core_type = #tpu.core_type<tc>, window_params = [{pipeline_mode = #tpu.pipeline_mode<synchronous>, transform_indices = @transform_0, window_bounds = array<i64: 32, 144>}, {pipeline_mode = #tpu.pipeline_mode<synchronous>, transform_indices = @transform_1, window_bounds = array<i64: 32, 1>}, {transform_indices = @transform_2, window_bounds = array<i64: 144, 104>}, {transform_indices = @transform_3, window_bounds = array<i64: 32, 104>}]} {
    %c0 = arith.constant 0 : index
    %c0_0 = arith.constant 0 : index
    %0 = vector.load %arg1[%c0, %c0_0] : memref<32x144xbf16, #tpu.memory_space<vmem>>, vector<32x144xbf16>
    %c0_1 = arith.constant 0 : index
    %c0_2 = arith.constant 0 : index
    %1 = vector.load %arg3[%c0_1, %c0_2] : memref<144x104xbf16, #tpu.memory_space<vmem>>, vector<144x104xbf16>
    %cst = arith.constant dense<0.000000e+00> : vector<32x104xf32>
    %2 = tpu.matmul %0, %1, %cst {dimension_numbers = #tpu.dot_dimension_numbers<[1], [0], [0], [1], [0, 0, 1, 1], [], []>} : vector<32x144xbf16>, vector<144x104xbf16>, vector<32x104xf32> -> vector<32x104xf32>
    %c0_3 = arith.constant 0 : index
    %c0_4 = arith.constant 0 : index
    %3 = vector.load %arg2[%c0_3, %c0_4] : memref<32x1xf32, #tpu.memory_space<vmem>>, vector<32x1xf32>
    %4 = vector.broadcast %3 : vector<32x1xf32> to vector<32x104xf32>
    %5 = arith.addf %2, %4 : vector<32x104xf32>
    %cst_5 = arith.constant 0.000000e+00 : f32
    %6 = vector.broadcast %cst_5 : f32 to vector<32x104xf32>
    %7 = arith.maximumf %5, %6 : vector<32x104xf32>
    %8 = arith.truncf %7 : vector<32x104xf32> to vector<32x104xbf16>
    %c0_6 = arith.constant 0 : index
    %c0_7 = arith.constant 0 : index
    %9 = vector.load %arg4[%c0_6, %c0_7] : memref<32x104xbf16, #tpu.memory_space<vmem>>, vector<32x104xbf16>
    tpu.vector_store %arg4[%c0_6, %c0_7], %8 {strides = array<i32>} : memref<32x104xbf16, #tpu.memory_space<vmem>>, vector<32x104xbf16>,
    return
  }
  func.func @transform_0(%arg0: i32) -> (i32, i32) {
    %c0_i32 = arith.constant 0 : i32
    %c0_i32_0 = arith.constant 0 : i32
    %c0_i32_1 = arith.constant 0 : i32
    return %c0_i32, %c0_i32_0 : i32, i32
  }
  func.func @transform_1(%arg0: i32) -> (i32, i32) {
    %c0_i32 = arith.constant 0 : i32
    %c0_i32_0 = arith.constant 0 : i32
    %c0_i32_1 = arith.constant 0 : i32
    return %c0_i32, %c0_i32_0 : i32, i32
  }
  func.func @transform_2(%arg0: i32) -> (i32, i32) {
    %c0_i32 = arith.constant 0 : i32
    %c0_i32_0 = arith.constant 0 : i32
    return %c0_i32, %arg0 : i32, i32
  }
  func.func @transform_3(%arg0: i32) -> (i32, i32) {
    %c0_i32 = arith.constant 0 : i32
    %c0_i32_0 = arith.constant 0 : i32
    return %c0_i32, %arg0 : i32, i32
  }
}

module attributes {stable_mosaic.version = 11 : i64} {
  func.func @_tail_kernel(%arg0: i32, %arg1: memref<1568x8xbf16, #tpu.memory_space<vmem>>, %arg2: memref<24x1568xbf16, #tpu.memory_space<vmem>>, %arg3: memref<24x1xf32, #tpu.memory_space<vmem>>, %arg4: memref<24x1xf32, #tpu.memory_space<vmem>>, %arg5: memref<24x1xf32, #tpu.memory_space<vmem>>, %arg6: memref<1568x24xbf16, #tpu.memory_space<vmem>>, %arg7: memref<1568x1xf32, #tpu.memory_space<vmem>>, %arg8: memref<32x24xbf16, #tpu.memory_space<vmem>>, %arg9: memref<32x1xf32, #tpu.memory_space<vmem>>, %arg10: memref<10x32xbf16, #tpu.memory_space<vmem>>, %arg11: memref<10x1xf32, #tpu.memory_space<vmem>>, %arg12: memref<1568x8xbf16, #tpu.memory_space<vmem>>, %arg13: memref<10x8xf32, #tpu.memory_space<vmem>>) attributes {dimension_semantics = [#tpu.dimension_semantics<parallel>], iteration_bounds = array<i64: 1>, scalar_prefetch = 0 : i64, scratch_operands = 0 : i64, tpu.core_type = #tpu.core_type<tc>, window_params = [{transform_indices = @transform_0, window_bounds = array<i64: 1568, 8>}, {pipeline_mode = #tpu.pipeline_mode<synchronous>, transform_indices = @transform_1, window_bounds = array<i64: 24, 1568>}, {pipeline_mode = #tpu.pipeline_mode<synchronous>, transform_indices = @transform_2, window_bounds = array<i64: 24, 1>}, {pipeline_mode = #tpu.pipeline_mode<synchronous>, transform_indices = @transform_3, window_bounds = array<i64: 24, 1>}, {pipeline_mode = #tpu.pipeline_mode<synchronous>, transform_indices = @transform_4, window_bounds = array<i64: 24, 1>}, {pipeline_mode = #tpu.pipeline_mode<synchronous>, transform_indices = @transform_5, window_bounds = array<i64: 1568, 24>}, {pipeline_mode = #tpu.pipeline_mode<synchronous>, transform_indices = @transform_6, window_bounds = array<i64: 1568, 1>}, {pipeline_mode = #tpu.pipeline_mode<synchronous>, transform_indices = @transform_7, window_bounds = array<i64: 32, 24>}, {pipeline_mode = #tpu.pipeline_mode<synchronous>, transform_indices = @transform_8, window_bounds = array<i64: 32, 1>}, {pipeline_mode = #tpu.pipeline_mode<synchronous>, transform_indices = @transform_9, window_bounds = array<i64: 10, 32>}, {pipeline_mode = #tpu.pipeline_mode<synchronous>, transform_indices = @transform_10, window_bounds = array<i64: 10, 1>}, {transform_indices = @transform_11, window_bounds = array<i64: 1568, 8>}, {transform_indices = @transform_12, window_bounds = array<i64: 10, 8>}]} {
    %c0 = arith.constant 0 : index
    %c0_0 = arith.constant 0 : index
    %0 = vector.load %arg2[%c0, %c0_0] : memref<24x1568xbf16, #tpu.memory_space<vmem>>, vector<24x1568xbf16>
    %c0_1 = arith.constant 0 : index
    %c0_2 = arith.constant 0 : index
    %1 = vector.load %arg1[%c0_1, %c0_2] : memref<1568x8xbf16, #tpu.memory_space<vmem>>, vector<1568x8xbf16>
    %cst = arith.constant dense<0.000000e+00> : vector<24x8xf32>
    %2 = tpu.matmul %0, %1, %cst {dimension_numbers = #tpu.dot_dimension_numbers<[1], [0], [0], [1], [0, 0, 1, 1], [], []>} : vector<24x1568xbf16>, vector<1568x8xbf16>, vector<24x8xf32> -> vector<24x8xf32>
    %c0_3 = arith.constant 0 : index
    %c0_4 = arith.constant 0 : index
    %3 = vector.load %arg3[%c0_3, %c0_4] : memref<24x1xf32, #tpu.memory_space<vmem>>, vector<24x1xf32>
    %4 = vector.broadcast %3 : vector<24x1xf32> to vector<24x8xf32>
    %5 = arith.addf %2, %4 : vector<24x8xf32>
    %cst_5 = arith.constant 0.0416666679 : f32
    %6 = vector.broadcast %cst_5 : f32 to vector<1x24xf32>
    %cst_6 = arith.constant dense<0.000000e+00> : vector<1x8xf32>
    %7 = tpu.matmul %6, %5, %cst_6 {dimension_numbers = #tpu.dot_dimension_numbers<[1], [0], [0], [1], [0, 0, 1, 1], [], []>} : vector<1x24xf32>, vector<24x8xf32>, vector<1x8xf32> -> vector<1x8xf32>
    %8 = vector.broadcast %7 : vector<1x8xf32> to vector<24x8xf32>
    %9 = arith.subf %5, %8 : vector<24x8xf32>
    %10 = arith.mulf %9, %9 : vector<24x8xf32>
    %cst_7 = arith.constant dense<0.000000e+00> : vector<1x8xf32>
    %11 = tpu.matmul %6, %10, %cst_7 {dimension_numbers = #tpu.dot_dimension_numbers<[1], [0], [0], [1], [0, 0, 1, 1], [], []>} : vector<1x24xf32>, vector<24x8xf32>, vector<1x8xf32> -> vector<1x8xf32>
    %cst_8 = arith.constant 9.99999974E-6 : f32
    %12 = vector.broadcast %cst_8 : f32 to vector<1x8xf32>
    %13 = arith.addf %11, %12 : vector<1x8xf32>
    %14 = math.rsqrt %13 : vector<1x8xf32>
    %15 = vector.broadcast %14 : vector<1x8xf32> to vector<24x8xf32>
    %16 = arith.mulf %9, %15 : vector<24x8xf32>
    %c0_9 = arith.constant 0 : index
    %c0_10 = arith.constant 0 : index
    %17 = vector.load %arg4[%c0_9, %c0_10] : memref<24x1xf32, #tpu.memory_space<vmem>>, vector<24x1xf32>
    %18 = vector.broadcast %17 : vector<24x1xf32> to vector<24x8xf32>
    %19 = arith.mulf %16, %18 : vector<24x8xf32>
    %c0_11 = arith.constant 0 : index
    %c0_12 = arith.constant 0 : index
    %20 = vector.load %arg5[%c0_11, %c0_12] : memref<24x1xf32, #tpu.memory_space<vmem>>, vector<24x1xf32>
    %21 = vector.broadcast %20 : vector<24x1xf32> to vector<24x8xf32>
    %22 = arith.addf %19, %21 : vector<24x8xf32>
    %23 = arith.truncf %22 : vector<24x8xf32> to vector<24x8xbf16>
    %c0_13 = arith.constant 0 : index
    %c0_14 = arith.constant 0 : index
    %24 = vector.load %arg6[%c0_13, %c0_14] : memref<1568x24xbf16, #tpu.memory_space<vmem>>, vector<1568x24xbf16>
    %cst_15 = arith.constant dense<0.000000e+00> : vector<1568x8xf32>
    %25 = tpu.matmul %24, %23, %cst_15 {dimension_numbers = #tpu.dot_dimension_numbers<[1], [0], [0], [1], [0, 0, 1, 1], [], []>} : vector<1568x24xbf16>, vector<24x8xbf16>, vector<1568x8xf32> -> vector<1568x8xf32>
    %c0_16 = arith.constant 0 : index
    %c0_17 = arith.constant 0 : index
    %26 = vector.load %arg7[%c0_16, %c0_17] : memref<1568x1xf32, #tpu.memory_space<vmem>>, vector<1568x1xf32>
    %27 = vector.broadcast %26 : vector<1568x1xf32> to vector<1568x8xf32>
    %28 = arith.addf %25, %27 : vector<1568x8xf32>
    %cst_18 = arith.constant 5.000000e-01 : f32
    %29 = vector.broadcast %cst_18 : f32 to vector<1568x8xf32>
    %30 = arith.mulf %29, %28 : vector<1568x8xf32>
    %cst_19 = arith.constant 4.471500e-02 : f32
    %31 = vector.broadcast %cst_19 : f32 to vector<1568x8xf32>
    %32 = arith.mulf %31, %28 : vector<1568x8xf32>
    %33 = arith.mulf %32, %28 : vector<1568x8xf32>
    %34 = arith.mulf %33, %28 : vector<1568x8xf32>
    %35 = arith.addf %28, %34 : vector<1568x8xf32>
    %cst_20 = arith.constant 0.797884583 : f32
    %36 = vector.broadcast %cst_20 : f32 to vector<1568x8xf32>
    %37 = arith.mulf %36, %35 : vector<1568x8xf32>
    %38 = math.tanh %37 : vector<1568x8xf32>
    %cst_21 = arith.constant 1.000000e+00 : f32
    %39 = vector.broadcast %cst_21 : f32 to vector<1568x8xf32>
    %40 = arith.addf %39, %38 : vector<1568x8xf32>
    %41 = arith.mulf %30, %40 : vector<1568x8xf32>
    %42 = arith.truncf %41 : vector<1568x8xf32> to vector<1568x8xbf16>
    %c0_22 = arith.constant 0 : index
    %c0_23 = arith.constant 0 : index
    %43 = vector.load %arg12[%c0_22, %c0_23] : memref<1568x8xbf16, #tpu.memory_space<vmem>>, vector<1568x8xbf16>
    tpu.vector_store %arg12[%c0_22, %c0_23], %42 {strides = array<i32>} : memref<1568x8xbf16, #tpu.memory_space<vmem>>, vector<1568x8xbf16>,
    %c0_24 = arith.constant 0 : index
    %c0_25 = arith.constant 0 : index
    %44 = vector.load %arg8[%c0_24, %c0_25] : memref<32x24xbf16, #tpu.memory_space<vmem>>, vector<32x24xbf16>
    %cst_26 = arith.constant dense<0.000000e+00> : vector<32x8xf32>
    %45 = tpu.matmul %44, %23, %cst_26 {dimension_numbers = #tpu.dot_dimension_numbers<[1], [0], [0], [1], [0, 0, 1, 1], [], []>} : vector<32x24xbf16>, vector<24x8xbf16>, vector<32x8xf32> -> vector<32x8xf32>
    %c0_27 = arith.constant 0 : index
    %c0_28 = arith.constant 0 : index
    %46 = vector.load %arg9[%c0_27, %c0_28] : memref<32x1xf32, #tpu.memory_space<vmem>>, vector<32x1xf32>
    %47 = vector.broadcast %46 : vector<32x1xf32> to vector<32x8xf32>
    %48 = arith.addf %45, %47 : vector<32x8xf32>
    %cst_29 = arith.constant 5.000000e-01 : f32
    %49 = vector.broadcast %cst_29 : f32 to vector<32x8xf32>
    %50 = arith.mulf %49, %48 : vector<32x8xf32>
    %cst_30 = arith.constant 4.471500e-02 : f32
    %51 = vector.broadcast %cst_30 : f32 to vector<32x8xf32>
    %52 = arith.mulf %51, %48 : vector<32x8xf32>
    %53 = arith.mulf %52, %48 : vector<32x8xf32>
    %54 = arith.mulf %53, %48 : vector<32x8xf32>
    %55 = arith.addf %48, %54 : vector<32x8xf32>
    %cst_31 = arith.constant 0.797884583 : f32
    %56 = vector.broadcast %cst_31 : f32 to vector<32x8xf32>
    %57 = arith.mulf %56, %55 : vector<32x8xf32>
    %58 = math.tanh %57 : vector<32x8xf32>
    %cst_32 = arith.constant 1.000000e+00 : f32
    %59 = vector.broadcast %cst_32 : f32 to vector<32x8xf32>
    %60 = arith.addf %59, %58 : vector<32x8xf32>
    %61 = arith.mulf %50, %60 : vector<32x8xf32>
    %c0_33 = arith.constant 0 : index
    %c0_34 = arith.constant 0 : index
    %62 = vector.load %arg10[%c0_33, %c0_34] : memref<10x32xbf16, #tpu.memory_space<vmem>>, vector<10x32xbf16>
    %63 = arith.truncf %61 : vector<32x8xf32> to vector<32x8xbf16>
    %cst_35 = arith.constant dense<0.000000e+00> : vector<10x8xf32>
    %64 = tpu.matmul %62, %63, %cst_35 {dimension_numbers = #tpu.dot_dimension_numbers<[1], [0], [0], [1], [0, 0, 1, 1], [], []>} : vector<10x32xbf16>, vector<32x8xbf16>, vector<10x8xf32> -> vector<10x8xf32>
    %c0_36 = arith.constant 0 : index
    %c0_37 = arith.constant 0 : index
    %65 = vector.load %arg11[%c0_36, %c0_37] : memref<10x1xf32, #tpu.memory_space<vmem>>, vector<10x1xf32>
    %66 = vector.broadcast %65 : vector<10x1xf32> to vector<10x8xf32>
    %67 = arith.addf %64, %66 : vector<10x8xf32>
    %c0_38 = arith.constant 0 : index
    %c0_39 = arith.constant 0 : index
    %68 = vector.load %arg13[%c0_38, %c0_39] : memref<10x8xf32, #tpu.memory_space<vmem>>, vector<10x8xf32>
    tpu.vector_store %arg13[%c0_38, %c0_39], %67 {strides = array<i32>} : memref<10x8xf32, #tpu.memory_space<vmem>>, vector<10x8xf32>,
    return
  }
  func.func @transform_0(%arg0: i32) -> (i32, i32) {
    %c0_i32 = arith.constant 0 : i32
    %c0_i32_0 = arith.constant 0 : i32
    return %c0_i32, %arg0 : i32, i32
  }
  func.func @transform_1(%arg0: i32) -> (i32, i32) {
    %c0_i32 = arith.constant 0 : i32
    %c0_i32_0 = arith.constant 0 : i32
    %c0_i32_1 = arith.constant 0 : i32
    return %c0_i32, %c0_i32_0 : i32, i32
  }
  func.func @transform_2(%arg0: i32) -> (i32, i32) {
    %c0_i32 = arith.constant 0 : i32
    %c0_i32_0 = arith.constant 0 : i32
    %c0_i32_1 = arith.constant 0 : i32
    return %c0_i32, %c0_i32_0 : i32, i32
  }
  func.func @transform_3(%arg0: i32) -> (i32, i32) {
    %c0_i32 = arith.constant 0 : i32
    %c0_i32_0 = arith.constant 0 : i32
    %c0_i32_1 = arith.constant 0 : i32
    return %c0_i32, %c0_i32_0 : i32, i32
  }
  func.func @transform_4(%arg0: i32) -> (i32, i32) {
    %c0_i32 = arith.constant 0 : i32
    %c0_i32_0 = arith.constant 0 : i32
    %c0_i32_1 = arith.constant 0 : i32
    return %c0_i32, %c0_i32_0 : i32, i32
  }
  func.func @transform_5(%arg0: i32) -> (i32, i32) {
    %c0_i32 = arith.constant 0 : i32
    %c0_i32_0 = arith.constant 0 : i32
    %c0_i32_1 = arith.constant 0 : i32
    return %c0_i32, %c0_i32_0 : i32, i32
  }
  func.func @transform_6(%arg0: i32) -> (i32, i32) {
    %c0_i32 = arith.constant 0 : i32
    %c0_i32_0 = arith.constant 0 : i32
    %c0_i32_1 = arith.constant 0 : i32
    return %c0_i32, %c0_i32_0 : i32, i32
  }
  func.func @transform_7(%arg0: i32) -> (i32, i32) {
    %c0_i32 = arith.constant 0 : i32
    %c0_i32_0 = arith.constant 0 : i32
    %c0_i32_1 = arith.constant 0 : i32
    return %c0_i32, %c0_i32_0 : i32, i32
  }
  func.func @transform_8(%arg0: i32) -> (i32, i32) {
    %c0_i32 = arith.constant 0 : i32
    %c0_i32_0 = arith.constant 0 : i32
    %c0_i32_1 = arith.constant 0 : i32
    return %c0_i32, %c0_i32_0 : i32, i32
  }
  func.func @transform_9(%arg0: i32) -> (i32, i32) {
    %c0_i32 = arith.constant 0 : i32
    %c0_i32_0 = arith.constant 0 : i32
    %c0_i32_1 = arith.constant 0 : i32
    return %c0_i32, %c0_i32_0 : i32, i32
  }
  func.func @transform_10(%arg0: i32) -> (i32, i32) {
    %c0_i32 = arith.constant 0 : i32
    %c0_i32_0 = arith.constant 0 : i32
    %c0_i32_1 = arith.constant 0 : i32
    return %c0_i32, %c0_i32_0 : i32, i32
  }
  func.func @transform_11(%arg0: i32) -> (i32, i32) {
    %c0_i32 = arith.constant 0 : i32
    %c0_i32_0 = arith.constant 0 : i32
    return %c0_i32, %arg0 : i32, i32
  }
  func.func @transform_12(%arg0: i32) -> (i32, i32) {
    %c0_i32 = arith.constant 0 : i32
    %c0_i32_0 = arith.constant 0 : i32
    return %c0_i32, %arg0 : i32, i32
  }
}

module attributes {stable_mosaic.version = 11 : i64} {
  func.func @_gemm_kernel(%arg0: i32, %arg1: memref<64x128xbf16, #tpu.memory_space<vmem>>, %arg2: memref<64x1xf32, #tpu.memory_space<vmem>>, %arg3: memref<128x104xbf16, #tpu.memory_space<vmem>>, %arg4: memref<64x104xbf16, #tpu.memory_space<vmem>>) attributes {dimension_semantics = [#tpu.dimension_semantics<parallel>], iteration_bounds = array<i64: 1>, scalar_prefetch = 0 : i64, scratch_operands = 0 : i64, tpu.core_type = #tpu.core_type<tc>, window_params = [{pipeline_mode = #tpu.pipeline_mode<synchronous>, transform_indices = @transform_0, window_bounds = array<i64: 64, 128>}, {pipeline_mode = #tpu.pipeline_mode<synchronous>, transform_indices = @transform_1, window_bounds = array<i64: 64, 1>}, {transform_indices = @transform_2, window_bounds = array<i64: 128, 104>}, {transform_indices = @transform_3, window_bounds = array<i64: 64, 104>}]} {
    %c0 = arith.constant 0 : index
    %c0_0 = arith.constant 0 : index
    %0 = vector.load %arg1[%c0, %c0_0] : memref<64x128xbf16, #tpu.memory_space<vmem>>, vector<64x128xbf16>
    %c0_1 = arith.constant 0 : index
    %c0_2 = arith.constant 0 : index
    %1 = vector.load %arg3[%c0_1, %c0_2] : memref<128x104xbf16, #tpu.memory_space<vmem>>, vector<128x104xbf16>
    %cst = arith.constant dense<0.000000e+00> : vector<64x104xf32>
    %2 = tpu.matmul %0, %1, %cst {dimension_numbers = #tpu.dot_dimension_numbers<[1], [0], [0], [1], [0, 0, 1, 1], [], []>} : vector<64x128xbf16>, vector<128x104xbf16>, vector<64x104xf32> -> vector<64x104xf32>
    %c0_3 = arith.constant 0 : index
    %c0_4 = arith.constant 0 : index
    %3 = vector.load %arg2[%c0_3, %c0_4] : memref<64x1xf32, #tpu.memory_space<vmem>>, vector<64x1xf32>
    %4 = vector.broadcast %3 : vector<64x1xf32> to vector<64x104xf32>
    %5 = arith.addf %2, %4 : vector<64x104xf32>
    %cst_5 = arith.constant 5.000000e-01 : f32
    %6 = vector.broadcast %cst_5 : f32 to vector<64x104xf32>
    %7 = arith.mulf %6, %5 : vector<64x104xf32>
    %cst_6 = arith.constant 4.471500e-02 : f32
    %8 = vector.broadcast %cst_6 : f32 to vector<64x104xf32>
    %9 = arith.mulf %8, %5 : vector<64x104xf32>
    %10 = arith.mulf %9, %5 : vector<64x104xf32>
    %11 = arith.mulf %10, %5 : vector<64x104xf32>
    %12 = arith.addf %5, %11 : vector<64x104xf32>
    %cst_7 = arith.constant 0.797884583 : f32
    %13 = vector.broadcast %cst_7 : f32 to vector<64x104xf32>
    %14 = arith.mulf %13, %12 : vector<64x104xf32>
    %15 = math.tanh %14 : vector<64x104xf32>
    %cst_8 = arith.constant 1.000000e+00 : f32
    %16 = vector.broadcast %cst_8 : f32 to vector<64x104xf32>
    %17 = arith.addf %16, %15 : vector<64x104xf32>
    %18 = arith.mulf %7, %17 : vector<64x104xf32>
    %19 = arith.truncf %18 : vector<64x104xf32> to vector<64x104xbf16>
    %c0_9 = arith.constant 0 : index
    %c0_10 = arith.constant 0 : index
    %20 = vector.load %arg4[%c0_9, %c0_10] : memref<64x104xbf16, #tpu.memory_space<vmem>>, vector<64x104xbf16>
    tpu.vector_store %arg4[%c0_9, %c0_10], %19 {strides = array<i32>} : memref<64x104xbf16, #tpu.memory_space<vmem>>, vector<64x104xbf16>,
    return
  }
  func.func @transform_0(%arg0: i32) -> (i32, i32) {
    %c0_i32 = arith.constant 0 : i32
    %c0_i32_0 = arith.constant 0 : i32
    %c0_i32_1 = arith.constant 0 : i32
    return %c0_i32, %c0_i32_0 : i32, i32
  }
  func.func @transform_1(%arg0: i32) -> (i32, i32) {
    %c0_i32 = arith.constant 0 : i32
    %c0_i32_0 = arith.constant 0 : i32
    %c0_i32_1 = arith.constant 0 : i32
    return %c0_i32, %c0_i32_0 : i32, i32
  }
  func.func @transform_2(%arg0: i32) -> (i32, i32) {
    %c0_i32 = arith.constant 0 : i32
    %c0_i32_0 = arith.constant 0 : i32
    return %c0_i32, %arg0 : i32, i32
  }
  func.func @transform_3(%arg0: i32) -> (i32, i32) {
    %c0_i32 = arith.constant 0 : i32
    %c0_i32_0 = arith.constant 0 : i32
    return %c0_i32, %arg0 : i32, i32
  }
}

module attributes {stable_mosaic.version = 11 : i64} {
  func.func @_gemm_kernel(%arg0: i32, %arg1: memref<4x64xbf16, #tpu.memory_space<vmem>>, %arg2: memref<4x1xf32, #tpu.memory_space<vmem>>, %arg3: memref<64x256xbf16, #tpu.memory_space<vmem>>, %arg4: memref<4x256xf32, #tpu.memory_space<vmem>>) attributes {dimension_semantics = [#tpu.dimension_semantics<parallel>], iteration_bounds = array<i64: 2>, scalar_prefetch = 0 : i64, scratch_operands = 0 : i64, tpu.core_type = #tpu.core_type<tc>, window_params = [{pipeline_mode = #tpu.pipeline_mode<synchronous>, transform_indices = @transform_0, window_bounds = array<i64: 4, 64>}, {pipeline_mode = #tpu.pipeline_mode<synchronous>, transform_indices = @transform_1, window_bounds = array<i64: 4, 1>}, {transform_indices = @transform_2, window_bounds = array<i64: 64, 256>}, {transform_indices = @transform_3, window_bounds = array<i64: 4, 256>}]} {
    %c0 = arith.constant 0 : index
    %c0_0 = arith.constant 0 : index
    %0 = vector.load %arg1[%c0, %c0_0] : memref<4x64xbf16, #tpu.memory_space<vmem>>, vector<4x64xbf16>
    %c0_1 = arith.constant 0 : index
    %c0_2 = arith.constant 0 : index
    %1 = vector.load %arg3[%c0_1, %c0_2] : memref<64x256xbf16, #tpu.memory_space<vmem>>, vector<64x256xbf16>
    %cst = arith.constant dense<0.000000e+00> : vector<4x256xf32>
    %2 = tpu.matmul %0, %1, %cst {dimension_numbers = #tpu.dot_dimension_numbers<[1], [0], [0], [1], [0, 0, 1, 1], [], []>} : vector<4x64xbf16>, vector<64x256xbf16>, vector<4x256xf32> -> vector<4x256xf32>
    %c0_3 = arith.constant 0 : index
    %c0_4 = arith.constant 0 : index
    %3 = vector.load %arg2[%c0_3, %c0_4] : memref<4x1xf32, #tpu.memory_space<vmem>>, vector<4x1xf32>
    %4 = vector.broadcast %3 : vector<4x1xf32> to vector<4x256xf32>
    %5 = arith.addf %2, %4 : vector<4x256xf32>
    %6 = arith.negf %5 : vector<4x256xf32>
    %7 = math.exp %6 : vector<4x256xf32>
    %cst_5 = arith.constant 1.000000e+00 : f32
    %8 = vector.broadcast %cst_5 : f32 to vector<4x256xf32>
    %9 = arith.addf %8, %7 : vector<4x256xf32>
    %10 = arith.divf %8, %9 : vector<4x256xf32>
    %c0_6 = arith.constant 0 : index
    %c0_7 = arith.constant 0 : index
    %11 = vector.load %arg4[%c0_6, %c0_7] : memref<4x256xf32, #tpu.memory_space<vmem>>, vector<4x256xf32>
    tpu.vector_store %arg4[%c0_6, %c0_7], %10 {strides = array<i32>} : memref<4x256xf32, #tpu.memory_space<vmem>>, vector<4x256xf32>,
    return
  }
  func.func @transform_0(%arg0: i32) -> (i32, i32) {
    %c0_i32 = arith.constant 0 : i32
    %c0_i32_0 = arith.constant 0 : i32
    %c0_i32_1 = arith.constant 0 : i32
    return %c0_i32, %c0_i32_0 : i32, i32
  }
  func.func @transform_1(%arg0: i32) -> (i32, i32) {
    %c0_i32 = arith.constant 0 : i32
    %c0_i32_0 = arith.constant 0 : i32
    %c0_i32_1 = arith.constant 0 : i32
    return %c0_i32, %c0_i32_0 : i32, i32
  }
  func.func @transform_2(%arg0: i32) -> (i32, i32) {
    %c0_i32 = arith.constant 0 : i32
    %c0_i32_0 = arith.constant 0 : i32
    return %c0_i32, %arg0 : i32, i32
  }
  func.func @transform_3(%arg0: i32) -> (i32, i32) {
    %c0_i32 = arith.constant 0 : i32
    %c0_i32_0 = arith.constant 0 : i32
    return %c0_i32, %arg0 : i32, i32
  }
}

</mosaic_0001>

<llo_original>
// kernel: autoencoder_forward.5
$region0: #{autoencoder_forward.5}
  #allocation0 [shape = 'u32[]', space=smem, size = 0x4, offset = 0x4, fixed_abs, tag = 'smem constant byte address 0x4 - core index']
  #allocation1 [shape = 'u32[144,128]{1,0:T(1,128)}', space=vmem, size = 0x12000, scoped, tag = 'internal scratch']
  %s0 = inlined_call_operand.vmem [shape: bf16[16,9], index: 0, kind: input, shape index: {}]
  %s1 = inlined_call_operand.vmem [shape: f32[16,1], index: 1, kind: input, shape index: {}]
  %s2 = inlined_call_operand.vmem [shape: bf16[9,512], index: 2, kind: input, shape index: {}]
  %s3 = inlined_call_operand.vmem [shape: bf16[16,512], index: 3, kind: output, shape index: {}]
  %s4 = sld [smem:[#allocation0]]
  $region117: #{autoencoder_forward.5} parent=0
    _
  %s6 = ssub.s32 1, %s4
  %s7 = scalar_select 0, %s6, %s4
  $region1: #{autoencoder_forward.5} parent=0
    #allocation2 [shape = 'u8[16384]{0}', space=vmem, size = 0x4000, scoped, tag = 'input window, operand 2']
    #allocation3 [shape = 'u8[16384]{0}', space=vmem, size = 0x4000, scoped, tag = 'output window, operand 0']
    loop: start=0, step=1, limit=4
    $region2: #{autoencoder_forward.5} parent=1 // loop_pre_header
      _
    $region3: #{autoencoder_forward.5} parent=1 // loop_header
      %s9 = sphi 0, %s13
      %p10 = scmp.ge.s32.totalorder %s9, 4
      %s17 = sphi 0, %s17
      %s19 = sphi 0, %s17
      %s20 = sphi 0, %s19
      %s34 = sphi 0, %s20
      %s38 = sphi 0, %s38
      %s40 = sphi 0, %s38
      %s41 = sphi 0, %s40
      %s55 = sphi 0, %s41
      %s61 = sphi 0, %s63
      %s64 = sphi 0, %s61
      %s65 = sphi 0, %s64
      %s81 = sphi 0, %s65
      %s87 = sphi 0, %s89
      %s90 = sphi 0, %s87
      %s91 = sphi 0, %s90
      %s107 = sphi 0, %s91
    $region4: #{autoencoder_forward.5} parent=1 // loop_header_branch
      %12 = sbr.rel (%p10) target = $region8
    $region5: #{autoencoder_forward.5} parent=1 // loop_body
      %s14 = ssub.s32 %s9, 1
      %s15 = ssub.s32 %s9, 2
      %s16 = sadd.s32 %s9, 1
      %s18 = sadd.s32 %s17, 1
      %p21 = scmp.eq.s32.totalorder %s9, 1
      %p22 = scmp.ne.s32.totalorder %s17, %s19
      %p23 = scmp.eq.s32.totalorder %s9, 0
      %p24 = por %p22, %p23
      %p25 = scmp.ne.s32.totalorder %s17, %s19
      %p26 = scmp.eq.s32.totalorder %s14, 1
      %p27 = por %p25, %p26
      %p28 = scmp.ne.s32.totalorder %s19, %s20
      %p29 = scmp.eq.s32.totalorder %s14, 0
      %p30 = por %p28, %p29
      %p31 = scmp.ne.s32.totalorder %s19, %s20
      %p32 = scmp.eq.s32.totalorder %s15, 1
      %p33 = por %p31, %p32
      %p35 = scmp.ne.s32.totalorder %s20, %s34
      %p36 = scmp.eq.s32.totalorder %s15, 0
      %p37 = por %p35, %p36
      %s39 = sadd.s32 %s38, 1
      %p42 = scmp.eq.s32.totalorder %s9, 1
      %p43 = scmp.ne.s32.totalorder %s38, %s40
      %p44 = scmp.eq.s32.totalorder %s9, 0
      %p45 = por %p43, %p44
      %p46 = scmp.ne.s32.totalorder %s38, %s40
      %p47 = scmp.eq.s32.totalorder %s14, 1
      %p48 = por %p46, %p47
      %p49 = scmp.ne.s32.totalorder %s40, %s41
      %p50 = scmp.eq.s32.totalorder %s14, 0
      %p51 = por %p49, %p50
      %p52 = scmp.ne.s32.totalorder %s40, %s41
      %p53 = scmp.eq.s32.totalorder %s15, 1
      %p54 = por %p52, %p53
      %p56 = scmp.ne.s32.totalorder %s41, %s55
      %p57 = scmp.eq.s32.totalorder %s15, 0
      %p58 = por %p56, %p57
      %s59 = ssub.s32 %s9, %s16
      %p60 = scmp.eq.s32.totalorder %s59, 0
      %s62 = sadd.s32 %s61, 1
      %s63 = scalar_select %p60, %s61, %s62
      %p66 = pneg %p60
      %p67 = scmp.eq.s32.totalorder %s9, 1
      %p68 = por %p66, %p67
      %p69 = scmp.ne.s32.totalorder %s61, %s64
      %p70 = scmp.eq.s32.totalorder %s9, 0
      %p71 = por %p69, %p70
      %p72 = scmp.ne.s32.totalorder %s61, %s64
      %p73 = scmp.eq.s32.totalorder %s14, 1
      %p74 = por %p72, %p73
      %p75 = scmp.ne.s32.totalorder %s64, %s65
      %p76 = scmp.eq.s32.totalorder %s14, 0
      %p77 = por %p75, %p76
      %p78 = scmp.ne.s32.totalorder %s64, %s65
      %p79 = scmp.eq.s32.totalorder %s15, 1
      %p80 = por %p78, %p79
      %p82 = scmp.ne.s32.totalorder %s65, %s81
      %p83 = scmp.eq.s32.totalorder %s15, 0
      %p84 = por %p82, %p83
      %s85 = ssub.s32 %s9, %s16
      %p86 = scmp.eq.s32.totalorder %s85, 0
      %s88 = sadd.s32 %s87, 1
      %s89 = scalar_select %p86, %s87, %s88
      %p92 = pneg %p86
      %p93 = scmp.eq.s32.totalorder %s9, 1
      %p94 = por %p92, %p93
      %p95 = scmp.ne.s32.totalorder %s87, %s90
      %p96 = scmp.eq.s32.totalorder %s9, 0
      %p97 = por %p95, %p96
      %p98 = scmp.ne.s32.totalorder %s87, %s90
      %p99 = scmp.eq.s32.totalorder %s14, 1
      %p100 = por %p98, %p99
      %p101 = scmp.ne.s32.totalorder %s90, %s91
      %p102 = scmp.eq.s32.totalorder %s14, 0
      %p103 = por %p101, %p102
      %p104 = scmp.ne.s32.totalorder %s90, %s91
      %p105 = scmp.eq.s32.totalorder %s15, 1
      %p106 = por %p104, %p105
      %p108 = scmp.ne.s32.totalorder %s91, %s107
      %p109 = scmp.eq.s32.totalorder %s15, 0
      %p110 = por %p108, %p109
      %p111 = scmp.le.s32.totalorder 1, %s9
      %p112 = scmp.lt.s32.totalorder %s9, 3
      %p113 = pnand %p111, %p112
      %p114 = pneg %p113
      // Predicated region
      $region9: #{autoencoder_forward.5} parent=5 // pred_check
        _
      $region10: #{autoencoder_forward.5} parent=5 // pred_check_branch
        %116 = sbr.rel (%p113) target = $region12
      $region11: #{autoencoder_forward.5} parent=5 // pred_region
        %s117 = ssub.s32 %s9, 1
        // Predicated region
        $region13: #{autoencoder_forward.5} parent=11 // pred_check
          %p118 = pneg %p30
        $region14: #{autoencoder_forward.5} parent=11 // pred_check_branch
          %120 = sbr.rel (%p118) target = $region16
        $region15: #{autoencoder_forward.5} parent=11 // pred_region
          _
        $region16: #{autoencoder_forward.5} parent=11 // pred_fallthru
          _
        // Predicated region
        $region17: #{autoencoder_forward.5} parent=11 // pred_check
          %p121 = pneg %p51
        $region18: #{autoencoder_forward.5} parent=11 // pred_check_branch
          %123 = sbr.rel (%p121) target = $region20
        $region19: #{autoencoder_forward.5} parent=11 // pred_region
          _
        $region20: #{autoencoder_forward.5} parent=11 // pred_fallthru
          _
      $region12: #{autoencoder_forward.5} parent=5 // pred_fallthru
        _
      %p124 = scmp.lt.s32.totalorder %s9, 2
      // Predicated region
      $region21: #{autoencoder_forward.5} parent=5 // pred_check
        %p125 = pneg %p124
      $region22: #{autoencoder_forward.5} parent=5 // pred_check_branch
        %127 = sbr.rel (%p125) target = $region24
      $region23: #{autoencoder_forward.5} parent=5 // pred_region
        // Predicated region
        $region25: #{autoencoder_forward.5} parent=23 // pred_check
          %p128 = pneg %p71
        $region26: #{autoencoder_forward.5} parent=23 // pred_check_branch
          %130 = sbr.rel (%p128) target = $region28
        $region27: #{autoencoder_forward.5} parent=23 // pred_region
          %s131 = sand.u32 %s61, 1
          %s132 = sand.u32 %s61, 1
          %s133 = smul.addr %s132, 16
          %s134 = scalar_lea.vmem [#allocation2], %s133
          %s135 = smul.u32 2, %s9
          %s136 = smul.addr %s135, 4
          %s137 = scalar_lea.vmem %s2, %s136
          // Predicated region
          $region29: #{autoencoder_forward.5} parent=27 // pred_check
            _
          $region30: #{autoencoder_forward.5} parent=27 // pred_check_branch
            %139 = sbr.rel (0) target = $region32
          $region31: #{autoencoder_forward.5} parent=27 // pred_region
            // Predicated region
            $region33: #{autoencoder_forward.5} parent=31 // pred_check
              _
            $region34: #{autoencoder_forward.5} parent=31 // pred_check_branch
              %141 = sbr.rel (0) target = $region36
            $region35: #{autoencoder_forward.5} parent=31 // pred_region
              // Predicated region
              $region48: #{autoencoder_forward.5} parent=35 // pred_check
                _
              $region49: #{autoencoder_forward.5} parent=35 // pred_check_branch
                %158 = sbr.rel (0) target = $region51
              $region50: #{autoencoder_forward.5} parent=35 // pred_region
                loop: start=0, step=1, limit=1
                $region52: #{autoencoder_forward.5} parent=50 // loop_pre_header
                  _
                $region53: #{autoencoder_forward.5} parent=50 // loop_header
                  %s160 = sphi 0, %s164
                  %p161 = scmp.ge.s32.totalorder %s160, 1
                  %s165 = sphi %s137, %s137
                  %s166 = sphi %s134, %s134
                $region54: #{autoencoder_forward.5} parent=50 // loop_header_branch
                  %163 = sbr.rel (%p161) target = $region58
                $region55: #{autoencoder_forward.5} parent=50 // loop_body
                  %v167 = vld [vmem:[%s165] sm:$0xff]
                  %168 = vst [vmem:[%s166] sm:$0xff] %v167
                  %v169 = vld [vmem:[%s165 + $0x10] sm:$0xff]
                  %170 = vst [vmem:[%s166 + $0x8] sm:$0xff] %v169
                $region56: #{autoencoder_forward.5} parent=50 // loop_footer
                  %s164 = sadd.s32 1, %s160
                $region57: #{autoencoder_forward.5} parent=50 // loop_footer_branch
                  %159 = sbr.rel target = $region53
                $region58: #{autoencoder_forward.5} parent=50 // loop_exit
                  _
              $region51: #{autoencoder_forward.5} parent=35 // pred_fallthru
                _
              // Predicated region
              $region59: #{autoencoder_forward.5} parent=35 // pred_check
                _
              $region60: #{autoencoder_forward.5} parent=35 // pred_check_branch
                %172 = sbr.rel target = $region62
              $region61: #{autoencoder_forward.5} parent=35 // pred_region
                _
              $region62: #{autoencoder_forward.5} parent=35 // pred_fallthru
                _
            $region36: #{autoencoder_forward.5} parent=31 // pred_fallthru
              _
            // Predicated region
            $region37: #{autoencoder_forward.5} parent=31 // pred_check
              _
            $region38: #{autoencoder_forward.5} parent=31 // pred_check_branch
              %143 = sbr.rel target = $region40
            $region39: #{autoencoder_forward.5} parent=31 // pred_region
              loop: start=0, step=1, limit=1
              $region41: #{autoencoder_forward.5} parent=39 // loop_pre_header
                _
              $region42: #{autoencoder_forward.5} parent=39 // loop_header
                %s146 = sphi 0, %s150
                %p147 = scmp.ge.s32.totalorder %s146, 1
                %s151 = sphi %s137, %s137
                %s152 = sphi %s134, %s134
              $region43: #{autoencoder_forward.5} parent=39 // loop_header_branch
                %149 = sbr.rel (%p147) target = $region47
              $region44: #{autoencoder_forward.5} parent=39 // loop_body
                %v153 = vld [vmem:[%s151] sm:$0xff]
                %154 = vst [vmem:[%s152] sm:$0xff] %v153
                %v155 = vld [vmem:[%s151 + $0x10] sm:$0xff]
                %156 = vst [vmem:[%s152 + $0x8] sm:$0xff] %v155
              $region45: #{autoencoder_forward.5} parent=39 // loop_footer
                %s150 = sadd.s32 1, %s146
              $region46: #{autoencoder_forward.5} parent=39 // loop_footer_branch
                %145 = sbr.rel target = $region42
              $region47: #{autoencoder_forward.5} parent=39 // loop_exit
                _
            $region40: #{autoencoder_forward.5} parent=31 // pred_fallthru
              _
          $region32: #{autoencoder_forward.5} parent=27 // pred_fallthru
            _
          %173 = vnop
        $region28: #{autoencoder_forward.5} parent=23 // pred_fallthru
          _
      $region24: #{autoencoder_forward.5} parent=5 // pred_fallthru
        _
      %p174 = scmp.le.s32.totalorder 1, %s9
      %p175 = scmp.lt.s32.totalorder %s9, 3
      %p176 = pnand %p174, %p175
      %p177 = pneg %p176
      // Predicated region
      $region63: #{autoencoder_forward.5} parent=5 // pred_check
        _
      $region64: #{autoencoder_forward.5} parent=5 // pred_check_branch
        %179 = sbr.rel (%p176) target = $region66
      $region65: #{autoencoder_forward.5} parent=5 // pred_region
        %s180 = ssub.s32 %s9, 1
        %s181 = sand.u32 %s64, 1
        %s182 = sand.u32 %s64, 1
        %s183 = smul.addr %s182, 16
        %s184 = scalar_lea.vmem [#allocation2], %s183
        // Predicated region
        $region67: #{autoencoder_forward.5} parent=65 // pred_check
          %p185 = pneg %p77
        $region68: #{autoencoder_forward.5} parent=65 // pred_check_branch
          %187 = sbr.rel (%p185) target = $region70
        $region69: #{autoencoder_forward.5} parent=65 // pred_region
          _
        $region70: #{autoencoder_forward.5} parent=65 // pred_fallthru
          _
        %p188 = pneg %p30
        %p189 = pneg %p27
        %p190 = pneg %p51
        %p191 = pneg %p48
        %s192 = sand.u32 %s64, 1
        %s193 = sand.u32 %s64, 1
        %s194 = smul.addr %s193, 16
        %s195 = scalar_lea.vmem [#allocation2], %s194
        %p196 = pneg %p77
        %p197 = pneg %p74
        %p198 = pneg %p103
        %p199 = pneg %p100
        %s200 = sand.u32 %s90, 1
        %s201 = sand.u32 %s90, 1
        %s202 = smul.addr %s201, 16
        %s203 = scalar_lea.vmem [#allocation3], %s202
        %s204 = smul.u32 2, %s14
        %s205 = smul.u32 2, %s14
        %v207 = vld [vmem:[%s0] sm:$0xf]
        %v208 = vld [vmem:[%s0 + $0x4] sm:$0xf]
        %v209 = vld [vmem:[%s184] sm:$0xff]
        %v210 = vld [vmem:[%s184 + $0x8] sm:$0x11]
        %v211 = vld [vmem:[%s1] sm:$0xff]
        %v212 = vld [vmem:[%s1 + $0x8] sm:$0xff]
        %214 = vset.pattern.permute.xlu0 0
        %215 = vperm.xlu0 %214, %v211
        %v216 = vpop.permute.xlu0 %215
        %219 = vset.pattern.permute.xlu0 0
        %220 = vperm.xlu0 %219, %v212
        %v221 = vpop.permute.xlu0 %220
        %v225 = vunpack.c.l.b16 %v207
        %v226 = vunpack.c.l.b16 %v208
        %v227 = vpack.c.b16 %v226, %v225
        %v230 = vunpack.c.l.b16 %v209
        %v231 = vunpack.c.h.b16 %v209
        %v232 = vunpack.c.l.b16 %v210
        %v233 = vunpack.c.h.b16 %v210
        %v234 = vpack.c.b16 %v232, %v230
        %v235 = vpack.c.b16 %v233, %v231
        %vm236 = vcmask 72704
        %v238 = vsel %vm236, %v227, 0
        %vm240 = vcmask 1043456
        %vm241 = vcmask 1044480
        %v242 = vsel %vm240, 4294967295, 65535
        %v243 = vsel %vm241, %v242, 0
        %v245 = vand.u32 %v234, %v243
        %v248 = vand.u32 %v235, %v243
        %250 = vmatprep.subr.bf16.mxu0 %v248
        %251 = vmatpush1.bf16.msra.mxu0 %v245
        %252 = vmatprep.subr.bf16.mxu0 0
        %253 = vmatpush1.bf16.msra.mxu0 0
        %254 = vmatprep.subr.bf16.mxu0 0
        %255 = vmatpush1.bf16.msra.mxu0 0
        %256 = vmatprep.subr.bf16.mxu0 0
        %257 = vmatpush1.bf16.msra.mxu0 0
        %258 = vmatprep.subr.bf16.mxu0 0
        %259 = vmatpush1.bf16.msra.mxu0 0
        %260 = vmatprep.subr.bf16.mxu0 0
        %261 = vmatpush1.bf16.msra.mxu0 0
        %262 = vmatprep.subr.bf16.mxu0 0
        %263 = vmatpush1.bf16.msra.mxu0 0
        %264 = vmatprep.subr.bf16.mxu0 0
        %265 = vmatpush1.bf16.msra.mxu0 0
        %266 = vmatprep.subr.bf16.mxu0 0
        %267 = vmatpush1.bf16.msra.mxu0 0
        %268 = vmatprep.subr.bf16.mxu0 0
        %269 = vmatpush1.bf16.msra.mxu0 0
        %270 = vmatprep.subr.bf16.mxu0 0
        %271 = vmatpush1.bf16.msra.mxu0 0
        %272 = vmatprep.subr.bf16.mxu0 0
        %273 = vmatpush1.bf16.msra.mxu0 0
        %274 = vmatprep.subr.bf16.mxu0 0
        %275 = vmatpush1.bf16.msra.mxu0 0
        %276 = vmatprep.subr.bf16.mxu0 0
        %277 = vmatpush1.bf16.msra.mxu0 0
        %278 = vmatprep.subr.bf16.mxu0 0
        %279 = vmatpush1.bf16.msra.mxu0 0
        %280 = vmatprep.subr.bf16.mxu0 0
        %281 = vmatpush1.bf16.msra.mxu0 0
        %282 = vmatprep.mubr.bf16.mxu0 0
        %283 = vmatmul.mubr.bf16.gmra.mrb[0].mxu0 %v238
        %v284 = vpop.f32.mrb[0].mxu0
        %v285 = vadd.f32 %v216, %v284
        %v286 = vpop.f32.mrb[0].mxu0
        %v287 = vadd.f32 %v216, %v286
        %v288 = vpop.f32.mrb[0].mxu0
        %v289 = vadd.f32 %v221, %v288
        %v290 = vpop.f32.mrb[0].mxu0
        %v291 = vadd.f32 %v221, %v290
        %292 = vdwg.mxu0
        %v293 = vmax.f32 %v285, 0.0
        %v294 = vmax.f32 %v287, 0.0
        %v295 = vmax.f32 %v289, 0.0
        %v296 = vmax.f32 %v291, 0.0
        %v297 = vpack.c.bf16 %v295, %v293
        %v298 = vpack.c.bf16 %v296, %v294
        %v301 = vunpack.c.l.b16 %v297
        %v302 = vunpack.c.l.b16 %v298
        %v303 = vunpack.c.h.b16 %v297
        %v304 = vunpack.c.h.b16 %v298
        %v305 = vpack.c.b16 %v302, %v301
        %v306 = vpack.c.b16 %v304, %v303
        %309 = vst [vmem:[%s203] sm:$0xff] %v305
        %310 = vst [vmem:[%s203 + $0x8] sm:$0xff] %v306
        %s311 = sand.u32 %s90, 1
        %s312 = sand.u32 %s90, 1
        %s313 = smul.addr %s312, 16
        %s314 = scalar_lea.vmem [#allocation3], %s313
        // Predicated region
        $region71: #{autoencoder_forward.5} parent=65 // pred_check
          %p315 = pneg %p100
        $region72: #{autoencoder_forward.5} parent=65 // pred_check_branch
          %317 = sbr.rel (%p315) target = $region74
        $region73: #{autoencoder_forward.5} parent=65 // pred_region
          %s318 = smul.u32 2, %s14
          %s319 = smul.addr %s318, 4
          %s320 = scalar_lea.vmem %s3, %s319
          // Predicated region
          $region75: #{autoencoder_forward.5} parent=73 // pred_check
            _
          $region76: #{autoencoder_forward.5} parent=73 // pred_check_branch
            %322 = sbr.rel (0) target = $region78
          $region77: #{autoencoder_forward.5} parent=73 // pred_region
            // Predicated region
            $region79: #{autoencoder_forward.5} parent=77 // pred_check
              _
            $region80: #{autoencoder_forward.5} parent=77 // pred_check_branch
              %324 = sbr.rel (0) target = $region82
            $region81: #{autoencoder_forward.5} parent=77 // pred_region
              // Predicated region
              $region94: #{autoencoder_forward.5} parent=81 // pred_check
                _
              $region95: #{autoencoder_forward.5} parent=81 // pred_check_branch
                %341 = sbr.rel (0) target = $region97
              $region96: #{autoencoder_forward.5} parent=81 // pred_region
                loop: start=0, step=1, limit=1
                $region98: #{autoencoder_forward.5} parent=96 // loop_pre_header
                  _
                $region99: #{autoencoder_forward.5} parent=96 // loop_header
                  %s343 = sphi 0, %s347
                  %p344 = scmp.ge.s32.totalorder %s343, 1
                  %s348 = sphi %s314, %s314
                  %s349 = sphi %s320, %s320
                $region100: #{autoencoder_forward.5} parent=96 // loop_header_branch
                  %346 = sbr.rel (%p344) target = $region104
                $region101: #{autoencoder_forward.5} parent=96 // loop_body
                  %v350 = vld [vmem:[%s348] sm:$0xff]
                  %351 = vst [vmem:[%s349] sm:$0xff] %v350
                  %v352 = vld [vmem:[%s348 + $0x8] sm:$0xff]
                  %353 = vst [vmem:[%s349 + $0x10] sm:$0xff] %v352
                $region102: #{autoencoder_forward.5} parent=96 // loop_footer
                  %s347 = sadd.s32 1, %s343
                $region103: #{autoencoder_forward.5} parent=96 // loop_footer_branch
                  %342 = sbr.rel target = $region99
                $region104: #{autoencoder_forward.5} parent=96 // loop_exit
                  _
              $region97: #{autoencoder_forward.5} parent=81 // pred_fallthru
                _
              // Predicated region
              $region105: #{autoencoder_forward.5} parent=81 // pred_check
                _
              $region106: #{autoencoder_forward.5} parent=81 // pred_check_branch
                %355 = sbr.rel target = $region108
              $region107: #{autoencoder_forward.5} parent=81 // pred_region
                _
              $region108: #{autoencoder_forward.5} parent=81 // pred_fallthru
                _
            $region82: #{autoencoder_forward.5} parent=77 // pred_fallthru
              _
            // Predicated region
            $region83: #{autoencoder_forward.5} parent=77 // pred_check
              _
            $region84: #{autoencoder_forward.5} parent=77 // pred_check_branch
              %326 = sbr.rel target = $region86
            $region85: #{autoencoder_forward.5} parent=77 // pred_region
              loop: start=0, step=1, limit=1
              $region87: #{autoencoder_forward.5} parent=85 // loop_pre_header
                _
              $region88: #{autoencoder_forward.5} parent=85 // loop_header
                %s329 = sphi 0, %s333
                %p330 = scmp.ge.s32.totalorder %s329, 1
                %s334 = sphi %s314, %s314
                %s335 = sphi %s320, %s320
              $region89: #{autoencoder_forward.5} parent=85 // loop_header_branch
                %332 = sbr.rel (%p330) target = $region93
              $region90: #{autoencoder_forward.5} parent=85 // loop_body
                %v336 = vld [vmem:[%s334] sm:$0xff]
                %337 = vst [vmem:[%s335] sm:$0xff] %v336
                %v338 = vld [vmem:[%s334 + $0x8] sm:$0xff]
                %339 = vst [vmem:[%s335 + $0x10] sm:$0xff] %v338
              $region91: #{autoencoder_forward.5} parent=85 // loop_footer
                %s333 = sadd.s32 1, %s329
              $region92: #{autoencoder_forward.5} parent=85 // loop_footer_branch
                %328 = sbr.rel target = $region88
              $region93: #{autoencoder_forward.5} parent=85 // loop_exit
                _
            $region86: #{autoencoder_forward.5} parent=77 // pred_fallthru
              _
          $region78: #{autoencoder_forward.5} parent=73 // pred_fallthru
            _
          %356 = vnop
        $region74: #{autoencoder_forward.5} parent=65 // pred_fallthru
          _
      $region66: #{autoencoder_forward.5} parent=5 // pred_fallthru
        _
      %p357 = scmp.le.s32.totalorder 2, %s9
      // Predicated region
      $region109: #{autoencoder_forward.5} parent=5 // pred_check
        %p358 = pneg %p357
      $region110: #{autoencoder_forward.5} parent=5 // pred_check_branch
        %360 = sbr.rel (%p358) target = $region112
      $region111: #{autoencoder_forward.5} parent=5 // pred_region
        %s361 = ssub.s32 %s9, 2
        // Predicated region
        $region113: #{autoencoder_forward.5} parent=111 // pred_check
          %p362 = pneg %p106
        $region114: #{autoencoder_forward.5} parent=111 // pred_check_branch
          %364 = sbr.rel (%p362) target = $region116
        $region115: #{autoencoder_forward.5} parent=111 // pred_region
          %s365 = sand.u32 %s91, 1
          %s366 = sand.u32 %s91, 1
          %s367 = smul.addr %s366, 16
          %s368 = scalar_lea.vmem [#allocation3], %s367
        $region116: #{autoencoder_forward.5} parent=111 // pred_fallthru
          _
      $region112: #{autoencoder_forward.5} parent=5 // pred_fallthru
        _
    $region6: #{autoencoder_forward.5} parent=1 // loop_footer
      %s13 = sadd.s32 1, %s9
    $region7: #{autoencoder_forward.5} parent=1 // loop_footer_branch
      %8 = sbr.rel target = $region3
    $region8: #{autoencoder_forward.5} parent=1 // loop_exit
      _

// kernel: autoencoder_forward.6
$region0: #{autoencoder_forward.6}
  #allocation0 [shape = 'u32[]', space=smem, size = 0x4, offset = 0x4, fixed_abs, tag = 'smem constant byte address 0x4 - core index']
  #allocation1 [shape = 'u32[144,128]{1,0:T(1,128)}', space=vmem, size = 0x12000, scoped, tag = 'internal scratch']
  %s0 = inlined_call_operand.vmem [shape: bf16[32,144], index: 0, kind: input, shape index: {}]
  %s1 = inlined_call_operand.vmem [shape: f32[32,1], index: 1, kind: input, shape index: {}]
  %s2 = inlined_call_operand.vmem [shape: bf16[144,104], index: 2, kind: input, shape index: {}]
  %s3 = inlined_call_operand.vmem [shape: bf16[32,104], index: 3, kind: output, shape index: {}]
  %s4 = sld [smem:[#allocation0]]
  $region22: #{autoencoder_forward.6} parent=0
    _
  %s6 = ssub.s32 1, %s4
  %s7 = scalar_select 0, %s6, %s4
  // Predicated region
  $region2: #{autoencoder_forward.6} parent=0 // pred_check
    _
  $region3: #{autoencoder_forward.6} parent=0 // pred_check_branch
    %9 = sbr.rel (0) target = $region5
  $region4: #{autoencoder_forward.6} parent=0 // pred_region
    _
  $region5: #{autoencoder_forward.6} parent=0 // pred_fallthru
    _
  // Predicated region
  $region6: #{autoencoder_forward.6} parent=0 // pred_check
    _
  $region7: #{autoencoder_forward.6} parent=0 // pred_check_branch
    %11 = sbr.rel (0) target = $region9
  $region8: #{autoencoder_forward.6} parent=0 // pred_region
    _
  $region9: #{autoencoder_forward.6} parent=0 // pred_fallthru
    _
  // Predicated region
  $region10: #{autoencoder_forward.6} parent=0 // pred_check
    _
  $region11: #{autoencoder_forward.6} parent=0 // pred_check_branch
    %13 = sbr.rel (0) target = $region13
  $region12: #{autoencoder_forward.6} parent=0 // pred_region
    _
  $region13: #{autoencoder_forward.6} parent=0 // pred_fallthru
    _
  %v15 = vld [vmem:[%s0] sm:$0xff]
  %v16 = vld [vmem:[%s0 + $0x8] sm:$0xff]
  %v17 = vld [vmem:[%s0 + $0x10] sm:$0xff]
  %v18 = vld [vmem:[%s0 + $0x18] sm:$0xff]
  %v19 = vld [vmem:[%s2] sm:$0xf]
  %v20 = vld [vmem:[%s2 + $0x4] sm:$0xf]
  %v21 = vld [vmem:[%s2 + $0x8] sm:$0xf]
  %v22 = vld [vmem:[%s2 + $0xc] sm:$0xf]
  %v23 = vld [vmem:[%s2 + $0x10] sm:$0xf]
  %v24 = vld [vmem:[%s2 + $0x14] sm:$0xf]
  %v25 = vld [vmem:[%s2 + $0x18] sm:$0xf]
  %v26 = vld [vmem:[%s2 + $0x1c] sm:$0xf]
  %v27 = vld [vmem:[%s2 + $0x20] sm:$0xf]
  %v28 = vld [vmem:[%s2 + $0x24] sm:$0xf]
  %v29 = vld [vmem:[%s2 + $0x28] sm:$0xf]
  %v30 = vld [vmem:[%s2 + $0x2c] sm:$0xf]
  %v31 = vld [vmem:[%s2 + $0x30] sm:$0xf]
  %v32 = vld [vmem:[%s2 + $0x34] sm:$0xf]
  %v33 = vld [vmem:[%s2 + $0x38] sm:$0xf]
  %v34 = vld [vmem:[%s2 + $0x3c] sm:$0xf]
  %v35 = vld [vmem:[%s2 + $0x40] sm:$0xf]
  %v36 = vld [vmem:[%s2 + $0x44] sm:$0xf]
  %v37 = vld [vmem:[%s1] sm:$0xff]
  %v38 = vld [vmem:[%s1 + $0x8] sm:$0xff]
  %v39 = vld [vmem:[%s1 + $0x10] sm:$0xff]
  %v40 = vld [vmem:[%s1 + $0x18] sm:$0xff]
  %42 = vset.pattern.permute.xlu0 0
  %43 = vperm.xlu0 %42, %v37
  %v44 = vpop.permute.xlu0 %43
  %47 = vset.pattern.permute.xlu0 0
  %48 = vperm.xlu0 %47, %v38
  %v49 = vpop.permute.xlu0 %48
  %52 = vset.pattern.permute.xlu0 0
  %53 = vperm.xlu0 %52, %v39
  %v54 = vpop.permute.xlu0 %53
  %57 = vset.pattern.permute.xlu0 0
  %58 = vperm.xlu0 %57, %v40
  %v59 = vpop.permute.xlu0 %58
  %v65 = vunpack.c.l.b16 %v15
  %v66 = vunpack.c.h.b16 %v15
  %v67 = vunpack.c.l.b16 %v16
  %v68 = vunpack.c.h.b16 %v16
  %v69 = vunpack.c.l.b16 %v17
  %v70 = vunpack.c.h.b16 %v17
  %v71 = vunpack.c.l.b16 %v18
  %v72 = vunpack.c.h.b16 %v18
  %v73 = vpack.c.b16 %v67, %v65
  %v74 = vpack.c.b16 %v68, %v66
  %v75 = vpack.c.b16 %v71, %v69
  %v76 = vpack.c.b16 %v72, %v70
  %v97 = vunpack.c.l.b16 %v19
  %v98 = vunpack.c.l.b16 %v20
  %v99 = vunpack.c.l.b16 %v21
  %v100 = vunpack.c.l.b16 %v22
  %v101 = vunpack.c.l.b16 %v23
  %v102 = vunpack.c.l.b16 %v24
  %v103 = vunpack.c.l.b16 %v25
  %v104 = vunpack.c.l.b16 %v26
  %v105 = vunpack.c.l.b16 %v27
  %v106 = vunpack.c.l.b16 %v28
  %v107 = vunpack.c.l.b16 %v29
  %v108 = vunpack.c.l.b16 %v30
  %v109 = vunpack.c.l.b16 %v31
  %v110 = vunpack.c.l.b16 %v32
  %v111 = vunpack.c.l.b16 %v33
  %v112 = vunpack.c.l.b16 %v34
  %v113 = vunpack.c.l.b16 %v35
  %v114 = vunpack.c.l.b16 %v36
  %v115 = vpack.c.b16 %v98, %v97
  %v116 = vpack.c.b16 %v100, %v99
  %v117 = vpack.c.b16 %v102, %v101
  %v118 = vpack.c.b16 %v104, %v103
  %v119 = vpack.c.b16 %v106, %v105
  %v120 = vpack.c.b16 %v108, %v107
  %v121 = vpack.c.b16 %v110, %v109
  %v122 = vpack.c.b16 %v112, %v111
  %v123 = vpack.c.b16 %v114, %v113
  %vm133 = vcmask 130048
  %v135 = vsel %vm133, %v74, 0
  %v138 = vsel %vm133, %v76, 0
  %140 = vmatprep.subr.bf16.mxu0 0
  %141 = vmatpush1.bf16.msra.mxu0 %v115
  %142 = vmatprep.subr.bf16.mxu0 0
  %143 = vmatpush1.bf16.msra.mxu0 %v116
  %144 = vmatprep.subr.bf16.mxu0 0
  %145 = vmatpush1.bf16.msra.mxu0 %v117
  %146 = vmatprep.subr.bf16.mxu0 0
  %147 = vmatpush1.bf16.msra.mxu0 %v118
  %148 = vmatprep.subr.bf16.mxu0 0
  %149 = vmatpush1.bf16.msra.mxu0 %v119
  %150 = vmatprep.subr.bf16.mxu0 0
  %151 = vmatpush1.bf16.msra.mxu0 %v120
  %152 = vmatprep.subr.bf16.mxu0 0
  %153 = vmatpush1.bf16.msra.mxu0 %v121
  %154 = vmatprep.subr.bf16.mxu0 0
  %155 = vmatpush1.bf16.msra.mxu0 %v122
  %156 = vmatprep.subr.bf16.mxu0 0
  %157 = vmatpush1.bf16.msra.mxu0 %v123
  %158 = vmatprep.subr.bf16.mxu0 0
  %159 = vmatpush1.bf16.msra.mxu0 0
  %160 = vmatprep.subr.bf16.mxu0 0
  %161 = vmatpush1.bf16.msra.mxu0 0
  %162 = vmatprep.subr.bf16.mxu0 0
  %163 = vmatpush1.bf16.msra.mxu0 0
  %164 = vmatprep.subr.bf16.mxu0 0
  %165 = vmatpush1.bf16.msra.mxu0 0
  %166 = vmatprep.subr.bf16.mxu0 0
  %167 = vmatpush1.bf16.msra.mxu0 0
  %168 = vmatprep.subr.bf16.mxu0 0
  %169 = vmatpush1.bf16.msra.mxu0 0
  %170 = vmatprep.subr.bf16.mxu0 0
  %171 = vmatpush1.bf16.msra.mxu0 0
  %172 = vmatprep.mubr.bf16.mxu0 %v135
  %173 = vmatmul.mubr.bf16.gmra.mrb[0].mxu0 %v73
  %v174 = vpop.f32.mrb[0].mxu0
  %v175 = vadd.f32 %v44, %v174
  %v176 = vpop.f32.mrb[0].mxu0
  %v177 = vpop.f32.mrb[0].mxu0
  %v178 = vadd.f32 %v49, %v177
  %v179 = vpop.f32.mrb[0].mxu0
  %180 = vmatprep.mubr.bf16.mxu0 %v138
  %181 = vmatmul.mubr.bf16.gmra.mrb[0].mxu0 %v75
  %v182 = vpop.f32.mrb[0].mxu0
  %v183 = vadd.f32 %v54, %v182
  %v184 = vpop.f32.mrb[0].mxu0
  %v185 = vpop.f32.mrb[0].mxu0
  %v186 = vadd.f32 %v59, %v185
  %v187 = vpop.f32.mrb[0].mxu0
  %188 = vdwg.mxu0
  %v189 = vmax.f32 %v175, 0.0
  %v190 = vmax.f32 %v178, 0.0
  %v191 = vmax.f32 %v183, 0.0
  %v192 = vmax.f32 %v186, 0.0
  %v193 = vpack.c.bf16 %v190, %v189
  %v194 = vpack.c.bf16 %v192, %v191
  %v197 = vunpack.c.l.b16 %v193
  %v198 = vunpack.c.h.b16 %v193
  %v199 = vunpack.c.l.b16 %v194
  %v200 = vunpack.c.h.b16 %v194
  %v201 = vpack.c.b16 %v197, %v197
  %v202 = vpack.c.b16 %v198, %v198
  %v203 = vpack.c.b16 %v199, %v199
  %v204 = vpack.c.b16 %v200, %v200
  %vm209 = vcmask 846848
  %210 = vst.msk [vmem:[%s3] sm:$0xf] %vm209, %v201
  %211 = vst.msk [vmem:[%s3 + $0x4] sm:$0xf] %vm209, %v202
  %212 = vst.msk [vmem:[%s3 + $0x8] sm:$0xf] %vm209, %v203
  %213 = vst.msk [vmem:[%s3 + $0xc] sm:$0xf] %vm209, %v204
  // Predicated region
  $region14: #{autoencoder_forward.6} parent=0 // pred_check
    _
  $region15: #{autoencoder_forward.6} parent=0 // pred_check_branch
    %215 = sbr.rel (0) target = $region17
  $region16: #{autoencoder_forward.6} parent=0 // pred_region
    _
  $region17: #{autoencoder_forward.6} parent=0 // pred_fallthru
    _
  // Predicated region
  $region18: #{autoencoder_forward.6} parent=0 // pred_check
    _
  $region19: #{autoencoder_forward.6} parent=0 // pred_check_branch
    %217 = sbr.rel (0) target = $region21
  $region20: #{autoencoder_forward.6} parent=0 // pred_region
    _
  $region21: #{autoencoder_forward.6} parent=0 // pred_fallthru
    _

// kernel: autoencoder_forward.8
$region0: #{autoencoder_forward.8}
  #allocation0 [shape = 'u32[]', space=smem, size = 0x4, offset = 0x4, fixed_abs, tag = 'smem constant byte address 0x4 - core index']
  #allocation1 [shape = 'u32[144,128]{1,0:T(1,128)}', space=vmem, size = 0x12000, scoped, tag = 'internal scratch']
  %s0 = inlined_call_operand.vmem [shape: bf16[64,128], index: 0, kind: input, shape index: {}]
  %s1 = inlined_call_operand.vmem [shape: f32[64,1], index: 1, kind: input, shape index: {}]
  %s2 = inlined_call_operand.vmem [shape: bf16[128,104], index: 2, kind: input, shape index: {}]
  %s3 = inlined_call_operand.vmem [shape: bf16[64,104], index: 3, kind: output, shape index: {}]
  %s4 = sld [smem:[#allocation0]]
  $region22: #{autoencoder_forward.8} parent=0
    _
  %s6 = ssub.s32 1, %s4
  %s7 = scalar_select 0, %s6, %s4
  // Predicated region
  $region2: #{autoencoder_forward.8} parent=0 // pred_check
    _
  $region3: #{autoencoder_forward.8} parent=0 // pred_check_branch
    %9 = sbr.rel (0) target = $region5
  $region4: #{autoencoder_forward.8} parent=0 // pred_region
    _
  $region5: #{autoencoder_forward.8} parent=0 // pred_fallthru
    _
  // Predicated region
  $region6: #{autoencoder_forward.8} parent=0 // pred_check
    _
  $region7: #{autoencoder_forward.8} parent=0 // pred_check_branch
    %11 = sbr.rel (0) target = $region9
  $region8: #{autoencoder_forward.8} parent=0 // pred_region
    _
  $region9: #{autoencoder_forward.8} parent=0 // pred_fallthru
    _
  // Predicated region
  $region10: #{autoencoder_forward.8} parent=0 // pred_check
    _
  $region11: #{autoencoder_forward.8} parent=0 // pred_check_branch
    %13 = sbr.rel (0) target = $region13
  $region12: #{autoencoder_forward.8} parent=0 // pred_region
    _
  $region13: #{autoencoder_forward.8} parent=0 // pred_fallthru
    _
  %v15 = vld [vmem:[%s0] sm:$0xf]
  %v16 = vld [vmem:[%s0 + $0x4] sm:$0xf]
  %v17 = vld [vmem:[%s0 + $0x8] sm:$0xf]
  %v18 = vld [vmem:[%s0 + $0xc] sm:$0xf]
  %v19 = vld [vmem:[%s0 + $0x10] sm:$0xf]
  %v20 = vld [vmem:[%s0 + $0x14] sm:$0xf]
  %v21 = vld [vmem:[%s0 + $0x18] sm:$0xf]
  %v22 = vld [vmem:[%s0 + $0x1c] sm:$0xf]
  %v23 = vld [vmem:[%s2] sm:$0xf]
  %v24 = vld [vmem:[%s2 + $0x4] sm:$0xf]
  %v25 = vld [vmem:[%s2 + $0x8] sm:$0xf]
  %v26 = vld [vmem:[%s2 + $0xc] sm:$0xf]
  %v27 = vld [vmem:[%s2 + $0x10] sm:$0xf]
  %v28 = vld [vmem:[%s2 + $0x14] sm:$0xf]
  %v29 = vld [vmem:[%s2 + $0x18] sm:$0xf]
  %v30 = vld [vmem:[%s2 + $0x1c] sm:$0xf]
  %v31 = vld [vmem:[%s2 + $0x20] sm:$0xf]
  %v32 = vld [vmem:[%s2 + $0x24] sm:$0xf]
  %v33 = vld [vmem:[%s2 + $0x28] sm:$0xf]
  %v34 = vld [vmem:[%s2 + $0x2c] sm:$0xf]
  %v35 = vld [vmem:[%s2 + $0x30] sm:$0xf]
  %v36 = vld [vmem:[%s2 + $0x34] sm:$0xf]
  %v37 = vld [vmem:[%s2 + $0x38] sm:$0xf]
  %v38 = vld [vmem:[%s2 + $0x3c] sm:$0xf]
  %v39 = vld [vmem:[%s1] sm:$0xff]
  %v40 = vld [vmem:[%s1 + $0x8] sm:$0xff]
  %v41 = vld [vmem:[%s1 + $0x10] sm:$0xff]
  %v42 = vld [vmem:[%s1 + $0x18] sm:$0xff]
  %v43 = vld [vmem:[%s1 + $0x20] sm:$0xff]
  %v44 = vld [vmem:[%s1 + $0x28] sm:$0xff]
  %v45 = vld [vmem:[%s1 + $0x30] sm:$0xff]
  %v46 = vld [vmem:[%s1 + $0x38] sm:$0xff]
  %48 = vset.pattern.permute.xlu0 0
  %49 = vperm.xlu0 %48, %v39
  %v50 = vpop.permute.xlu0 %49
  %53 = vset.pattern.permute.xlu0 0
  %54 = vperm.xlu0 %53, %v40
  %v55 = vpop.permute.xlu0 %54
  %58 = vset.pattern.permute.xlu0 0
  %59 = vperm.xlu0 %58, %v41
  %v60 = vpop.permute.xlu0 %59
  %63 = vset.pattern.permute.xlu0 0
  %64 = vperm.xlu0 %63, %v42
  %v65 = vpop.permute.xlu0 %64
  %68 = vset.pattern.permute.xlu0 0
  %69 = vperm.xlu0 %68, %v43
  %v70 = vpop.permute.xlu0 %69
  %73 = vset.pattern.permute.xlu0 0
  %74 = vperm.xlu0 %73, %v44
  %v75 = vpop.permute.xlu0 %74
  %78 = vset.pattern.permute.xlu0 0
  %79 = vperm.xlu0 %78, %v45
  %v80 = vpop.permute.xlu0 %79
  %83 = vset.pattern.permute.xlu0 0
  %84 = vperm.xlu0 %83, %v46
  %v85 = vpop.permute.xlu0 %84
  %v95 = vunpack.c.l.b16 %v15
  %v96 = vunpack.c.l.b16 %v16
  %v97 = vunpack.c.l.b16 %v17
  %v98 = vunpack.c.l.b16 %v18
  %v99 = vunpack.c.l.b16 %v19
  %v100 = vunpack.c.l.b16 %v20
  %v101 = vunpack.c.l.b16 %v21
  %v102 = vunpack.c.l.b16 %v22
  %v103 = vpack.c.b16 %v96, %v95
  %v104 = vpack.c.b16 %v98, %v97
  %v105 = vpack.c.b16 %v100, %v99
  %v106 = vpack.c.b16 %v102, %v101
  %v127 = vunpack.c.l.b16 %v23
  %v128 = vunpack.c.l.b16 %v24
  %v129 = vunpack.c.l.b16 %v25
  %v130 = vunpack.c.l.b16 %v26
  %v131 = vunpack.c.l.b16 %v27
  %v132 = vunpack.c.l.b16 %v28
  %v133 = vunpack.c.l.b16 %v29
  %v134 = vunpack.c.l.b16 %v30
  %v135 = vunpack.c.l.b16 %v31
  %v136 = vunpack.c.l.b16 %v32
  %v137 = vunpack.c.l.b16 %v33
  %v138 = vunpack.c.l.b16 %v34
  %v139 = vunpack.c.l.b16 %v35
  %v140 = vunpack.c.l.b16 %v36
  %v141 = vunpack.c.l.b16 %v37
  %v142 = vunpack.c.l.b16 %v38
  %v143 = vpack.c.b16 %v128, %v127
  %v144 = vpack.c.b16 %v130, %v129
  %v145 = vpack.c.b16 %v132, %v131
  %v146 = vpack.c.b16 %v134, %v133
  %v147 = vpack.c.b16 %v136, %v135
  %v148 = vpack.c.b16 %v138, %v137
  %v149 = vpack.c.b16 %v140, %v139
  %v150 = vpack.c.b16 %v142, %v141
  %159 = vmatprep.subr.bf16.mxu0 0
  %160 = vmatpush1.bf16.msra.mxu0 %v143
  %161 = vmatprep.subr.bf16.mxu0 0
  %162 = vmatpush1.bf16.msra.mxu0 %v144
  %163 = vmatprep.subr.bf16.mxu0 0
  %164 = vmatpush1.bf16.msra.mxu0 %v145
  %165 = vmatprep.subr.bf16.mxu0 0
  %166 = vmatpush1.bf16.msra.mxu0 %v146
  %167 = vmatprep.subr.bf16.mxu0 0
  %168 = vmatpush1.bf16.msra.mxu0 %v147
  %169 = vmatprep.subr.bf16.mxu0 0
  %170 = vmatpush1.bf16.msra.mxu0 %v148
  %171 = vmatprep.subr.bf16.mxu0 0
  %172 = vmatpush1.bf16.msra.mxu0 %v149
  %173 = vmatprep.subr.bf16.mxu0 0
  %174 = vmatpush1.bf16.msra.mxu0 %v150
  %175 = vmatprep.subr.bf16.mxu0 0
  %176 = vmatpush1.bf16.msra.mxu0 0
  %177 = vmatprep.subr.bf16.mxu0 0
  %178 = vmatpush1.bf16.msra.mxu0 0
  %179 = vmatprep.subr.bf16.mxu0 0
  %180 = vmatpush1.bf16.msra.mxu0 0
  %181 = vmatprep.subr.bf16.mxu0 0
  %182 = vmatpush1.bf16.msra.mxu0 0
  %183 = vmatprep.subr.bf16.mxu0 0
  %184 = vmatpush1.bf16.msra.mxu0 0
  %185 = vmatprep.subr.bf16.mxu0 0
  %186 = vmatpush1.bf16.msra.mxu0 0
  %187 = vmatprep.subr.bf16.mxu0 0
  %188 = vmatpush1.bf16.msra.mxu0 0
  %189 = vmatprep.subr.bf16.mxu0 0
  %190 = vmatpush1.bf16.msra.mxu0 0
  %191 = vmatprep.mubr.bf16.mxu0 0
  %192 = vmatmul.mubr.bf16.gmra.mrb[0].mxu0 %v103
  %v193 = vpop.f32.mrb[0].mxu0
  %v194 = vadd.f32 %v50, %v193
  %v195 = vpop.f32.mrb[0].mxu0
  %v196 = vpop.f32.mrb[0].mxu0
  %v197 = vadd.f32 %v55, %v196
  %v198 = vpop.f32.mrb[0].mxu0
  %199 = vmatprep.mubr.bf16.mxu0 0
  %200 = vmatmul.mubr.bf16.gmra.mrb[0].mxu0 %v104
  %v201 = vpop.f32.mrb[0].mxu0
  %v202 = vadd.f32 %v60, %v201
  %v203 = vpop.f32.mrb[0].mxu0
  %v204 = vpop.f32.mrb[0].mxu0
  %v205 = vadd.f32 %v65, %v204
  %v206 = vpop.f32.mrb[0].mxu0
  %207 = vmatprep.mubr.bf16.mxu0 0
  %208 = vmatmul.mubr.bf16.gmra.mrb[0].mxu0 %v105
  %v209 = vpop.f32.mrb[0].mxu0
  %v210 = vadd.f32 %v70, %v209
  %v211 = vpop.f32.mrb[0].mxu0
  %v212 = vpop.f32.mrb[0].mxu0
  %v213 = vadd.f32 %v75, %v212
  %v214 = vpop.f32.mrb[0].mxu0
  %215 = vmatprep.mubr.bf16.mxu0 0
  %216 = vmatmul.mubr.bf16.gmra.mrb[0].mxu0 %v106
  %v217 = vpop.f32.mrb[0].mxu0
  %v218 = vadd.f32 %v80, %v217
  %v219 = vpop.f32.mrb[0].mxu0
  %v220 = vpop.f32.mrb[0].mxu0
  %v221 = vadd.f32 %v85, %v220
  %v222 = vpop.f32.mrb[0].mxu0
  %223 = vdwg.mxu0
  %v224 = vmul.f32 %v194, 0.5
  %v225 = vmul.f32 %v197, 0.5
  %v226 = vmul.f32 %v202, 0.5
  %v227 = vmul.f32 %v205, 0.5
  %v228 = vmul.f32 %v210, 0.5
  %v229 = vmul.f32 %v213, 0.5
  %v230 = vmul.f32 %v218, 0.5
  %v231 = vmul.f32 %v221, 0.5
  %v232 = vmul.f32 %v194, 0.044715
  %v233 = vmul.f32 %v197, 0.044715
  %v234 = vmul.f32 %v202, 0.044715
  %v235 = vmul.f32 %v205, 0.044715
  %v236 = vmul.f32 %v210, 0.044715
  %v237 = vmul.f32 %v213, 0.044715
  %v238 = vmul.f32 %v218, 0.044715
  %v239 = vmul.f32 %v221, 0.044715
  %v240 = vmul.f32 %v232, %v194
  %v241 = vmul.f32 %v233, %v197
  %v242 = vmul.f32 %v234, %v202
  %v243 = vmul.f32 %v235, %v205
  %v244 = vmul.f32 %v236, %v210
  %v245 = vmul.f32 %v237, %v213
  %v246 = vmul.f32 %v238, %v218
  %v247 = vmul.f32 %v239, %v221
  %v248 = vmul.f32 %v240, %v194
  %v249 = vmul.f32 %v241, %v197
  %v250 = vmul.f32 %v242, %v202
  %v251 = vmul.f32 %v243, %v205
  %v252 = vmul.f32 %v244, %v210
  %v253 = vmul.f32 %v245, %v213
  %v254 = vmul.f32 %v246, %v218
  %v255 = vmul.f32 %v247, %v221
  %v256 = vadd.f32 %v194, %v248
  %v257 = vadd.f32 %v197, %v249
  %v258 = vadd.f32 %v202, %v250
  %v259 = vadd.f32 %v205, %v251
  %v260 = vadd.f32 %v210, %v252
  %v261 = vadd.f32 %v213, %v253
  %v262 = vadd.f32 %v218, %v254
  %v263 = vadd.f32 %v221, %v255
  %v264 = vmul.f32 %v256, 0.7978846
  %v265 = vmul.f32 %v257, 0.7978846
  %v266 = vmul.f32 %v258, 0.7978846
  %v267 = vmul.f32 %v259, 0.7978846
  %v268 = vmul.f32 %v260, 0.7978846
  %v269 = vmul.f32 %v261, 0.7978846
  %v270 = vmul.f32 %v262, 0.7978846
  %v271 = vmul.f32 %v263, 0.7978846
  %v272 = vtanh.pop %v264
  %v273 = vtanh.pop %v265
  %v274 = vtanh.pop %v266
  %v275 = vtanh.pop %v267
  %v276 = vtanh.pop %v268
  %v277 = vtanh.pop %v269
  %v278 = vtanh.pop %v270
  %v279 = vtanh.pop %v271
  %v280 = vadd.f32 %v272, 1.0
  %v281 = vadd.f32 %v273, 1.0
  %v282 = vadd.f32 %v274, 1.0
  %v283 = vadd.f32 %v275, 1.0
  %v284 = vadd.f32 %v276, 1.0
  %v285 = vadd.f32 %v277, 1.0
  %v286 = vadd.f32 %v278, 1.0
  %v287 = vadd.f32 %v279, 1.0
  %v288 = vmul.f32 %v224, %v280
  %v289 = vmul.f32 %v225, %v281
  %v290 = vmul.f32 %v226, %v282
  %v291 = vmul.f32 %v227, %v283
  %v292 = vmul.f32 %v228, %v284
  %v293 = vmul.f32 %v229, %v285
  %v294 = vmul.f32 %v230, %v286
  %v295 = vmul.f32 %v231, %v287
  %v296 = vpack.c.bf16 %v289, %v288
  %v297 = vpack.c.bf16 %v291, %v290
  %v298 = vpack.c.bf16 %v293, %v292
  %v299 = vpack.c.bf16 %v295, %v294
  %v304 = vunpack.c.l.b16 %v296
  %v305 = vunpack.c.h.b16 %v296
  %v306 = vunpack.c.l.b16 %v297
  %v307 = vunpack.c.h.b16 %v297
  %v308 = vunpack.c.l.b16 %v298
  %v309 = vunpack.c.h.b16 %v298
  %v310 = vunpack.c.l.b16 %v299
  %v311 = vunpack.c.h.b16 %v299
  %v312 = vpack.c.b16 %v304, %v304
  %v313 = vpack.c.b16 %v305, %v305
  %v314 = vpack.c.b16 %v306, %v306
  %v315 = vpack.c.b16 %v307, %v307
  %v316 = vpack.c.b16 %v308, %v308
  %v317 = vpack.c.b16 %v309, %v309
  %v318 = vpack.c.b16 %v310, %v310
  %v319 = vpack.c.b16 %v311, %v311
  %vm328 = vcmask 846848
  %329 = vst.msk [vmem:[%s3] sm:$0xf] %vm328, %v312
  %330 = vst.msk [vmem:[%s3 + $0x4] sm:$0xf] %vm328, %v313
  %331 = vst.msk [vmem:[%s3 + $0x8] sm:$0xf] %vm328, %v314
  %332 = vst.msk [vmem:[%s3 + $0xc] sm:$0xf] %vm328, %v315
  %333 = vst.msk [vmem:[%s3 + $0x10] sm:$0xf] %vm328, %v316
  %334 = vst.msk [vmem:[%s3 + $0x14] sm:$0xf] %vm328, %v317
  %335 = vst.msk [vmem:[%s3 + $0x18] sm:$0xf] %vm328, %v318
  %336 = vst.msk [vmem:[%s3 + $0x1c] sm:$0xf] %vm328, %v319
  // Predicated region
  $region14: #{autoencoder_forward.8} parent=0 // pred_check
    _
  $region15: #{autoencoder_forward.8} parent=0 // pred_check_branch
    %338 = sbr.rel (0) target = $region17
  $region16: #{autoencoder_forward.8} parent=0 // pred_region
    _
  $region17: #{autoencoder_forward.8} parent=0 // pred_fallthru
    _
  // Predicated region
  $region18: #{autoencoder_forward.8} parent=0 // pred_check
    _
  $region19: #{autoencoder_forward.8} parent=0 // pred_check_branch
    %340 = sbr.rel (0) target = $region21
  $region20: #{autoencoder_forward.8} parent=0 // pred_region
    _
  $region21: #{autoencoder_forward.8} parent=0 // pred_fallthru
    _

// kernel: autoencoder_forward.7
$region0: #{autoencoder_forward.7}
  #allocation0 [shape = 'u32[]', space=smem, size = 0x4, offset = 0x4, fixed_abs, tag = 'smem constant byte address 0x4 - core index']
  #allocation1 [shape = 'u32[144,128]{1,0:T(1,128)}', space=vmem, size = 0x12000, scoped, tag = 'internal scratch']
  %s0 = inlined_call_operand.vmem [shape: bf16[1568,8], index: 0, kind: input, shape index: {}]
  %s1 = inlined_call_operand.vmem [shape: bf16[24,1568], index: 1, kind: input, shape index: {}]
  %s2 = inlined_call_operand.vmem [shape: f32[24,1], index: 2, kind: input, shape index: {}]
  %s3 = inlined_call_operand.vmem [shape: f32[24,1], index: 3, kind: input, shape index: {}]
  %s4 = inlined_call_operand.vmem [shape: f32[24,1], index: 4, kind: input, shape index: {}]
  %s5 = inlined_call_operand.vmem [shape: bf16[1568,24], index: 5, kind: input, shape index: {}]
  %s6 = inlined_call_operand.vmem [shape: f32[1568,1], index: 6, kind: input, shape index: {}]
  %s7 = inlined_call_operand.vmem [shape: bf16[32,24], index: 7, kind: input, shape index: {}]
  %s8 = inlined_call_operand.vmem [shape: f32[32,1], index: 8, kind: input, shape index: {}]
  %s9 = inlined_call_operand.vmem [shape: bf16[10,32], index: 9, kind: input, shape index: {}]
  %s10 = inlined_call_operand.vmem [shape: f32[10,1], index: 10, kind: input, shape index: {}]
  %s11 = inlined_call_operand.vmem [shape: bf16[1568,8], index: 11, kind: output, shape index: {0}]
  %s12 = inlined_call_operand.vmem [shape: f32[10,8], index: 12, kind: output, shape index: {1}]
  %13 = xla_tuple %s11, %s12
  %s14 = sld [smem:[#allocation0]]
  $region62: #{autoencoder_forward.7} parent=0
    _
  %s16 = ssub.s32 1, %s14
  %s17 = scalar_select 0, %s16, %s14
  // Predicated region
  $region2: #{autoencoder_forward.7} parent=0 // pred_check
    _
  $region3: #{autoencoder_forward.7} parent=0 // pred_check_branch
    %19 = sbr.rel (0) target = $region5
  $region4: #{autoencoder_forward.7} parent=0 // pred_region
    _
  $region5: #{autoencoder_forward.7} parent=0 // pred_fallthru
    _
  // Predicated region
  $region6: #{autoencoder_forward.7} parent=0 // pred_check
    _
  $region7: #{autoencoder_forward.7} parent=0 // pred_check_branch
    %21 = sbr.rel (0) target = $region9
  $region8: #{autoencoder_forward.7} parent=0 // pred_region
    _
  $region9: #{autoencoder_forward.7} parent=0 // pred_fallthru
    _
  // Predicated region
  $region10: #{autoencoder_forward.7} parent=0 // pred_check
    _
  $region11: #{autoencoder_forward.7} parent=0 // pred_check_branch
    %23 = sbr.rel (0) target = $region13
  $region12: #{autoencoder_forward.7} parent=0 // pred_region
    _
  $region13: #{autoencoder_forward.7} parent=0 // pred_fallthru
    _
  // Predicated region
  $region14: #{autoencoder_forward.7} parent=0 // pred_check
    _
  $region15: #{autoencoder_forward.7} parent=0 // pred_check_branch
    %25 = sbr.rel (0) target = $region17
  $region16: #{autoencoder_forward.7} parent=0 // pred_region
    _
  $region17: #{autoencoder_forward.7} parent=0 // pred_fallthru
    _
  // Predicated region
  $region18: #{autoencoder_forward.7} parent=0 // pred_check
    _
  $region19: #{autoencoder_forward.7} parent=0 // pred_check_branch
    %27 = sbr.rel (0) target = $region21
  $region20: #{autoencoder_forward.7} parent=0 // pred_region
    _
  $region21: #{autoencoder_forward.7} parent=0 // pred_fallthru
    _
  // Predicated region
  $region22: #{autoencoder_forward.7} parent=0 // pred_check
    _
  $region23: #{autoencoder_forward.7} parent=0 // pred_check_branch
    %29 = sbr.rel (0) target = $region25
  $region24: #{autoencoder_forward.7} parent=0 // pred_region
    _
  $region25: #{autoencoder_forward.7} parent=0 // pred_fallthru
    _
  // Predicated region
  $region26: #{autoencoder_forward.7} parent=0 // pred_check
    _
  $region27: #{autoencoder_forward.7} parent=0 // pred_check_branch
    %31 = sbr.rel (0) target = $region29
  $region28: #{autoencoder_forward.7} parent=0 // pred_region
    _
  $region29: #{autoencoder_forward.7} parent=0 // pred_fallthru
    _
  // Predicated region
  $region30: #{autoencoder_forward.7} parent=0 // pred_check
    _
  $region31: #{autoencoder_forward.7} parent=0 // pred_check_branch
    %33 = sbr.rel (0) target = $region33
  $region32: #{autoencoder_forward.7} parent=0 // pred_region
    _
  $region33: #{autoencoder_forward.7} parent=0 // pred_fallthru
    _
  // Predicated region
  $region34: #{autoencoder_forward.7} parent=0 // pred_check
    _
  $region35: #{autoencoder_forward.7} parent=0 // pred_check_branch
    %35 = sbr.rel (0) target = $region37
  $region36: #{autoencoder_forward.7} parent=0 // pred_region
    _
  $region37: #{autoencoder_forward.7} parent=0 // pred_fallthru
    _
  // Predicated region
  $region38: #{autoencoder_forward.7} parent=0 // pred_check
    _
  $region39: #{autoencoder_forward.7} parent=0 // pred_check_branch
    %37 = sbr.rel (0) target = $region41
  $region40: #{autoencoder_forward.7} parent=0 // pred_region
    _
  $region41: #{autoencoder_forward.7} parent=0 // pred_fallthru
    _
  // Predicated region
  $region42: #{autoencoder_forward.7} parent=0 // pred_check
    _
  $region43: #{autoencoder_forward.7} parent=0 // pred_check_branch
    %39 = sbr.rel (0) target = $region45
  $region44: #{autoencoder_forward.7} parent=0 // pred_region
    _
  $region45: #{autoencoder_forward.7} parent=0 // pred_fallthru
    _
  %v41 = vld [vmem:[%s1] sm:$0xff]
  %v42 = vld [vmem:[%s1 + $0x8] sm:$0xff]
  %v43 = vld [vmem:[%s1 + $0x10] sm:$0xff]
  %v44 = vld [vmem:[%s1 + $0x18] sm:$0xff]
  %v45 = vld [vmem:[%s1 + $0x20] sm:$0xff]
  %v46 = vld [vmem:[%s1 + $0x28] sm:$0xff]
  %v47 = vld [vmem:[%s1 + $0x30] sm:$0xf]
  %v48 = vld [vmem:[%s1 + $0x34] sm:$0xff]
  %v49 = vld [vmem:[%s1 + $0x3c] sm:$0xff]
  %v50 = vld [vmem:[%s1 + $0x44] sm:$0xff]
  %v51 = vld [vmem:[%s1 + $0x4c] sm:$0xff]
  %v52 = vld [vmem:[%s1 + $0x54] sm:$0xff]
  %v53 = vld [vmem:[%s1 + $0x5c] sm:$0xff]
  %v54 = vld [vmem:[%s1 + $0x64] sm:$0xf]
  %v55 = vld [vmem:[%s1 + $0x68] sm:$0xff]
  %v56 = vld [vmem:[%s1 + $0x70] sm:$0xff]
  %v57 = vld [vmem:[%s1 + $0x78] sm:$0xff]
  %v58 = vld [vmem:[%s1 + $0x80] sm:$0xff]
  %v59 = vld [vmem:[%s1 + $0x88] sm:$0xff]
  %v60 = vld [vmem:[%s1 + $0x90] sm:$0xff]
  %v61 = vld [vmem:[%s1 + $0x98] sm:$0xf]
  %v62 = vld [vmem:[%s0] sm:$0xf]
  %v63 = vld [vmem:[%s0 + $0x4] sm:$0xf]
  %v64 = vld [vmem:[%s0 + $0x8] sm:$0xf]
  %v65 = vld [vmem:[%s0 + $0xc] sm:$0xf]
  %v66 = vld [vmem:[%s0 + $0x10] sm:$0xf]
  %v67 = vld [vmem:[%s0 + $0x14] sm:$0xf]
  %v68 = vld [vmem:[%s0 + $0x18] sm:$0xf]
  %v69 = vld [vmem:[%s0 + $0x1c] sm:$0xf]
  %v70 = vld [vmem:[%s0 + $0x20] sm:$0xf]
  %v71 = vld [vmem:[%s0 + $0x24] sm:$0xf]
  %v72 = vld [vmem:[%s0 + $0x28] sm:$0xf]
  %v73 = vld [vmem:[%s0 + $0x2c] sm:$0xf]
  %v74 = vld [vmem:[%s0 + $0x30] sm:$0xf]
  %v75 = vld [vmem:[%s0 + $0x34] sm:$0xf]
  %v76 = vld [vmem:[%s0 + $0x38] sm:$0xf]
  %v77 = vld [vmem:[%s0 + $0x3c] sm:$0xf]
  %v78 = vld [vmem:[%s0 + $0x40] sm:$0xf]
  %v79 = vld [vmem:[%s0 + $0x44] sm:$0xf]
  %v80 = vld [vmem:[%s0 + $0x48] sm:$0xf]
  %v81 = vld [vmem:[%s0 + $0x4c] sm:$0xf]
  %v82 = vld [vmem:[%s0 + $0x50] sm:$0xf]
  %v83 = vld [vmem:[%s0 + $0x54] sm:$0xf]
  %v84 = vld [vmem:[%s0 + $0x58] sm:$0xf]
  %v85 = vld [vmem:[%s0 + $0x5c] sm:$0xf]
  %v86 = vld [vmem:[%s0 + $0x60] sm:$0xf]
  %v87 = vld [vmem:[%s0 + $0x64] sm:$0xf]
  %v88 = vld [vmem:[%s0 + $0x68] sm:$0xf]
  %v89 = vld [vmem:[%s0 + $0x6c] sm:$0xf]
  %v90 = vld [vmem:[%s0 + $0x70] sm:$0xf]
  %v91 = vld [vmem:[%s0 + $0x74] sm:$0xf]
  %v92 = vld [vmem:[%s0 + $0x78] sm:$0xf]
  %v93 = vld [vmem:[%s0 + $0x7c] sm:$0xf]
  %v94 = vld [vmem:[%s0 + $0x80] sm:$0xf]
  %v95 = vld [vmem:[%s0 + $0x84] sm:$0xf]
  %v96 = vld [vmem:[%s0 + $0x88] sm:$0xf]
  %v97 = vld [vmem:[%s0 + $0x8c] sm:$0xf]
  %v98 = vld [vmem:[%s0 + $0x90] sm:$0xf]
  %v99 = vld [vmem:[%s0 + $0x94] sm:$0xf]
  %v100 = vld [vmem:[%s0 + $0x98] sm:$0xf]
  %v101 = vld [vmem:[%s0 + $0x9c] sm:$0xf]
  %v102 = vld [vmem:[%s0 + $0xa0] sm:$0xf]
  %v103 = vld [vmem:[%s0 + $0xa4] sm:$0xf]
  %v104 = vld [vmem:[%s0 + $0xa8] sm:$0xf]
  %v105 = vld [vmem:[%s0 + $0xac] sm:$0xf]
  %v106 = vld [vmem:[%s0 + $0xb0] sm:$0xf]
  %v107 = vld [vmem:[%s0 + $0xb4] sm:$0xf]
  %v108 = vld [vmem:[%s0 + $0xb8] sm:$0xf]
  %v109 = vld [vmem:[%s0 + $0xbc] sm:$0xf]
  %v110 = vld [vmem:[%s0 + $0xc0] sm:$0xf]
  %v111 = vld [vmem:[%s0 + $0xc4] sm:$0xf]
  %v112 = vld [vmem:[%s0 + $0xc8] sm:$0xf]
  %v113 = vld [vmem:[%s0 + $0xcc] sm:$0xf]
  %v114 = vld [vmem:[%s0 + $0xd0] sm:$0xf]
  %v115 = vld [vmem:[%s0 + $0xd4] sm:$0xf]
  %v116 = vld [vmem:[%s0 + $0xd8] sm:$0xf]
  %v117 = vld [vmem:[%s0 + $0xdc] sm:$0xf]
  %v118 = vld [vmem:[%s0 + $0xe0] sm:$0xf]
  %v119 = vld [vmem:[%s0 + $0xe4] sm:$0xf]
  %v120 = vld [vmem:[%s0 + $0xe8] sm:$0xf]
  %v121 = vld [vmem:[%s0 + $0xec] sm:$0xf]
  %v122 = vld [vmem:[%s0 + $0xf0] sm:$0xf]
  %v123 = vld [vmem:[%s0 + $0xf4] sm:$0xf]
  %v124 = vld [vmem:[%s0 + $0xf8] sm:$0xf]
  %v125 = vld [vmem:[%s0 + $0xfc] sm:$0xf]
  %v126 = vld [vmem:[%s0 + $0x100] sm:$0xf]
  %v127 = vld [vmem:[%s0 + $0x104] sm:$0xf]
  %v128 = vld [vmem:[%s0 + $0x108] sm:$0xf]
  %v129 = vld [vmem:[%s0 + $0x10c] sm:$0xf]
  %v130 = vld [vmem:[%s0 + $0x110] sm:$0xf]
  %v131 = vld [vmem:[%s0 + $0x114] sm:$0xf]
  %v132 = vld [vmem:[%s0 + $0x118] sm:$0xf]
  %v133 = vld [vmem:[%s0 + $0x11c] sm:$0xf]
  %v134 = vld [vmem:[%s0 + $0x120] sm:$0xf]
  %v135 = vld [vmem:[%s0 + $0x124] sm:$0xf]
  %v136 = vld [vmem:[%s0 + $0x128] sm:$0xf]
  %v137 = vld [vmem:[%s0 + $0x12c] sm:$0xf]
  %v138 = vld [vmem:[%s0 + $0x130] sm:$0xf]
  %v139 = vld [vmem:[%s0 + $0x134] sm:$0xf]
  %v140 = vld [vmem:[%s0 + $0x138] sm:$0xf]
  %v141 = vld [vmem:[%s0 + $0x13c] sm:$0xf]
  %v142 = vld [vmem:[%s0 + $0x140] sm:$0xf]
  %v143 = vld [vmem:[%s0 + $0x144] sm:$0xf]
  %v144 = vld [vmem:[%s0 + $0x148] sm:$0xf]
  %v145 = vld [vmem:[%s0 + $0x14c] sm:$0xf]
  %v146 = vld [vmem:[%s0 + $0x150] sm:$0xf]
  %v147 = vld [vmem:[%s0 + $0x154] sm:$0xf]
  %v148 = vld [vmem:[%s0 + $0x158] sm:$0xf]
  %v149 = vld [vmem:[%s0 + $0x15c] sm:$0xf]
  %v150 = vld [vmem:[%s0 + $0x160] sm:$0xf]
  %v151 = vld [vmem:[%s0 + $0x164] sm:$0xf]
  %v152 = vld [vmem:[%s0 + $0x168] sm:$0xf]
  %v153 = vld [vmem:[%s0 + $0x16c] sm:$0xf]
  %v154 = vld [vmem:[%s0 + $0x170] sm:$0xf]
  %v155 = vld [vmem:[%s0 + $0x174] sm:$0xf]
  %v156 = vld [vmem:[%s0 + $0x178] sm:$0xf]
  %v157 = vld [vmem:[%s0 + $0x17c] sm:$0xf]
  %v158 = vld [vmem:[%s0 + $0x180] sm:$0xf]
  %v159 = vld [vmem:[%s0 + $0x184] sm:$0xf]
  %v160 = vld [vmem:[%s0 + $0x188] sm:$0xf]
  %v161 = vld [vmem:[%s0 + $0x18c] sm:$0xf]
  %v162 = vld [vmem:[%s0 + $0x190] sm:$0xf]
  %v163 = vld [vmem:[%s0 + $0x194] sm:$0xf]
  %v164 = vld [vmem:[%s0 + $0x198] sm:$0xf]
  %v165 = vld [vmem:[%s0 + $0x19c] sm:$0xf]
  %v166 = vld [vmem:[%s0 + $0x1a0] sm:$0xf]
  %v167 = vld [vmem:[%s0 + $0x1a4] sm:$0xf]
  %v168 = vld [vmem:[%s0 + $0x1a8] sm:$0xf]
  %v169 = vld [vmem:[%s0 + $0x1ac] sm:$0xf]
  %v170 = vld [vmem:[%s0 + $0x1b0] sm:$0xf]
  %v171 = vld [vmem:[%s0 + $0x1b4] sm:$0xf]
  %v172 = vld [vmem:[%s0 + $0x1b8] sm:$0xf]
  %v173 = vld [vmem:[%s0 + $0x1bc] sm:$0xf]
  %v174 = vld [vmem:[%s0 + $0x1c0] sm:$0xf]
  %v175 = vld [vmem:[%s0 + $0x1c4] sm:$0xf]
  %v176 = vld [vmem:[%s0 + $0x1c8] sm:$0xf]
  %v177 = vld [vmem:[%s0 + $0x1cc] sm:$0xf]
  %v178 = vld [vmem:[%s0 + $0x1d0] sm:$0xf]
  %v179 = vld [vmem:[%s0 + $0x1d4] sm:$0xf]
  %v180 = vld [vmem:[%s0 + $0x1d8] sm:$0xf]
  %v181 = vld [vmem:[%s0 + $0x1dc] sm:$0xf]
  %v182 = vld [vmem:[%s0 + $0x1e0] sm:$0xf]
  %v183 = vld [vmem:[%s0 + $0x1e4] sm:$0xf]
  %v184 = vld [vmem:[%s0 + $0x1e8] sm:$0xf]
  %v185 = vld [vmem:[%s0 + $0x1ec] sm:$0xf]
  %v186 = vld [vmem:[%s0 + $0x1f0] sm:$0xf]
  %v187 = vld [vmem:[%s0 + $0x1f4] sm:$0xf]
  %v188 = vld [vmem:[%s0 + $0x1f8] sm:$0xf]
  %v189 = vld [vmem:[%s0 + $0x1fc] sm:$0xf]
  %v190 = vld [vmem:[%s0 + $0x200] sm:$0xf]
  %v191 = vld [vmem:[%s0 + $0x204] sm:$0xf]
  %v192 = vld [vmem:[%s0 + $0x208] sm:$0xf]
  %v193 = vld [vmem:[%s0 + $0x20c] sm:$0xf]
  %v194 = vld [vmem:[%s0 + $0x210] sm:$0xf]
  %v195 = vld [vmem:[%s0 + $0x214] sm:$0xf]
  %v196 = vld [vmem:[%s0 + $0x218] sm:$0xf]
  %v197 = vld [vmem:[%s0 + $0x21c] sm:$0xf]
  %v198 = vld [vmem:[%s0 + $0x220] sm:$0xf]
  %v199 = vld [vmem:[%s0 + $0x224] sm:$0xf]
  %v200 = vld [vmem:[%s0 + $0x228] sm:$0xf]
  %v201 = vld [vmem:[%s0 + $0x22c] sm:$0xf]
  %v202 = vld [vmem:[%s0 + $0x230] sm:$0xf]
  %v203 = vld [vmem:[%s0 + $0x234] sm:$0xf]
  %v204 = vld [vmem:[%s0 + $0x238] sm:$0xf]
  %v205 = vld [vmem:[%s0 + $0x23c] sm:$0xf]
  %v206 = vld [vmem:[%s0 + $0x240] sm:$0xf]
  %v207 = vld [vmem:[%s0 + $0x244] sm:$0xf]
  %v208 = vld [vmem:[%s0 + $0x248] sm:$0xf]
  %v209 = vld [vmem:[%s0 + $0x24c] sm:$0xf]
  %v210 = vld [vmem:[%s0 + $0x250] sm:$0xf]
  %v211 = vld [vmem:[%s0 + $0x254] sm:$0xf]
  %v212 = vld [vmem:[%s0 + $0x258] sm:$0xf]
  %v213 = vld [vmem:[%s0 + $0x25c] sm:$0xf]
  %v214 = vld [vmem:[%s0 + $0x260] sm:$0xf]
  %v215 = vld [vmem:[%s0 + $0x264] sm:$0xf]
  %v216 = vld [vmem:[%s0 + $0x268] sm:$0xf]
  %v217 = vld [vmem:[%s0 + $0x26c] sm:$0xf]
  %v218 = vld [vmem:[%s0 + $0x270] sm:$0xf]
  %v219 = vld [vmem:[%s0 + $0x274] sm:$0xf]
  %v220 = vld [vmem:[%s0 + $0x278] sm:$0xf]
  %v221 = vld [vmem:[%s0 + $0x27c] sm:$0xf]
  %v222 = vld [vmem:[%s0 + $0x280] sm:$0xf]
  %v223 = vld [vmem:[%s0 + $0x284] sm:$0xf]
  %v224 = vld [vmem:[%s0 + $0x288] sm:$0xf]
  %v225 = vld [vmem:[%s0 + $0x28c] sm:$0xf]
  %v226 = vld [vmem:[%s0 + $0x290] sm:$0xf]
  %v227 = vld [vmem:[%s0 + $0x294] sm:$0xf]
  %v228 = vld [vmem:[%s0 + $0x298] sm:$0xf]
  %v229 = vld [vmem:[%s0 + $0x29c] sm:$0xf]
  %v230 = vld [vmem:[%s0 + $0x2a0] sm:$0xf]
  %v231 = vld [vmem:[%s0 + $0x2a4] sm:$0xf]
  %v232 = vld [vmem:[%s0 + $0x2a8] sm:$0xf]
  %v233 = vld [vmem:[%s0 + $0x2ac] sm:$0xf]
  %v234 = vld [vmem:[%s0 + $0x2b0] sm:$0xf]
  %v235 = vld [vmem:[%s0 + $0x2b4] sm:$0xf]
  %v236 = vld [vmem:[%s0 + $0x2b8] sm:$0xf]
  %v237 = vld [vmem:[%s0 + $0x2bc] sm:$0xf]
  %v238 = vld [vmem:[%s0 + $0x2c0] sm:$0xf]
  %v239 = vld [vmem:[%s0 + $0x2c4] sm:$0xf]
  %v240 = vld [vmem:[%s0 + $0x2c8] sm:$0xf]
  %v241 = vld [vmem:[%s0 + $0x2cc] sm:$0xf]
  %v242 = vld [vmem:[%s0 + $0x2d0] sm:$0xf]
  %v243 = vld [vmem:[%s0 + $0x2d4] sm:$0xf]
  %v244 = vld [vmem:[%s0 + $0x2d8] sm:$0xf]
  %v245 = vld [vmem:[%s0 + $0x2dc] sm:$0xf]
  %v246 = vld [vmem:[%s0 + $0x2e0] sm:$0xf]
  %v247 = vld [vmem:[%s0 + $0x2e4] sm:$0xf]
  %v248 = vld [vmem:[%s0 + $0x2e8] sm:$0xf]
  %v249 = vld [vmem:[%s0 + $0x2ec] sm:$0xf]
  %v250 = vld [vmem:[%s0 + $0x2f0] sm:$0xf]
  %v251 = vld [vmem:[%s0 + $0x2f4] sm:$0xf]
  %v252 = vld [vmem:[%s0 + $0x2f8] sm:$0xf]
  %v253 = vld [vmem:[%s0 + $0x2fc] sm:$0xf]
  %v254 = vld [vmem:[%s0 + $0x300] sm:$0xf]
  %v255 = vld [vmem:[%s0 + $0x304] sm:$0xf]
  %v256 = vld [vmem:[%s0 + $0x308] sm:$0xf]
  %v257 = vld [vmem:[%s0 + $0x30c] sm:$0xf]
  %v258 = vld [vmem:[%s2] sm:$0xff]
  %v259 = vld [vmem:[%s2 + $0x8] sm:$0xff]
  %v260 = vld [vmem:[%s2 + $0x10] sm:$0xff]
  %262 = vset.pattern.permute.xlu0 0
  %263 = vperm.xlu0 %262, %v258
  %v264 = vpop.permute.xlu0 %263
  %267 = vset.pattern.permute.xlu0 0
  %268 = vperm.xlu0 %267, %v259
  %v269 = vpop.permute.xlu0 %268
  %272 = vset.pattern.permute.xlu0 0
  %273 = vperm.xlu0 %272, %v260
  %v274 = vpop.permute.xlu0 %273
  %v297 = vunpack.c.l.b16 %v41
  %v298 = vunpack.c.h.b16 %v41
  %v299 = vunpack.c.l.b16 %v42
  %v300 = vunpack.c.h.b16 %v42
  %v301 = vunpack.c.l.b16 %v43
  %v302 = vunpack.c.h.b16 %v43
  %v303 = vunpack.c.l.b16 %v44
  %v304 = vunpack.c.h.b16 %v44
  %v305 = vunpack.c.l.b16 %v45
  %v306 = vunpack.c.h.b16 %v45
  %v307 = vunpack.c.l.b16 %v46
  %v308 = vunpack.c.h.b16 %v46
  %v309 = vunpack.c.l.b16 %v47
  %v310 = vunpack.c.l.b16 %v48
  %v311 = vunpack.c.h.b16 %v48
  %v312 = vunpack.c.l.b16 %v49
  %v313 = vunpack.c.h.b16 %v49
  %v314 = vunpack.c.l.b16 %v50
  %v315 = vunpack.c.h.b16 %v50
  %v316 = vunpack.c.l.b16 %v51
  %v317 = vunpack.c.h.b16 %v51
  %v318 = vunpack.c.l.b16 %v52
  %v319 = vunpack.c.h.b16 %v52
  %v320 = vunpack.c.l.b16 %v53
  %v321 = vunpack.c.h.b16 %v53
  %v322 = vunpack.c.l.b16 %v54
  %v323 = vunpack.c.l.b16 %v55
  %v324 = vunpack.c.h.b16 %v55
  %v325 = vunpack.c.l.b16 %v56
  %v326 = vunpack.c.h.b16 %v56
  %v327 = vunpack.c.l.b16 %v57
  %v328 = vunpack.c.h.b16 %v57
  %v329 = vunpack.c.l.b16 %v58
  %v330 = vunpack.c.h.b16 %v58
  %v331 = vunpack.c.l.b16 %v59
  %v332 = vunpack.c.h.b16 %v59
  %v333 = vunpack.c.l.b16 %v60
  %v334 = vunpack.c.h.b16 %v60
  %v335 = vunpack.c.l.b16 %v61
  %v336 = vpack.c.b16 %v310, %v297
  %v337 = vpack.c.b16 %v311, %v298
  %v338 = vpack.c.b16 %v312, %v299
  %v339 = vpack.c.b16 %v313, %v300
  %v340 = vpack.c.b16 %v314, %v301
  %v341 = vpack.c.b16 %v315, %v302
  %v342 = vpack.c.b16 %v316, %v303
  %v343 = vpack.c.b16 %v317, %v304
  %v344 = vpack.c.b16 %v318, %v305
  %v345 = vpack.c.b16 %v319, %v306
  %v346 = vpack.c.b16 %v320, %v307
  %v347 = vpack.c.b16 %v321, %v308
  %v348 = vpack.c.b16 %v322, %v309
  %v349 = vpack.c.b16 %v323, %v323
  %v350 = vpack.c.b16 %v324, %v324
  %v351 = vpack.c.b16 %v325, %v325
  %v352 = vpack.c.b16 %v326, %v326
  %v353 = vpack.c.b16 %v327, %v327
  %v354 = vpack.c.b16 %v328, %v328
  %v355 = vpack.c.b16 %v329, %v329
  %v356 = vpack.c.b16 %v330, %v330
  %v357 = vpack.c.b16 %v331, %v331
  %v358 = vpack.c.b16 %v332, %v332
  %v359 = vpack.c.b16 %v333, %v333
  %v360 = vpack.c.b16 %v334, %v334
  %v361 = vpack.c.b16 %v335, %v335
  %v582 = vunpack.c.l.b16 %v62
  %v583 = vunpack.c.l.b16 %v63
  %v584 = vunpack.c.l.b16 %v64
  %v585 = vunpack.c.l.b16 %v65
  %v586 = vunpack.c.l.b16 %v66
  %v587 = vunpack.c.l.b16 %v67
  %v588 = vunpack.c.l.b16 %v68
  %v589 = vunpack.c.l.b16 %v69
  %v590 = vunpack.c.l.b16 %v70
  %v591 = vunpack.c.l.b16 %v71
  %v592 = vunpack.c.l.b16 %v72
  %v593 = vunpack.c.l.b16 %v73
  %v594 = vunpack.c.l.b16 %v74
  %v595 = vunpack.c.l.b16 %v75
  %v596 = vunpack.c.l.b16 %v76
  %v597 = vunpack.c.l.b16 %v77
  %v598 = vunpack.c.l.b16 %v78
  %v599 = vunpack.c.l.b16 %v79
  %v600 = vunpack.c.l.b16 %v80
  %v601 = vunpack.c.l.b16 %v81
  %v602 = vunpack.c.l.b16 %v82
  %v603 = vunpack.c.l.b16 %v83
  %v604 = vunpack.c.l.b16 %v84
  %v605 = vunpack.c.l.b16 %v85
  %v606 = vunpack.c.l.b16 %v86
  %v607 = vunpack.c.l.b16 %v87
  %v608 = vunpack.c.l.b16 %v88
  %v609 = vunpack.c.l.b16 %v89
  %v610 = vunpack.c.l.b16 %v90
  %v611 = vunpack.c.l.b16 %v91
  %v612 = vunpack.c.l.b16 %v92
  %v613 = vunpack.c.l.b16 %v93
  %v614 = vunpack.c.l.b16 %v94
  %v615 = vunpack.c.l.b16 %v95
  %v616 = vunpack.c.l.b16 %v96
  %v617 = vunpack.c.l.b16 %v97
  %v618 = vunpack.c.l.b16 %v98
  %v619 = vunpack.c.l.b16 %v99
  %v620 = vunpack.c.l.b16 %v100
  %v621 = vunpack.c.l.b16 %v101
  %v622 = vunpack.c.l.b16 %v102
  %v623 = vunpack.c.l.b16 %v103
  %v624 = vunpack.c.l.b16 %v104
  %v625 = vunpack.c.l.b16 %v105
  %v626 = vunpack.c.l.b16 %v106
  %v627 = vunpack.c.l.b16 %v107
  %v628 = vunpack.c.l.b16 %v108
  %v629 = vunpack.c.l.b16 %v109
  %v630 = vunpack.c.l.b16 %v110
  %v631 = vunpack.c.l.b16 %v111
  %v632 = vunpack.c.l.b16 %v112
  %v633 = vunpack.c.l.b16 %v113
  %v634 = vunpack.c.l.b16 %v114
  %v635 = vunpack.c.l.b16 %v115
  %v636 = vunpack.c.l.b16 %v116
  %v637 = vunpack.c.l.b16 %v117
  %v638 = vunpack.c.l.b16 %v118
  %v639 = vunpack.c.l.b16 %v119
  %v640 = vunpack.c.l.b16 %v120
  %v641 = vunpack.c.l.b16 %v121
  %v642 = vunpack.c.l.b16 %v122
  %v643 = vunpack.c.l.b16 %v123
  %v644 = vunpack.c.l.b16 %v124
  %v645 = vunpack.c.l.b16 %v125
  %v646 = vunpack.c.l.b16 %v126
  %v647 = vunpack.c.l.b16 %v127
  %v648 = vunpack.c.l.b16 %v128
  %v649 = vunpack.c.l.b16 %v129
  %v650 = vunpack.c.l.b16 %v130
  %v651 = vunpack.c.l.b16 %v131
  %v652 = vunpack.c.l.b16 %v132
  %v653 = vunpack.c.l.b16 %v133
  %v654 = vunpack.c.l.b16 %v134
  %v655 = vunpack.c.l.b16 %v135
  %v656 = vunpack.c.l.b16 %v136
  %v657 = vunpack.c.l.b16 %v137
  %v658 = vunpack.c.l.b16 %v138
  %v659 = vunpack.c.l.b16 %v139
  %v660 = vunpack.c.l.b16 %v140
  %v661 = vunpack.c.l.b16 %v141
  %v662 = vunpack.c.l.b16 %v142
  %v663 = vunpack.c.l.b16 %v143
  %v664 = vunpack.c.l.b16 %v144
  %v665 = vunpack.c.l.b16 %v145
  %v666 = vunpack.c.l.b16 %v146
  %v667 = vunpack.c.l.b16 %v147
  %v668 = vunpack.c.l.b16 %v148
  %v669 = vunpack.c.l.b16 %v149
  %v670 = vunpack.c.l.b16 %v150
  %v671 = vunpack.c.l.b16 %v151
  %v672 = vunpack.c.l.b16 %v152
  %v673 = vunpack.c.l.b16 %v153
  %v674 = vunpack.c.l.b16 %v154
  %v675 = vunpack.c.l.b16 %v155
  %v676 = vunpack.c.l.b16 %v156
  %v677 = vunpack.c.l.b16 %v157
  %v678 = vunpack.c.l.b16 %v158
  %v679 = vunpack.c.l.b16 %v159
  %v680 = vunpack.c.l.b16 %v160
  %v681 = vunpack.c.l.b16 %v161
  %v682 = vunpack.c.l.b16 %v162
  %v683 = vunpack.c.l.b16 %v163
  %v684 = vunpack.c.l.b16 %v164
  %v685 = vunpack.c.l.b16 %v165
  %v686 = vunpack.c.l.b16 %v166
  %v687 = vunpack.c.l.b16 %v167
  %v688 = vunpack.c.l.b16 %v168
  %v689 = vunpack.c.l.b16 %v169
  %v690 = vunpack.c.l.b16 %v170
  %v691 = vunpack.c.l.b16 %v171
  %v692 = vunpack.c.l.b16 %v172
  %v693 = vunpack.c.l.b16 %v173
  %v694 = vunpack.c.l.b16 %v174
  %v695 = vunpack.c.l.b16 %v175
  %v696 = vunpack.c.l.b16 %v176
  %v697 = vunpack.c.l.b16 %v177
  %v698 = vunpack.c.l.b16 %v178
  %v699 = vunpack.c.l.b16 %v179
  %v700 = vunpack.c.l.b16 %v180
  %v701 = vunpack.c.l.b16 %v181
  %v702 = vunpack.c.l.b16 %v182
  %v703 = vunpack.c.l.b16 %v183
  %v704 = vunpack.c.l.b16 %v184
  %v705 = vunpack.c.l.b16 %v185
  %v706 = vunpack.c.l.b16 %v186
  %v707 = vunpack.c.l.b16 %v187
  %v708 = vunpack.c.l.b16 %v188
  %v709 = vunpack.c.l.b16 %v189
  %v710 = vunpack.c.l.b16 %v190
  %v711 = vunpack.c.l.b16 %v191
  %v712 = vunpack.c.l.b16 %v192
  %v713 = vunpack.c.l.b16 %v193
  %v714 = vunpack.c.l.b16 %v194
  %v715 = vunpack.c.l.b16 %v195
  %v716 = vunpack.c.l.b16 %v196
  %v717 = vunpack.c.l.b16 %v197
  %v718 = vunpack.c.l.b16 %v198
  %v719 = vunpack.c.l.b16 %v199
  %v720 = vunpack.c.l.b16 %v200
  %v721 = vunpack.c.l.b16 %v201
  %v722 = vunpack.c.l.b16 %v202
  %v723 = vunpack.c.l.b16 %v203
  %v724 = vunpack.c.l.b16 %v204
  %v725 = vunpack.c.l.b16 %v205
  %v726 = vunpack.c.l.b16 %v206
  %v727 = vunpack.c.l.b16 %v207
  %v728 = vunpack.c.l.b16 %v208
  %v729 = vunpack.c.l.b16 %v209
  %v730 = vunpack.c.l.b16 %v210
  %v731 = vunpack.c.l.b16 %v211
  %v732 = vunpack.c.l.b16 %v212
  %v733 = vunpack.c.l.b16 %v213
  %v734 = vunpack.c.l.b16 %v214
  %v735 = vunpack.c.l.b16 %v215
  %v736 = vunpack.c.l.b16 %v216
  %v737 = vunpack.c.l.b16 %v217
  %v738 = vunpack.c.l.b16 %v218
  %v739 = vunpack.c.l.b16 %v219
  %v740 = vunpack.c.l.b16 %v220
  %v741 = vunpack.c.l.b16 %v221
  %v742 = vunpack.c.l.b16 %v222
  %v743 = vunpack.c.l.b16 %v223
  %v744 = vunpack.c.l.b16 %v224
  %v745 = vunpack.c.l.b16 %v225
  %v746 = vunpack.c.l.b16 %v226
  %v747 = vunpack.c.l.b16 %v227
  %v748 = vunpack.c.l.b16 %v228
  %v749 = vunpack.c.l.b16 %v229
  %v750 = vunpack.c.l.b16 %v230
  %v751 = vunpack.c.l.b16 %v231
  %v752 = vunpack.c.l.b16 %v232
  %v753 = vunpack.c.l.b16 %v233
  %v754 = vunpack.c.l.b16 %v234
  %v755 = vunpack.c.l.b16 %v235
  %v756 = vunpack.c.l.b16 %v236
  %v757 = vunpack.c.l.b16 %v237
  %v758 = vunpack.c.l.b16 %v238
  %v759 = vunpack.c.l.b16 %v239
  %v760 = vunpack.c.l.b16 %v240
  %v761 = vunpack.c.l.b16 %v241
  %v762 = vunpack.c.l.b16 %v242
  %v763 = vunpack.c.l.b16 %v243
  %v764 = vunpack.c.l.b16 %v244
  %v765 = vunpack.c.l.b16 %v245
  %v766 = vunpack.c.l.b16 %v246
  %v767 = vunpack.c.l.b16 %v247
  %v768 = vunpack.c.l.b16 %v248
  %v769 = vunpack.c.l.b16 %v249
  %v770 = vunpack.c.l.b16 %v250
  %v771 = vunpack.c.l.b16 %v251
  %v772 = vunpack.c.l.b16 %v252
  %v773 = vunpack.c.l.b16 %v253
  %v774 = vunpack.c.l.b16 %v254
  %v775 = vunpack.c.l.b16 %v255
  %v776 = vunpack.c.l.b16 %v256
  %v777 = vunpack.c.l.b16 %v257
  %v778 = vpack.c.b16 %v583, %v582
  %v779 = vpack.c.b16 %v585, %v584
  %v780 = vpack.c.b16 %v587, %v586
  %v781 = vpack.c.b16 %v589, %v588
  %v782 = vpack.c.b16 %v591, %v590
  %v783 = vpack.c.b16 %v593, %v592
  %v784 = vpack.c.b16 %v595, %v594
  %v785 = vpack.c.b16 %v597, %v596
  %v786 = vpack.c.b16 %v599, %v598
  %v787 = vpack.c.b16 %v601, %v600
  %v788 = vpack.c.b16 %v603, %v602
  %v789 = vpack.c.b16 %v605, %v604
  %v790 = vpack.c.b16 %v607, %v606
  %v791 = vpack.c.b16 %v609, %v608
  %v792 = vpack.c.b16 %v611, %v610
  %v793 = vpack.c.b16 %v613, %v612
  %v794 = vpack.c.b16 %v615, %v614
  %v795 = vpack.c.b16 %v617, %v616
  %v796 = vpack.c.b16 %v619, %v618
  %v797 = vpack.c.b16 %v621, %v620
  %v798 = vpack.c.b16 %v623, %v622
  %v799 = vpack.c.b16 %v625, %v624
  %v800 = vpack.c.b16 %v627, %v626
  %v801 = vpack.c.b16 %v629, %v628
  %v802 = vpack.c.b16 %v631, %v630
  %v803 = vpack.c.b16 %v633, %v632
  %v804 = vpack.c.b16 %v635, %v634
  %v805 = vpack.c.b16 %v637, %v636
  %v806 = vpack.c.b16 %v639, %v638
  %v807 = vpack.c.b16 %v641, %v640
  %v808 = vpack.c.b16 %v643, %v642
  %v809 = vpack.c.b16 %v645, %v644
  %v810 = vpack.c.b16 %v647, %v646
  %v811 = vpack.c.b16 %v649, %v648
  %v812 = vpack.c.b16 %v651, %v650
  %v813 = vpack.c.b16 %v653, %v652
  %v814 = vpack.c.b16 %v655, %v654
  %v815 = vpack.c.b16 %v657, %v656
  %v816 = vpack.c.b16 %v659, %v658
  %v817 = vpack.c.b16 %v661, %v660
  %v818 = vpack.c.b16 %v663, %v662
  %v819 = vpack.c.b16 %v665, %v664
  %v820 = vpack.c.b16 %v667, %v666
  %v821 = vpack.c.b16 %v669, %v668
  %v822 = vpack.c.b16 %v671, %v670
  %v823 = vpack.c.b16 %v673, %v672
  %v824 = vpack.c.b16 %v675, %v674
  %v825 = vpack.c.b16 %v677, %v676
  %v826 = vpack.c.b16 %v679, %v678
  %v827 = vpack.c.b16 %v681, %v680
  %v828 = vpack.c.b16 %v683, %v682
  %v829 = vpack.c.b16 %v685, %v684
  %v830 = vpack.c.b16 %v687, %v686
  %v831 = vpack.c.b16 %v689, %v688
  %v832 = vpack.c.b16 %v691, %v690
  %v833 = vpack.c.b16 %v693, %v692
  %v834 = vpack.c.b16 %v695, %v694
  %v835 = vpack.c.b16 %v697, %v696
  %v836 = vpack.c.b16 %v699, %v698
  %v837 = vpack.c.b16 %v701, %v700
  %v838 = vpack.c.b16 %v703, %v702
  %v839 = vpack.c.b16 %v705, %v704
  %v840 = vpack.c.b16 %v707, %v706
  %v841 = vpack.c.b16 %v709, %v708
  %v842 = vpack.c.b16 %v711, %v710
  %v843 = vpack.c.b16 %v713, %v712
  %v844 = vpack.c.b16 %v715, %v714
  %v845 = vpack.c.b16 %v717, %v716
  %v846 = vpack.c.b16 %v719, %v718
  %v847 = vpack.c.b16 %v721, %v720
  %v848 = vpack.c.b16 %v723, %v722
  %v849 = vpack.c.b16 %v725, %v724
  %v850 = vpack.c.b16 %v727, %v726
  %v851 = vpack.c.b16 %v729, %v728
  %v852 = vpack.c.b16 %v731, %v730
  %v853 = vpack.c.b16 %v733, %v732
  %v854 = vpack.c.b16 %v735, %v734
  %v855 = vpack.c.b16 %v737, %v736
  %v856 = vpack.c.b16 %v739, %v738
  %v857 = vpack.c.b16 %v741, %v740
  %v858 = vpack.c.b16 %v743, %v742
  %v859 = vpack.c.b16 %v745, %v744
  %v860 = vpack.c.b16 %v747, %v746
  %v861 = vpack.c.b16 %v749, %v748
  %v862 = vpack.c.b16 %v751, %v750
  %v863 = vpack.c.b16 %v753, %v752
  %v864 = vpack.c.b16 %v755, %v754
  %v865 = vpack.c.b16 %v757, %v756
  %v866 = vpack.c.b16 %v759, %v758
  %v867 = vpack.c.b16 %v761, %v760
  %v868 = vpack.c.b16 %v763, %v762
  %v869 = vpack.c.b16 %v765, %v764
  %v870 = vpack.c.b16 %v767, %v766
  %v871 = vpack.c.b16 %v769, %v768
  %v872 = vpack.c.b16 %v771, %v770
  %v873 = vpack.c.b16 %v773, %v772
  %v874 = vpack.c.b16 %v775, %v774
  %v875 = vpack.c.b16 %v777, %v776
  %vm974 = vcmask 261120
  %v976 = vsel %vm974, %v348, 0
  %v979 = vsel %vm974, %v361, 0
  %981 = vmatprep.subr.bf16.mxu0 0
  %982 = vmatpush1.bf16.msra.mxu0 %v778
  %983 = vmatprep.subr.bf16.mxu0 0
  %984 = vmatpush1.bf16.msra.mxu0 %v779
  %985 = vmatprep.subr.bf16.mxu0 0
  %986 = vmatpush1.bf16.msra.mxu0 %v780
  %987 = vmatprep.subr.bf16.mxu0 0
  %988 = vmatpush1.bf16.msra.mxu0 %v781
  %989 = vmatprep.subr.bf16.mxu0 0
  %990 = vmatpush1.bf16.msra.mxu0 %v782
  %991 = vmatprep.subr.bf16.mxu0 0
  %992 = vmatpush1.bf16.msra.mxu0 %v783
  %993 = vmatprep.subr.bf16.mxu0 0
  %994 = vmatpush1.bf16.msra.mxu0 %v784
  %995 = vmatprep.subr.bf16.mxu0 0
  %996 = vmatpush1.bf16.msra.mxu0 %v785
  %997 = vmatprep.subr.bf16.mxu0 0
  %998 = vmatpush1.bf16.msra.mxu0 %v786
  %999 = vmatprep.subr.bf16.mxu0 0
  %1000 = vmatpush1.bf16.msra.mxu0 %v787
  %1001 = vmatprep.subr.bf16.mxu0 0
  %1002 = vmatpush1.bf16.msra.mxu0 %v788
  %1003 = vmatprep.subr.bf16.mxu0 0
  %1004 = vmatpush1.bf16.msra.mxu0 %v789
  %1005 = vmatprep.subr.bf16.mxu0 0
  %1006 = vmatpush1.bf16.msra.mxu0 %v790
  %1007 = vmatprep.subr.bf16.mxu0 0
  %1008 = vmatpush1.bf16.msra.mxu0 %v791
  %1009 = vmatprep.subr.bf16.mxu0 0
  %1010 = vmatpush1.bf16.msra.mxu0 %v792
  %1011 = vmatprep.subr.bf16.mxu0 0
  %1012 = vmatpush1.bf16.msra.mxu0 %v793
  %1013 = vmatprep.mubr.bf16.mxu0 %v337
  %1014 = vmatmul.mubr.bf16.gmra.mrb[0].mxu0 %v336
  %v1015 = vpop.f32.mrb[0].mxu0
  %v1016 = vadd.f32 %v264, %v1015
  %v1017 = vpop.f32.mrb[0].mxu0
  %v1018 = vpop.f32.mrb[0].mxu0
  %v1019 = vadd.f32 %v269, %v1018
  %v1020 = vpop.f32.mrb[0].mxu0
  %1021 = vmatprep.mubr.bf16.mxu0 %v350
  %1022 = vmatmul.mubr.bf16.gmra.mrb[0].mxu0 %v349
  %v1023 = vpop.f32.mrb[0].mxu0
  %v1024 = vadd.f32 %v274, %v1023
  %v1025 = vpop.f32.mrb[0].mxu0
  %v1026 = vpop.f32.mrb[0].mxu0
  %v1027 = vpop.f32.mrb[0].mxu0
  %1028 = vdwg.mxu0
  %1029 = vmatprep.subr.bf16.mxu0 0
  %1030 = vmatpush1.bf16.msra.mxu0 %v794
  %1031 = vmatprep.subr.bf16.mxu0 0
  %1032 = vmatpush1.bf16.msra.mxu0 %v795
  %1033 = vmatprep.subr.bf16.mxu0 0
  %1034 = vmatpush1.bf16.msra.mxu0 %v796
  %1035 = vmatprep.subr.bf16.mxu0 0
  %1036 = vmatpush1.bf16.msra.mxu0 %v797
  %1037 = vmatprep.subr.bf16.mxu0 0
  %1038 = vmatpush1.bf16.msra.mxu0 %v798
  %1039 = vmatprep.subr.bf16.mxu0 0
  %1040 = vmatpush1.bf16.msra.mxu0 %v799
  %1041 = vmatprep.subr.bf16.mxu0 0
  %1042 = vmatpush1.bf16.msra.mxu0 %v800
  %1043 = vmatprep.subr.bf16.mxu0 0
  %1044 = vmatpush1.bf16.msra.mxu0 %v801
  %1045 = vmatprep.subr.bf16.mxu0 0
  %1046 = vmatpush1.bf16.msra.mxu0 %v802
  %1047 = vmatprep.subr.bf16.mxu0 0
  %1048 = vmatpush1.bf16.msra.mxu0 %v803
  %1049 = vmatprep.subr.bf16.mxu0 0
  %1050 = vmatpush1.bf16.msra.mxu0 %v804
  %1051 = vmatprep.subr.bf16.mxu0 0
  %1052 = vmatpush1.bf16.msra.mxu0 %v805
  %1053 = vmatprep.subr.bf16.mxu0 0
  %1054 = vmatpush1.bf16.msra.mxu0 %v806
  %1055 = vmatprep.subr.bf16.mxu0 0
  %1056 = vmatpush1.bf16.msra.mxu0 %v807
  %1057 = vmatprep.subr.bf16.mxu0 0
  %1058 = vmatpush1.bf16.msra.mxu0 %v808
  %1059 = vmatprep.subr.bf16.mxu0 0
  %1060 = vmatpush1.bf16.msra.mxu0 %v809
  %1061 = vmatprep.mubr.bf16.mxu0 %v339
  %1062 = vmatmul.mubr.bf16.gmra.mrb[0].mxu0 %v338
  %v1063 = vpop.f32.mrb[0].mxu0
  %v1064 = vadd.f32 %v1016, %v1063
  %v1065 = vpop.f32.mrb[0].mxu0
  %v1066 = vpop.f32.mrb[0].mxu0
  %v1067 = vadd.f32 %v1019, %v1066
  %v1068 = vpop.f32.mrb[0].mxu0
  %1069 = vmatprep.mubr.bf16.mxu0 %v352
  %1070 = vmatmul.mubr.bf16.gmra.mrb[0].mxu0 %v351
  %v1071 = vpop.f32.mrb[0].mxu0
  %v1072 = vadd.f32 %v1024, %v1071
  %v1073 = vpop.f32.mrb[0].mxu0
  %v1074 = vpop.f32.mrb[0].mxu0
  %v1075 = vpop.f32.mrb[0].mxu0
  %1076 = vdwg.mxu0
  %1077 = vmatprep.subr.bf16.mxu0 0
  %1078 = vmatpush1.bf16.msra.mxu0 %v810
  %1079 = vmatprep.subr.bf16.mxu0 0
  %1080 = vmatpush1.bf16.msra.mxu0 %v811
  %1081 = vmatprep.subr.bf16.mxu0 0
  %1082 = vmatpush1.bf16.msra.mxu0 %v812
  %1083 = vmatprep.subr.bf16.mxu0 0
  %1084 = vmatpush1.bf16.msra.mxu0 %v813
  %1085 = vmatprep.subr.bf16.mxu0 0
  %1086 = vmatpush1.bf16.msra.mxu0 %v814
  %1087 = vmatprep.subr.bf16.mxu0 0
  %1088 = vmatpush1.bf16.msra.mxu0 %v815
  %1089 = vmatprep.subr.bf16.mxu0 0
  %1090 = vmatpush1.bf16.msra.mxu0 %v816
  %1091 = vmatprep.subr.bf16.mxu0 0
  %1092 = vmatpush1.bf16.msra.mxu0 %v817
  %1093 = vmatprep.subr.bf16.mxu0 0
  %1094 = vmatpush1.bf16.msra.mxu0 %v818
  %1095 = vmatprep.subr.bf16.mxu0 0
  %1096 = vmatpush1.bf16.msra.mxu0 %v819
  %1097 = vmatprep.subr.bf16.mxu0 0
  %1098 = vmatpush1.bf16.msra.mxu0 %v820
  %1099 = vmatprep.subr.bf16.mxu0 0
  %1100 = vmatpush1.bf16.msra.mxu0 %v821
  %1101 = vmatprep.subr.bf16.mxu0 0
  %1102 = vmatpush1.bf16.msra.mxu0 %v822
  %1103 = vmatprep.subr.bf16.mxu0 0
  %1104 = vmatpush1.bf16.msra.mxu0 %v823
  %1105 = vmatprep.subr.bf16.mxu0 0
  %1106 = vmatpush1.bf16.msra.mxu0 %v824
  %1107 = vmatprep.subr.bf16.mxu0 0
  %1108 = vmatpush1.bf16.msra.mxu0 %v825
  %1109 = vmatprep.mubr.bf16.mxu0 %v341
  %1110 = vmatmul.mubr.bf16.gmra.mrb[0].mxu0 %v340
  %v1111 = vpop.f32.mrb[0].mxu0
  %v1112 = vadd.f32 %v1064, %v1111
  %v1113 = vpop.f32.mrb[0].mxu0
  %v1114 = vpop.f32.mrb[0].mxu0
  %v1115 = vadd.f32 %v1067, %v1114
  %v1116 = vpop.f32.mrb[0].mxu0
  %1117 = vmatprep.mubr.bf16.mxu0 %v354
  %1118 = vmatmul.mubr.bf16.gmra.mrb[0].mxu0 %v353
  %v1119 = vpop.f32.mrb[0].mxu0
  %v1120 = vadd.f32 %v1072, %v1119
  %v1121 = vpop.f32.mrb[0].mxu0
  %v1122 = vpop.f32.mrb[0].mxu0
  %v1123 = vpop.f32.mrb[0].mxu0
  %1124 = vdwg.mxu0
  %1125 = vmatprep.subr.bf16.mxu0 0
  %1126 = vmatpush1.bf16.msra.mxu0 %v826
  %1127 = vmatprep.subr.bf16.mxu0 0
  %1128 = vmatpush1.bf16.msra.mxu0 %v827
  %1129 = vmatprep.subr.bf16.mxu0 0
  %1130 = vmatpush1.bf16.msra.mxu0 %v828
  %1131 = vmatprep.subr.bf16.mxu0 0
  %1132 = vmatpush1.bf16.msra.mxu0 %v829
  %1133 = vmatprep.subr.bf16.mxu0 0
  %1134 = vmatpush1.bf16.msra.mxu0 %v830
  %1135 = vmatprep.subr.bf16.mxu0 0
  %1136 = vmatpush1.bf16.msra.mxu0 %v831
  %1137 = vmatprep.subr.bf16.mxu0 0
  %1138 = vmatpush1.bf16.msra.mxu0 %v832
  %1139 = vmatprep.subr.bf16.mxu0 0
  %1140 = vmatpush1.bf16.msra.mxu0 %v833
  %1141 = vmatprep.subr.bf16.mxu0 0
  %1142 = vmatpush1.bf16.msra.mxu0 %v834
  %1143 = vmatprep.subr.bf16.mxu0 0
  %1144 = vmatpush1.bf16.msra.mxu0 %v835
  %1145 = vmatprep.subr.bf16.mxu0 0
  %1146 = vmatpush1.bf16.msra.mxu0 %v836
  %1147 = vmatprep.subr.bf16.mxu0 0
  %1148 = vmatpush1.bf16.msra.mxu0 %v837
  %1149 = vmatprep.subr.bf16.mxu0 0
  %1150 = vmatpush1.bf16.msra.mxu0 %v838
  %1151 = vmatprep.subr.bf16.mxu0 0
  %1152 = vmatpush1.bf16.msra.mxu0 %v839
  %1153 = vmatprep.subr.bf16.mxu0 0
  %1154 = vmatpush1.bf16.msra.mxu0 %v840
  %1155 = vmatprep.subr.bf16.mxu0 0
  %1156 = vmatpush1.bf16.msra.mxu0 %v841
  %1157 = vmatprep.mubr.bf16.mxu0 %v343
  %1158 = vmatmul.mubr.bf16.gmra.mrb[0].mxu0 %v342
  %v1159 = vpop.f32.mrb[0].mxu0
  %v1160 = vadd.f32 %v1112, %v1159
  %v1161 = vpop.f32.mrb[0].mxu0
  %v1162 = vpop.f32.mrb[0].mxu0
  %v1163 = vadd.f32 %v1115, %v1162
  %v1164 = vpop.f32.mrb[0].mxu0
  %1165 = vmatprep.mubr.bf16.mxu0 %v356
  %1166 = vmatmul.mubr.bf16.gmra.mrb[0].mxu0 %v355
  %v1167 = vpop.f32.mrb[0].mxu0
  %v1168 = vadd.f32 %v1120, %v1167
  %v1169 = vpop.f32.mrb[0].mxu0
  %v1170 = vpop.f32.mrb[0].mxu0
  %v1171 = vpop.f32.mrb[0].mxu0
  %1172 = vdwg.mxu0
  %1173 = vmatprep.subr.bf16.mxu0 0
  %1174 = vmatpush1.bf16.msra.mxu0 %v842
  %1175 = vmatprep.subr.bf16.mxu0 0
  %1176 = vmatpush1.bf16.msra.mxu0 %v843
  %1177 = vmatprep.subr.bf16.mxu0 0
  %1178 = vmatpush1.bf16.msra.mxu0 %v844
  %1179 = vmatprep.subr.bf16.mxu0 0
  %1180 = vmatpush1.bf16.msra.mxu0 %v845
  %1181 = vmatprep.subr.bf16.mxu0 0
  %1182 = vmatpush1.bf16.msra.mxu0 %v846
  %1183 = vmatprep.subr.bf16.mxu0 0
  %1184 = vmatpush1.bf16.msra.mxu0 %v847
  %1185 = vmatprep.subr.bf16.mxu0 0
  %1186 = vmatpush1.bf16.msra.mxu0 %v848
  %1187 = vmatprep.subr.bf16.mxu0 0
  %1188 = vmatpush1.bf16.msra.mxu0 %v849
  %1189 = vmatprep.subr.bf16.mxu0 0
  %1190 = vmatpush1.bf16.msra.mxu0 %v850
  %1191 = vmatprep.subr.bf16.mxu0 0
  %1192 = vmatpush1.bf16.msra.mxu0 %v851
  %1193 = vmatprep.subr.bf16.mxu0 0
  %1194 = vmatpush1.bf16.msra.mxu0 %v852
  %1195 = vmatprep.subr.bf16.mxu0 0
  %1196 = vmatpush1.bf16.msra.mxu0 %v853
  %1197 = vmatprep.subr.bf16.mxu0 0
  %1198 = vmatpush1.bf16.msra.mxu0 %v854
  %1199 = vmatprep.subr.bf16.mxu0 0
  %1200 = vmatpush1.bf16.msra.mxu0 %v855
  %1201 = vmatprep.subr.bf16.mxu0 0
  %1202 = vmatpush1.bf16.msra.mxu0 %v856
  %1203 = vmatprep.subr.bf16.mxu0 0
  %1204 = vmatpush1.bf16.msra.mxu0 %v857
  %1205 = vmatprep.mubr.bf16.mxu0 %v345
  %1206 = vmatmul.mubr.bf16.gmra.mrb[0].mxu0 %v344
  %v1207 = vpop.f32.mrb[0].mxu0
  %v1208 = vadd.f32 %v1160, %v1207
  %v1209 = vpop.f32.mrb[0].mxu0
  %v1210 = vpop.f32.mrb[0].mxu0
  %v1211 = vadd.f32 %v1163, %v1210
  %v1212 = vpop.f32.mrb[0].mxu0
  %1213 = vmatprep.mubr.bf16.mxu0 %v358
  %1214 = vmatmul.mubr.bf16.gmra.mrb[0].mxu0 %v357
  %v1215 = vpop.f32.mrb[0].mxu0
  %v1216 = vadd.f32 %v1168, %v1215
  %v1217 = vpop.f32.mrb[0].mxu0
  %v1218 = vpop.f32.mrb[0].mxu0
  %v1219 = vpop.f32.mrb[0].mxu0
  %1220 = vdwg.mxu0
  %1221 = vmatprep.subr.bf16.mxu0 0
  %1222 = vmatpush1.bf16.msra.mxu0 %v858
  %1223 = vmatprep.subr.bf16.mxu0 0
  %1224 = vmatpush1.bf16.msra.mxu0 %v859
  %1225 = vmatprep.subr.bf16.mxu0 0
  %1226 = vmatpush1.bf16.msra.mxu0 %v860
  %1227 = vmatprep.subr.bf16.mxu0 0
  %1228 = vmatpush1.bf16.msra.mxu0 %v861
  %1229 = vmatprep.subr.bf16.mxu0 0
  %1230 = vmatpush1.bf16.msra.mxu0 %v862
  %1231 = vmatprep.subr.bf16.mxu0 0
  %1232 = vmatpush1.bf16.msra.mxu0 %v863
  %1233 = vmatprep.subr.bf16.mxu0 0
  %1234 = vmatpush1.bf16.msra.mxu0 %v864
  %1235 = vmatprep.subr.bf16.mxu0 0
  %1236 = vmatpush1.bf16.msra.mxu0 %v865
  %1237 = vmatprep.subr.bf16.mxu0 0
  %1238 = vmatpush1.bf16.msra.mxu0 %v866
  %1239 = vmatprep.subr.bf16.mxu0 0
  %1240 = vmatpush1.bf16.msra.mxu0 %v867
  %1241 = vmatprep.subr.bf16.mxu0 0
  %1242 = vmatpush1.bf16.msra.mxu0 %v868
  %1243 = vmatprep.subr.bf16.mxu0 0
  %1244 = vmatpush1.bf16.msra.mxu0 %v869
  %1245 = vmatprep.subr.bf16.mxu0 0
  %1246 = vmatpush1.bf16.msra.mxu0 %v870
  %1247 = vmatprep.subr.bf16.mxu0 0
  %1248 = vmatpush1.bf16.msra.mxu0 %v871
  %1249 = vmatprep.subr.bf16.mxu0 0
  %1250 = vmatpush1.bf16.msra.mxu0 %v872
  %1251 = vmatprep.subr.bf16.mxu0 0
  %1252 = vmatpush1.bf16.msra.mxu0 %v873
  %1253 = vmatprep.mubr.bf16.mxu0 %v347
  %1254 = vmatmul.mubr.bf16.gmra.mrb[0].mxu0 %v346
  %v1255 = vpop.f32.mrb[0].mxu0
  %v1256 = vadd.f32 %v1208, %v1255
  %v1257 = vpop.f32.mrb[0].mxu0
  %v1258 = vpop.f32.mrb[0].mxu0
  %v1259 = vadd.f32 %v1211, %v1258
  %v1260 = vpop.f32.mrb[0].mxu0
  %1261 = vmatprep.mubr.bf16.mxu0 %v360
  %1262 = vmatmul.mubr.bf16.gmra.mrb[0].mxu0 %v359
  %v1263 = vpop.f32.mrb[0].mxu0
  %v1264 = vadd.f32 %v1216, %v1263
  %v1265 = vpop.f32.mrb[0].mxu0
  %v1266 = vpop.f32.mrb[0].mxu0
  %v1267 = vpop.f32.mrb[0].mxu0
  %1268 = vdwg.mxu0
  %1269 = vmatprep.subr.bf16.mxu0 0
  %1270 = vmatpush1.bf16.msra.mxu0 %v874
  %1271 = vmatprep.subr.bf16.mxu0 0
  %1272 = vmatpush1.bf16.msra.mxu0 %v875
  %1273 = vmatprep.subr.bf16.mxu0 0
  %1274 = vmatpush1.bf16.msra.mxu0 0
  %1275 = vmatprep.subr.bf16.mxu0 0
  %1276 = vmatpush1.bf16.msra.mxu0 0
  %1277 = vmatprep.subr.bf16.mxu0 0
  %1278 = vmatpush1.bf16.msra.mxu0 0
  %1279 = vmatprep.subr.bf16.mxu0 0
  %1280 = vmatpush1.bf16.msra.mxu0 0
  %1281 = vmatprep.subr.bf16.mxu0 0
  %1282 = vmatpush1.bf16.msra.mxu0 0
  %1283 = vmatprep.subr.bf16.mxu0 0
  %1284 = vmatpush1.bf16.msra.mxu0 0
  %1285 = vmatprep.subr.bf16.mxu0 0
  %1286 = vmatpush1.bf16.msra.mxu0 0
  %1287 = vmatprep.subr.bf16.mxu0 0
  %1288 = vmatpush1.bf16.msra.mxu0 0
  %1289 = vmatprep.subr.bf16.mxu0 0
  %1290 = vmatpush1.bf16.msra.mxu0 0
  %1291 = vmatprep.subr.bf16.mxu0 0
  %1292 = vmatpush1.bf16.msra.mxu0 0
  %1293 = vmatprep.subr.bf16.mxu0 0
  %1294 = vmatpush1.bf16.msra.mxu0 0
  %1295 = vmatprep.subr.bf16.mxu0 0
  %1296 = vmatpush1.bf16.msra.mxu0 0
  %1297 = vmatprep.subr.bf16.mxu0 0
  %1298 = vmatpush1.bf16.msra.mxu0 0
  %1299 = vmatprep.subr.bf16.mxu0 0
  %1300 = vmatpush1.bf16.msra.mxu0 0
  %1301 = vmatprep.mubr.bf16.mxu0 0
  %1302 = vmatmul.mubr.bf16.gmra.mrb[0].mxu0 %v976
  %v1303 = vpop.f32.mrb[0].mxu0
  %v1304 = vadd.f32 %v1256, %v1303
  %v1305 = vpop.f32.mrb[0].mxu0
  %v1306 = vpop.f32.mrb[0].mxu0
  %v1307 = vadd.f32 %v1259, %v1306
  %v1308 = vpop.f32.mrb[0].mxu0
  %1309 = vmatprep.mubr.bf16.mxu0 0
  %1310 = vmatmul.mubr.bf16.gmra.mrb[0].mxu0 %v979
  %v1311 = vpop.f32.mrb[0].mxu0
  %v1312 = vadd.f32 %v1264, %v1311
  %v1313 = vpop.f32.mrb[0].mxu0
  %v1314 = vpop.f32.mrb[0].mxu0
  %v1315 = vpop.f32.mrb[0].mxu0
  %1316 = vdwg.mxu0
  %vm1317 = vcmask 195584
  %v1319 = vsel %vm1317, 0.041666668, 0
  %1321 = vmatprep.subr.mxu0 0.0
  %1322 = vmatpush1.msra.mxu0 %v1304
  %1323 = vmatprep.subr.mxu0 0.0
  %1324 = vmatpush1.msra.mxu0 %v1307
  %1325 = vmatprep.subr.mxu0 0.0
  %1326 = vmatpush1.msra.mxu0 %v1312
  %1327 = vmatprep.subr.mxu0 0.0
  %1328 = vmatpush1.msra.mxu0 0.0
  %1329 = vmatprep.subr.mxu0 0.0
  %1330 = vmatpush1.msra.mxu0 0.0
  %1331 = vmatprep.subr.mxu0 0.0
  %1332 = vmatpush1.msra.mxu0 0.0
  %1333 = vmatprep.subr.mxu0 0.0
  %1334 = vmatpush1.msra.mxu0 0.0
  %1335 = vmatprep.subr.mxu0 0.0
  %1336 = vmatpush1.msra.mxu0 0.0
  %1337 = vmatprep.subr.mxu0 0.0
  %1338 = vmatpush1.msra.mxu0 0.0
  %1339 = vmatprep.subr.mxu0 0.0
  %1340 = vmatpush1.msra.mxu0 0.0
  %1341 = vmatprep.subr.mxu0 0.0
  %1342 = vmatpush1.msra.mxu0 0.0
  %1343 = vmatprep.subr.mxu0 0.0
  %1344 = vmatpush1.msra.mxu0 0.0
  %1345 = vmatprep.subr.mxu0 0.0
  %1346 = vmatpush1.msra.mxu0 0.0
  %1347 = vmatprep.subr.mxu0 0.0
  %1348 = vmatpush1.msra.mxu0 0.0
  %1349 = vmatprep.subr.mxu0 0.0
  %1350 = vmatpush1.msra.mxu0 0.0
  %1351 = vmatprep.subr.mxu0 0.0
  %1352 = vmatpush1.msra.mxu0 0.0
  %1353 = vmatprep.subr.mxu0 0.0
  %1354 = vmatpush1.msra.mxu0 0.0
  %1355 = vmatprep.subr.mxu0 0.0
  %1356 = vmatpush1.msra.mxu0 0.0
  %1357 = vmatprep.subr.mxu0 0.0
  %1358 = vmatpush1.msra.mxu0 0.0
  %1359 = vmatprep.subr.mxu0 0.0
  %1360 = vmatpush1.msra.mxu0 0.0
  %1361 = vmatprep.subr.mxu0 0.0
  %1362 = vmatpush1.msra.mxu0 0.0
  %1363 = vmatprep.subr.mxu0 0.0
  %1364 = vmatpush1.msra.mxu0 0.0
  %1365 = vmatprep.subr.mxu0 0.0
  %1366 = vmatpush1.msra.mxu0 0.0
  %1367 = vmatprep.subr.mxu0 0.0
  %1368 = vmatpush1.msra.mxu0 0.0
  %1369 = vmatprep.subr.mxu0 0.0
  %1370 = vmatpush1.msra.mxu0 0.0
  %1371 = vmatprep.subr.mxu0 0.0
  %1372 = vmatpush1.msra.mxu0 0.0
  %1373 = vmatprep.subr.mxu0 0.0
  %1374 = vmatpush1.msra.mxu0 0.0
  %1375 = vmatprep.subr.mxu0 0.0
  %1376 = vmatpush1.msra.mxu0 0.0
  %1377 = vmatprep.subr.mxu0 0.0
  %1378 = vmatpush1.msra.mxu0 0.0
  %1379 = vmatprep.subr.mxu0 0.0
  %1380 = vmatpush1.msra.mxu0 0.0
  %1381 = vmatprep.subr.mxu0 0.0
  %1382 = vmatpush1.msra.mxu0 0.0
  %1383 = vmatprep.subr.mxu0 0.0
  %1384 = vmatpush1.msra.mxu0 0.0
  %1385 = vmatprep.mubr.f32.mxu0 0.0
  %1386 = vmatmul.mubr.f32.gmra.mrb[0].mxu0 %v1319
  %v1387 = vpop.f32.mrb[0].mxu0
  %v1388 = vadd.f32 0.0, %v1387
  %v1389 = vpop.f32.mrb[0].mxu0
  %1390 = vdwg.mxu0
  %v1391 = vlaneseq
  %v1392 = vshrl.u32 %v1391, 7
  %v1393 = vsub.s32 0, %v1392
  %v1394 = vrot.slane %v1388, %v1393
  %v1395 = vsub.f32 %v1304, %v1394
  %v1396 = vsub.f32 %v1307, %v1394
  %v1397 = vsub.f32 %v1312, %v1394
  %v1398 = vmul.f32 %v1395, %v1395
  %v1399 = vmul.f32 %v1396, %v1396
  %v1400 = vmul.f32 %v1397, %v1397
  %1401 = vmatprep.subr.mxu0 0.0
  %1402 = vmatpush1.msra.mxu0 %v1398
  %1403 = vmatprep.subr.mxu0 0.0
  %1404 = vmatpush1.msra.mxu0 %v1399
  %1405 = vmatprep.subr.mxu0 0.0
  %1406 = vmatpush1.msra.mxu0 %v1400
  %1407 = vmatprep.subr.mxu0 0.0
  %1408 = vmatpush1.msra.mxu0 0.0
  %1409 = vmatprep.subr.mxu0 0.0
  %1410 = vmatpush1.msra.mxu0 0.0
  %1411 = vmatprep.subr.mxu0 0.0
  %1412 = vmatpush1.msra.mxu0 0.0
  %1413 = vmatprep.subr.mxu0 0.0
  %1414 = vmatpush1.msra.mxu0 0.0
  %1415 = vmatprep.subr.mxu0 0.0
  %1416 = vmatpush1.msra.mxu0 0.0
  %1417 = vmatprep.subr.mxu0 0.0
  %1418 = vmatpush1.msra.mxu0 0.0
  %1419 = vmatprep.subr.mxu0 0.0
  %1420 = vmatpush1.msra.mxu0 0.0
  %1421 = vmatprep.subr.mxu0 0.0
  %1422 = vmatpush1.msra.mxu0 0.0
  %1423 = vmatprep.subr.mxu0 0.0
  %1424 = vmatpush1.msra.mxu0 0.0
  %1425 = vmatprep.subr.mxu0 0.0
  %1426 = vmatpush1.msra.mxu0 0.0
  %1427 = vmatprep.subr.mxu0 0.0
  %1428 = vmatpush1.msra.mxu0 0.0
  %1429 = vmatprep.subr.mxu0 0.0
  %1430 = vmatpush1.msra.mxu0 0.0
  %1431 = vmatprep.subr.mxu0 0.0
  %1432 = vmatpush1.msra.mxu0 0.0
  %1433 = vmatprep.subr.mxu0 0.0
  %1434 = vmatpush1.msra.mxu0 0.0
  %1435 = vmatprep.subr.mxu0 0.0
  %1436 = vmatpush1.msra.mxu0 0.0
  %1437 = vmatprep.subr.mxu0 0.0
  %1438 = vmatpush1.msra.mxu0 0.0
  %1439 = vmatprep.subr.mxu0 0.0
  %1440 = vmatpush1.msra.mxu0 0.0
  %1441 = vmatprep.subr.mxu0 0.0
  %1442 = vmatpush1.msra.mxu0 0.0
  %1443 = vmatprep.subr.mxu0 0.0
  %1444 = vmatpush1.msra.mxu0 0.0
  %1445 = vmatprep.subr.mxu0 0.0
  %1446 = vmatpush1.msra.mxu0 0.0
  %1447 = vmatprep.subr.mxu0 0.0
  %1448 = vmatpush1.msra.mxu0 0.0
  %1449 = vmatprep.subr.mxu0 0.0
  %1450 = vmatpush1.msra.mxu0 0.0
  %1451 = vmatprep.subr.mxu0 0.0
  %1452 = vmatpush1.msra.mxu0 0.0
  %1453 = vmatprep.subr.mxu0 0.0
  %1454 = vmatpush1.msra.mxu0 0.0
  %1455 = vmatprep.subr.mxu0 0.0
  %1456 = vmatpush1.msra.mxu0 0.0
  %1457 = vmatprep.subr.mxu0 0.0
  %1458 = vmatpush1.msra.mxu0 0.0
  %1459 = vmatprep.subr.mxu0 0.0
  %1460 = vmatpush1.msra.mxu0 0.0
  %1461 = vmatprep.subr.mxu0 0.0
  %1462 = vmatpush1.msra.mxu0 0.0
  %1463 = vmatprep.subr.mxu0 0.0
  %1464 = vmatpush1.msra.mxu0 0.0
  %1465 = vmatprep.mubr.f32.mxu0 0.0
  %1466 = vmatmul.mubr.f32.gmra.mrb[0].mxu0 %v1319
  %v1467 = vpop.f32.mrb[0].mxu0
  %v1468 = vadd.f32 1e-05, %v1467
  %v1469 = vpop.f32.mrb[0].mxu0
  %1470 = vdwg.mxu0
  %v1471 = vrsqrt.pop %v1468
  %v1472 = vlaneseq
  %v1473 = vshrl.u32 %v1472, 7
  %v1474 = vsub.s32 0, %v1473
  %v1475 = vrot.slane %v1471, %v1474
  %v1476 = vmul.f32 %v1395, %v1475
  %v1477 = vmul.f32 %v1396, %v1475
  %v1478 = vmul.f32 %v1397, %v1475
  %v1479 = vld [vmem:[%s3] sm:$0xff]
  %v1480 = vld [vmem:[%s3 + $0x8] sm:$0xff]
  %v1481 = vld [vmem:[%s3 + $0x10] sm:$0xff]
  %1483 = vset.pattern.permute.xlu0 0
  %1484 = vperm.xlu0 %1483, %v1479
  %v1485 = vpop.permute.xlu0 %1484
  %1488 = vset.pattern.permute.xlu0 0
  %1489 = vperm.xlu0 %1488, %v1480
  %v1490 = vpop.permute.xlu0 %1489
  %1493 = vset.pattern.permute.xlu0 0
  %1494 = vperm.xlu0 %1493, %v1481
  %v1495 = vpop.permute.xlu0 %1494
  %v1497 = vmul.f32 %v1476, %v1485
  %v1498 = vmul.f32 %v1477, %v1490
  %v1499 = vmul.f32 %v1478, %v1495
  %v1500 = vld [vmem:[%s4] sm:$0xff]
  %v1501 = vld [vmem:[%s4 + $0x8] sm:$0xff]
  %v1502 = vld [vmem:[%s4 + $0x10] sm:$0xff]
  %1504 = vset.pattern.permute.xlu0 0
  %1505 = vperm.xlu0 %1504, %v1500
  %v1506 = vpop.permute.xlu0 %1505
  %1509 = vset.pattern.permute.xlu0 0
  %1510 = vperm.xlu0 %1509, %v1501
  %v1511 = vpop.permute.xlu0 %1510
  %1514 = vset.pattern.permute.xlu0 0
  %1515 = vperm.xlu0 %1514, %v1502
  %v1516 = vpop.permute.xlu0 %1515
  %v1518 = vadd.f32 %v1497, %v1506
  %v1519 = vadd.f32 %v1498, %v1511
  %v1520 = vadd.f32 %v1499, %v1516
  %v1521 = vpack.c.bf16 %v1519, %v1518
  %v1522 = vpack.c.bf16 %v1520, %v1520
  %v1523 = vld [vmem:[%s5] sm:$0xf]
  %v1524 = vld [vmem:[%s5 + $0x4] sm:$0xf]
  %v1525 = vld [vmem:[%s5 + $0x8] sm:$0xf]
  %v1526 = vld [vmem:[%s5 + $0xc] sm:$0xf]
  %v1527 = vld [vmem:[%s5 + $0x10] sm:$0xf]
  %v1528 = vld [vmem:[%s5 + $0x14] sm:$0xf]
  %v1529 = vld [vmem:[%s5 + $0x18] sm:$0xf]
  %v1530 = vld [vmem:[%s5 + $0x1c] sm:$0xf]
  %v1531 = vld [vmem:[%s5 + $0x20] sm:$0xf]
  %v1532 = vld [vmem:[%s5 + $0x24] sm:$0xf]
  %v1533 = vld [vmem:[%s5 + $0x28] sm:$0xf]
  %v1534 = vld [vmem:[%s5 + $0x2c] sm:$0xf]
  %v1535 = vld [vmem:[%s5 + $0x30] sm:$0xf]
  %v1536 = vld [vmem:[%s5 + $0x34] sm:$0xf]
  %v1537 = vld [vmem:[%s5 + $0x38] sm:$0xf]
  %v1538 = vld [vmem:[%s5 + $0x3c] sm:$0xf]
  %v1539 = vld [vmem:[%s5 + $0x40] sm:$0xf]
  %v1540 = vld [vmem:[%s5 + $0x44] sm:$0xf]
  %v1541 = vld [vmem:[%s5 + $0x48] sm:$0xf]
  %v1542 = vld [vmem:[%s5 + $0x4c] sm:$0xf]
  %v1543 = vld [vmem:[%s5 + $0x50] sm:$0xf]
  %v1544 = vld [vmem:[%s5 + $0x54] sm:$0xf]
  %v1545 = vld [vmem:[%s5 + $0x58] sm:$0xf]
  %v1546 = vld [vmem:[%s5 + $0x5c] sm:$0xf]
  %v1547 = vld [vmem:[%s5 + $0x60] sm:$0xf]
  %v1548 = vld [vmem:[%s5 + $0x64] sm:$0xf]
  %v1549 = vld [vmem:[%s5 + $0x68] sm:$0xf]
  %v1550 = vld [vmem:[%s5 + $0x6c] sm:$0xf]
  %v1551 = vld [vmem:[%s5 + $0x70] sm:$0xf]
  %v1552 = vld [vmem:[%s5 + $0x74] sm:$0xf]
  %v1553 = vld [vmem:[%s5 + $0x78] sm:$0xf]
  %v1554 = vld [vmem:[%s5 + $0x7c] sm:$0xf]
  %v1555 = vld [vmem:[%s5 + $0x80] sm:$0xf]
  %v1556 = vld [vmem:[%s5 + $0x84] sm:$0xf]
  %v1557 = vld [vmem:[%s5 + $0x88] sm:$0xf]
  %v1558 = vld [vmem:[%s5 + $0x8c] sm:$0xf]
  %v1559 = vld [vmem:[%s5 + $0x90] sm:$0xf]
  %v1560 = vld [vmem:[%s5 + $0x94] sm:$0xf]
  %v1561 = vld [vmem:[%s5 + $0x98] sm:$0xf]
  %v1562 = vld [vmem:[%s5 + $0x9c] sm:$0xf]
  %v1563 = vld [vmem:[%s5 + $0xa0] sm:$0xf]
  %v1564 = vld [vmem:[%s5 + $0xa4] sm:$0xf]
  %v1565 = vld [vmem:[%s5 + $0xa8] sm:$0xf]
  %v1566 = vld [vmem:[%s5 + $0xac] sm:$0xf]
  %v1567 = vld [vmem:[%s5 + $0xb0] sm:$0xf]
  %v1568 = vld [vmem:[%s5 + $0xb4] sm:$0xf]
  %v1569 = vld [vmem:[%s5 + $0xb8] sm:$0xf]
  %v1570 = vld [vmem:[%s5 + $0xbc] sm:$0xf]
  %v1571 = vld [vmem:[%s5 + $0xc0] sm:$0xf]
  %v1572 = vld [vmem:[%s5 + $0xc4] sm:$0xf]
  %v1573 = vld [vmem:[%s5 + $0xc8] sm:$0xf]
  %v1574 = vld [vmem:[%s5 + $0xcc] sm:$0xf]
  %v1575 = vld [vmem:[%s5 + $0xd0] sm:$0xf]
  %v1576 = vld [vmem:[%s5 + $0xd4] sm:$0xf]
  %v1577 = vld [vmem:[%s5 + $0xd8] sm:$0xf]
  %v1578 = vld [vmem:[%s5 + $0xdc] sm:$0xf]
  %v1579 = vld [vmem:[%s5 + $0xe0] sm:$0xf]
  %v1580 = vld [vmem:[%s5 + $0xe4] sm:$0xf]
  %v1581 = vld [vmem:[%s5 + $0xe8] sm:$0xf]
  %v1582 = vld [vmem:[%s5 + $0xec] sm:$0xf]
  %v1583 = vld [vmem:[%s5 + $0xf0] sm:$0xf]
  %v1584 = vld [vmem:[%s5 + $0xf4] sm:$0xf]
  %v1585 = vld [vmem:[%s5 + $0xf8] sm:$0xf]
  %v1586 = vld [vmem:[%s5 + $0xfc] sm:$0xf]
  %v1587 = vld [vmem:[%s5 + $0x100] sm:$0xf]
  %v1588 = vld [vmem:[%s5 + $0x104] sm:$0xf]
  %v1589 = vld [vmem:[%s5 + $0x108] sm:$0xf]
  %v1590 = vld [vmem:[%s5 + $0x10c] sm:$0xf]
  %v1591 = vld [vmem:[%s5 + $0x110] sm:$0xf]
  %v1592 = vld [vmem:[%s5 + $0x114] sm:$0xf]
  %v1593 = vld [vmem:[%s5 + $0x118] sm:$0xf]
  %v1594 = vld [vmem:[%s5 + $0x11c] sm:$0xf]
  %v1595 = vld [vmem:[%s5 + $0x120] sm:$0xf]
  %v1596 = vld [vmem:[%s5 + $0x124] sm:$0xf]
  %v1597 = vld [vmem:[%s5 + $0x128] sm:$0xf]
  %v1598 = vld [vmem:[%s5 + $0x12c] sm:$0xf]
  %v1599 = vld [vmem:[%s5 + $0x130] sm:$0xf]
  %v1600 = vld [vmem:[%s5 + $0x134] sm:$0xf]
  %v1601 = vld [vmem:[%s5 + $0x138] sm:$0xf]
  %v1602 = vld [vmem:[%s5 + $0x13c] sm:$0xf]
  %v1603 = vld [vmem:[%s5 + $0x140] sm:$0xf]
  %v1604 = vld [vmem:[%s5 + $0x144] sm:$0xf]
  %v1605 = vld [vmem:[%s5 + $0x148] sm:$0xf]
  %v1606 = vld [vmem:[%s5 + $0x14c] sm:$0xf]
  %v1607 = vld [vmem:[%s5 + $0x150] sm:$0xf]
  %v1608 = vld [vmem:[%s5 + $0x154] sm:$0xf]
  %v1609 = vld [vmem:[%s5 + $0x158] sm:$0xf]
  %v1610 = vld [vmem:[%s5 + $0x15c] sm:$0xf]
  %v1611 = vld [vmem:[%s5 + $0x160] sm:$0xf]
  %v1612 = vld [vmem:[%s5 + $0x164] sm:$0xf]
  %v1613 = vld [vmem:[%s5 + $0x168] sm:$0xf]
  %v1614 = vld [vmem:[%s5 + $0x16c] sm:$0xf]
  %v1615 = vld [vmem:[%s5 + $0x170] sm:$0xf]
  %v1616 = vld [vmem:[%s5 + $0x174] sm:$0xf]
  %v1617 = vld [vmem:[%s5 + $0x178] sm:$0xf]
  %v1618 = vld [vmem:[%s5 + $0x17c] sm:$0xf]
  %v1619 = vld [vmem:[%s5 + $0x180] sm:$0xf]
  %v1620 = vld [vmem:[%s5 + $0x184] sm:$0xf]
  %v1621 = vld [vmem:[%s5 + $0x188] sm:$0xf]
  %v1622 = vld [vmem:[%s5 + $0x18c] sm:$0xf]
  %v1623 = vld [vmem:[%s5 + $0x190] sm:$0xf]
  %v1624 = vld [vmem:[%s5 + $0x194] sm:$0xf]
  %v1625 = vld [vmem:[%s5 + $0x198] sm:$0xf]
  %v1626 = vld [vmem:[%s5 + $0x19c] sm:$0xf]
  %v1627 = vld [vmem:[%s5 + $0x1a0] sm:$0xf]
  %v1628 = vld [vmem:[%s5 + $0x1a4] sm:$0xf]
  %v1629 = vld [vmem:[%s5 + $0x1a8] sm:$0xf]
  %v1630 = vld [vmem:[%s5 + $0x1ac] sm:$0xf]
  %v1631 = vld [vmem:[%s5 + $0x1b0] sm:$0xf]
  %v1632 = vld [vmem:[%s5 + $0x1b4] sm:$0xf]
  %v1633 = vld [vmem:[%s5 + $0x1b8] sm:$0xf]
  %v1634 = vld [vmem:[%s5 + $0x1bc] sm:$0xf]
  %v1635 = vld [vmem:[%s5 + $0x1c0] sm:$0xf]
  %v1636 = vld [vmem:[%s5 + $0x1c4] sm:$0xf]
  %v1637 = vld [vmem:[%s5 + $0x1c8] sm:$0xf]
  %v1638 = vld [vmem:[%s5 + $0x1cc] sm:$0xf]
  %v1639 = vld [vmem:[%s5 + $0x1d0] sm:$0xf]
  %v1640 = vld [vmem:[%s5 + $0x1d4] sm:$0xf]
  %v1641 = vld [vmem:[%s5 + $0x1d8] sm:$0xf]
  %v1642 = vld [vmem:[%s5 + $0x1dc] sm:$0xf]
  %v1643 = vld [vmem:[%s5 + $0x1e0] sm:$0xf]
  %v1644 = vld [vmem:[%s5 + $0x1e4] sm:$0xf]
  %v1645 = vld [vmem:[%s5 + $0x1e8] sm:$0xf]
  %v1646 = vld [vmem:[%s5 + $0x1ec] sm:$0xf]
  %v1647 = vld [vmem:[%s5 + $0x1f0] sm:$0xf]
  %v1648 = vld [vmem:[%s5 + $0x1f4] sm:$0xf]
  %v1649 = vld [vmem:[%s5 + $0x1f8] sm:$0xf]
  %v1650 = vld [vmem:[%s5 + $0x1fc] sm:$0xf]
  %v1651 = vld [vmem:[%s5 + $0x200] sm:$0xf]
  %v1652 = vld [vmem:[%s5 + $0x204] sm:$0xf]
  %v1653 = vld [vmem:[%s5 + $0x208] sm:$0xf]
  %v1654 = vld [vmem:[%s5 + $0x20c] sm:$0xf]
  %v1655 = vld [vmem:[%s5 + $0x210] sm:$0xf]
  %v1656 = vld [vmem:[%s5 + $0x214] sm:$0xf]
  %v1657 = vld [vmem:[%s5 + $0x218] sm:$0xf]
  %v1658 = vld [vmem:[%s5 + $0x21c] sm:$0xf]
  %v1659 = vld [vmem:[%s5 + $0x220] sm:$0xf]
  %v1660 = vld [vmem:[%s5 + $0x224] sm:$0xf]
  %v1661 = vld [vmem:[%s5 + $0x228] sm:$0xf]
  %v1662 = vld [vmem:[%s5 + $0x22c] sm:$0xf]
  %v1663 = vld [vmem:[%s5 + $0x230] sm:$0xf]
  %v1664 = vld [vmem:[%s5 + $0x234] sm:$0xf]
  %v1665 = vld [vmem:[%s5 + $0x238] sm:$0xf]
  %v1666 = vld [vmem:[%s5 + $0x23c] sm:$0xf]
  %v1667 = vld [vmem:[%s5 + $0x240] sm:$0xf]
  %v1668 = vld [vmem:[%s5 + $0x244] sm:$0xf]
  %v1669 = vld [vmem:[%s5 + $0x248] sm:$0xf]
  %v1670 = vld [vmem:[%s5 + $0x24c] sm:$0xf]
  %v1671 = vld [vmem:[%s5 + $0x250] sm:$0xf]
  %v1672 = vld [vmem:[%s5 + $0x254] sm:$0xf]
  %v1673 = vld [vmem:[%s5 + $0x258] sm:$0xf]
  %v1674 = vld [vmem:[%s5 + $0x25c] sm:$0xf]
  %v1675 = vld [vmem:[%s5 + $0x260] sm:$0xf]
  %v1676 = vld [vmem:[%s5 + $0x264] sm:$0xf]
  %v1677 = vld [vmem:[%s5 + $0x268] sm:$0xf]
  %v1678 = vld [vmem:[%s5 + $0x26c] sm:$0xf]
  %v1679 = vld [vmem:[%s5 + $0x270] sm:$0xf]
  %v1680 = vld [vmem:[%s5 + $0x274] sm:$0xf]
  %v1681 = vld [vmem:[%s5 + $0x278] sm:$0xf]
  %v1682 = vld [vmem:[%s5 + $0x27c] sm:$0xf]
  %v1683 = vld [vmem:[%s5 + $0x280] sm:$0xf]
  %v1684 = vld [vmem:[%s5 + $0x284] sm:$0xf]
  %v1685 = vld [vmem:[%s5 + $0x288] sm:$0xf]
  %v1686 = vld [vmem:[%s5 + $0x28c] sm:$0xf]
  %v1687 = vld [vmem:[%s5 + $0x290] sm:$0xf]
  %v1688 = vld [vmem:[%s5 + $0x294] sm:$0xf]
  %v1689 = vld [vmem:[%s5 + $0x298] sm:$0xf]
  %v1690 = vld [vmem:[%s5 + $0x29c] sm:$0xf]
  %v1691 = vld [vmem:[%s5 + $0x2a0] sm:$0xf]
  %v1692 = vld [vmem:[%s5 + $0x2a4] sm:$0xf]
  %v1693 = vld [vmem:[%s5 + $0x2a8] sm:$0xf]
  %v1694 = vld [vmem:[%s5 + $0x2ac] sm:$0xf]
  %v1695 = vld [vmem:[%s5 + $0x2b0] sm:$0xf]
  %v1696 = vld [vmem:[%s5 + $0x2b4] sm:$0xf]
  %v1697 = vld [vmem:[%s5 + $0x2b8] sm:$0xf]
  %v1698 = vld [vmem:[%s5 + $0x2bc] sm:$0xf]
  %v1699 = vld [vmem:[%s5 + $0x2c0] sm:$0xf]
  %v1700 = vld [vmem:[%s5 + $0x2c4] sm:$0xf]
  %v1701 = vld [vmem:[%s5 + $0x2c8] sm:$0xf]
  %v1702 = vld [vmem:[%s5 + $0x2cc] sm:$0xf]
  %v1703 = vld [vmem:[%s5 + $0x2d0] sm:$0xf]
  %v1704 = vld [vmem:[%s5 + $0x2d4] sm:$0xf]
  %v1705 = vld [vmem:[%s5 + $0x2d8] sm:$0xf]
  %v1706 = vld [vmem:[%s5 + $0x2dc] sm:$0xf]
  %v1707 = vld [vmem:[%s5 + $0x2e0] sm:$0xf]
  %v1708 = vld [vmem:[%s5 + $0x2e4] sm:$0xf]
  %v1709 = vld [vmem:[%s5 + $0x2e8] sm:$0xf]
  %v1710 = vld [vmem:[%s5 + $0x2ec] sm:$0xf]
  %v1711 = vld [vmem:[%s5 + $0x2f0] sm:$0xf]
  %v1712 = vld [vmem:[%s5 + $0x2f4] sm:$0xf]
  %v1713 = vld [vmem:[%s5 + $0x2f8] sm:$0xf]
  %v1714 = vld [vmem:[%s5 + $0x2fc] sm:$0xf]
  %v1715 = vld [vmem:[%s5 + $0x300] sm:$0xf]
  %v1716 = vld [vmem:[%s5 + $0x304] sm:$0xf]
  %v1717 = vld [vmem:[%s5 + $0x308] sm:$0xf]
  %v1718 = vld [vmem:[%s5 + $0x30c] sm:$0xf]
  %v1719 = vld [vmem:[%s6] sm:$0xff]
  %v1720 = vld [vmem:[%s6 + $0x8] sm:$0xff]
  %v1721 = vld [vmem:[%s6 + $0x10] sm:$0xff]
  %v1722 = vld [vmem:[%s6 + $0x18] sm:$0xff]
  %v1723 = vld [vmem:[%s6 + $0x20] sm:$0xff]
  %v1724 = vld [vmem:[%s6 + $0x28] sm:$0xff]
  %v1725 = vld [vmem:[%s6 + $0x30] sm:$0xff]
  %v1726 = vld [vmem:[%s6 + $0x38] sm:$0xff]
  %v1727 = vld [vmem:[%s6 + $0x40] sm:$0xff]
  %v1728 = vld [vmem:[%s6 + $0x48] sm:$0xff]
  %v1729 = vld [vmem:[%s6 + $0x50] sm:$0xff]
  %v1730 = vld [vmem:[%s6 + $0x58] sm:$0xff]
  %v1731 = vld [vmem:[%s6 + $0x60] sm:$0xff]
  %v1732 = vld [vmem:[%s6 + $0x68] sm:$0xff]
  %v1733 = vld [vmem:[%s6 + $0x70] sm:$0xff]
  %v1734 = vld [vmem:[%s6 + $0x78] sm:$0xff]
  %v1735 = vld [vmem:[%s6 + $0x80] sm:$0xff]
  %v1736 = vld [vmem:[%s6 + $0x88] sm:$0xff]
  %v1737 = vld [vmem:[%s6 + $0x90] sm:$0xff]
  %v1738 = vld [vmem:[%s6 + $0x98] sm:$0xff]
  %v1739 = vld [vmem:[%s6 + $0xa0] sm:$0xff]
  %v1740 = vld [vmem:[%s6 + $0xa8] sm:$0xff]
  %v1741 = vld [vmem:[%s6 + $0xb0] sm:$0xff]
  %v1742 = vld [vmem:[%s6 + $0xb8] sm:$0xff]
  %v1743 = vld [vmem:[%s6 + $0xc0] sm:$0xff]
  %v1744 = vld [vmem:[%s6 + $0xc8] sm:$0xff]
  %v1745 = vld [vmem:[%s6 + $0xd0] sm:$0xff]
  %v1746 = vld [vmem:[%s6 + $0xd8] sm:$0xff]
  %v1747 = vld [vmem:[%s6 + $0xe0] sm:$0xff]
  %v1748 = vld [vmem:[%s6 + $0xe8] sm:$0xff]
  %v1749 = vld [vmem:[%s6 + $0xf0] sm:$0xff]
  %v1750 = vld [vmem:[%s6 + $0xf8] sm:$0xff]
  %v1751 = vld [vmem:[%s6 + $0x100] sm:$0xff]
  %v1752 = vld [vmem:[%s6 + $0x108] sm:$0xff]
  %v1753 = vld [vmem:[%s6 + $0x110] sm:$0xff]
  %v1754 = vld [vmem:[%s6 + $0x118] sm:$0xff]
  %v1755 = vld [vmem:[%s6 + $0x120] sm:$0xff]
  %v1756 = vld [vmem:[%s6 + $0x128] sm:$0xff]
  %v1757 = vld [vmem:[%s6 + $0x130] sm:$0xff]
  %v1758 = vld [vmem:[%s6 + $0x138] sm:$0xff]
  %v1759 = vld [vmem:[%s6 + $0x140] sm:$0xff]
  %v1760 = vld [vmem:[%s6 + $0x148] sm:$0xff]
  %v1761 = vld [vmem:[%s6 + $0x150] sm:$0xff]
  %v1762 = vld [vmem:[%s6 + $0x158] sm:$0xff]
  %v1763 = vld [vmem:[%s6 + $0x160] sm:$0xff]
  %v1764 = vld [vmem:[%s6 + $0x168] sm:$0xff]
  %v1765 = vld [vmem:[%s6 + $0x170] sm:$0xff]
  %v1766 = vld [vmem:[%s6 + $0x178] sm:$0xff]
  %v1767 = vld [vmem:[%s6 + $0x180] sm:$0xff]
  %v1768 = vld [vmem:[%s6 + $0x188] sm:$0xff]
  %v1769 = vld [vmem:[%s6 + $0x190] sm:$0xff]
  %v1770 = vld [vmem:[%s6 + $0x198] sm:$0xff]
  %v1771 = vld [vmem:[%s6 + $0x1a0] sm:$0xff]
  %v1772 = vld [vmem:[%s6 + $0x1a8] sm:$0xff]
  %v1773 = vld [vmem:[%s6 + $0x1b0] sm:$0xff]
  %v1774 = vld [vmem:[%s6 + $0x1b8] sm:$0xff]
  %v1775 = vld [vmem:[%s6 + $0x1c0] sm:$0xff]
  %v1776 = vld [vmem:[%s6 + $0x1c8] sm:$0xff]
  %v1777 = vld [vmem:[%s6 + $0x1d0] sm:$0xff]
  %v1778 = vld [vmem:[%s6 + $0x1d8] sm:$0xff]
  %v1779 = vld [vmem:[%s6 + $0x1e0] sm:$0xff]
  %v1780 = vld [vmem:[%s6 + $0x1e8] sm:$0xff]
  %v1781 = vld [vmem:[%s6 + $0x1f0] sm:$0xff]
  %v1782 = vld [vmem:[%s6 + $0x1f8] sm:$0xff]
  %v1783 = vld [vmem:[%s6 + $0x200] sm:$0xff]
  %v1784 = vld [vmem:[%s6 + $0x208] sm:$0xff]
  %v1785 = vld [vmem:[%s6 + $0x210] sm:$0xff]
  %v1786 = vld [vmem:[%s6 + $0x218] sm:$0xff]
  %v1787 = vld [vmem:[%s6 + $0x220] sm:$0xff]
  %v1788 = vld [vmem:[%s6 + $0x228] sm:$0xff]
  %v1789 = vld [vmem:[%s6 + $0x230] sm:$0xff]
  %v1790 = vld [vmem:[%s6 + $0x238] sm:$0xff]
  %v1791 = vld [vmem:[%s6 + $0x240] sm:$0xff]
  %v1792 = vld [vmem:[%s6 + $0x248] sm:$0xff]
  %v1793 = vld [vmem:[%s6 + $0x250] sm:$0xff]
  %v1794 = vld [vmem:[%s6 + $0x258] sm:$0xff]
  %v1795 = vld [vmem:[%s6 + $0x260] sm:$0xff]
  %v1796 = vld [vmem:[%s6 + $0x268] sm:$0xff]
  %v1797 = vld [vmem:[%s6 + $0x270] sm:$0xff]
  %v1798 = vld [vmem:[%s6 + $0x278] sm:$0xff]
  %v1799 = vld [vmem:[%s6 + $0x280] sm:$0xff]
  %v1800 = vld [vmem:[%s6 + $0x288] sm:$0xff]
  %v1801 = vld [vmem:[%s6 + $0x290] sm:$0xff]
  %v1802 = vld [vmem:[%s6 + $0x298] sm:$0xff]
  %v1803 = vld [vmem:[%s6 + $0x2a0] sm:$0xff]
  %v1804 = vld [vmem:[%s6 + $0x2a8] sm:$0xff]
  %v1805 = vld [vmem:[%s6 + $0x2b0] sm:$0xff]
  %v1806 = vld [vmem:[%s6 + $0x2b8] sm:$0xff]
  %v1807 = vld [vmem:[%s6 + $0x2c0] sm:$0xff]
  %v1808 = vld [vmem:[%s6 + $0x2c8] sm:$0xff]
  %v1809 = vld [vmem:[%s6 + $0x2d0] sm:$0xff]
  %v1810 = vld [vmem:[%s6 + $0x2d8] sm:$0xff]
  %v1811 = vld [vmem:[%s6 + $0x2e0] sm:$0xff]
  %v1812 = vld [vmem:[%s6 + $0x2e8] sm:$0xff]
  %v1813 = vld [vmem:[%s6 + $0x2f0] sm:$0xff]
  %v1814 = vld [vmem:[%s6 + $0x2f8] sm:$0xff]
  %v1815 = vld [vmem:[%s6 + $0x300] sm:$0xff]
  %v1816 = vld [vmem:[%s6 + $0x308] sm:$0xff]
  %v1817 = vld [vmem:[%s6 + $0x310] sm:$0xff]
  %v1818 = vld [vmem:[%s6 + $0x318] sm:$0xff]
  %v1819 = vld [vmem:[%s6 + $0x320] sm:$0xff]
  %v1820 = vld [vmem:[%s6 + $0x328] sm:$0xff]
  %v1821 = vld [vmem:[%s6 + $0x330] sm:$0xff]
  %v1822 = vld [vmem:[%s6 + $0x338] sm:$0xff]
  %v1823 = vld [vmem:[%s6 + $0x340] sm:$0xff]
  %v1824 = vld [vmem:[%s6 + $0x348] sm:$0xff]
  %v1825 = vld [vmem:[%s6 + $0x350] sm:$0xff]
  %v1826 = vld [vmem:[%s6 + $0x358] sm:$0xff]
  %v1827 = vld [vmem:[%s6 + $0x360] sm:$0xff]
  %v1828 = vld [vmem:[%s6 + $0x368] sm:$0xff]
  %v1829 = vld [vmem:[%s6 + $0x370] sm:$0xff]
  %v1830 = vld [vmem:[%s6 + $0x378] sm:$0xff]
  %v1831 = vld [vmem:[%s6 + $0x380] sm:$0xff]
  %v1832 = vld [vmem:[%s6 + $0x388] sm:$0xff]
  %v1833 = vld [vmem:[%s6 + $0x390] sm:$0xff]
  %v1834 = vld [vmem:[%s6 + $0x398] sm:$0xff]
  %v1835 = vld [vmem:[%s6 + $0x3a0] sm:$0xff]
  %v1836 = vld [vmem:[%s6 + $0x3a8] sm:$0xff]
  %v1837 = vld [vmem:[%s6 + $0x3b0] sm:$0xff]
  %v1838 = vld [vmem:[%s6 + $0x3b8] sm:$0xff]
  %v1839 = vld [vmem:[%s6 + $0x3c0] sm:$0xff]
  %v1840 = vld [vmem:[%s6 + $0x3c8] sm:$0xff]
  %v1841 = vld [vmem:[%s6 + $0x3d0] sm:$0xff]
  %v1842 = vld [vmem:[%s6 + $0x3d8] sm:$0xff]
  %v1843 = vld [vmem:[%s6 + $0x3e0] sm:$0xff]
  %v1844 = vld [vmem:[%s6 + $0x3e8] sm:$0xff]
  %v1845 = vld [vmem:[%s6 + $0x3f0] sm:$0xff]
  %v1846 = vld [vmem:[%s6 + $0x3f8] sm:$0xff]
  %v1847 = vld [vmem:[%s6 + $0x400] sm:$0xff]
  %v1848 = vld [vmem:[%s6 + $0x408] sm:$0xff]
  %v1849 = vld [vmem:[%s6 + $0x410] sm:$0xff]
  %v1850 = vld [vmem:[%s6 + $0x418] sm:$0xff]
  %v1851 = vld [vmem:[%s6 + $0x420] sm:$0xff]
  %v1852 = vld [vmem:[%s6 + $0x428] sm:$0xff]
  %v1853 = vld [vmem:[%s6 + $0x430] sm:$0xff]
  %v1854 = vld [vmem:[%s6 + $0x438] sm:$0xff]
  %v1855 = vld [vmem:[%s6 + $0x440] sm:$0xff]
  %v1856 = vld [vmem:[%s6 + $0x448] sm:$0xff]
  %v1857 = vld [vmem:[%s6 + $0x450] sm:$0xff]
  %v1858 = vld [vmem:[%s6 + $0x458] sm:$0xff]
  %v1859 = vld [vmem:[%s6 + $0x460] sm:$0xff]
  %v1860 = vld [vmem:[%s6 + $0x468] sm:$0xff]
  %v1861 = vld [vmem:[%s6 + $0x470] sm:$0xff]
  %v1862 = vld [vmem:[%s6 + $0x478] sm:$0xff]
  %v1863 = vld [vmem:[%s6 + $0x480] sm:$0xff]
  %v1864 = vld [vmem:[%s6 + $0x488] sm:$0xff]
  %v1865 = vld [vmem:[%s6 + $0x490] sm:$0xff]
  %v1866 = vld [vmem:[%s6 + $0x498] sm:$0xff]
  %v1867 = vld [vmem:[%s6 + $0x4a0] sm:$0xff]
  %v1868 = vld [vmem:[%s6 + $0x4a8] sm:$0xff]
  %v1869 = vld [vmem:[%s6 + $0x4b0] sm:$0xff]
  %v1870 = vld [vmem:[%s6 + $0x4b8] sm:$0xff]
  %v1871 = vld [vmem:[%s6 + $0x4c0] sm:$0xff]
  %v1872 = vld [vmem:[%s6 + $0x4c8] sm:$0xff]
  %v1873 = vld [vmem:[%s6 + $0x4d0] sm:$0xff]
  %v1874 = vld [vmem:[%s6 + $0x4d8] sm:$0xff]
  %v1875 = vld [vmem:[%s6 + $0x4e0] sm:$0xff]
  %v1876 = vld [vmem:[%s6 + $0x4e8] sm:$0xff]
  %v1877 = vld [vmem:[%s6 + $0x4f0] sm:$0xff]
  %v1878 = vld [vmem:[%s6 + $0x4f8] sm:$0xff]
  %v1879 = vld [vmem:[%s6 + $0x500] sm:$0xff]
  %v1880 = vld [vmem:[%s6 + $0x508] sm:$0xff]
  %v1881 = vld [vmem:[%s6 + $0x510] sm:$0xff]
  %v1882 = vld [vmem:[%s6 + $0x518] sm:$0xff]
  %v1883 = vld [vmem:[%s6 + $0x520] sm:$0xff]
  %v1884 = vld [vmem:[%s6 + $0x528] sm:$0xff]
  %v1885 = vld [vmem:[%s6 + $0x530] sm:$0xff]
  %v1886 = vld [vmem:[%s6 + $0x538] sm:$0xff]
  %v1887 = vld [vmem:[%s6 + $0x540] sm:$0xff]
  %v1888 = vld [vmem:[%s6 + $0x548] sm:$0xff]
  %v1889 = vld [vmem:[%s6 + $0x550] sm:$0xff]
  %v1890 = vld [vmem:[%s6 + $0x558] sm:$0xff]
  %v1891 = vld [vmem:[%s6 + $0x560] sm:$0xff]
  %v1892 = vld [vmem:[%s6 + $0x568] sm:$0xff]
  %v1893 = vld [vmem:[%s6 + $0x570] sm:$0xff]
  %v1894 = vld [vmem:[%s6 + $0x578] sm:$0xff]
  %v1895 = vld [vmem:[%s6 + $0x580] sm:$0xff]
  %v1896 = vld [vmem:[%s6 + $0x588] sm:$0xff]
  %v1897 = vld [vmem:[%s6 + $0x590] sm:$0xff]
  %v1898 = vld [vmem:[%s6 + $0x598] sm:$0xff]
  %v1899 = vld [vmem:[%s6 + $0x5a0] sm:$0xff]
  %v1900 = vld [vmem:[%s6 + $0x5a8] sm:$0xff]
  %v1901 = vld [vmem:[%s6 + $0x5b0] sm:$0xff]
  %v1902 = vld [vmem:[%s6 + $0x5b8] sm:$0xff]
  %v1903 = vld [vmem:[%s6 + $0x5c0] sm:$0xff]
  %v1904 = vld [vmem:[%s6 + $0x5c8] sm:$0xff]
  %v1905 = vld [vmem:[%s6 + $0x5d0] sm:$0xff]
  %v1906 = vld [vmem:[%s6 + $0x5d8] sm:$0xff]
  %v1907 = vld [vmem:[%s6 + $0x5e0] sm:$0xff]
  %v1908 = vld [vmem:[%s6 + $0x5e8] sm:$0xff]
  %v1909 = vld [vmem:[%s6 + $0x5f0] sm:$0xff]
  %v1910 = vld [vmem:[%s6 + $0x5f8] sm:$0xff]
  %v1911 = vld [vmem:[%s6 + $0x600] sm:$0xff]
  %v1912 = vld [vmem:[%s6 + $0x608] sm:$0xff]
  %v1913 = vld [vmem:[%s6 + $0x610] sm:$0xff]
  %v1914 = vld [vmem:[%s6 + $0x618] sm:$0xff]
  %1916 = vset.pattern.permute.xlu0 0
  %1917 = vperm.xlu0 %1916, %v1719
  %v1918 = vpop.permute.xlu0 %1917
  %1921 = vset.pattern.permute.xlu0 0
  %1922 = vperm.xlu0 %1921, %v1720
  %v1923 = vpop.permute.xlu0 %1922
  %1926 = vset.pattern.permute.xlu0 0
  %1927 = vperm.xlu0 %1926, %v1721
  %v1928 = vpop.permute.xlu0 %1927
  %1931 = vset.pattern.permute.xlu0 0
  %1932 = vperm.xlu0 %1931, %v1722
  %v1933 = vpop.permute.xlu0 %1932
  %1936 = vset.pattern.permute.xlu0 0
  %1937 = vperm.xlu0 %1936, %v1723
  %v1938 = vpop.permute.xlu0 %1937
  %1941 = vset.pattern.permute.xlu0 0
  %1942 = vperm.xlu0 %1941, %v1724
  %v1943 = vpop.permute.xlu0 %1942
  %1946 = vset.pattern.permute.xlu0 0
  %1947 = vperm.xlu0 %1946, %v1725
  %v1948 = vpop.permute.xlu0 %1947
  %1951 = vset.pattern.permute.xlu0 0
  %1952 = vperm.xlu0 %1951, %v1726
  %v1953 = vpop.permute.xlu0 %1952
  %1956 = vset.pattern.permute.xlu0 0
  %1957 = vperm.xlu0 %1956, %v1727
  %v1958 = vpop.permute.xlu0 %1957
  %1961 = vset.pattern.permute.xlu0 0
  %1962 = vperm.xlu0 %1961, %v1728
  %v1963 = vpop.permute.xlu0 %1962
  %1966 = vset.pattern.permute.xlu0 0
  %1967 = vperm.xlu0 %1966, %v1729
  %v1968 = vpop.permute.xlu0 %1967
  %1971 = vset.pattern.permute.xlu0 0
  %1972 = vperm.xlu0 %1971, %v1730
  %v1973 = vpop.permute.xlu0 %1972
  %1976 = vset.pattern.permute.xlu0 0
  %1977 = vperm.xlu0 %1976, %v1731
  %v1978 = vpop.permute.xlu0 %1977
  %1981 = vset.pattern.permute.xlu0 0
  %1982 = vperm.xlu0 %1981, %v1732
  %v1983 = vpop.permute.xlu0 %1982
  %1986 = vset.pattern.permute.xlu0 0
  %1987 = vperm.xlu0 %1986, %v1733
  %v1988 = vpop.permute.xlu0 %1987
  %1991 = vset.pattern.permute.xlu0 0
  %1992 = vperm.xlu0 %1991, %v1734
  %v1993 = vpop.permute.xlu0 %1992
  %1996 = vset.pattern.permute.xlu0 0
  %1997 = vperm.xlu0 %1996, %v1735
  %v1998 = vpop.permute.xlu0 %1997
  %2001 = vset.pattern.permute.xlu0 0
  %2002 = vperm.xlu0 %2001, %v1736
  %v2003 = vpop.permute.xlu0 %2002
  %2006 = vset.pattern.permute.xlu0 0
  %2007 = vperm.xlu0 %2006, %v1737
  %v2008 = vpop.permute.xlu0 %2007
  %2011 = vset.pattern.permute.xlu0 0
  %2012 = vperm.xlu0 %2011, %v1738
  %v2013 = vpop.permute.xlu0 %2012
  %2016 = vset.pattern.permute.xlu0 0
  %2017 = vperm.xlu0 %2016, %v1739
  %v2018 = vpop.permute.xlu0 %2017
  %2021 = vset.pattern.permute.xlu0 0
  %2022 = vperm.xlu0 %2021, %v1740
  %v2023 = vpop.permute.xlu0 %2022
  %2026 = vset.pattern.permute.xlu0 0
  %2027 = vperm.xlu0 %2026, %v1741
  %v2028 = vpop.permute.xlu0 %2027
  %2031 = vset.pattern.permute.xlu0 0
  %2032 = vperm.xlu0 %2031, %v1742
  %v2033 = vpop.permute.xlu0 %2032
  %2036 = vset.pattern.permute.xlu0 0
  %2037 = vperm.xlu0 %2036, %v1743
  %v2038 = vpop.permute.xlu0 %2037
  %2041 = vset.pattern.permute.xlu0 0
  %2042 = vperm.xlu0 %2041, %v1744
  %v2043 = vpop.permute.xlu0 %2042
  %2046 = vset.pattern.permute.xlu0 0
  %2047 = vperm.xlu0 %2046, %v1745
  %v2048 = vpop.permute.xlu0 %2047
  %2051 = vset.pattern.permute.xlu0 0
  %2052 = vperm.xlu0 %2051, %v1746
  %v2053 = vpop.permute.xlu0 %2052
  %2056 = vset.pattern.permute.xlu0 0
  %2057 = vperm.xlu0 %2056, %v1747
  %v2058 = vpop.permute.xlu0 %2057
  %2061 = vset.pattern.permute.xlu0 0
  %2062 = vperm.xlu0 %2061, %v1748
  %v2063 = vpop.permute.xlu0 %2062
  %2066 = vset.pattern.permute.xlu0 0
  %2067 = vperm.xlu0 %2066, %v1749
  %v2068 = vpop.permute.xlu0 %2067
  %2071 = vset.pattern.permute.xlu0 0
  %2072 = vperm.xlu0 %2071, %v1750
  %v2073 = vpop.permute.xlu0 %2072
  %2076 = vset.pattern.permute.xlu0 0
  %2077 = vperm.xlu0 %2076, %v1751
  %v2078 = vpop.permute.xlu0 %2077
  %2081 = vset.pattern.permute.xlu0 0
  %2082 = vperm.xlu0 %2081, %v1752
  %v2083 = vpop.permute.xlu0 %2082
  %2086 = vset.pattern.permute.xlu0 0
  %2087 = vperm.xlu0 %2086, %v1753
  %v2088 = vpop.permute.xlu0 %2087
  %2091 = vset.pattern.permute.xlu0 0
  %2092 = vperm.xlu0 %2091, %v1754
  %v2093 = vpop.permute.xlu0 %2092
  %2096 = vset.pattern.permute.xlu0 0
  %2097 = vperm.xlu0 %2096, %v1755
  %v2098 = vpop.permute.xlu0 %2097
  %2101 = vset.pattern.permute.xlu0 0
  %2102 = vperm.xlu0 %2101, %v1756
  %v2103 = vpop.permute.xlu0 %2102
  %2106 = vset.pattern.permute.xlu0 0
  %2107 = vperm.xlu0 %2106, %v1757
  %v2108 = vpop.permute.xlu0 %2107
  %2111 = vset.pattern.permute.xlu0 0
  %2112 = vperm.xlu0 %2111, %v1758
  %v2113 = vpop.permute.xlu0 %2112
  %2116 = vset.pattern.permute.xlu0 0
  %2117 = vperm.xlu0 %2116, %v1759
  %v2118 = vpop.permute.xlu0 %2117
  %2121 = vset.pattern.permute.xlu0 0
  %2122 = vperm.xlu0 %2121, %v1760
  %v2123 = vpop.permute.xlu0 %2122
  %2126 = vset.pattern.permute.xlu0 0
  %2127 = vperm.xlu0 %2126, %v1761
  %v2128 = vpop.permute.xlu0 %2127
  %2131 = vset.pattern.permute.xlu0 0
  %2132 = vperm.xlu0 %2131, %v1762
  %v2133 = vpop.permute.xlu0 %2132
  %2136 = vset.pattern.permute.xlu0 0
  %2137 = vperm.xlu0 %2136, %v1763
  %v2138 = vpop.permute.xlu0 %2137
  %2141 = vset.pattern.permute.xlu0 0
  %2142 = vperm.xlu0 %2141, %v1764
  %v2143 = vpop.permute.xlu0 %2142
  %2146 = vset.pattern.permute.xlu0 0
  %2147 = vperm.xlu0 %2146, %v1765
  %v2148 = vpop.permute.xlu0 %2147
  %2151 = vset.pattern.permute.xlu0 0
  %2152 = vperm.xlu0 %2151, %v1766
  %v2153 = vpop.permute.xlu0 %2152
  %2156 = vset.pattern.permute.xlu0 0
  %2157 = vperm.xlu0 %2156, %v1767
  %v2158 = vpop.permute.xlu0 %2157
  %2161 = vset.pattern.permute.xlu0 0
  %2162 = vperm.xlu0 %2161, %v1768
  %v2163 = vpop.permute.xlu0 %2162
  %2166 = vset.pattern.permute.xlu0 0
  %2167 = vperm.xlu0 %2166, %v1769
  %v2168 = vpop.permute.xlu0 %2167
  %2171 = vset.pattern.permute.xlu0 0
  %2172 = vperm.xlu0 %2171, %v1770
  %v2173 = vpop.permute.xlu0 %2172
  %2176 = vset.pattern.permute.xlu0 0
  %2177 = vperm.xlu0 %2176, %v1771
  %v2178 = vpop.permute.xlu0 %2177
  %2181 = vset.pattern.permute.xlu0 0
  %2182 = vperm.xlu0 %2181, %v1772
  %v2183 = vpop.permute.xlu0 %2182
  %2186 = vset.pattern.permute.xlu0 0
  %2187 = vperm.xlu0 %2186, %v1773
  %v2188 = vpop.permute.xlu0 %2187
  %2191 = vset.pattern.permute.xlu0 0
  %2192 = vperm.xlu0 %2191, %v1774
  %v2193 = vpop.permute.xlu0 %2192
  %2196 = vset.pattern.permute.xlu0 0
  %2197 = vperm.xlu0 %2196, %v1775
  %v2198 = vpop.permute.xlu0 %2197
  %2201 = vset.pattern.permute.xlu0 0
  %2202 = vperm.xlu0 %2201, %v1776
  %v2203 = vpop.permute.xlu0 %2202
  %2206 = vset.pattern.permute.xlu0 0
  %2207 = vperm.xlu0 %2206, %v1777
  %v2208 = vpop.permute.xlu0 %2207
  %2211 = vset.pattern.permute.xlu0 0
  %2212 = vperm.xlu0 %2211, %v1778
  %v2213 = vpop.permute.xlu0 %2212
  %2216 = vset.pattern.permute.xlu0 0
  %2217 = vperm.xlu0 %2216, %v1779
  %v2218 = vpop.permute.xlu0 %2217
  %2221 = vset.pattern.permute.xlu0 0
  %2222 = vperm.xlu0 %2221, %v1780
  %v2223 = vpop.permute.xlu0 %2222
  %2226 = vset.pattern.permute.xlu0 0
  %2227 = vperm.xlu0 %2226, %v1781
  %v2228 = vpop.permute.xlu0 %2227
  %2231 = vset.pattern.permute.xlu0 0
  %2232 = vperm.xlu0 %2231, %v1782
  %v2233 = vpop.permute.xlu0 %2232
  %2236 = vset.pattern.permute.xlu0 0
  %2237 = vperm.xlu0 %2236, %v1783
  %v2238 = vpop.permute.xlu0 %2237
  %2241 = vset.pattern.permute.xlu0 0
  %2242 = vperm.xlu0 %2241, %v1784
  %v2243 = vpop.permute.xlu0 %2242
  %2246 = vset.pattern.permute.xlu0 0
  %2247 = vperm.xlu0 %2246, %v1785
  %v2248 = vpop.permute.xlu0 %2247
  %2251 = vset.pattern.permute.xlu0 0
  %2252 = vperm.xlu0 %2251, %v1786
  %v2253 = vpop.permute.xlu0 %2252
  %2256 = vset.pattern.permute.xlu0 0
  %2257 = vperm.xlu0 %2256, %v1787
  %v2258 = vpop.permute.xlu0 %2257
  %2261 = vset.pattern.permute.xlu0 0
  %2262 = vperm.xlu0 %2261, %v1788
  %v2263 = vpop.permute.xlu0 %2262
  %2266 = vset.pattern.permute.xlu0 0
  %2267 = vperm.xlu0 %2266, %v1789
  %v2268 = vpop.permute.xlu0 %2267
  %2271 = vset.pattern.permute.xlu0 0
  %2272 = vperm.xlu0 %2271, %v1790
  %v2273 = vpop.permute.xlu0 %2272
  %2276 = vset.pattern.permute.xlu0 0
  %2277 = vperm.xlu0 %2276, %v1791
  %v2278 = vpop.permute.xlu0 %2277
  %2281 = vset.pattern.permute.xlu0 0
  %2282 = vperm.xlu0 %2281, %v1792
  %v2283 = vpop.permute.xlu0 %2282
  %2286 = vset.pattern.permute.xlu0 0
  %2287 = vperm.xlu0 %2286, %v1793
  %v2288 = vpop.permute.xlu0 %2287
  %2291 = vset.pattern.permute.xlu0 0
  %2292 = vperm.xlu0 %2291, %v1794
  %v2293 = vpop.permute.xlu0 %2292
  %2296 = vset.pattern.permute.xlu0 0
  %2297 = vperm.xlu0 %2296, %v1795
  %v2298 = vpop.permute.xlu0 %2297
  %2301 = vset.pattern.permute.xlu0 0
  %2302 = vperm.xlu0 %2301, %v1796
  %v2303 = vpop.permute.xlu0 %2302
  %2306 = vset.pattern.permute.xlu0 0
  %2307 = vperm.xlu0 %2306, %v1797
  %v2308 = vpop.permute.xlu0 %2307
  %2311 = vset.pattern.permute.xlu0 0
  %2312 = vperm.xlu0 %2311, %v1798
  %v2313 = vpop.permute.xlu0 %2312
  %2316 = vset.pattern.permute.xlu0 0
  %2317 = vperm.xlu0 %2316, %v1799
  %v2318 = vpop.permute.xlu0 %2317
  %2321 = vset.pattern.permute.xlu0 0
  %2322 = vperm.xlu0 %2321, %v1800
  %v2323 = vpop.permute.xlu0 %2322
  %2326 = vset.pattern.permute.xlu0 0
  %2327 = vperm.xlu0 %2326, %v1801
  %v2328 = vpop.permute.xlu0 %2327
  %2331 = vset.pattern.permute.xlu0 0
  %2332 = vperm.xlu0 %2331, %v1802
  %v2333 = vpop.permute.xlu0 %2332
  %2336 = vset.pattern.permute.xlu0 0
  %2337 = vperm.xlu0 %2336, %v1803
  %v2338 = vpop.permute.xlu0 %2337
  %2341 = vset.pattern.permute.xlu0 0
  %2342 = vperm.xlu0 %2341, %v1804
  %v2343 = vpop.permute.xlu0 %2342
  %2346 = vset.pattern.permute.xlu0 0
  %2347 = vperm.xlu0 %2346, %v1805
  %v2348 = vpop.permute.xlu0 %2347
  %2351 = vset.pattern.permute.xlu0 0
  %2352 = vperm.xlu0 %2351, %v1806
  %v2353 = vpop.permute.xlu0 %2352
  %2356 = vset.pattern.permute.xlu0 0
  %2357 = vperm.xlu0 %2356, %v1807
  %v2358 = vpop.permute.xlu0 %2357
  %2361 = vset.pattern.permute.xlu0 0
  %2362 = vperm.xlu0 %2361, %v1808
  %v2363 = vpop.permute.xlu0 %2362
  %2366 = vset.pattern.permute.xlu0 0
  %2367 = vperm.xlu0 %2366, %v1809
  %v2368 = vpop.permute.xlu0 %2367
  %2371 = vset.pattern.permute.xlu0 0
  %2372 = vperm.xlu0 %2371, %v1810
  %v2373 = vpop.permute.xlu0 %2372
  %2376 = vset.pattern.permute.xlu0 0
  %2377 = vperm.xlu0 %2376, %v1811
  %v2378 = vpop.permute.xlu0 %2377
  %2381 = vset.pattern.permute.xlu0 0
  %2382 = vperm.xlu0 %2381, %v1812
  %v2383 = vpop.permute.xlu0 %2382
  %2386 = vset.pattern.permute.xlu0 0
  %2387 = vperm.xlu0 %2386, %v1813
  %v2388 = vpop.permute.xlu0 %2387
  %2391 = vset.pattern.permute.xlu0 0
  %2392 = vperm.xlu0 %2391, %v1814
  %v2393 = vpop.permute.xlu0 %2392
  %2396 = vset.pattern.permute.xlu0 0
  %2397 = vperm.xlu0 %2396, %v1815
  %v2398 = vpop.permute.xlu0 %2397
  %2401 = vset.pattern.permute.xlu0 0
  %2402 = vperm.xlu0 %2401, %v1816
  %v2403 = vpop.permute.xlu0 %2402
  %2406 = vset.pattern.permute.xlu0 0
  %2407 = vperm.xlu0 %2406, %v1817
  %v2408 = vpop.permute.xlu0 %2407
  %2411 = vset.pattern.permute.xlu0 0
  %2412 = vperm.xlu0 %2411, %v1818
  %v2413 = vpop.permute.xlu0 %2412
  %2416 = vset.pattern.permute.xlu0 0
  %2417 = vperm.xlu0 %2416, %v1819
  %v2418 = vpop.permute.xlu0 %2417
  %2421 = vset.pattern.permute.xlu0 0
  %2422 = vperm.xlu0 %2421, %v1820
  %v2423 = vpop.permute.xlu0 %2422
  %2426 = vset.pattern.permute.xlu0 0
  %2427 = vperm.xlu0 %2426, %v1821
  %v2428 = vpop.permute.xlu0 %2427
  %2431 = vset.pattern.permute.xlu0 0
  %2432 = vperm.xlu0 %2431, %v1822
  %v2433 = vpop.permute.xlu0 %2432
  %2436 = vset.pattern.permute.xlu0 0
  %2437 = vperm.xlu0 %2436, %v1823
  %v2438 = vpop.permute.xlu0 %2437
  %2441 = vset.pattern.permute.xlu0 0
  %2442 = vperm.xlu0 %2441, %v1824
  %v2443 = vpop.permute.xlu0 %2442
  %2446 = vset.pattern.permute.xlu0 0
  %2447 = vperm.xlu0 %2446, %v1825
  %v2448 = vpop.permute.xlu0 %2447
  %2451 = vset.pattern.permute.xlu0 0
  %2452 = vperm.xlu0 %2451, %v1826
  %v2453 = vpop.permute.xlu0 %2452
  %2456 = vset.pattern.permute.xlu0 0
  %2457 = vperm.xlu0 %2456, %v1827
  %v2458 = vpop.permute.xlu0 %2457
  %2461 = vset.pattern.permute.xlu0 0
  %2462 = vperm.xlu0 %2461, %v1828
  %v2463 = vpop.permute.xlu0 %2462
  %2466 = vset.pattern.permute.xlu0 0
  %2467 = vperm.xlu0 %2466, %v1829
  %v2468 = vpop.permute.xlu0 %2467
  %2471 = vset.pattern.permute.xlu0 0
  %2472 = vperm.xlu0 %2471, %v1830
  %v2473 = vpop.permute.xlu0 %2472
  %2476 = vset.pattern.permute.xlu0 0
  %2477 = vperm.xlu0 %2476, %v1831
  %v2478 = vpop.permute.xlu0 %2477
  %2481 = vset.pattern.permute.xlu0 0
  %2482 = vperm.xlu0 %2481, %v1832
  %v2483 = vpop.permute.xlu0 %2482
  %2486 = vset.pattern.permute.xlu0 0
  %2487 = vperm.xlu0 %2486, %v1833
  %v2488 = vpop.permute.xlu0 %2487
  %2491 = vset.pattern.permute.xlu0 0
  %2492 = vperm.xlu0 %2491, %v1834
  %v2493 = vpop.permute.xlu0 %2492
  %2496 = vset.pattern.permute.xlu0 0
  %2497 = vperm.xlu0 %2496, %v1835
  %v2498 = vpop.permute.xlu0 %2497
  %2501 = vset.pattern.permute.xlu0 0
  %2502 = vperm.xlu0 %2501, %v1836
  %v2503 = vpop.permute.xlu0 %2502
  %2506 = vset.pattern.permute.xlu0 0
  %2507 = vperm.xlu0 %2506, %v1837
  %v2508 = vpop.permute.xlu0 %2507
  %2511 = vset.pattern.permute.xlu0 0
  %2512 = vperm.xlu0 %2511, %v1838
  %v2513 = vpop.permute.xlu0 %2512
  %2516 = vset.pattern.permute.xlu0 0
  %2517 = vperm.xlu0 %2516, %v1839
  %v2518 = vpop.permute.xlu0 %2517
  %2521 = vset.pattern.permute.xlu0 0
  %2522 = vperm.xlu0 %2521, %v1840
  %v2523 = vpop.permute.xlu0 %2522
  %2526 = vset.pattern.permute.xlu0 0
  %2527 = vperm.xlu0 %2526, %v1841
  %v2528 = vpop.permute.xlu0 %2527
  %2531 = vset.pattern.permute.xlu0 0
  %2532 = vperm.xlu0 %2531, %v1842
  %v2533 = vpop.permute.xlu0 %2532
  %2536 = vset.pattern.permute.xlu0 0
  %2537 = vperm.xlu0 %2536, %v1843
  %v2538 = vpop.permute.xlu0 %2537
  %2541 = vset.pattern.permute.xlu0 0
  %2542 = vperm.xlu0 %2541, %v1844
  %v2543 = vpop.permute.xlu0 %2542
  %2546 = vset.pattern.permute.xlu0 0
  %2547 = vperm.xlu0 %2546, %v1845
  %v2548 = vpop.permute.xlu0 %2547
  %2551 = vset.pattern.permute.xlu0 0
  %2552 = vperm.xlu0 %2551, %v1846
  %v2553 = vpop.permute.xlu0 %2552
  %2556 = vset.pattern.permute.xlu0 0
  %2557 = vperm.xlu0 %2556, %v1847
  %v2558 = vpop.permute.xlu0 %2557
  %2561 = vset.pattern.permute.xlu0 0
  %2562 = vperm.xlu0 %2561, %v1848
  %v2563 = vpop.permute.xlu0 %2562
  %2566 = vset.pattern.permute.xlu0 0
  %2567 = vperm.xlu0 %2566, %v1849
  %v2568 = vpop.permute.xlu0 %2567
  %2571 = vset.pattern.permute.xlu0 0
  %2572 = vperm.xlu0 %2571, %v1850
  %v2573 = vpop.permute.xlu0 %2572
  %2576 = vset.pattern.permute.xlu0 0
  %2577 = vperm.xlu0 %2576, %v1851
  %v2578 = vpop.permute.xlu0 %2577
  %2581 = vset.pattern.permute.xlu0 0
  %2582 = vperm.xlu0 %2581, %v1852
  %v2583 = vpop.permute.xlu0 %2582
  %2586 = vset.pattern.permute.xlu0 0
  %2587 = vperm.xlu0 %2586, %v1853
  %v2588 = vpop.permute.xlu0 %2587
  %2591 = vset.pattern.permute.xlu0 0
  %2592 = vperm.xlu0 %2591, %v1854
  %v2593 = vpop.permute.xlu0 %2592
  %2596 = vset.pattern.permute.xlu0 0
  %2597 = vperm.xlu0 %2596, %v1855
  %v2598 = vpop.permute.xlu0 %2597
  %2601 = vset.pattern.permute.xlu0 0
  %2602 = vperm.xlu0 %2601, %v1856
  %v2603 = vpop.permute.xlu0 %2602
  %2606 = vset.pattern.permute.xlu0 0
  %2607 = vperm.xlu0 %2606, %v1857
  %v2608 = vpop.permute.xlu0 %2607
  %2611 = vset.pattern.permute.xlu0 0
  %2612 = vperm.xlu0 %2611, %v1858
  %v2613 = vpop.permute.xlu0 %2612
  %2616 = vset.pattern.permute.xlu0 0
  %2617 = vperm.xlu0 %2616, %v1859
  %v2618 = vpop.permute.xlu0 %2617
  %2621 = vset.pattern.permute.xlu0 0
  %2622 = vperm.xlu0 %2621, %v1860
  %v2623 = vpop.permute.xlu0 %2622
  %2626 = vset.pattern.permute.xlu0 0
  %2627 = vperm.xlu0 %2626, %v1861
  %v2628 = vpop.permute.xlu0 %2627
  %2631 = vset.pattern.permute.xlu0 0
  %2632 = vperm.xlu0 %2631, %v1862
  %v2633 = vpop.permute.xlu0 %2632
  %2636 = vset.pattern.permute.xlu0 0
  %2637 = vperm.xlu0 %2636, %v1863
  %v2638 = vpop.permute.xlu0 %2637
  %2641 = vset.pattern.permute.xlu0 0
  %2642 = vperm.xlu0 %2641, %v1864
  %v2643 = vpop.permute.xlu0 %2642
  %2646 = vset.pattern.permute.xlu0 0
  %2647 = vperm.xlu0 %2646, %v1865
  %v2648 = vpop.permute.xlu0 %2647
  %2651 = vset.pattern.permute.xlu0 0
  %2652 = vperm.xlu0 %2651, %v1866
  %v2653 = vpop.permute.xlu0 %2652
  %2656 = vset.pattern.permute.xlu0 0
  %2657 = vperm.xlu0 %2656, %v1867
  %v2658 = vpop.permute.xlu0 %2657
  %2661 = vset.pattern.permute.xlu0 0
  %2662 = vperm.xlu0 %2661, %v1868
  %v2663 = vpop.permute.xlu0 %2662
  %2666 = vset.pattern.permute.xlu0 0
  %2667 = vperm.xlu0 %2666, %v1869
  %v2668 = vpop.permute.xlu0 %2667
  %2671 = vset.pattern.permute.xlu0 0
  %2672 = vperm.xlu0 %2671, %v1870
  %v2673 = vpop.permute.xlu0 %2672
  %2676 = vset.pattern.permute.xlu0 0
  %2677 = vperm.xlu0 %2676, %v1871
  %v2678 = vpop.permute.xlu0 %2677
  %2681 = vset.pattern.permute.xlu0 0
  %2682 = vperm.xlu0 %2681, %v1872
  %v2683 = vpop.permute.xlu0 %2682
  %2686 = vset.pattern.permute.xlu0 0
  %2687 = vperm.xlu0 %2686, %v1873
  %v2688 = vpop.permute.xlu0 %2687
  %2691 = vset.pattern.permute.xlu0 0
  %2692 = vperm.xlu0 %2691, %v1874
  %v2693 = vpop.permute.xlu0 %2692
  %2696 = vset.pattern.permute.xlu0 0
  %2697 = vperm.xlu0 %2696, %v1875
  %v2698 = vpop.permute.xlu0 %2697
  %2701 = vset.pattern.permute.xlu0 0
  %2702 = vperm.xlu0 %2701, %v1876
  %v2703 = vpop.permute.xlu0 %2702
  %2706 = vset.pattern.permute.xlu0 0
  %2707 = vperm.xlu0 %2706, %v1877
  %v2708 = vpop.permute.xlu0 %2707
  %2711 = vset.pattern.permute.xlu0 0
  %2712 = vperm.xlu0 %2711, %v1878
  %v2713 = vpop.permute.xlu0 %2712
  %2716 = vset.pattern.permute.xlu0 0
  %2717 = vperm.xlu0 %2716, %v1879
  %v2718 = vpop.permute.xlu0 %2717
  %2721 = vset.pattern.permute.xlu0 0
  %2722 = vperm.xlu0 %2721, %v1880
  %v2723 = vpop.permute.xlu0 %2722
  %2726 = vset.pattern.permute.xlu0 0
  %2727 = vperm.xlu0 %2726, %v1881
  %v2728 = vpop.permute.xlu0 %2727
  %2731 = vset.pattern.permute.xlu0 0
  %2732 = vperm.xlu0 %2731, %v1882
  %v2733 = vpop.permute.xlu0 %2732
  %2736 = vset.pattern.permute.xlu0 0
  %2737 = vperm.xlu0 %2736, %v1883
  %v2738 = vpop.permute.xlu0 %2737
  %2741 = vset.pattern.permute.xlu0 0
  %2742 = vperm.xlu0 %2741, %v1884
  %v2743 = vpop.permute.xlu0 %2742
  %2746 = vset.pattern.permute.xlu0 0
  %2747 = vperm.xlu0 %2746, %v1885
  %v2748 = vpop.permute.xlu0 %2747
  %2751 = vset.pattern.permute.xlu0 0
  %2752 = vperm.xlu0 %2751, %v1886
  %v2753 = vpop.permute.xlu0 %2752
  %2756 = vset.pattern.permute.xlu0 0
  %2757 = vperm.xlu0 %2756, %v1887
  %v2758 = vpop.permute.xlu0 %2757
  %2761 = vset.pattern.permute.xlu0 0
  %2762 = vperm.xlu0 %2761, %v1888
  %v2763 = vpop.permute.xlu0 %2762
  %2766 = vset.pattern.permute.xlu0 0
  %2767 = vperm.xlu0 %2766, %v1889
  %v2768 = vpop.permute.xlu0 %2767
  %2771 = vset.pattern.permute.xlu0 0
  %2772 = vperm.xlu0 %2771, %v1890
  %v2773 = vpop.permute.xlu0 %2772
  %2776 = vset.pattern.permute.xlu0 0
  %2777 = vperm.xlu0 %2776, %v1891
  %v2778 = vpop.permute.xlu0 %2777
  %2781 = vset.pattern.permute.xlu0 0
  %2782 = vperm.xlu0 %2781, %v1892
  %v2783 = vpop.permute.xlu0 %2782
  %2786 = vset.pattern.permute.xlu0 0
  %2787 = vperm.xlu0 %2786, %v1893
  %v2788 = vpop.permute.xlu0 %2787
  %2791 = vset.pattern.permute.xlu0 0
  %2792 = vperm.xlu0 %2791, %v1894
  %v2793 = vpop.permute.xlu0 %2792
  %2796 = vset.pattern.permute.xlu0 0
  %2797 = vperm.xlu0 %2796, %v1895
  %v2798 = vpop.permute.xlu0 %2797
  %2801 = vset.pattern.permute.xlu0 0
  %2802 = vperm.xlu0 %2801, %v1896
  %v2803 = vpop.permute.xlu0 %2802
  %2806 = vset.pattern.permute.xlu0 0
  %2807 = vperm.xlu0 %2806, %v1897
  %v2808 = vpop.permute.xlu0 %2807
  %2811 = vset.pattern.permute.xlu0 0
  %2812 = vperm.xlu0 %2811, %v1898
  %v2813 = vpop.permute.xlu0 %2812
  %2816 = vset.pattern.permute.xlu0 0
  %2817 = vperm.xlu0 %2816, %v1899
  %v2818 = vpop.permute.xlu0 %2817
  %2821 = vset.pattern.permute.xlu0 0
  %2822 = vperm.xlu0 %2821, %v1900
  %v2823 = vpop.permute.xlu0 %2822
  %2826 = vset.pattern.permute.xlu0 0
  %2827 = vperm.xlu0 %2826, %v1901
  %v2828 = vpop.permute.xlu0 %2827
  %2831 = vset.pattern.permute.xlu0 0
  %2832 = vperm.xlu0 %2831, %v1902
  %v2833 = vpop.permute.xlu0 %2832
  %2836 = vset.pattern.permute.xlu0 0
  %2837 = vperm.xlu0 %2836, %v1903
  %v2838 = vpop.permute.xlu0 %2837
  %2841 = vset.pattern.permute.xlu0 0
  %2842 = vperm.xlu0 %2841, %v1904
  %v2843 = vpop.permute.xlu0 %2842
  %2846 = vset.pattern.permute.xlu0 0
  %2847 = vperm.xlu0 %2846, %v1905
  %v2848 = vpop.permute.xlu0 %2847
  %2851 = vset.pattern.permute.xlu0 0
  %2852 = vperm.xlu0 %2851, %v1906
  %v2853 = vpop.permute.xlu0 %2852
  %2856 = vset.pattern.permute.xlu0 0
  %2857 = vperm.xlu0 %2856, %v1907
  %v2858 = vpop.permute.xlu0 %2857
  %2861 = vset.pattern.permute.xlu0 0
  %2862 = vperm.xlu0 %2861, %v1908
  %v2863 = vpop.permute.xlu0 %2862
  %2866 = vset.pattern.permute.xlu0 0
  %2867 = vperm.xlu0 %2866, %v1909
  %v2868 = vpop.permute.xlu0 %2867
  %2871 = vset.pattern.permute.xlu0 0
  %2872 = vperm.xlu0 %2871, %v1910
  %v2873 = vpop.permute.xlu0 %2872
  %2876 = vset.pattern.permute.xlu0 0
  %2877 = vperm.xlu0 %2876, %v1911
  %v2878 = vpop.permute.xlu0 %2877
  %2881 = vset.pattern.permute.xlu0 0
  %2882 = vperm.xlu0 %2881, %v1912
  %v2883 = vpop.permute.xlu0 %2882
  %2886 = vset.pattern.permute.xlu0 0
  %2887 = vperm.xlu0 %2886, %v1913
  %v2888 = vpop.permute.xlu0 %2887
  %2891 = vset.pattern.permute.xlu0 0
  %2892 = vperm.xlu0 %2891, %v1914
  %v2893 = vpop.permute.xlu0 %2892
  %v3091 = vunpack.c.l.b16 %v1523
  %v3092 = vunpack.c.l.b16 %v1524
  %v3093 = vunpack.c.l.b16 %v1525
  %v3094 = vunpack.c.l.b16 %v1526
  %v3095 = vunpack.c.l.b16 %v1527
  %v3096 = vunpack.c.l.b16 %v1528
  %v3097 = vunpack.c.l.b16 %v1529
  %v3098 = vunpack.c.l.b16 %v1530
  %v3099 = vunpack.c.l.b16 %v1531
  %v3100 = vunpack.c.l.b16 %v1532
  %v3101 = vunpack.c.l.b16 %v1533
  %v3102 = vunpack.c.l.b16 %v1534
  %v3103 = vunpack.c.l.b16 %v1535
  %v3104 = vunpack.c.l.b16 %v1536
  %v3105 = vunpack.c.l.b16 %v1537
  %v3106 = vunpack.c.l.b16 %v1538
  %v3107 = vunpack.c.l.b16 %v1539
  %v3108 = vunpack.c.l.b16 %v1540
  %v3109 = vunpack.c.l.b16 %v1541
  %v3110 = vunpack.c.l.b16 %v1542
  %v3111 = vunpack.c.l.b16 %v1543
  %v3112 = vunpack.c.l.b16 %v1544
  %v3113 = vunpack.c.l.b16 %v1545
  %v3114 = vunpack.c.l.b16 %v1546
  %v3115 = vunpack.c.l.b16 %v1547
  %v3116 = vunpack.c.l.b16 %v1548
  %v3117 = vunpack.c.l.b16 %v1549
  %v3118 = vunpack.c.l.b16 %v1550
  %v3119 = vunpack.c.l.b16 %v1551
  %v3120 = vunpack.c.l.b16 %v1552
  %v3121 = vunpack.c.l.b16 %v1553
  %v3122 = vunpack.c.l.b16 %v1554
  %v3123 = vunpack.c.l.b16 %v1555
  %v3124 = vunpack.c.l.b16 %v1556
  %v3125 = vunpack.c.l.b16 %v1557
  %v3126 = vunpack.c.l.b16 %v1558
  %v3127 = vunpack.c.l.b16 %v1559
  %v3128 = vunpack.c.l.b16 %v1560
  %v3129 = vunpack.c.l.b16 %v1561
  %v3130 = vunpack.c.l.b16 %v1562
  %v3131 = vunpack.c.l.b16 %v1563
  %v3132 = vunpack.c.l.b16 %v1564
  %v3133 = vunpack.c.l.b16 %v1565
  %v3134 = vunpack.c.l.b16 %v1566
  %v3135 = vunpack.c.l.b16 %v1567
  %v3136 = vunpack.c.l.b16 %v1568
  %v3137 = vunpack.c.l.b16 %v1569
  %v3138 = vunpack.c.l.b16 %v1570
  %v3139 = vunpack.c.l.b16 %v1571
  %v3140 = vunpack.c.l.b16 %v1572
  %v3141 = vunpack.c.l.b16 %v1573
  %v3142 = vunpack.c.l.b16 %v1574
  %v3143 = vunpack.c.l.b16 %v1575
  %v3144 = vunpack.c.l.b16 %v1576
  %v3145 = vunpack.c.l.b16 %v1577
  %v3146 = vunpack.c.l.b16 %v1578
  %v3147 = vunpack.c.l.b16 %v1579
  %v3148 = vunpack.c.l.b16 %v1580
  %v3149 = vunpack.c.l.b16 %v1581
  %v3150 = vunpack.c.l.b16 %v1582
  %v3151 = vunpack.c.l.b16 %v1583
  %v3152 = vunpack.c.l.b16 %v1584
  %v3153 = vunpack.c.l.b16 %v1585
  %v3154 = vunpack.c.l.b16 %v1586
  %v3155 = vunpack.c.l.b16 %v1587
  %v3156 = vunpack.c.l.b16 %v1588
  %v3157 = vunpack.c.l.b16 %v1589
  %v3158 = vunpack.c.l.b16 %v1590
  %v3159 = vunpack.c.l.b16 %v1591
  %v3160 = vunpack.c.l.b16 %v1592
  %v3161 = vunpack.c.l.b16 %v1593
  %v3162 = vunpack.c.l.b16 %v1594
  %v3163 = vunpack.c.l.b16 %v1595
  %v3164 = vunpack.c.l.b16 %v1596
  %v3165 = vunpack.c.l.b16 %v1597
  %v3166 = vunpack.c.l.b16 %v1598
  %v3167 = vunpack.c.l.b16 %v1599
  %v3168 = vunpack.c.l.b16 %v1600
  %v3169 = vunpack.c.l.b16 %v1601
  %v3170 = vunpack.c.l.b16 %v1602
  %v3171 = vunpack.c.l.b16 %v1603
  %v3172 = vunpack.c.l.b16 %v1604
  %v3173 = vunpack.c.l.b16 %v1605
  %v3174 = vunpack.c.l.b16 %v1606
  %v3175 = vunpack.c.l.b16 %v1607
  %v3176 = vunpack.c.l.b16 %v1608
  %v3177 = vunpack.c.l.b16 %v1609
  %v3178 = vunpack.c.l.b16 %v1610
  %v3179 = vunpack.c.l.b16 %v1611
  %v3180 = vunpack.c.l.b16 %v1612
  %v3181 = vunpack.c.l.b16 %v1613
  %v3182 = vunpack.c.l.b16 %v1614
  %v3183 = vunpack.c.l.b16 %v1615
  %v3184 = vunpack.c.l.b16 %v1616
  %v3185 = vunpack.c.l.b16 %v1617
  %v3186 = vunpack.c.l.b16 %v1618
  %v3187 = vunpack.c.l.b16 %v1619
  %v3188 = vunpack.c.l.b16 %v1620
  %v3189 = vunpack.c.l.b16 %v1621
  %v3190 = vunpack.c.l.b16 %v1622
  %v3191 = vunpack.c.l.b16 %v1623
  %v3192 = vunpack.c.l.b16 %v1624
  %v3193 = vunpack.c.l.b16 %v1625
  %v3194 = vunpack.c.l.b16 %v1626
  %v3195 = vunpack.c.l.b16 %v1627
  %v3196 = vunpack.c.l.b16 %v1628
  %v3197 = vunpack.c.l.b16 %v1629
  %v3198 = vunpack.c.l.b16 %v1630
  %v3199 = vunpack.c.l.b16 %v1631
  %v3200 = vunpack.c.l.b16 %v1632
  %v3201 = vunpack.c.l.b16 %v1633
  %v3202 = vunpack.c.l.b16 %v1634
  %v3203 = vunpack.c.l.b16 %v1635
  %v3204 = vunpack.c.l.b16 %v1636
  %v3205 = vunpack.c.l.b16 %v1637
  %v3206 = vunpack.c.l.b16 %v1638
  %v3207 = vunpack.c.l.b16 %v1639
  %v3208 = vunpack.c.l.b16 %v1640
  %v3209 = vunpack.c.l.b16 %v1641
  %v3210 = vunpack.c.l.b16 %v1642
  %v3211 = vunpack.c.l.b16 %v1643
  %v3212 = vunpack.c.l.b16 %v1644
  %v3213 = vunpack.c.l.b16 %v1645
  %v3214 = vunpack.c.l.b16 %v1646
  %v3215 = vunpack.c.l.b16 %v1647
  %v3216 = vunpack.c.l.b16 %v1648
  %v3217 = vunpack.c.l.b16 %v1649
  %v3218 = vunpack.c.l.b16 %v1650
  %v3219 = vunpack.c.l.b16 %v1651
  %v3220 = vunpack.c.l.b16 %v1652
  %v3221 = vunpack.c.l.b16 %v1653
  %v3222 = vunpack.c.l.b16 %v1654
  %v3223 = vunpack.c.l.b16 %v1655
  %v3224 = vunpack.c.l.b16 %v1656
  %v3225 = vunpack.c.l.b16 %v1657
  %v3226 = vunpack.c.l.b16 %v1658
  %v3227 = vunpack.c.l.b16 %v1659
  %v3228 = vunpack.c.l.b16 %v1660
  %v3229 = vunpack.c.l.b16 %v1661
  %v3230 = vunpack.c.l.b16 %v1662
  %v3231 = vunpack.c.l.b16 %v1663
  %v3232 = vunpack.c.l.b16 %v1664
  %v3233 = vunpack.c.l.b16 %v1665
  %v3234 = vunpack.c.l.b16 %v1666
  %v3235 = vunpack.c.l.b16 %v1667
  %v3236 = vunpack.c.l.b16 %v1668
  %v3237 = vunpack.c.l.b16 %v1669
  %v3238 = vunpack.c.l.b16 %v1670
  %v3239 = vunpack.c.l.b16 %v1671
  %v3240 = vunpack.c.l.b16 %v1672
  %v3241 = vunpack.c.l.b16 %v1673
  %v3242 = vunpack.c.l.b16 %v1674
  %v3243 = vunpack.c.l.b16 %v1675
  %v3244 = vunpack.c.l.b16 %v1676
  %v3245 = vunpack.c.l.b16 %v1677
  %v3246 = vunpack.c.l.b16 %v1678
  %v3247 = vunpack.c.l.b16 %v1679
  %v3248 = vunpack.c.l.b16 %v1680
  %v3249 = vunpack.c.l.b16 %v1681
  %v3250 = vunpack.c.l.b16 %v1682
  %v3251 = vunpack.c.l.b16 %v1683
  %v3252 = vunpack.c.l.b16 %v1684
  %v3253 = vunpack.c.l.b16 %v1685
  %v3254 = vunpack.c.l.b16 %v1686
  %v3255 = vunpack.c.l.b16 %v1687
  %v3256 = vunpack.c.l.b16 %v1688
  %v3257 = vunpack.c.l.b16 %v1689
  %v3258 = vunpack.c.l.b16 %v1690
  %v3259 = vunpack.c.l.b16 %v1691
  %v3260 = vunpack.c.l.b16 %v1692
  %v3261 = vunpack.c.l.b16 %v1693
  %v3262 = vunpack.c.l.b16 %v1694
  %v3263 = vunpack.c.l.b16 %v1695
  %v3264 = vunpack.c.l.b16 %v1696
  %v3265 = vunpack.c.l.b16 %v1697
  %v3266 = vunpack.c.l.b16 %v1698
  %v3267 = vunpack.c.l.b16 %v1699
  %v3268 = vunpack.c.l.b16 %v1700
  %v3269 = vunpack.c.l.b16 %v1701
  %v3270 = vunpack.c.l.b16 %v1702
  %v3271 = vunpack.c.l.b16 %v1703
  %v3272 = vunpack.c.l.b16 %v1704
  %v3273 = vunpack.c.l.b16 %v1705
  %v3274 = vunpack.c.l.b16 %v1706
  %v3275 = vunpack.c.l.b16 %v1707
  %v3276 = vunpack.c.l.b16 %v1708
  %v3277 = vunpack.c.l.b16 %v1709
  %v3278 = vunpack.c.l.b16 %v1710
  %v3279 = vunpack.c.l.b16 %v1711
  %v3280 = vunpack.c.l.b16 %v1712
  %v3281 = vunpack.c.l.b16 %v1713
  %v3282 = vunpack.c.l.b16 %v1714
  %v3283 = vunpack.c.l.b16 %v1715
  %v3284 = vunpack.c.l.b16 %v1716
  %v3285 = vunpack.c.l.b16 %v1717
  %v3286 = vunpack.c.l.b16 %v1718
  %v3287 = vpack.c.b16 %v3092, %v3091
  %v3288 = vpack.c.b16 %v3094, %v3093
  %v3289 = vpack.c.b16 %v3096, %v3095
  %v3290 = vpack.c.b16 %v3098, %v3097
  %v3291 = vpack.c.b16 %v3100, %v3099
  %v3292 = vpack.c.b16 %v3102, %v3101
  %v3293 = vpack.c.b16 %v3104, %v3103
  %v3294 = vpack.c.b16 %v3106, %v3105
  %v3295 = vpack.c.b16 %v3108, %v3107
  %v3296 = vpack.c.b16 %v3110, %v3109
  %v3297 = vpack.c.b16 %v3112, %v3111
  %v3298 = vpack.c.b16 %v3114, %v3113
  %v3299 = vpack.c.b16 %v3116, %v3115
  %v3300 = vpack.c.b16 %v3118, %v3117
  %v3301 = vpack.c.b16 %v3120, %v3119
  %v3302 = vpack.c.b16 %v3122, %v3121
  %v3303 = vpack.c.b16 %v3124, %v3123
  %v3304 = vpack.c.b16 %v3126, %v3125
  %v3305 = vpack.c.b16 %v3128, %v3127
  %v3306 = vpack.c.b16 %v3130, %v3129
  %v3307 = vpack.c.b16 %v3132, %v3131
  %v3308 = vpack.c.b16 %v3134, %v3133
  %v3309 = vpack.c.b16 %v3136, %v3135
  %v3310 = vpack.c.b16 %v3138, %v3137
  %v3311 = vpack.c.b16 %v3140, %v3139
  %v3312 = vpack.c.b16 %v3142, %v3141
  %v3313 = vpack.c.b16 %v3144, %v3143
  %v3314 = vpack.c.b16 %v3146, %v3145
  %v3315 = vpack.c.b16 %v3148, %v3147
  %v3316 = vpack.c.b16 %v3150, %v3149
  %v3317 = vpack.c.b16 %v3152, %v3151
  %v3318 = vpack.c.b16 %v3154, %v3153
  %v3319 = vpack.c.b16 %v3156, %v3155
  %v3320 = vpack.c.b16 %v3158, %v3157
  %v3321 = vpack.c.b16 %v3160, %v3159
  %v3322 = vpack.c.b16 %v3162, %v3161
  %v3323 = vpack.c.b16 %v3164, %v3163
  %v3324 = vpack.c.b16 %v3166, %v3165
  %v3325 = vpack.c.b16 %v3168, %v3167
  %v3326 = vpack.c.b16 %v3170, %v3169
  %v3327 = vpack.c.b16 %v3172, %v3171
  %v3328 = vpack.c.b16 %v3174, %v3173
  %v3329 = vpack.c.b16 %v3176, %v3175
  %v3330 = vpack.c.b16 %v3178, %v3177
  %v3331 = vpack.c.b16 %v3180, %v3179
  %v3332 = vpack.c.b16 %v3182, %v3181
  %v3333 = vpack.c.b16 %v3184, %v3183
  %v3334 = vpack.c.b16 %v3186, %v3185
  %v3335 = vpack.c.b16 %v3188, %v3187
  %v3336 = vpack.c.b16 %v3190, %v3189
  %v3337 = vpack.c.b16 %v3192, %v3191
  %v3338 = vpack.c.b16 %v3194, %v3193
  %v3339 = vpack.c.b16 %v3196, %v3195
  %v3340 = vpack.c.b16 %v3198, %v3197
  %v3341 = vpack.c.b16 %v3200, %v3199
  %v3342 = vpack.c.b16 %v3202, %v3201
  %v3343 = vpack.c.b16 %v3204, %v3203
  %v3344 = vpack.c.b16 %v3206, %v3205
  %v3345 = vpack.c.b16 %v3208, %v3207
  %v3346 = vpack.c.b16 %v3210, %v3209
  %v3347 = vpack.c.b16 %v3212, %v3211
  %v3348 = vpack.c.b16 %v3214, %v3213
  %v3349 = vpack.c.b16 %v3216, %v3215
  %v3350 = vpack.c.b16 %v3218, %v3217
  %v3351 = vpack.c.b16 %v3220, %v3219
  %v3352 = vpack.c.b16 %v3222, %v3221
  %v3353 = vpack.c.b16 %v3224, %v3223
  %v3354 = vpack.c.b16 %v3226, %v3225
  %v3355 = vpack.c.b16 %v3228, %v3227
  %v3356 = vpack.c.b16 %v3230, %v3229
  %v3357 = vpack.c.b16 %v3232, %v3231
  %v3358 = vpack.c.b16 %v3234, %v3233
  %v3359 = vpack.c.b16 %v3236, %v3235
  %v3360 = vpack.c.b16 %v3238, %v3237
  %v3361 = vpack.c.b16 %v3240, %v3239
  %v3362 = vpack.c.b16 %v3242, %v3241
  %v3363 = vpack.c.b16 %v3244, %v3243
  %v3364 = vpack.c.b16 %v3246, %v3245
  %v3365 = vpack.c.b16 %v3248, %v3247
  %v3366 = vpack.c.b16 %v3250, %v3249
  %v3367 = vpack.c.b16 %v3252, %v3251
  %v3368 = vpack.c.b16 %v3254, %v3253
  %v3369 = vpack.c.b16 %v3256, %v3255
  %v3370 = vpack.c.b16 %v3258, %v3257
  %v3371 = vpack.c.b16 %v3260, %v3259
  %v3372 = vpack.c.b16 %v3262, %v3261
  %v3373 = vpack.c.b16 %v3264, %v3263
  %v3374 = vpack.c.b16 %v3266, %v3265
  %v3375 = vpack.c.b16 %v3268, %v3267
  %v3376 = vpack.c.b16 %v3270, %v3269
  %v3377 = vpack.c.b16 %v3272, %v3271
  %v3378 = vpack.c.b16 %v3274, %v3273
  %v3379 = vpack.c.b16 %v3276, %v3275
  %v3380 = vpack.c.b16 %v3278, %v3277
  %v3381 = vpack.c.b16 %v3280, %v3279
  %v3382 = vpack.c.b16 %v3282, %v3281
  %v3383 = vpack.c.b16 %v3284, %v3283
  %v3384 = vpack.c.b16 %v3286, %v3285
  %v3386 = vsel %vm1317, %v3287, 0
  %v3389 = vsel %vm1317, %v3288, 0
  %v3392 = vsel %vm1317, %v3289, 0
  %v3395 = vsel %vm1317, %v3290, 0
  %v3398 = vsel %vm1317, %v3291, 0
  %v3401 = vsel %vm1317, %v3292, 0
  %v3404 = vsel %vm1317, %v3293, 0
  %v3407 = vsel %vm1317, %v3294, 0
  %v3410 = vsel %vm1317, %v3295, 0
  %v3413 = vsel %vm1317, %v3296, 0
  %v3416 = vsel %vm1317, %v3297, 0
  %v3419 = vsel %vm1317, %v3298, 0
  %v3422 = vsel %vm1317, %v3299, 0
  %v3425 = vsel %vm1317, %v3300, 0
  %v3428 = vsel %vm1317, %v3301, 0
  %v3431 = vsel %vm1317, %v3302, 0
  %v3434 = vsel %vm1317, %v3303, 0
  %v3437 = vsel %vm1317, %v3304, 0
  %v3440 = vsel %vm1317, %v3305, 0
  %v3443 = vsel %vm1317, %v3306, 0
  %v3446 = vsel %vm1317, %v3307, 0
  %v3449 = vsel %vm1317, %v3308, 0
  %v3452 = vsel %vm1317, %v3309, 0
  %v3455 = vsel %vm1317, %v3310, 0
  %v3458 = vsel %vm1317, %v3311, 0
  %v3461 = vsel %vm1317, %v3312, 0
  %v3464 = vsel %vm1317, %v3313, 0
  %v3467 = vsel %vm1317, %v3314, 0
  %v3470 = vsel %vm1317, %v3315, 0
  %v3473 = vsel %vm1317, %v3316, 0
  %v3476 = vsel %vm1317, %v3317, 0
  %v3479 = vsel %vm1317, %v3318, 0
  %v3482 = vsel %vm1317, %v3319, 0
  %v3485 = vsel %vm1317, %v3320, 0
  %v3488 = vsel %vm1317, %v3321, 0
  %v3491 = vsel %vm1317, %v3322, 0
  %v3494 = vsel %vm1317, %v3323, 0
  %v3497 = vsel %vm1317, %v3324, 0
  %v3500 = vsel %vm1317, %v3325, 0
  %v3503 = vsel %vm1317, %v3326, 0
  %v3506 = vsel %vm1317, %v3327, 0
  %v3509 = vsel %vm1317, %v3328, 0
  %v3512 = vsel %vm1317, %v3329, 0
  %v3515 = vsel %vm1317, %v3330, 0
  %v3518 = vsel %vm1317, %v3331, 0
  %v3521 = vsel %vm1317, %v3332, 0
  %v3524 = vsel %vm1317, %v3333, 0
  %v3527 = vsel %vm1317, %v3334, 0
  %v3530 = vsel %vm1317, %v3335, 0
  %v3533 = vsel %vm1317, %v3336, 0
  %v3536 = vsel %vm1317, %v3337, 0
  %v3539 = vsel %vm1317, %v3338, 0
  %v3542 = vsel %vm1317, %v3339, 0
  %v3545 = vsel %vm1317, %v3340, 0
  %v3548 = vsel %vm1317, %v3341, 0
  %v3551 = vsel %vm1317, %v3342, 0
  %v3554 = vsel %vm1317, %v3343, 0
  %v3557 = vsel %vm1317, %v3344, 0
  %v3560 = vsel %vm1317, %v3345, 0
  %v3563 = vsel %vm1317, %v3346, 0
  %v3566 = vsel %vm1317, %v3347, 0
  %v3569 = vsel %vm1317, %v3348, 0
  %v3572 = vsel %vm1317, %v3349, 0
  %v3575 = vsel %vm1317, %v3350, 0
  %v3578 = vsel %vm1317, %v3351, 0
  %v3581 = vsel %vm1317, %v3352, 0
  %v3584 = vsel %vm1317, %v3353, 0
  %v3587 = vsel %vm1317, %v3354, 0
  %v3590 = vsel %vm1317, %v3355, 0
  %v3593 = vsel %vm1317, %v3356, 0
  %v3596 = vsel %vm1317, %v3357, 0
  %v3599 = vsel %vm1317, %v3358, 0
  %v3602 = vsel %vm1317, %v3359, 0
  %v3605 = vsel %vm1317, %v3360, 0
  %v3608 = vsel %vm1317, %v3361, 0
  %v3611 = vsel %vm1317, %v3362, 0
  %v3614 = vsel %vm1317, %v3363, 0
  %v3617 = vsel %vm1317, %v3364, 0
  %v3620 = vsel %vm1317, %v3365, 0
  %v3623 = vsel %vm1317, %v3366, 0
  %v3626 = vsel %vm1317, %v3367, 0
  %v3629 = vsel %vm1317, %v3368, 0
  %v3632 = vsel %vm1317, %v3369, 0
  %v3635 = vsel %vm1317, %v3370, 0
  %v3638 = vsel %vm1317, %v3371, 0
  %v3641 = vsel %vm1317, %v3372, 0
  %v3644 = vsel %vm1317, %v3373, 0
  %v3647 = vsel %vm1317, %v3374, 0
  %v3650 = vsel %vm1317, %v3375, 0
  %v3653 = vsel %vm1317, %v3376, 0
  %v3656 = vsel %vm1317, %v3377, 0
  %v3659 = vsel %vm1317, %v3378, 0
  %v3662 = vsel %vm1317, %v3379, 0
  %v3665 = vsel %vm1317, %v3380, 0
  %v3668 = vsel %vm1317, %v3381, 0
  %v3671 = vsel %vm1317, %v3382, 0
  %v3674 = vsel %vm1317, %v3383, 0
  %v3677 = vsel %vm1317, %v3384, 0
  %vm3679 = vcmask 1043456
  %v3681 = vsel %vm3679, %v1522, 0
  %3683 = vmatprep.subr.bf16.mxu0 0
  %3684 = vmatpush1.bf16.msra.mxu0 %v1521
  %3685 = vmatprep.subr.bf16.mxu0 0
  %3686 = vmatpush1.bf16.msra.mxu0 %v3681
  %3687 = vmatprep.subr.bf16.mxu0 0
  %3688 = vmatpush1.bf16.msra.mxu0 0
  %3689 = vmatprep.subr.bf16.mxu0 0
  %3690 = vmatpush1.bf16.msra.mxu0 0
  %3691 = vmatprep.subr.bf16.mxu0 0
  %3692 = vmatpush1.bf16.msra.mxu0 0
  %3693 = vmatprep.subr.bf16.mxu0 0
  %3694 = vmatpush1.bf16.msra.mxu0 0
  %3695 = vmatprep.subr.bf16.mxu0 0
  %3696 = vmatpush1.bf16.msra.mxu0 0
  %3697 = vmatprep.subr.bf16.mxu0 0
  %3698 = vmatpush1.bf16.msra.mxu0 0
  %3699 = vmatprep.subr.bf16.mxu0 0
  %3700 = vmatpush1.bf16.msra.mxu0 0
  %3701 = vmatprep.subr.bf16.mxu0 0
  %3702 = vmatpush1.bf16.msra.mxu0 0
  %3703 = vmatprep.subr.bf16.mxu0 0
  %3704 = vmatpush1.bf16.msra.mxu0 0
  %3705 = vmatprep.subr.bf16.mxu0 0
  %3706 = vmatpush1.bf16.msra.mxu0 0
  %3707 = vmatprep.subr.bf16.mxu0 0
  %3708 = vmatpush1.bf16.msra.mxu0 0
  %3709 = vmatprep.subr.bf16.mxu0 0
  %3710 = vmatpush1.bf16.msra.mxu0 0
  %3711 = vmatprep.subr.bf16.mxu0 0
  %3712 = vmatpush1.bf16.msra.mxu0 0
  %3713 = vmatprep.subr.bf16.mxu0 0
  %3714 = vmatpush1.bf16.msra.mxu0 0
  %3715 = vmatprep.mubr.bf16.mxu0 0
  %3716 = vmatmul.mubr.bf16.gmra.mrb[0].mxu0 %v3386
  %v3717 = vpop.f32.mrb[0].mxu0
  %v3718 = vadd.f32 %v1918, %v3717
  %v3719 = vpop.f32.mrb[0].mxu0
  %v3720 = vpop.f32.mrb[0].mxu0
  %v3721 = vadd.f32 %v1923, %v3720
  %v3722 = vpop.f32.mrb[0].mxu0
  %3723 = vmatprep.mubr.bf16.mxu0 0
  %3724 = vmatmul.mubr.bf16.gmra.mrb[0].mxu0 %v3389
  %v3725 = vpop.f32.mrb[0].mxu0
  %v3726 = vadd.f32 %v1928, %v3725
  %v3727 = vpop.f32.mrb[0].mxu0
  %v3728 = vpop.f32.mrb[0].mxu0
  %v3729 = vadd.f32 %v1933, %v3728
  %v3730 = vpop.f32.mrb[0].mxu0
  %3731 = vmatprep.mubr.bf16.mxu0 0
  %3732 = vmatmul.mubr.bf16.gmra.mrb[0].mxu0 %v3392
  %v3733 = vpop.f32.mrb[0].mxu0
  %v3734 = vadd.f32 %v1938, %v3733
  %v3735 = vpop.f32.mrb[0].mxu0
  %v3736 = vpop.f32.mrb[0].mxu0
  %v3737 = vadd.f32 %v1943, %v3736
  %v3738 = vpop.f32.mrb[0].mxu0
  %3739 = vmatprep.mubr.bf16.mxu0 0
  %3740 = vmatmul.mubr.bf16.gmra.mrb[0].mxu0 %v3395
  %v3741 = vpop.f32.mrb[0].mxu0
  %v3742 = vadd.f32 %v1948, %v3741
  %v3743 = vpop.f32.mrb[0].mxu0
  %v3744 = vpop.f32.mrb[0].mxu0
  %v3745 = vadd.f32 %v1953, %v3744
  %v3746 = vpop.f32.mrb[0].mxu0
  %3747 = vmatprep.mubr.bf16.mxu0 0
  %3748 = vmatmul.mubr.bf16.gmra.mrb[0].mxu0 %v3398
  %v3749 = vpop.f32.mrb[0].mxu0
  %v3750 = vadd.f32 %v1958, %v3749
  %v3751 = vpop.f32.mrb[0].mxu0
  %v3752 = vpop.f32.mrb[0].mxu0
  %v3753 = vadd.f32 %v1963, %v3752
  %v3754 = vpop.f32.mrb[0].mxu0
  %3755 = vmatprep.mubr.bf16.mxu0 0
  %3756 = vmatmul.mubr.bf16.gmra.mrb[0].mxu0 %v3401
  %v3757 = vpop.f32.mrb[0].mxu0
  %v3758 = vadd.f32 %v1968, %v3757
  %v3759 = vpop.f32.mrb[0].mxu0
  %v3760 = vpop.f32.mrb[0].mxu0
  %v3761 = vadd.f32 %v1973, %v3760
  %v3762 = vpop.f32.mrb[0].mxu0
  %3763 = vmatprep.mubr.bf16.mxu0 0
  %3764 = vmatmul.mubr.bf16.gmra.mrb[0].mxu0 %v3404
  %v3765 = vpop.f32.mrb[0].mxu0
  %v3766 = vadd.f32 %v1978, %v3765
  %v3767 = vpop.f32.mrb[0].mxu0
  %v3768 = vpop.f32.mrb[0].mxu0
  %v3769 = vadd.f32 %v1983, %v3768
  %v3770 = vpop.f32.mrb[0].mxu0
  %3771 = vmatprep.mubr.bf16.mxu0 0
  %3772 = vmatmul.mubr.bf16.gmra.mrb[0].mxu0 %v3407
  %v3773 = vpop.f32.mrb[0].mxu0
  %v3774 = vadd.f32 %v1988, %v3773
  %v3775 = vpop.f32.mrb[0].mxu0
  %v3776 = vpop.f32.mrb[0].mxu0
  %v3777 = vadd.f32 %v1993, %v3776
  %v3778 = vpop.f32.mrb[0].mxu0
  %3779 = vmatprep.mubr.bf16.mxu0 0
  %3780 = vmatmul.mubr.bf16.gmra.mrb[0].mxu0 %v3410
  %v3781 = vpop.f32.mrb[0].mxu0
  %v3782 = vadd.f32 %v1998, %v3781
  %v3783 = vpop.f32.mrb[0].mxu0
  %v3784 = vpop.f32.mrb[0].mxu0
  %v3785 = vadd.f32 %v2003, %v3784
  %v3786 = vpop.f32.mrb[0].mxu0
  %3787 = vmatprep.mubr.bf16.mxu0 0
  %3788 = vmatmul.mubr.bf16.gmra.mrb[0].mxu0 %v3413
  %v3789 = vpop.f32.mrb[0].mxu0
  %v3790 = vadd.f32 %v2008, %v3789
  %v3791 = vpop.f32.mrb[0].mxu0
  %v3792 = vpop.f32.mrb[0].mxu0
  %v3793 = vadd.f32 %v2013, %v3792
  %v3794 = vpop.f32.mrb[0].mxu0
  %3795 = vmatprep.mubr.bf16.mxu0 0
  %3796 = vmatmul.mubr.bf16.gmra.mrb[0].mxu0 %v3416
  %v3797 = vpop.f32.mrb[0].mxu0
  %v3798 = vadd.f32 %v2018, %v3797
  %v3799 = vpop.f32.mrb[0].mxu0
  %v3800 = vpop.f32.mrb[0].mxu0
  %v3801 = vadd.f32 %v2023, %v3800
  %v3802 = vpop.f32.mrb[0].mxu0
  %3803 = vmatprep.mubr.bf16.mxu0 0
  %3804 = vmatmul.mubr.bf16.gmra.mrb[0].mxu0 %v3419
  %v3805 = vpop.f32.mrb[0].mxu0
  %v3806 = vadd.f32 %v2028, %v3805
  %v3807 = vpop.f32.mrb[0].mxu0
  %v3808 = vpop.f32.mrb[0].mxu0
  %v3809 = vadd.f32 %v2033, %v3808
  %v3810 = vpop.f32.mrb[0].mxu0
  %3811 = vmatprep.mubr.bf16.mxu0 0
  %3812 = vmatmul.mubr.bf16.gmra.mrb[0].mxu0 %v3422
  %v3813 = vpop.f32.mrb[0].mxu0
  %v3814 = vadd.f32 %v2038, %v3813
  %v3815 = vpop.f32.mrb[0].mxu0
  %v3816 = vpop.f32.mrb[0].mxu0
  %v3817 = vadd.f32 %v2043, %v3816
  %v3818 = vpop.f32.mrb[0].mxu0
  %3819 = vmatprep.mubr.bf16.mxu0 0
  %3820 = vmatmul.mubr.bf16.gmra.mrb[0].mxu0 %v3425
  %v3821 = vpop.f32.mrb[0].mxu0
  %v3822 = vadd.f32 %v2048, %v3821
  %v3823 = vpop.f32.mrb[0].mxu0
  %v3824 = vpop.f32.mrb[0].mxu0
  %v3825 = vadd.f32 %v2053, %v3824
  %v3826 = vpop.f32.mrb[0].mxu0
  %3827 = vmatprep.mubr.bf16.mxu0 0
  %3828 = vmatmul.mubr.bf16.gmra.mrb[0].mxu0 %v3428
  %v3829 = vpop.f32.mrb[0].mxu0
  %v3830 = vadd.f32 %v2058, %v3829
  %v3831 = vpop.f32.mrb[0].mxu0
  %v3832 = vpop.f32.mrb[0].mxu0
  %v3833 = vadd.f32 %v2063, %v3832
  %v3834 = vpop.f32.mrb[0].mxu0
  %3835 = vmatprep.mubr.bf16.mxu0 0
  %3836 = vmatmul.mubr.bf16.gmra.mrb[0].mxu0 %v3431
  %v3837 = vpop.f32.mrb[0].mxu0
  %v3838 = vadd.f32 %v2068, %v3837
  %v3839 = vpop.f32.mrb[0].mxu0
  %v3840 = vpop.f32.mrb[0].mxu0
  %v3841 = vadd.f32 %v2073, %v3840
  %v3842 = vpop.f32.mrb[0].mxu0
  %3843 = vmatprep.mubr.bf16.mxu0 0
  %3844 = vmatmul.mubr.bf16.gmra.mrb[0].mxu0 %v3434
  %v3845 = vpop.f32.mrb[0].mxu0
  %v3846 = vadd.f32 %v2078, %v3845
  %v3847 = vpop.f32.mrb[0].mxu0
  %v3848 = vpop.f32.mrb[0].mxu0
  %v3849 = vadd.f32 %v2083, %v3848
  %v3850 = vpop.f32.mrb[0].mxu0
  %3851 = vmatprep.mubr.bf16.mxu0 0
  %3852 = vmatmul.mubr.bf16.gmra.mrb[0].mxu0 %v3437
  %v3853 = vpop.f32.mrb[0].mxu0
  %v3854 = vadd.f32 %v2088, %v3853
  %v3855 = vpop.f32.mrb[0].mxu0
  %v3856 = vpop.f32.mrb[0].mxu0
  %v3857 = vadd.f32 %v2093, %v3856
  %v3858 = vpop.f32.mrb[0].mxu0
  %3859 = vmatprep.mubr.bf16.mxu0 0
  %3860 = vmatmul.mubr.bf16.gmra.mrb[0].mxu0 %v3440
  %v3861 = vpop.f32.mrb[0].mxu0
  %v3862 = vadd.f32 %v2098, %v3861
  %v3863 = vpop.f32.mrb[0].mxu0
  %v3864 = vpop.f32.mrb[0].mxu0
  %v3865 = vadd.f32 %v2103, %v3864
  %v3866 = vpop.f32.mrb[0].mxu0
  %3867 = vmatprep.mubr.bf16.mxu0 0
  %3868 = vmatmul.mubr.bf16.gmra.mrb[0].mxu0 %v3443
  %v3869 = vpop.f32.mrb[0].mxu0
  %v3870 = vadd.f32 %v2108, %v3869
  %v3871 = vpop.f32.mrb[0].mxu0
  %v3872 = vpop.f32.mrb[0].mxu0
  %v3873 = vadd.f32 %v2113, %v3872
  %v3874 = vpop.f32.mrb[0].mxu0
  %3875 = vmatprep.mubr.bf16.mxu0 0
  %3876 = vmatmul.mubr.bf16.gmra.mrb[0].mxu0 %v3446
  %v3877 = vpop.f32.mrb[0].mxu0
  %v3878 = vadd.f32 %v2118, %v3877
  %v3879 = vpop.f32.mrb[0].mxu0
  %v3880 = vpop.f32.mrb[0].mxu0
  %v3881 = vadd.f32 %v2123, %v3880
  %v3882 = vpop.f32.mrb[0].mxu0
  %3883 = vmatprep.mubr.bf16.mxu0 0
  %3884 = vmatmul.mubr.bf16.gmra.mrb[0].mxu0 %v3449
  %v3885 = vpop.f32.mrb[0].mxu0
  %v3886 = vadd.f32 %v2128, %v3885
  %v3887 = vpop.f32.mrb[0].mxu0
  %v3888 = vpop.f32.mrb[0].mxu0
  %v3889 = vadd.f32 %v2133, %v3888
  %v3890 = vpop.f32.mrb[0].mxu0
  %3891 = vmatprep.mubr.bf16.mxu0 0
  %3892 = vmatmul.mubr.bf16.gmra.mrb[0].mxu0 %v3452
  %v3893 = vpop.f32.mrb[0].mxu0
  %v3894 = vadd.f32 %v2138, %v3893
  %v3895 = vpop.f32.mrb[0].mxu0
  %v3896 = vpop.f32.mrb[0].mxu0
  %v3897 = vadd.f32 %v2143, %v3896
  %v3898 = vpop.f32.mrb[0].mxu0
  %3899 = vmatprep.mubr.bf16.mxu0 0
  %3900 = vmatmul.mubr.bf16.gmra.mrb[0].mxu0 %v3455
  %v3901 = vpop.f32.mrb[0].mxu0
  %v3902 = vadd.f32 %v2148, %v3901
  %v3903 = vpop.f32.mrb[0].mxu0
  %v3904 = vpop.f32.mrb[0].mxu0
  %v3905 = vadd.f32 %v2153, %v3904
  %v3906 = vpop.f32.mrb[0].mxu0
  %3907 = vmatprep.mubr.bf16.mxu0 0
  %3908 = vmatmul.mubr.bf16.gmra.mrb[0].mxu0 %v3458
  %v3909 = vpop.f32.mrb[0].mxu0
  %v3910 = vadd.f32 %v2158, %v3909
  %v3911 = vpop.f32.mrb[0].mxu0
  %v3912 = vpop.f32.mrb[0].mxu0
  %v3913 = vadd.f32 %v2163, %v3912
  %v3914 = vpop.f32.mrb[0].mxu0
  %3915 = vmatprep.mubr.bf16.mxu0 0
  %3916 = vmatmul.mubr.bf16.gmra.mrb[0].mxu0 %v3461
  %v3917 = vpop.f32.mrb[0].mxu0
  %v3918 = vadd.f32 %v2168, %v3917
  %v3919 = vpop.f32.mrb[0].mxu0
  %v3920 = vpop.f32.mrb[0].mxu0
  %v3921 = vadd.f32 %v2173, %v3920
  %v3922 = vpop.f32.mrb[0].mxu0
  %3923 = vmatprep.mubr.bf16.mxu0 0
  %3924 = vmatmul.mubr.bf16.gmra.mrb[0].mxu0 %v3464
  %v3925 = vpop.f32.mrb[0].mxu0
  %v3926 = vadd.f32 %v2178, %v3925
  %v3927 = vpop.f32.mrb[0].mxu0
  %v3928 = vpop.f32.mrb[0].mxu0
  %v3929 = vadd.f32 %v2183, %v3928
  %v3930 = vpop.f32.mrb[0].mxu0
  %3931 = vmatprep.mubr.bf16.mxu0 0
  %3932 = vmatmul.mubr.bf16.gmra.mrb[0].mxu0 %v3467
  %v3933 = vpop.f32.mrb[0].mxu0
  %v3934 = vadd.f32 %v2188, %v3933
  %v3935 = vpop.f32.mrb[0].mxu0
  %v3936 = vpop.f32.mrb[0].mxu0
  %v3937 = vadd.f32 %v2193, %v3936
  %v3938 = vpop.f32.mrb[0].mxu0
  %3939 = vmatprep.mubr.bf16.mxu0 0
  %3940 = vmatmul.mubr.bf16.gmra.mrb[0].mxu0 %v3470
  %v3941 = vpop.f32.mrb[0].mxu0
  %v3942 = vadd.f32 %v2198, %v3941
  %v3943 = vpop.f32.mrb[0].mxu0
  %v3944 = vpop.f32.mrb[0].mxu0
  %v3945 = vadd.f32 %v2203, %v3944
  %v3946 = vpop.f32.mrb[0].mxu0
  %3947 = vmatprep.mubr.bf16.mxu0 0
  %3948 = vmatmul.mubr.bf16.gmra.mrb[0].mxu0 %v3473
  %v3949 = vpop.f32.mrb[0].mxu0
  %v3950 = vadd.f32 %v2208, %v3949
  %v3951 = vpop.f32.mrb[0].mxu0
  %v3952 = vpop.f32.mrb[0].mxu0
  %v3953 = vadd.f32 %v2213, %v3952
  %v3954 = vpop.f32.mrb[0].mxu0
  %3955 = vmatprep.mubr.bf16.mxu0 0
  %3956 = vmatmul.mubr.bf16.gmra.mrb[0].mxu0 %v3476
  %v3957 = vpop.f32.mrb[0].mxu0
  %v3958 = vadd.f32 %v2218, %v3957
  %v3959 = vpop.f32.mrb[0].mxu0
  %v3960 = vpop.f32.mrb[0].mxu0
  %v3961 = vadd.f32 %v2223, %v3960
  %v3962 = vpop.f32.mrb[0].mxu0
  %3963 = vmatprep.mubr.bf16.mxu0 0
  %3964 = vmatmul.mubr.bf16.gmra.mrb[0].mxu0 %v3479
  %v3965 = vpop.f32.mrb[0].mxu0
  %v3966 = vadd.f32 %v2228, %v3965
  %v3967 = vpop.f32.mrb[0].mxu0
  %v3968 = vpop.f32.mrb[0].mxu0
  %v3969 = vadd.f32 %v2233, %v3968
  %v3970 = vpop.f32.mrb[0].mxu0
  %3971 = vmatprep.mubr.bf16.mxu0 0
  %3972 = vmatmul.mubr.bf16.gmra.mrb[0].mxu0 %v3482
  %v3973 = vpop.f32.mrb[0].mxu0
  %v3974 = vadd.f32 %v2238, %v3973
  %v3975 = vpop.f32.mrb[0].mxu0
  %v3976 = vpop.f32.mrb[0].mxu0
  %v3977 = vadd.f32 %v2243, %v3976
  %v3978 = vpop.f32.mrb[0].mxu0
  %3979 = vmatprep.mubr.bf16.mxu0 0
  %3980 = vmatmul.mubr.bf16.gmra.mrb[0].mxu0 %v3485
  %v3981 = vpop.f32.mrb[0].mxu0
  %v3982 = vadd.f32 %v2248, %v3981
  %v3983 = vpop.f32.mrb[0].mxu0
  %v3984 = vpop.f32.mrb[0].mxu0
  %v3985 = vadd.f32 %v2253, %v3984
  %v3986 = vpop.f32.mrb[0].mxu0
  %3987 = vmatprep.mubr.bf16.mxu0 0
  %3988 = vmatmul.mubr.bf16.gmra.mrb[0].mxu0 %v3488
  %v3989 = vpop.f32.mrb[0].mxu0
  %v3990 = vadd.f32 %v2258, %v3989
  %v3991 = vpop.f32.mrb[0].mxu0
  %v3992 = vpop.f32.mrb[0].mxu0
  %v3993 = vadd.f32 %v2263, %v3992
  %v3994 = vpop.f32.mrb[0].mxu0
  %3995 = vmatprep.mubr.bf16.mxu0 0
  %3996 = vmatmul.mubr.bf16.gmra.mrb[0].mxu0 %v3491
  %v3997 = vpop.f32.mrb[0].mxu0
  %v3998 = vadd.f32 %v2268, %v3997
  %v3999 = vpop.f32.mrb[0].mxu0
  %v4000 = vpop.f32.mrb[0].mxu0
  %v4001 = vadd.f32 %v2273, %v4000
  %v4002 = vpop.f32.mrb[0].mxu0
  %4003 = vmatprep.mubr.bf16.mxu0 0
  %4004 = vmatmul.mubr.bf16.gmra.mrb[0].mxu0 %v3494
  %v4005 = vpop.f32.mrb[0].mxu0
  %v4006 = vadd.f32 %v2278, %v4005
  %v4007 = vpop.f32.mrb[0].mxu0
  %v4008 = vpop.f32.mrb[0].mxu0
  %v4009 = vadd.f32 %v2283, %v4008
  %v4010 = vpop.f32.mrb[0].mxu0
  %4011 = vmatprep.mubr.bf16.mxu0 0
  %4012 = vmatmul.mubr.bf16.gmra.mrb[0].mxu0 %v3497
  %v4013 = vpop.f32.mrb[0].mxu0
  %v4014 = vadd.f32 %v2288, %v4013
  %v4015 = vpop.f32.mrb[0].mxu0
  %v4016 = vpop.f32.mrb[0].mxu0
  %v4017 = vadd.f32 %v2293, %v4016
  %v4018 = vpop.f32.mrb[0].mxu0
  %4019 = vmatprep.mubr.bf16.mxu0 0
  %4020 = vmatmul.mubr.bf16.gmra.mrb[0].mxu0 %v3500
  %v4021 = vpop.f32.mrb[0].mxu0
  %v4022 = vadd.f32 %v2298, %v4021
  %v4023 = vpop.f32.mrb[0].mxu0
  %v4024 = vpop.f32.mrb[0].mxu0
  %v4025 = vadd.f32 %v2303, %v4024
  %v4026 = vpop.f32.mrb[0].mxu0
  %4027 = vmatprep.mubr.bf16.mxu0 0
  %4028 = vmatmul.mubr.bf16.gmra.mrb[0].mxu0 %v3503
  %v4029 = vpop.f32.mrb[0].mxu0
  %v4030 = vadd.f32 %v2308, %v4029
  %v4031 = vpop.f32.mrb[0].mxu0
  %v4032 = vpop.f32.mrb[0].mxu0
  %v4033 = vadd.f32 %v2313, %v4032
  %v4034 = vpop.f32.mrb[0].mxu0
  %4035 = vmatprep.mubr.bf16.mxu0 0
  %4036 = vmatmul.mubr.bf16.gmra.mrb[0].mxu0 %v3506
  %v4037 = vpop.f32.mrb[0].mxu0
  %v4038 = vadd.f32 %v2318, %v4037
  %v4039 = vpop.f32.mrb[0].mxu0
  %v4040 = vpop.f32.mrb[0].mxu0
  %v4041 = vadd.f32 %v2323, %v4040
  %v4042 = vpop.f32.mrb[0].mxu0
  %4043 = vmatprep.mubr.bf16.mxu0 0
  %4044 = vmatmul.mubr.bf16.gmra.mrb[0].mxu0 %v3509
  %v4045 = vpop.f32.mrb[0].mxu0
  %v4046 = vadd.f32 %v2328, %v4045
  %v4047 = vpop.f32.mrb[0].mxu0
  %v4048 = vpop.f32.mrb[0].mxu0
  %v4049 = vadd.f32 %v2333, %v4048
  %v4050 = vpop.f32.mrb[0].mxu0
  %4051 = vmatprep.mubr.bf16.mxu0 0
  %4052 = vmatmul.mubr.bf16.gmra.mrb[0].mxu0 %v3512
  %v4053 = vpop.f32.mrb[0].mxu0
  %v4054 = vadd.f32 %v2338, %v4053
  %v4055 = vpop.f32.mrb[0].mxu0
  %v4056 = vpop.f32.mrb[0].mxu0
  %v4057 = vadd.f32 %v2343, %v4056
  %v4058 = vpop.f32.mrb[0].mxu0
  %4059 = vmatprep.mubr.bf16.mxu0 0
  %4060 = vmatmul.mubr.bf16.gmra.mrb[0].mxu0 %v3515
  %v4061 = vpop.f32.mrb[0].mxu0
  %v4062 = vadd.f32 %v2348, %v4061
  %v4063 = vpop.f32.mrb[0].mxu0
  %v4064 = vpop.f32.mrb[0].mxu0
  %v4065 = vadd.f32 %v2353, %v4064
  %v4066 = vpop.f32.mrb[0].mxu0
  %4067 = vmatprep.mubr.bf16.mxu0 0
  %4068 = vmatmul.mubr.bf16.gmra.mrb[0].mxu0 %v3518
  %v4069 = vpop.f32.mrb[0].mxu0
  %v4070 = vadd.f32 %v2358, %v4069
  %v4071 = vpop.f32.mrb[0].mxu0
  %v4072 = vpop.f32.mrb[0].mxu0
  %v4073 = vadd.f32 %v2363, %v4072
  %v4074 = vpop.f32.mrb[0].mxu0
  %4075 = vmatprep.mubr.bf16.mxu0 0
  %4076 = vmatmul.mubr.bf16.gmra.mrb[0].mxu0 %v3521
  %v4077 = vpop.f32.mrb[0].mxu0
  %v4078 = vadd.f32 %v2368, %v4077
  %v4079 = vpop.f32.mrb[0].mxu0
  %v4080 = vpop.f32.mrb[0].mxu0
  %v4081 = vadd.f32 %v2373, %v4080
  %v4082 = vpop.f32.mrb[0].mxu0
  %4083 = vmatprep.mubr.bf16.mxu0 0
  %4084 = vmatmul.mubr.bf16.gmra.mrb[0].mxu0 %v3524
  %v4085 = vpop.f32.mrb[0].mxu0
  %v4086 = vadd.f32 %v2378, %v4085
  %v4087 = vpop.f32.mrb[0].mxu0
  %v4088 = vpop.f32.mrb[0].mxu0
  %v4089 = vadd.f32 %v2383, %v4088
  %v4090 = vpop.f32.mrb[0].mxu0
  %4091 = vmatprep.mubr.bf16.mxu0 0
  %4092 = vmatmul.mubr.bf16.gmra.mrb[0].mxu0 %v3527
  %v4093 = vpop.f32.mrb[0].mxu0
  %v4094 = vadd.f32 %v2388, %v4093
  %v4095 = vpop.f32.mrb[0].mxu0
  %v4096 = vpop.f32.mrb[0].mxu0
  %v4097 = vadd.f32 %v2393, %v4096
  %v4098 = vpop.f32.mrb[0].mxu0
  %4099 = vmatprep.mubr.bf16.mxu0 0
  %4100 = vmatmul.mubr.bf16.gmra.mrb[0].mxu0 %v3530
  %v4101 = vpop.f32.mrb[0].mxu0
  %v4102 = vadd.f32 %v2398, %v4101
  %v4103 = vpop.f32.mrb[0].mxu0
  %v4104 = vpop.f32.mrb[0].mxu0
  %v4105 = vadd.f32 %v2403, %v4104
  %v4106 = vpop.f32.mrb[0].mxu0
  %4107 = vmatprep.mubr.bf16.mxu0 0
  %4108 = vmatmul.mubr.bf16.gmra.mrb[0].mxu0 %v3533
  %v4109 = vpop.f32.mrb[0].mxu0
  %v4110 = vadd.f32 %v2408, %v4109
  %v4111 = vpop.f32.mrb[0].mxu0
  %v4112 = vpop.f32.mrb[0].mxu0
  %v4113 = vadd.f32 %v2413, %v4112
  %v4114 = vpop.f32.mrb[0].mxu0
  %4115 = vmatprep.mubr.bf16.mxu0 0
  %4116 = vmatmul.mubr.bf16.gmra.mrb[0].mxu0 %v3536
  %v4117 = vpop.f32.mrb[0].mxu0
  %v4118 = vadd.f32 %v2418, %v4117
  %v4119 = vpop.f32.mrb[0].mxu0
  %v4120 = vpop.f32.mrb[0].mxu0
  %v4121 = vadd.f32 %v2423, %v4120
  %v4122 = vpop.f32.mrb[0].mxu0
  %4123 = vmatprep.mubr.bf16.mxu0 0
  %4124 = vmatmul.mubr.bf16.gmra.mrb[0].mxu0 %v3539
  %v4125 = vpop.f32.mrb[0].mxu0
  %v4126 = vadd.f32 %v2428, %v4125
  %v4127 = vpop.f32.mrb[0].mxu0
  %v4128 = vpop.f32.mrb[0].mxu0
  %v4129 = vadd.f32 %v2433, %v4128
  %v4130 = vpop.f32.mrb[0].mxu0
  %4131 = vmatprep.mubr.bf16.mxu0 0
  %4132 = vmatmul.mubr.bf16.gmra.mrb[0].mxu0 %v3542
  %v4133 = vpop.f32.mrb[0].mxu0
  %v4134 = vadd.f32 %v2438, %v4133
  %v4135 = vpop.f32.mrb[0].mxu0
  %v4136 = vpop.f32.mrb[0].mxu0
  %v4137 = vadd.f32 %v2443, %v4136
  %v4138 = vpop.f32.mrb[0].mxu0
  %4139 = vmatprep.mubr.bf16.mxu0 0
  %4140 = vmatmul.mubr.bf16.gmra.mrb[0].mxu0 %v3545
  %v4141 = vpop.f32.mrb[0].mxu0
  %v4142 = vadd.f32 %v2448, %v4141
  %v4143 = vpop.f32.mrb[0].mxu0
  %v4144 = vpop.f32.mrb[0].mxu0
  %v4145 = vadd.f32 %v2453, %v4144
  %v4146 = vpop.f32.mrb[0].mxu0
  %4147 = vmatprep.mubr.bf16.mxu0 0
  %4148 = vmatmul.mubr.bf16.gmra.mrb[0].mxu0 %v3548
  %v4149 = vpop.f32.mrb[0].mxu0
  %v4150 = vadd.f32 %v2458, %v4149
  %v4151 = vpop.f32.mrb[0].mxu0
  %v4152 = vpop.f32.mrb[0].mxu0
  %v4153 = vadd.f32 %v2463, %v4152
  %v4154 = vpop.f32.mrb[0].mxu0
  %4155 = vmatprep.mubr.bf16.mxu0 0
  %4156 = vmatmul.mubr.bf16.gmra.mrb[0].mxu0 %v3551
  %v4157 = vpop.f32.mrb[0].mxu0
  %v4158 = vadd.f32 %v2468, %v4157
  %v4159 = vpop.f32.mrb[0].mxu0
  %v4160 = vpop.f32.mrb[0].mxu0
  %v4161 = vadd.f32 %v2473, %v4160
  %v4162 = vpop.f32.mrb[0].mxu0
  %4163 = vmatprep.mubr.bf16.mxu0 0
  %4164 = vmatmul.mubr.bf16.gmra.mrb[0].mxu0 %v3554
  %v4165 = vpop.f32.mrb[0].mxu0
  %v4166 = vadd.f32 %v2478, %v4165
  %v4167 = vpop.f32.mrb[0].mxu0
  %v4168 = vpop.f32.mrb[0].mxu0
  %v4169 = vadd.f32 %v2483, %v4168
  %v4170 = vpop.f32.mrb[0].mxu0
  %4171 = vmatprep.mubr.bf16.mxu0 0
  %4172 = vmatmul.mubr.bf16.gmra.mrb[0].mxu0 %v3557
  %v4173 = vpop.f32.mrb[0].mxu0
  %v4174 = vadd.f32 %v2488, %v4173
  %v4175 = vpop.f32.mrb[0].mxu0
  %v4176 = vpop.f32.mrb[0].mxu0
  %v4177 = vadd.f32 %v2493, %v4176
  %v4178 = vpop.f32.mrb[0].mxu0
  %4179 = vmatprep.mubr.bf16.mxu0 0
  %4180 = vmatmul.mubr.bf16.gmra.mrb[0].mxu0 %v3560
  %v4181 = vpop.f32.mrb[0].mxu0
  %v4182 = vadd.f32 %v2498, %v4181
  %v4183 = vpop.f32.mrb[0].mxu0
  %v4184 = vpop.f32.mrb[0].mxu0
  %v4185 = vadd.f32 %v2503, %v4184
  %v4186 = vpop.f32.mrb[0].mxu0
  %4187 = vmatprep.mubr.bf16.mxu0 0
  %4188 = vmatmul.mubr.bf16.gmra.mrb[0].mxu0 %v3563
  %v4189 = vpop.f32.mrb[0].mxu0
  %v4190 = vadd.f32 %v2508, %v4189
  %v4191 = vpop.f32.mrb[0].mxu0
  %v4192 = vpop.f32.mrb[0].mxu0
  %v4193 = vadd.f32 %v2513, %v4192
  %v4194 = vpop.f32.mrb[0].mxu0
  %4195 = vmatprep.mubr.bf16.mxu0 0
  %4196 = vmatmul.mubr.bf16.gmra.mrb[0].mxu0 %v3566
  %v4197 = vpop.f32.mrb[0].mxu0
  %v4198 = vadd.f32 %v2518, %v4197
  %v4199 = vpop.f32.mrb[0].mxu0
  %v4200 = vpop.f32.mrb[0].mxu0
  %v4201 = vadd.f32 %v2523, %v4200
  %v4202 = vpop.f32.mrb[0].mxu0
  %4203 = vmatprep.mubr.bf16.mxu0 0
  %4204 = vmatmul.mubr.bf16.gmra.mrb[0].mxu0 %v3569
  %v4205 = vpop.f32.mrb[0].mxu0
  %v4206 = vadd.f32 %v2528, %v4205
  %v4207 = vpop.f32.mrb[0].mxu0
  %v4208 = vpop.f32.mrb[0].mxu0
  %v4209 = vadd.f32 %v2533, %v4208
  %v4210 = vpop.f32.mrb[0].mxu0
  %4211 = vmatprep.mubr.bf16.mxu0 0
  %4212 = vmatmul.mubr.bf16.gmra.mrb[0].mxu0 %v3572
  %v4213 = vpop.f32.mrb[0].mxu0
  %v4214 = vadd.f32 %v2538, %v4213
  %v4215 = vpop.f32.mrb[0].mxu0
  %v4216 = vpop.f32.mrb[0].mxu0
  %v4217 = vadd.f32 %v2543, %v4216
  %v4218 = vpop.f32.mrb[0].mxu0
  %4219 = vmatprep.mubr.bf16.mxu0 0
  %4220 = vmatmul.mubr.bf16.gmra.mrb[0].mxu0 %v3575
  %v4221 = vpop.f32.mrb[0].mxu0
  %v4222 = vadd.f32 %v2548, %v4221
  %v4223 = vpop.f32.mrb[0].mxu0
  %v4224 = vpop.f32.mrb[0].mxu0
  %v4225 = vadd.f32 %v2553, %v4224
  %v4226 = vpop.f32.mrb[0].mxu0
  %4227 = vmatprep.mubr.bf16.mxu0 0
  %4228 = vmatmul.mubr.bf16.gmra.mrb[0].mxu0 %v3578
  %v4229 = vpop.f32.mrb[0].mxu0
  %v4230 = vadd.f32 %v2558, %v4229
  %v4231 = vpop.f32.mrb[0].mxu0
  %v4232 = vpop.f32.mrb[0].mxu0
  %v4233 = vadd.f32 %v2563, %v4232
  %v4234 = vpop.f32.mrb[0].mxu0
  %4235 = vmatprep.mubr.bf16.mxu0 0
  %4236 = vmatmul.mubr.bf16.gmra.mrb[0].mxu0 %v3581
  %v4237 = vpop.f32.mrb[0].mxu0
  %v4238 = vadd.f32 %v2568, %v4237
  %v4239 = vpop.f32.mrb[0].mxu0
  %v4240 = vpop.f32.mrb[0].mxu0
  %v4241 = vadd.f32 %v2573, %v4240
  %v4242 = vpop.f32.mrb[0].mxu0
  %4243 = vmatprep.mubr.bf16.mxu0 0
  %4244 = vmatmul.mubr.bf16.gmra.mrb[0].mxu0 %v3584
  %v4245 = vpop.f32.mrb[0].mxu0
  %v4246 = vadd.f32 %v2578, %v4245
  %v4247 = vpop.f32.mrb[0].mxu0
  %v4248 = vpop.f32.mrb[0].mxu0
  %v4249 = vadd.f32 %v2583, %v4248
  %v4250 = vpop.f32.mrb[0].mxu0
  %4251 = vmatprep.mubr.bf16.mxu0 0
  %4252 = vmatmul.mubr.bf16.gmra.mrb[0].mxu0 %v3587
  %v4253 = vpop.f32.mrb[0].mxu0
  %v4254 = vadd.f32 %v2588, %v4253
  %v4255 = vpop.f32.mrb[0].mxu0
  %v4256 = vpop.f32.mrb[0].mxu0
  %v4257 = vadd.f32 %v2593, %v4256
  %v4258 = vpop.f32.mrb[0].mxu0
  %4259 = vmatprep.mubr.bf16.mxu0 0
  %4260 = vmatmul.mubr.bf16.gmra.mrb[0].mxu0 %v3590
  %v4261 = vpop.f32.mrb[0].mxu0
  %v4262 = vadd.f32 %v2598, %v4261
  %v4263 = vpop.f32.mrb[0].mxu0
  %v4264 = vpop.f32.mrb[0].mxu0
  %v4265 = vadd.f32 %v2603, %v4264
  %v4266 = vpop.f32.mrb[0].mxu0
  %4267 = vmatprep.mubr.bf16.mxu0 0
  %4268 = vmatmul.mubr.bf16.gmra.mrb[0].mxu0 %v3593
  %v4269 = vpop.f32.mrb[0].mxu0
  %v4270 = vadd.f32 %v2608, %v4269
  %v4271 = vpop.f32.mrb[0].mxu0
  %v4272 = vpop.f32.mrb[0].mxu0
  %v4273 = vadd.f32 %v2613, %v4272
  %v4274 = vpop.f32.mrb[0].mxu0
  %4275 = vmatprep.mubr.bf16.mxu0 0
  %4276 = vmatmul.mubr.bf16.gmra.mrb[0].mxu0 %v3596
  %v4277 = vpop.f32.mrb[0].mxu0
  %v4278 = vadd.f32 %v2618, %v4277
  %v4279 = vpop.f32.mrb[0].mxu0
  %v4280 = vpop.f32.mrb[0].mxu0
  %v4281 = vadd.f32 %v2623, %v4280
  %v4282 = vpop.f32.mrb[0].mxu0
  %4283 = vmatprep.mubr.bf16.mxu0 0
  %4284 = vmatmul.mubr.bf16.gmra.mrb[0].mxu0 %v3599
  %v4285 = vpop.f32.mrb[0].mxu0
  %v4286 = vadd.f32 %v2628, %v4285
  %v4287 = vpop.f32.mrb[0].mxu0
  %v4288 = vpop.f32.mrb[0].mxu0
  %v4289 = vadd.f32 %v2633, %v4288
  %v4290 = vpop.f32.mrb[0].mxu0
  %4291 = vmatprep.mubr.bf16.mxu0 0
  %4292 = vmatmul.mubr.bf16.gmra.mrb[0].mxu0 %v3602
  %v4293 = vpop.f32.mrb[0].mxu0
  %v4294 = vadd.f32 %v2638, %v4293
  %v4295 = vpop.f32.mrb[0].mxu0
  %v4296 = vpop.f32.mrb[0].mxu0
  %v4297 = vadd.f32 %v2643, %v4296
  %v4298 = vpop.f32.mrb[0].mxu0
  %4299 = vmatprep.mubr.bf16.mxu0 0
  %4300 = vmatmul.mubr.bf16.gmra.mrb[0].mxu0 %v3605
  %v4301 = vpop.f32.mrb[0].mxu0
  %v4302 = vadd.f32 %v2648, %v4301
  %v4303 = vpop.f32.mrb[0].mxu0
  %v4304 = vpop.f32.mrb[0].mxu0
  %v4305 = vadd.f32 %v2653, %v4304
  %v4306 = vpop.f32.mrb[0].mxu0
  %4307 = vmatprep.mubr.bf16.mxu0 0
  %4308 = vmatmul.mubr.bf16.gmra.mrb[0].mxu0 %v3608
  %v4309 = vpop.f32.mrb[0].mxu0
  %v4310 = vadd.f32 %v2658, %v4309
  %v4311 = vpop.f32.mrb[0].mxu0
  %v4312 = vpop.f32.mrb[0].mxu0
  %v4313 = vadd.f32 %v2663, %v4312
  %v4314 = vpop.f32.mrb[0].mxu0
  %4315 = vmatprep.mubr.bf16.mxu0 0
  %4316 = vmatmul.mubr.bf16.gmra.mrb[0].mxu0 %v3611
  %v4317 = vpop.f32.mrb[0].mxu0
  %v4318 = vadd.f32 %v2668, %v4317
  %v4319 = vpop.f32.mrb[0].mxu0
  %v4320 = vpop.f32.mrb[0].mxu0
  %v4321 = vadd.f32 %v2673, %v4320
  %v4322 = vpop.f32.mrb[0].mxu0
  %4323 = vmatprep.mubr.bf16.mxu0 0
  %4324 = vmatmul.mubr.bf16.gmra.mrb[0].mxu0 %v3614
  %v4325 = vpop.f32.mrb[0].mxu0
  %v4326 = vadd.f32 %v2678, %v4325
  %v4327 = vpop.f32.mrb[0].mxu0
  %v4328 = vpop.f32.mrb[0].mxu0
  %v4329 = vadd.f32 %v2683, %v4328
  %v4330 = vpop.f32.mrb[0].mxu0
  %4331 = vmatprep.mubr.bf16.mxu0 0
  %4332 = vmatmul.mubr.bf16.gmra.mrb[0].mxu0 %v3617
  %v4333 = vpop.f32.mrb[0].mxu0
  %v4334 = vadd.f32 %v2688, %v4333
  %v4335 = vpop.f32.mrb[0].mxu0
  %v4336 = vpop.f32.mrb[0].mxu0
  %v4337 = vadd.f32 %v2693, %v4336
  %v4338 = vpop.f32.mrb[0].mxu0
  %4339 = vmatprep.mubr.bf16.mxu0 0
  %4340 = vmatmul.mubr.bf16.gmra.mrb[0].mxu0 %v3620
  %v4341 = vpop.f32.mrb[0].mxu0
  %v4342 = vadd.f32 %v2698, %v4341
  %v4343 = vpop.f32.mrb[0].mxu0
  %v4344 = vpop.f32.mrb[0].mxu0
  %v4345 = vadd.f32 %v2703, %v4344
  %v4346 = vpop.f32.mrb[0].mxu0
  %4347 = vmatprep.mubr.bf16.mxu0 0
  %4348 = vmatmul.mubr.bf16.gmra.mrb[0].mxu0 %v3623
  %v4349 = vpop.f32.mrb[0].mxu0
  %v4350 = vadd.f32 %v2708, %v4349
  %v4351 = vpop.f32.mrb[0].mxu0
  %v4352 = vpop.f32.mrb[0].mxu0
  %v4353 = vadd.f32 %v2713, %v4352
  %v4354 = vpop.f32.mrb[0].mxu0
  %4355 = vmatprep.mubr.bf16.mxu0 0
  %4356 = vmatmul.mubr.bf16.gmra.mrb[0].mxu0 %v3626
  %v4357 = vpop.f32.mrb[0].mxu0
  %v4358 = vadd.f32 %v2718, %v4357
  %v4359 = vpop.f32.mrb[0].mxu0
  %v4360 = vpop.f32.mrb[0].mxu0
  %v4361 = vadd.f32 %v2723, %v4360
  %v4362 = vpop.f32.mrb[0].mxu0
  %4363 = vmatprep.mubr.bf16.mxu0 0
  %4364 = vmatmul.mubr.bf16.gmra.mrb[0].mxu0 %v3629
  %v4365 = vpop.f32.mrb[0].mxu0
  %v4366 = vadd.f32 %v2728, %v4365
  %v4367 = vpop.f32.mrb[0].mxu0
  %v4368 = vpop.f32.mrb[0].mxu0
  %v4369 = vadd.f32 %v2733, %v4368
  %v4370 = vpop.f32.mrb[0].mxu0
  %4371 = vmatprep.mubr.bf16.mxu0 0
  %4372 = vmatmul.mubr.bf16.gmra.mrb[0].mxu0 %v3632
  %v4373 = vpop.f32.mrb[0].mxu0
  %v4374 = vadd.f32 %v2738, %v4373
  %v4375 = vpop.f32.mrb[0].mxu0
  %v4376 = vpop.f32.mrb[0].mxu0
  %v4377 = vadd.f32 %v2743, %v4376
  %v4378 = vpop.f32.mrb[0].mxu0
  %4379 = vmatprep.mubr.bf16.mxu0 0
  %4380 = vmatmul.mubr.bf16.gmra.mrb[0].mxu0 %v3635
  %v4381 = vpop.f32.mrb[0].mxu0
  %v4382 = vadd.f32 %v2748, %v4381
  %v4383 = vpop.f32.mrb[0].mxu0
  %v4384 = vpop.f32.mrb[0].mxu0
  %v4385 = vadd.f32 %v2753, %v4384
  %v4386 = vpop.f32.mrb[0].mxu0
  %4387 = vmatprep.mubr.bf16.mxu0 0
  %4388 = vmatmul.mubr.bf16.gmra.mrb[0].mxu0 %v3638
  %v4389 = vpop.f32.mrb[0].mxu0
  %v4390 = vadd.f32 %v2758, %v4389
  %v4391 = vpop.f32.mrb[0].mxu0
  %v4392 = vpop.f32.mrb[0].mxu0
  %v4393 = vadd.f32 %v2763, %v4392
  %v4394 = vpop.f32.mrb[0].mxu0
  %4395 = vmatprep.mubr.bf16.mxu0 0
  %4396 = vmatmul.mubr.bf16.gmra.mrb[0].mxu0 %v3641
  %v4397 = vpop.f32.mrb[0].mxu0
  %v4398 = vadd.f32 %v2768, %v4397
  %v4399 = vpop.f32.mrb[0].mxu0
  %v4400 = vpop.f32.mrb[0].mxu0
  %v4401 = vadd.f32 %v2773, %v4400
  %v4402 = vpop.f32.mrb[0].mxu0
  %4403 = vmatprep.mubr.bf16.mxu0 0
  %4404 = vmatmul.mubr.bf16.gmra.mrb[0].mxu0 %v3644
  %v4405 = vpop.f32.mrb[0].mxu0
  %v4406 = vadd.f32 %v2778, %v4405
  %v4407 = vpop.f32.mrb[0].mxu0
  %v4408 = vpop.f32.mrb[0].mxu0
  %v4409 = vadd.f32 %v2783, %v4408
  %v4410 = vpop.f32.mrb[0].mxu0
  %4411 = vmatprep.mubr.bf16.mxu0 0
  %4412 = vmatmul.mubr.bf16.gmra.mrb[0].mxu0 %v3647
  %v4413 = vpop.f32.mrb[0].mxu0
  %v4414 = vadd.f32 %v2788, %v4413
  %v4415 = vpop.f32.mrb[0].mxu0
  %v4416 = vpop.f32.mrb[0].mxu0
  %v4417 = vadd.f32 %v2793, %v4416
  %v4418 = vpop.f32.mrb[0].mxu0
  %4419 = vmatprep.mubr.bf16.mxu0 0
  %4420 = vmatmul.mubr.bf16.gmra.mrb[0].mxu0 %v3650
  %v4421 = vpop.f32.mrb[0].mxu0
  %v4422 = vadd.f32 %v2798, %v4421
  %v4423 = vpop.f32.mrb[0].mxu0
  %v4424 = vpop.f32.mrb[0].mxu0
  %v4425 = vadd.f32 %v2803, %v4424
  %v4426 = vpop.f32.mrb[0].mxu0
  %4427 = vmatprep.mubr.bf16.mxu0 0
  %4428 = vmatmul.mubr.bf16.gmra.mrb[0].mxu0 %v3653
  %v4429 = vpop.f32.mrb[0].mxu0
  %v4430 = vadd.f32 %v2808, %v4429
  %v4431 = vpop.f32.mrb[0].mxu0
  %v4432 = vpop.f32.mrb[0].mxu0
  %v4433 = vadd.f32 %v2813, %v4432
  %v4434 = vpop.f32.mrb[0].mxu0
  %4435 = vmatprep.mubr.bf16.mxu0 0
  %4436 = vmatmul.mubr.bf16.gmra.mrb[0].mxu0 %v3656
  %v4437 = vpop.f32.mrb[0].mxu0
  %v4438 = vadd.f32 %v2818, %v4437
  %v4439 = vpop.f32.mrb[0].mxu0
  %v4440 = vpop.f32.mrb[0].mxu0
  %v4441 = vadd.f32 %v2823, %v4440
  %v4442 = vpop.f32.mrb[0].mxu0
  %4443 = vmatprep.mubr.bf16.mxu0 0
  %4444 = vmatmul.mubr.bf16.gmra.mrb[0].mxu0 %v3659
  %v4445 = vpop.f32.mrb[0].mxu0
  %v4446 = vadd.f32 %v2828, %v4445
  %v4447 = vpop.f32.mrb[0].mxu0
  %v4448 = vpop.f32.mrb[0].mxu0
  %v4449 = vadd.f32 %v2833, %v4448
  %v4450 = vpop.f32.mrb[0].mxu0
  %4451 = vmatprep.mubr.bf16.mxu0 0
  %4452 = vmatmul.mubr.bf16.gmra.mrb[0].mxu0 %v3662
  %v4453 = vpop.f32.mrb[0].mxu0
  %v4454 = vadd.f32 %v2838, %v4453
  %v4455 = vpop.f32.mrb[0].mxu0
  %v4456 = vpop.f32.mrb[0].mxu0
  %v4457 = vadd.f32 %v2843, %v4456
  %v4458 = vpop.f32.mrb[0].mxu0
  %4459 = vmatprep.mubr.bf16.mxu0 0
  %4460 = vmatmul.mubr.bf16.gmra.mrb[0].mxu0 %v3665
  %v4461 = vpop.f32.mrb[0].mxu0
  %v4462 = vadd.f32 %v2848, %v4461
  %v4463 = vpop.f32.mrb[0].mxu0
  %v4464 = vpop.f32.mrb[0].mxu0
  %v4465 = vadd.f32 %v2853, %v4464
  %v4466 = vpop.f32.mrb[0].mxu0
  %4467 = vmatprep.mubr.bf16.mxu0 0
  %4468 = vmatmul.mubr.bf16.gmra.mrb[0].mxu0 %v3668
  %v4469 = vpop.f32.mrb[0].mxu0
  %v4470 = vadd.f32 %v2858, %v4469
  %v4471 = vpop.f32.mrb[0].mxu0
  %v4472 = vpop.f32.mrb[0].mxu0
  %v4473 = vadd.f32 %v2863, %v4472
  %v4474 = vpop.f32.mrb[0].mxu0
  %4475 = vmatprep.mubr.bf16.mxu0 0
  %4476 = vmatmul.mubr.bf16.gmra.mrb[0].mxu0 %v3671
  %v4477 = vpop.f32.mrb[0].mxu0
  %v4478 = vadd.f32 %v2868, %v4477
  %v4479 = vpop.f32.mrb[0].mxu0
  %v4480 = vpop.f32.mrb[0].mxu0
  %v4481 = vadd.f32 %v2873, %v4480
  %v4482 = vpop.f32.mrb[0].mxu0
  %4483 = vmatprep.mubr.bf16.mxu0 0
  %4484 = vmatmul.mubr.bf16.gmra.mrb[0].mxu0 %v3674
  %v4485 = vpop.f32.mrb[0].mxu0
  %v4486 = vadd.f32 %v2878, %v4485
  %v4487 = vpop.f32.mrb[0].mxu0
  %v4488 = vpop.f32.mrb[0].mxu0
  %v4489 = vadd.f32 %v2883, %v4488
  %v4490 = vpop.f32.mrb[0].mxu0
  %4491 = vmatprep.mubr.bf16.mxu0 0
  %4492 = vmatmul.mubr.bf16.gmra.mrb[0].mxu0 %v3677
  %v4493 = vpop.f32.mrb[0].mxu0
  %v4494 = vadd.f32 %v2888, %v4493
  %v4495 = vpop.f32.mrb[0].mxu0
  %v4496 = vpop.f32.mrb[0].mxu0
  %v4497 = vadd.f32 %v2893, %v4496
  %v4498 = vpop.f32.mrb[0].mxu0
  %4499 = vdwg.mxu0
  %v4500 = vmul.f32 %v3718, 0.5
  %v4501 = vmul.f32 %v3721, 0.5
  %v4502 = vmul.f32 %v3726, 0.5
  %v4503 = vmul.f32 %v3729, 0.5
  %v4504 = vmul.f32 %v3734, 0.5
  %v4505 = vmul.f32 %v3737, 0.5
  %v4506 = vmul.f32 %v3742, 0.5
  %v4507 = vmul.f32 %v3745, 0.5
  %v4508 = vmul.f32 %v3750, 0.5
  %v4509 = vmul.f32 %v3753, 0.5
  %v4510 = vmul.f32 %v3758, 0.5
  %v4511 = vmul.f32 %v3761, 0.5
  %v4512 = vmul.f32 %v3766, 0.5
  %v4513 = vmul.f32 %v3769, 0.5
  %v4514 = vmul.f32 %v3774, 0.5
  %v4515 = vmul.f32 %v3777, 0.5
  %v4516 = vmul.f32 %v3782, 0.5
  %v4517 = vmul.f32 %v3785, 0.5
  %v4518 = vmul.f32 %v3790, 0.5
  %v4519 = vmul.f32 %v3793, 0.5
  %v4520 = vmul.f32 %v3798, 0.5
  %v4521 = vmul.f32 %v3801, 0.5
  %v4522 = vmul.f32 %v3806, 0.5
  %v4523 = vmul.f32 %v3809, 0.5
  %v4524 = vmul.f32 %v3814, 0.5
  %v4525 = vmul.f32 %v3817, 0.5
  %v4526 = vmul.f32 %v3822, 0.5
  %v4527 = vmul.f32 %v3825, 0.5
  %v4528 = vmul.f32 %v3830, 0.5
  %v4529 = vmul.f32 %v3833, 0.5
  %v4530 = vmul.f32 %v3838, 0.5
  %v4531 = vmul.f32 %v3841, 0.5
  %v4532 = vmul.f32 %v3846, 0.5
  %v4533 = vmul.f32 %v3849, 0.5
  %v4534 = vmul.f32 %v3854, 0.5
  %v4535 = vmul.f32 %v3857, 0.5
  %v4536 = vmul.f32 %v3862, 0.5
  %v4537 = vmul.f32 %v3865, 0.5
  %v4538 = vmul.f32 %v3870, 0.5
  %v4539 = vmul.f32 %v3873, 0.5
  %v4540 = vmul.f32 %v3878, 0.5
  %v4541 = vmul.f32 %v3881, 0.5
  %v4542 = vmul.f32 %v3886, 0.5
  %v4543 = vmul.f32 %v3889, 0.5
  %v4544 = vmul.f32 %v3894, 0.5
  %v4545 = vmul.f32 %v3897, 0.5
  %v4546 = vmul.f32 %v3902, 0.5
  %v4547 = vmul.f32 %v3905, 0.5
  %v4548 = vmul.f32 %v3910, 0.5
  %v4549 = vmul.f32 %v3913, 0.5
  %v4550 = vmul.f32 %v3918, 0.5
  %v4551 = vmul.f32 %v3921, 0.5
  %v4552 = vmul.f32 %v3926, 0.5
  %v4553 = vmul.f32 %v3929, 0.5
  %v4554 = vmul.f32 %v3934, 0.5
  %v4555 = vmul.f32 %v3937, 0.5
  %v4556 = vmul.f32 %v3942, 0.5
  %v4557 = vmul.f32 %v3945, 0.5
  %v4558 = vmul.f32 %v3950, 0.5
  %v4559 = vmul.f32 %v3953, 0.5
  %v4560 = vmul.f32 %v3958, 0.5
  %v4561 = vmul.f32 %v3961, 0.5
  %v4562 = vmul.f32 %v3966, 0.5
  %v4563 = vmul.f32 %v3969, 0.5
  %v4564 = vmul.f32 %v3974, 0.5
  %v4565 = vmul.f32 %v3977, 0.5
  %v4566 = vmul.f32 %v3982, 0.5
  %v4567 = vmul.f32 %v3985, 0.5
  %v4568 = vmul.f32 %v3990, 0.5
  %v4569 = vmul.f32 %v3993, 0.5
  %v4570 = vmul.f32 %v3998, 0.5
  %v4571 = vmul.f32 %v4001, 0.5
  %v4572 = vmul.f32 %v4006, 0.5
  %v4573 = vmul.f32 %v4009, 0.5
  %v4574 = vmul.f32 %v4014, 0.5
  %v4575 = vmul.f32 %v4017, 0.5
  %v4576 = vmul.f32 %v4022, 0.5
  %v4577 = vmul.f32 %v4025, 0.5
  %v4578 = vmul.f32 %v4030, 0.5
  %v4579 = vmul.f32 %v4033, 0.5
  %v4580 = vmul.f32 %v4038, 0.5
  %v4581 = vmul.f32 %v4041, 0.5
  %v4582 = vmul.f32 %v4046, 0.5
  %v4583 = vmul.f32 %v4049, 0.5
  %v4584 = vmul.f32 %v4054, 0.5
  %v4585 = vmul.f32 %v4057, 0.5
  %v4586 = vmul.f32 %v4062, 0.5
  %v4587 = vmul.f32 %v4065, 0.5
  %v4588 = vmul.f32 %v4070, 0.5
  %v4589 = vmul.f32 %v4073, 0.5
  %v4590 = vmul.f32 %v4078, 0.5
  %v4591 = vmul.f32 %v4081, 0.5
  %v4592 = vmul.f32 %v4086, 0.5
  %v4593 = vmul.f32 %v4089, 0.5
  %v4594 = vmul.f32 %v4094, 0.5
  %v4595 = vmul.f32 %v4097, 0.5
  %v4596 = vmul.f32 %v4102, 0.5
  %v4597 = vmul.f32 %v4105, 0.5
  %v4598 = vmul.f32 %v4110, 0.5
  %v4599 = vmul.f32 %v4113, 0.5
  %v4600 = vmul.f32 %v4118, 0.5
  %v4601 = vmul.f32 %v4121, 0.5
  %v4602 = vmul.f32 %v4126, 0.5
  %v4603 = vmul.f32 %v4129, 0.5
  %v4604 = vmul.f32 %v4134, 0.5
  %v4605 = vmul.f32 %v4137, 0.5
  %v4606 = vmul.f32 %v4142, 0.5
  %v4607 = vmul.f32 %v4145, 0.5
  %v4608 = vmul.f32 %v4150, 0.5
  %v4609 = vmul.f32 %v4153, 0.5
  %v4610 = vmul.f32 %v4158, 0.5
  %v4611 = vmul.f32 %v4161, 0.5
  %v4612 = vmul.f32 %v4166, 0.5
  %v4613 = vmul.f32 %v4169, 0.5
  %v4614 = vmul.f32 %v4174, 0.5
  %v4615 = vmul.f32 %v4177, 0.5
  %v4616 = vmul.f32 %v4182, 0.5
  %v4617 = vmul.f32 %v4185, 0.5
  %v4618 = vmul.f32 %v4190, 0.5
  %v4619 = vmul.f32 %v4193, 0.5
  %v4620 = vmul.f32 %v4198, 0.5
  %v4621 = vmul.f32 %v4201, 0.5
  %v4622 = vmul.f32 %v4206, 0.5
  %v4623 = vmul.f32 %v4209, 0.5
  %v4624 = vmul.f32 %v4214, 0.5
  %v4625 = vmul.f32 %v4217, 0.5
  %v4626 = vmul.f32 %v4222, 0.5
  %v4627 = vmul.f32 %v4225, 0.5
  %v4628 = vmul.f32 %v4230, 0.5
  %v4629 = vmul.f32 %v4233, 0.5
  %v4630 = vmul.f32 %v4238, 0.5
  %v4631 = vmul.f32 %v4241, 0.5
  %v4632 = vmul.f32 %v4246, 0.5
  %v4633 = vmul.f32 %v4249, 0.5
  %v4634 = vmul.f32 %v4254, 0.5
  %v4635 = vmul.f32 %v4257, 0.5
  %v4636 = vmul.f32 %v4262, 0.5
  %v4637 = vmul.f32 %v4265, 0.5
  %v4638 = vmul.f32 %v4270, 0.5
  %v4639 = vmul.f32 %v4273, 0.5
  %v4640 = vmul.f32 %v4278, 0.5
  %v4641 = vmul.f32 %v4281, 0.5
  %v4642 = vmul.f32 %v4286, 0.5
  %v4643 = vmul.f32 %v4289, 0.5
  %v4644 = vmul.f32 %v4294, 0.5
  %v4645 = vmul.f32 %v4297, 0.5
  %v4646 = vmul.f32 %v4302, 0.5
  %v4647 = vmul.f32 %v4305, 0.5
  %v4648 = vmul.f32 %v4310, 0.5
  %v4649 = vmul.f32 %v4313, 0.5
  %v4650 = vmul.f32 %v4318, 0.5
  %v4651 = vmul.f32 %v4321, 0.5
  %v4652 = vmul.f32 %v4326, 0.5
  %v4653 = vmul.f32 %v4329, 0.5
  %v4654 = vmul.f32 %v4334, 0.5
  %v4655 = vmul.f32 %v4337, 0.5
  %v4656 = vmul.f32 %v4342, 0.5
  %v4657 = vmul.f32 %v4345, 0.5
  %v4658 = vmul.f32 %v4350, 0.5
  %v4659 = vmul.f32 %v4353, 0.5
  %v4660 = vmul.f32 %v4358, 0.5
  %v4661 = vmul.f32 %v4361, 0.5
  %v4662 = vmul.f32 %v4366, 0.5
  %v4663 = vmul.f32 %v4369, 0.5
  %v4664 = vmul.f32 %v4374, 0.5
  %v4665 = vmul.f32 %v4377, 0.5
  %v4666 = vmul.f32 %v4382, 0.5
  %v4667 = vmul.f32 %v4385, 0.5
  %v4668 = vmul.f32 %v4390, 0.5
  %v4669 = vmul.f32 %v4393, 0.5
  %v4670 = vmul.f32 %v4398, 0.5
  %v4671 = vmul.f32 %v4401, 0.5
  %v4672 = vmul.f32 %v4406, 0.5
  %v4673 = vmul.f32 %v4409, 0.5
  %v4674 = vmul.f32 %v4414, 0.5
  %v4675 = vmul.f32 %v4417, 0.5
  %v4676 = vmul.f32 %v4422, 0.5
  %v4677 = vmul.f32 %v4425, 0.5
  %v4678 = vmul.f32 %v4430, 0.5
  %v4679 = vmul.f32 %v4433, 0.5
  %v4680 = vmul.f32 %v4438, 0.5
  %v4681 = vmul.f32 %v4441, 0.5
  %v4682 = vmul.f32 %v4446, 0.5
  %v4683 = vmul.f32 %v4449, 0.5
  %v4684 = vmul.f32 %v4454, 0.5
  %v4685 = vmul.f32 %v4457, 0.5
  %v4686 = vmul.f32 %v4462, 0.5
  %v4687 = vmul.f32 %v4465, 0.5
  %v4688 = vmul.f32 %v4470, 0.5
  %v4689 = vmul.f32 %v4473, 0.5
  %v4690 = vmul.f32 %v4478, 0.5
  %v4691 = vmul.f32 %v4481, 0.5
  %v4692 = vmul.f32 %v4486, 0.5
  %v4693 = vmul.f32 %v4489, 0.5
  %v4694 = vmul.f32 %v4494, 0.5
  %v4695 = vmul.f32 %v4497, 0.5
  %v4696 = vmul.f32 %v3718, 0.044715
  %v4697 = vmul.f32 %v3721, 0.044715
  %v4698 = vmul.f32 %v3726, 0.044715
  %v4699 = vmul.f32 %v3729, 0.044715
  %v4700 = vmul.f32 %v3734, 0.044715
  %v4701 = vmul.f32 %v3737, 0.044715
  %v4702 = vmul.f32 %v3742, 0.044715
  %v4703 = vmul.f32 %v3745, 0.044715
  %v4704 = vmul.f32 %v3750, 0.044715
  %v4705 = vmul.f32 %v3753, 0.044715
  %v4706 = vmul.f32 %v3758, 0.044715
  %v4707 = vmul.f32 %v3761, 0.044715
  %v4708 = vmul.f32 %v3766, 0.044715
  %v4709 = vmul.f32 %v3769, 0.044715
  %v4710 = vmul.f32 %v3774, 0.044715
  %v4711 = vmul.f32 %v3777, 0.044715
  %v4712 = vmul.f32 %v3782, 0.044715
  %v4713 = vmul.f32 %v3785, 0.044715
  %v4714 = vmul.f32 %v3790, 0.044715
  %v4715 = vmul.f32 %v3793, 0.044715
  %v4716 = vmul.f32 %v3798, 0.044715
  %v4717 = vmul.f32 %v3801, 0.044715
  %v4718 = vmul.f32 %v3806, 0.044715
  %v4719 = vmul.f32 %v3809, 0.044715
  %v4720 = vmul.f32 %v3814, 0.044715
  %v4721 = vmul.f32 %v3817, 0.044715
  %v4722 = vmul.f32 %v3822, 0.044715
  %v4723 = vmul.f32 %v3825, 0.044715
  %v4724 = vmul.f32 %v3830, 0.044715
  %v4725 = vmul.f32 %v3833, 0.044715
  %v4726 = vmul.f32 %v3838, 0.044715
  %v4727 = vmul.f32 %v3841, 0.044715
  %v4728 = vmul.f32 %v3846, 0.044715
  %v4729 = vmul.f32 %v3849, 0.044715
  %v4730 = vmul.f32 %v3854, 0.044715
  %v4731 = vmul.f32 %v3857, 0.044715
  %v4732 = vmul.f32 %v3862, 0.044715
  %v4733 = vmul.f32 %v3865, 0.044715
  %v4734 = vmul.f32 %v3870, 0.044715
  %v4735 = vmul.f32 %v3873, 0.044715
  %v4736 = vmul.f32 %v3878, 0.044715
  %v4737 = vmul.f32 %v3881, 0.044715
  %v4738 = vmul.f32 %v3886, 0.044715
  %v4739 = vmul.f32 %v3889, 0.044715
  %v4740 = vmul.f32 %v3894, 0.044715
  %v4741 = vmul.f32 %v3897, 0.044715
  %v4742 = vmul.f32 %v3902, 0.044715
  %v4743 = vmul.f32 %v3905, 0.044715
  %v4744 = vmul.f32 %v3910, 0.044715
  %v4745 = vmul.f32 %v3913, 0.044715
  %v4746 = vmul.f32 %v3918, 0.044715
  %v4747 = vmul.f32 %v3921, 0.044715
  %v4748 = vmul.f32 %v3926, 0.044715
  %v4749 = vmul.f32 %v3929, 0.044715
  %v4750 = vmul.f32 %v3934, 0.044715
  %v4751 = vmul.f32 %v3937, 0.044715
  %v4752 = vmul.f32 %v3942, 0.044715
  %v4753 = vmul.f32 %v3945, 0.044715
  %v4754 = vmul.f32 %v3950, 0.044715
  %v4755 = vmul.f32 %v3953, 0.044715
  %v4756 = vmul.f32 %v3958, 0.044715
  %v4757 = vmul.f32 %v3961, 0.044715
  %v4758 = vmul.f32 %v3966, 0.044715
  %v4759 = vmul.f32 %v3969, 0.044715
  %v4760 = vmul.f32 %v3974, 0.044715
  %v4761 = vmul.f32 %v3977, 0.044715
  %v4762 = vmul.f32 %v3982, 0.044715
  %v4763 = vmul.f32 %v3985, 0.044715
  %v4764 = vmul.f32 %v3990, 0.044715
  %v4765 = vmul.f32 %v3993, 0.044715
  %v4766 = vmul.f32 %v3998, 0.044715
  %v4767 = vmul.f32 %v4001, 0.044715
  %v4768 = vmul.f32 %v4006, 0.044715
  %v4769 = vmul.f32 %v4009, 0.044715
  %v4770 = vmul.f32 %v4014, 0.044715
  %v4771 = vmul.f32 %v4017, 0.044715
  %v4772 = vmul.f32 %v4022, 0.044715
  %v4773 = vmul.f32 %v4025, 0.044715
  %v4774 = vmul.f32 %v4030, 0.044715
  %v4775 = vmul.f32 %v4033, 0.044715
  %v4776 = vmul.f32 %v4038, 0.044715
  %v4777 = vmul.f32 %v4041, 0.044715
  %v4778 = vmul.f32 %v4046, 0.044715
  %v4779 = vmul.f32 %v4049, 0.044715
  %v4780 = vmul.f32 %v4054, 0.044715
  %v4781 = vmul.f32 %v4057, 0.044715
  %v4782 = vmul.f32 %v4062, 0.044715
  %v4783 = vmul.f32 %v4065, 0.044715
  %v4784 = vmul.f32 %v4070, 0.044715
  %v4785 = vmul.f32 %v4073, 0.044715
  %v4786 = vmul.f32 %v4078, 0.044715
  %v4787 = vmul.f32 %v4081, 0.044715
  %v4788 = vmul.f32 %v4086, 0.044715
  %v4789 = vmul.f32 %v4089, 0.044715
  %v4790 = vmul.f32 %v4094, 0.044715
  %v4791 = vmul.f32 %v4097, 0.044715
  %v4792 = vmul.f32 %v4102, 0.044715
  %v4793 = vmul.f32 %v4105, 0.044715
  %v4794 = vmul.f32 %v4110, 0.044715
  %v4795 = vmul.f32 %v4113, 0.044715
  %v4796 = vmul.f32 %v4118, 0.044715
  %v4797 = vmul.f32 %v4121, 0.044715
  %v4798 = vmul.f32 %v4126, 0.044715
  %v4799 = vmul.f32 %v4129, 0.044715
  %v4800 = vmul.f32 %v4134, 0.044715
  %v4801 = vmul.f32 %v4137, 0.044715
  %v4802 = vmul.f32 %v4142, 0.044715
  %v4803 = vmul.f32 %v4145, 0.044715
  %v4804 = vmul.f32 %v4150, 0.044715
  %v4805 = vmul.f32 %v4153, 0.044715
  %v4806 = vmul.f32 %v4158, 0.044715
  %v4807 = vmul.f32 %v4161, 0.044715
  %v4808 = vmul.f32 %v4166, 0.044715
  %v4809 = vmul.f32 %v4169, 0.044715
  %v4810 = vmul.f32 %v4174, 0.044715
  %v4811 = vmul.f32 %v4177, 0.044715
  %v4812 = vmul.f32 %v4182, 0.044715
  %v4813 = vmul.f32 %v4185, 0.044715
  %v4814 = vmul.f32 %v4190, 0.044715
  %v4815 = vmul.f32 %v4193, 0.044715
  %v4816 = vmul.f32 %v4198, 0.044715
  %v4817 = vmul.f32 %v4201, 0.044715
  %v4818 = vmul.f32 %v4206, 0.044715
  %v4819 = vmul.f32 %v4209, 0.044715
  %v4820 = vmul.f32 %v4214, 0.044715
  %v4821 = vmul.f32 %v4217, 0.044715
  %v4822 = vmul.f32 %v4222, 0.044715
  %v4823 = vmul.f32 %v4225, 0.044715
  %v4824 = vmul.f32 %v4230, 0.044715
  %v4825 = vmul.f32 %v4233, 0.044715
  %v4826 = vmul.f32 %v4238, 0.044715
  %v4827 = vmul.f32 %v4241, 0.044715
  %v4828 = vmul.f32 %v4246, 0.044715
  %v4829 = vmul.f32 %v4249, 0.044715
  %v4830 = vmul.f32 %v4254, 0.044715
  %v4831 = vmul.f32 %v4257, 0.044715
  %v4832 = vmul.f32 %v4262, 0.044715
  %v4833 = vmul.f32 %v4265, 0.044715
  %v4834 = vmul.f32 %v4270, 0.044715
  %v4835 = vmul.f32 %v4273, 0.044715
  %v4836 = vmul.f32 %v4278, 0.044715
  %v4837 = vmul.f32 %v4281, 0.044715
  %v4838 = vmul.f32 %v4286, 0.044715
  %v4839 = vmul.f32 %v4289, 0.044715
  %v4840 = vmul.f32 %v4294, 0.044715
  %v4841 = vmul.f32 %v4297, 0.044715
  %v4842 = vmul.f32 %v4302, 0.044715
  %v4843 = vmul.f32 %v4305, 0.044715
  %v4844 = vmul.f32 %v4310, 0.044715
  %v4845 = vmul.f32 %v4313, 0.044715
  %v4846 = vmul.f32 %v4318, 0.044715
  %v4847 = vmul.f32 %v4321, 0.044715
  %v4848 = vmul.f32 %v4326, 0.044715
  %v4849 = vmul.f32 %v4329, 0.044715
  %v4850 = vmul.f32 %v4334, 0.044715
  %v4851 = vmul.f32 %v4337, 0.044715
  %v4852 = vmul.f32 %v4342, 0.044715
  %v4853 = vmul.f32 %v4345, 0.044715
  %v4854 = vmul.f32 %v4350, 0.044715
  %v4855 = vmul.f32 %v4353, 0.044715
  %v4856 = vmul.f32 %v4358, 0.044715
  %v4857 = vmul.f32 %v4361, 0.044715
  %v4858 = vmul.f32 %v4366, 0.044715
  %v4859 = vmul.f32 %v4369, 0.044715
  %v4860 = vmul.f32 %v4374, 0.044715
  %v4861 = vmul.f32 %v4377, 0.044715
  %v4862 = vmul.f32 %v4382, 0.044715
  %v4863 = vmul.f32 %v4385, 0.044715
  %v4864 = vmul.f32 %v4390, 0.044715
  %v4865 = vmul.f32 %v4393, 0.044715
  %v4866 = vmul.f32 %v4398, 0.044715
  %v4867 = vmul.f32 %v4401, 0.044715
  %v4868 = vmul.f32 %v4406, 0.044715
  %v4869 = vmul.f32 %v4409, 0.044715
  %v4870 = vmul.f32 %v4414, 0.044715
  %v4871 = vmul.f32 %v4417, 0.044715
  %v4872 = vmul.f32 %v4422, 0.044715
  %v4873 = vmul.f32 %v4425, 0.044715
  %v4874 = vmul.f32 %v4430, 0.044715
  %v4875 = vmul.f32 %v4433, 0.044715
  %v4876 = vmul.f32 %v4438, 0.044715
  %v4877 = vmul.f32 %v4441, 0.044715
  %v4878 = vmul.f32 %v4446, 0.044715
  %v4879 = vmul.f32 %v4449, 0.044715
  %v4880 = vmul.f32 %v4454, 0.044715
  %v4881 = vmul.f32 %v4457, 0.044715
  %v4882 = vmul.f32 %v4462, 0.044715
  %v4883 = vmul.f32 %v4465, 0.044715
  %v4884 = vmul.f32 %v4470, 0.044715
  %v4885 = vmul.f32 %v4473, 0.044715
  %v4886 = vmul.f32 %v4478, 0.044715
  %v4887 = vmul.f32 %v4481, 0.044715
  %v4888 = vmul.f32 %v4486, 0.044715
  %v4889 = vmul.f32 %v4489, 0.044715
  %v4890 = vmul.f32 %v4494, 0.044715
  %v4891 = vmul.f32 %v4497, 0.044715
  %v4892 = vmul.f32 %v4696, %v3718
  %v4893 = vmul.f32 %v4697, %v3721
  %v4894 = vmul.f32 %v4698, %v3726
  %v4895 = vmul.f32 %v4699, %v3729
  %v4896 = vmul.f32 %v4700, %v3734
  %v4897 = vmul.f32 %v4701, %v3737
  %v4898 = vmul.f32 %v4702, %v3742
  %v4899 = vmul.f32 %v4703, %v3745
  %v4900 = vmul.f32 %v4704, %v3750
  %v4901 = vmul.f32 %v4705, %v3753
  %v4902 = vmul.f32 %v4706, %v3758
  %v4903 = vmul.f32 %v4707, %v3761
  %v4904 = vmul.f32 %v4708, %v3766
  %v4905 = vmul.f32 %v4709, %v3769
  %v4906 = vmul.f32 %v4710, %v3774
  %v4907 = vmul.f32 %v4711, %v3777
  %v4908 = vmul.f32 %v4712, %v3782
  %v4909 = vmul.f32 %v4713, %v3785
  %v4910 = vmul.f32 %v4714, %v3790
  %v4911 = vmul.f32 %v4715, %v3793
  %v4912 = vmul.f32 %v4716, %v3798
  %v4913 = vmul.f32 %v4717, %v3801
  %v4914 = vmul.f32 %v4718, %v3806
  %v4915 = vmul.f32 %v4719, %v3809
  %v4916 = vmul.f32 %v4720, %v3814
  %v4917 = vmul.f32 %v4721, %v3817
  %v4918 = vmul.f32 %v4722, %v3822
  %v4919 = vmul.f32 %v4723, %v3825
  %v4920 = vmul.f32 %v4724, %v3830
  %v4921 = vmul.f32 %v4725, %v3833
  %v4922 = vmul.f32 %v4726, %v3838
  %v4923 = vmul.f32 %v4727, %v3841
  %v4924 = vmul.f32 %v4728, %v3846
  %v4925 = vmul.f32 %v4729, %v3849
  %v4926 = vmul.f32 %v4730, %v3854
  %v4927 = vmul.f32 %v4731, %v3857
  %v4928 = vmul.f32 %v4732, %v3862
  %v4929 = vmul.f32 %v4733, %v3865
  %v4930 = vmul.f32 %v4734, %v3870
  %v4931 = vmul.f32 %v4735, %v3873
  %v4932 = vmul.f32 %v4736, %v3878
  %v4933 = vmul.f32 %v4737, %v3881
  %v4934 = vmul.f32 %v4738, %v3886
  %v4935 = vmul.f32 %v4739, %v3889
  %v4936 = vmul.f32 %v4740, %v3894
  %v4937 = vmul.f32 %v4741, %v3897
  %v4938 = vmul.f32 %v4742, %v3902
  %v4939 = vmul.f32 %v4743, %v3905
  %v4940 = vmul.f32 %v4744, %v3910
  %v4941 = vmul.f32 %v4745, %v3913
  %v4942 = vmul.f32 %v4746, %v3918
  %v4943 = vmul.f32 %v4747, %v3921
  %v4944 = vmul.f32 %v4748, %v3926
  %v4945 = vmul.f32 %v4749, %v3929
  %v4946 = vmul.f32 %v4750, %v3934
  %v4947 = vmul.f32 %v4751, %v3937
  %v4948 = vmul.f32 %v4752, %v3942
  %v4949 = vmul.f32 %v4753, %v3945
  %v4950 = vmul.f32 %v4754, %v3950
  %v4951 = vmul.f32 %v4755, %v3953
  %v4952 = vmul.f32 %v4756, %v3958
  %v4953 = vmul.f32 %v4757, %v3961
  %v4954 = vmul.f32 %v4758, %v3966
  %v4955 = vmul.f32 %v4759, %v3969
  %v4956 = vmul.f32 %v4760, %v3974
  %v4957 = vmul.f32 %v4761, %v3977
  %v4958 = vmul.f32 %v4762, %v3982
  %v4959 = vmul.f32 %v4763, %v3985
  %v4960 = vmul.f32 %v4764, %v3990
  %v4961 = vmul.f32 %v4765, %v3993
  %v4962 = vmul.f32 %v4766, %v3998
  %v4963 = vmul.f32 %v4767, %v4001
  %v4964 = vmul.f32 %v4768, %v4006
  %v4965 = vmul.f32 %v4769, %v4009
  %v4966 = vmul.f32 %v4770, %v4014
  %v4967 = vmul.f32 %v4771, %v4017
  %v4968 = vmul.f32 %v4772, %v4022
  %v4969 = vmul.f32 %v4773, %v4025
  %v4970 = vmul.f32 %v4774, %v4030
  %v4971 = vmul.f32 %v4775, %v4033
  %v4972 = vmul.f32 %v4776, %v4038
  %v4973 = vmul.f32 %v4777, %v4041
  %v4974 = vmul.f32 %v4778, %v4046
  %v4975 = vmul.f32 %v4779, %v4049
  %v4976 = vmul.f32 %v4780, %v4054
  %v4977 = vmul.f32 %v4781, %v4057
  %v4978 = vmul.f32 %v4782, %v4062
  %v4979 = vmul.f32 %v4783, %v4065
  %v4980 = vmul.f32 %v4784, %v4070
  %v4981 = vmul.f32 %v4785, %v4073
  %v4982 = vmul.f32 %v4786, %v4078
  %v4983 = vmul.f32 %v4787, %v4081
  %v4984 = vmul.f32 %v4788, %v4086
  %v4985 = vmul.f32 %v4789, %v4089
  %v4986 = vmul.f32 %v4790, %v4094
  %v4987 = vmul.f32 %v4791, %v4097
  %v4988 = vmul.f32 %v4792, %v4102
  %v4989 = vmul.f32 %v4793, %v4105
  %v4990 = vmul.f32 %v4794, %v4110
  %v4991 = vmul.f32 %v4795, %v4113
  %v4992 = vmul.f32 %v4796, %v4118
  %v4993 = vmul.f32 %v4797, %v4121
  %v4994 = vmul.f32 %v4798, %v4126
  %v4995 = vmul.f32 %v4799, %v4129
  %v4996 = vmul.f32 %v4800, %v4134
  %v4997 = vmul.f32 %v4801, %v4137
  %v4998 = vmul.f32 %v4802, %v4142
  %v4999 = vmul.f32 %v4803, %v4145
  %v5000 = vmul.f32 %v4804, %v4150
  %v5001 = vmul.f32 %v4805, %v4153
  %v5002 = vmul.f32 %v4806, %v4158
  %v5003 = vmul.f32 %v4807, %v4161
  %v5004 = vmul.f32 %v4808, %v4166
  %v5005 = vmul.f32 %v4809, %v4169
  %v5006 = vmul.f32 %v4810, %v4174
  %v5007 = vmul.f32 %v4811, %v4177
  %v5008 = vmul.f32 %v4812, %v4182
  %v5009 = vmul.f32 %v4813, %v4185
  %v5010 = vmul.f32 %v4814, %v4190
  %v5011 = vmul.f32 %v4815, %v4193
  %v5012 = vmul.f32 %v4816, %v4198
  %v5013 = vmul.f32 %v4817, %v4201
  %v5014 = vmul.f32 %v4818, %v4206
  %v5015 = vmul.f32 %v4819, %v4209
  %v5016 = vmul.f32 %v4820, %v4214
  %v5017 = vmul.f32 %v4821, %v4217
  %v5018 = vmul.f32 %v4822, %v4222
  %v5019 = vmul.f32 %v4823, %v4225
  %v5020 = vmul.f32 %v4824, %v4230
  %v5021 = vmul.f32 %v4825, %v4233
  %v5022 = vmul.f32 %v4826, %v4238
  %v5023 = vmul.f32 %v4827, %v4241
  %v5024 = vmul.f32 %v4828, %v4246
  %v5025 = vmul.f32 %v4829, %v4249
  %v5026 = vmul.f32 %v4830, %v4254
  %v5027 = vmul.f32 %v4831, %v4257
  %v5028 = vmul.f32 %v4832, %v4262
  %v5029 = vmul.f32 %v4833, %v4265
  %v5030 = vmul.f32 %v4834, %v4270
  %v5031 = vmul.f32 %v4835, %v4273
  %v5032 = vmul.f32 %v4836, %v4278
  %v5033 = vmul.f32 %v4837, %v4281
  %v5034 = vmul.f32 %v4838, %v4286
  %v5035 = vmul.f32 %v4839, %v4289
  %v5036 = vmul.f32 %v4840, %v4294
  %v5037 = vmul.f32 %v4841, %v4297
  %v5038 = vmul.f32 %v4842, %v4302
  %v5039 = vmul.f32 %v4843, %v4305
  %v5040 = vmul.f32 %v4844, %v4310
  %v5041 = vmul.f32 %v4845, %v4313
  %v5042 = vmul.f32 %v4846, %v4318
  %v5043 = vmul.f32 %v4847, %v4321
  %v5044 = vmul.f32 %v4848, %v4326
  %v5045 = vmul.f32 %v4849, %v4329
  %v5046 = vmul.f32 %v4850, %v4334
  %v5047 = vmul.f32 %v4851, %v4337
  %v5048 = vmul.f32 %v4852, %v4342
  %v5049 = vmul.f32 %v4853, %v4345
  %v5050 = vmul.f32 %v4854, %v4350
  %v5051 = vmul.f32 %v4855, %v4353
  %v5052 = vmul.f32 %v4856, %v4358
  %v5053 = vmul.f32 %v4857, %v4361
  %v5054 = vmul.f32 %v4858, %v4366
  %v5055 = vmul.f32 %v4859, %v4369
  %v5056 = vmul.f32 %v4860, %v4374
  %v5057 = vmul.f32 %v4861, %v4377
  %v5058 = vmul.f32 %v4862, %v4382
  %v5059 = vmul.f32 %v4863, %v4385
  %v5060 = vmul.f32 %v4864, %v4390
  %v5061 = vmul.f32 %v4865, %v4393
  %v5062 = vmul.f32 %v4866, %v4398
  %v5063 = vmul.f32 %v4867, %v4401
  %v5064 = vmul.f32 %v4868, %v4406
  %v5065 = vmul.f32 %v4869, %v4409
  %v5066 = vmul.f32 %v4870, %v4414
  %v5067 = vmul.f32 %v4871, %v4417
  %v5068 = vmul.f32 %v4872, %v4422
  %v5069 = vmul.f32 %v4873, %v4425
  %v5070 = vmul.f32 %v4874, %v4430
  %v5071 = vmul.f32 %v4875, %v4433
  %v5072 = vmul.f32 %v4876, %v4438
  %v5073 = vmul.f32 %v4877, %v4441
  %v5074 = vmul.f32 %v4878, %v4446
  %v5075 = vmul.f32 %v4879, %v4449
  %v5076 = vmul.f32 %v4880, %v4454
  %v5077 = vmul.f32 %v4881, %v4457
  %v5078 = vmul.f32 %v4882, %v4462
  %v5079 = vmul.f32 %v4883, %v4465
  %v5080 = vmul.f32 %v4884, %v4470
  %v5081 = vmul.f32 %v4885, %v4473
  %v5082 = vmul.f32 %v4886, %v4478
  %v5083 = vmul.f32 %v4887, %v4481
  %v5084 = vmul.f32 %v4888, %v4486
  %v5085 = vmul.f32 %v4889, %v4489
  %v5086 = vmul.f32 %v4890, %v4494
  %v5087 = vmul.f32 %v4891, %v4497
  %v5088 = vmul.f32 %v4892, %v3718
  %v5089 = vmul.f32 %v4893, %v3721
  %v5090 = vmul.f32 %v4894, %v3726
  %v5091 = vmul.f32 %v4895, %v3729
  %v5092 = vmul.f32 %v4896, %v3734
  %v5093 = vmul.f32 %v4897, %v3737
  %v5094 = vmul.f32 %v4898, %v3742
  %v5095 = vmul.f32 %v4899, %v3745
  %v5096 = vmul.f32 %v4900, %v3750
  %v5097 = vmul.f32 %v4901, %v3753
  %v5098 = vmul.f32 %v4902, %v3758
  %v5099 = vmul.f32 %v4903, %v3761
  %v5100 = vmul.f32 %v4904, %v3766
  %v5101 = vmul.f32 %v4905, %v3769
  %v5102 = vmul.f32 %v4906, %v3774
  %v5103 = vmul.f32 %v4907, %v3777
  %v5104 = vmul.f32 %v4908, %v3782
  %v5105 = vmul.f32 %v4909, %v3785
  %v5106 = vmul.f32 %v4910, %v3790
  %v5107 = vmul.f32 %v4911, %v3793
  %v5108 = vmul.f32 %v4912, %v3798
  %v5109 = vmul.f32 %v4913, %v3801
  %v5110 = vmul.f32 %v4914, %v3806
  %v5111 = vmul.f32 %v4915, %v3809
  %v5112 = vmul.f32 %v4916, %v3814
  %v5113 = vmul.f32 %v4917, %v3817
  %v5114 = vmul.f32 %v4918, %v3822
  %v5115 = vmul.f32 %v4919, %v3825
  %v5116 = vmul.f32 %v4920, %v3830
  %v5117 = vmul.f32 %v4921, %v3833
  %v5118 = vmul.f32 %v4922, %v3838
  %v5119 = vmul.f32 %v4923, %v3841
  %v5120 = vmul.f32 %v4924, %v3846
  %v5121 = vmul.f32 %v4925, %v3849
  %v5122 = vmul.f32 %v4926, %v3854
  %v5123 = vmul.f32 %v4927, %v3857
  %v5124 = vmul.f32 %v4928, %v3862
  %v5125 = vmul.f32 %v4929, %v3865
  %v5126 = vmul.f32 %v4930, %v3870
  %v5127 = vmul.f32 %v4931, %v3873
  %v5128 = vmul.f32 %v4932, %v3878
  %v5129 = vmul.f32 %v4933, %v3881
  %v5130 = vmul.f32 %v4934, %v3886
  %v5131 = vmul.f32 %v4935, %v3889
  %v5132 = vmul.f32 %v4936, %v3894
  %v5133 = vmul.f32 %v4937, %v3897
  %v5134 = vmul.f32 %v4938, %v3902
  %v5135 = vmul.f32 %v4939, %v3905
  %v5136 = vmul.f32 %v4940, %v3910
  %v5137 = vmul.f32 %v4941, %v3913
  %v5138 = vmul.f32 %v4942, %v3918
  %v5139 = vmul.f32 %v4943, %v3921
  %v5140 = vmul.f32 %v4944, %v3926
  %v5141 = vmul.f32 %v4945, %v3929
  %v5142 = vmul.f32 %v4946, %v3934
  %v5143 = vmul.f32 %v4947, %v3937
  %v5144 = vmul.f32 %v4948, %v3942
  %v5145 = vmul.f32 %v4949, %v3945
  %v5146 = vmul.f32 %v4950, %v3950
  %v5147 = vmul.f32 %v4951, %v3953
  %v5148 = vmul.f32 %v4952, %v3958
  %v5149 = vmul.f32 %v4953, %v3961
  %v5150 = vmul.f32 %v4954, %v3966
  %v5151 = vmul.f32 %v4955, %v3969
  %v5152 = vmul.f32 %v4956, %v3974
  %v5153 = vmul.f32 %v4957, %v3977
  %v5154 = vmul.f32 %v4958, %v3982
  %v5155 = vmul.f32 %v4959, %v3985
  %v5156 = vmul.f32 %v4960, %v3990
  %v5157 = vmul.f32 %v4961, %v3993
  %v5158 = vmul.f32 %v4962, %v3998
  %v5159 = vmul.f32 %v4963, %v4001
  %v5160 = vmul.f32 %v4964, %v4006
  %v5161 = vmul.f32 %v4965, %v4009
  %v5162 = vmul.f32 %v4966, %v4014
  %v5163 = vmul.f32 %v4967, %v4017
  %v5164 = vmul.f32 %v4968, %v4022
  %v5165 = vmul.f32 %v4969, %v4025
  %v5166 = vmul.f32 %v4970, %v4030
  %v5167 = vmul.f32 %v4971, %v4033
  %v5168 = vmul.f32 %v4972, %v4038
  %v5169 = vmul.f32 %v4973, %v4041
  %v5170 = vmul.f32 %v4974, %v4046
  %v5171 = vmul.f32 %v4975, %v4049
  %v5172 = vmul.f32 %v4976, %v4054
  %v5173 = vmul.f32 %v4977, %v4057
  %v5174 = vmul.f32 %v4978, %v4062
  %v5175 = vmul.f32 %v4979, %v4065
  %v5176 = vmul.f32 %v4980, %v4070
  %v5177 = vmul.f32 %v4981, %v4073
  %v5178 = vmul.f32 %v4982, %v4078
  %v5179 = vmul.f32 %v4983, %v4081
  %v5180 = vmul.f32 %v4984, %v4086
  %v5181 = vmul.f32 %v4985, %v4089
  %v5182 = vmul.f32 %v4986, %v4094
  %v5183 = vmul.f32 %v4987, %v4097
  %v5184 = vmul.f32 %v4988, %v4102
  %v5185 = vmul.f32 %v4989, %v4105
  %v5186 = vmul.f32 %v4990, %v4110
  %v5187 = vmul.f32 %v4991, %v4113
  %v5188 = vmul.f32 %v4992, %v4118
  %v5189 = vmul.f32 %v4993, %v4121
  %v5190 = vmul.f32 %v4994, %v4126
  %v5191 = vmul.f32 %v4995, %v4129
  %v5192 = vmul.f32 %v4996, %v4134
  %v5193 = vmul.f32 %v4997, %v4137
  %v5194 = vmul.f32 %v4998, %v4142
  %v5195 = vmul.f32 %v4999, %v4145
  %v5196 = vmul.f32 %v5000, %v4150
  %v5197 = vmul.f32 %v5001, %v4153
  %v5198 = vmul.f32 %v5002, %v4158
  %v5199 = vmul.f32 %v5003, %v4161
  %v5200 = vmul.f32 %v5004, %v4166
  %v5201 = vmul.f32 %v5005, %v4169
  %v5202 = vmul.f32 %v5006, %v4174
  %v5203 = vmul.f32 %v5007, %v4177
  %v5204 = vmul.f32 %v5008, %v4182
  %v5205 = vmul.f32 %v5009, %v4185
  %v5206 = vmul.f32 %v5010, %v4190
  %v5207 = vmul.f32 %v5011, %v4193
  %v5208 = vmul.f32 %v5012, %v4198
  %v5209 = vmul.f32 %v5013, %v4201
  %v5210 = vmul.f32 %v5014, %v4206
  %v5211 = vmul.f32 %v5015, %v4209
  %v5212 = vmul.f32 %v5016, %v4214
  %v5213 = vmul.f32 %v5017, %v4217
  %v5214 = vmul.f32 %v5018, %v4222
  %v5215 = vmul.f32 %v5019, %v4225
  %v5216 = vmul.f32 %v5020, %v4230
  %v5217 = vmul.f32 %v5021, %v4233
  %v5218 = vmul.f32 %v5022, %v4238
  %v5219 = vmul.f32 %v5023, %v4241
  %v5220 = vmul.f32 %v5024, %v4246
  %v5221 = vmul.f32 %v5025, %v4249
  %v5222 = vmul.f32 %v5026, %v4254
  %v5223 = vmul.f32 %v5027, %v4257
  %v5224 = vmul.f32 %v5028, %v4262
  %v5225 = vmul.f32 %v5029, %v4265
  %v5226 = vmul.f32 %v5030, %v4270
  %v5227 = vmul.f32 %v5031, %v4273
  %v5228 = vmul.f32 %v5032, %v4278
  %v5229 = vmul.f32 %v5033, %v4281
  %v5230 = vmul.f32 %v5034, %v4286
  %v5231 = vmul.f32 %v5035, %v4289
  %v5232 = vmul.f32 %v5036, %v4294
  %v5233 = vmul.f32 %v5037, %v4297
  %v5234 = vmul.f32 %v5038, %v4302
  %v5235 = vmul.f32 %v5039, %v4305
  %v5236 = vmul.f32 %v5040, %v4310
  %v5237 = vmul.f32 %v5041, %v4313
  %v5238 = vmul.f32 %v5042, %v4318
  %v5239 = vmul.f32 %v5043, %v4321
  %v5240 = vmul.f32 %v5044, %v4326
  %v5241 = vmul.f32 %v5045, %v4329
  %v5242 = vmul.f32 %v5046, %v4334
  %v5243 = vmul.f32 %v5047, %v4337
  %v5244 = vmul.f32 %v5048, %v4342
  %v5245 = vmul.f32 %v5049, %v4345
  %v5246 = vmul.f32 %v5050, %v4350
  %v5247 = vmul.f32 %v5051, %v4353
  %v5248 = vmul.f32 %v5052, %v4358
  %v5249 = vmul.f32 %v5053, %v4361
  %v5250 = vmul.f32 %v5054, %v4366
  %v5251 = vmul.f32 %v5055, %v4369
  %v5252 = vmul.f32 %v5056, %v4374
  %v5253 = vmul.f32 %v5057, %v4377
  %v5254 = vmul.f32 %v5058, %v4382
  %v5255 = vmul.f32 %v5059, %v4385
  %v5256 = vmul.f32 %v5060, %v4390
  %v5257 = vmul.f32 %v5061, %v4393
  %v5258 = vmul.f32 %v5062, %v4398
  %v5259 = vmul.f32 %v5063, %v4401
  %v5260 = vmul.f32 %v5064, %v4406
  %v5261 = vmul.f32 %v5065, %v4409
  %v5262 = vmul.f32 %v5066, %v4414
  %v5263 = vmul.f32 %v5067, %v4417
  %v5264 = vmul.f32 %v5068, %v4422
  %v5265 = vmul.f32 %v5069, %v4425
  %v5266 = vmul.f32 %v5070, %v4430
  %v5267 = vmul.f32 %v5071, %v4433
  %v5268 = vmul.f32 %v5072, %v4438
  %v5269 = vmul.f32 %v5073, %v4441
  %v5270 = vmul.f32 %v5074, %v4446
  %v5271 = vmul.f32 %v5075, %v4449
  %v5272 = vmul.f32 %v5076, %v4454
  %v5273 = vmul.f32 %v5077, %v4457
  %v5274 = vmul.f32 %v5078, %v4462
  %v5275 = vmul.f32 %v5079, %v4465
  %v5276 = vmul.f32 %v5080, %v4470
  %v5277 = vmul.f32 %v5081, %v4473
  %v5278 = vmul.f32 %v5082, %v4478
  %v5279 = vmul.f32 %v5083, %v4481
  %v5280 = vmul.f32 %v5084, %v4486
  %v5281 = vmul.f32 %v5085, %v4489
  %v5282 = vmul.f32 %v5086, %v4494
  %v5283 = vmul.f32 %v5087, %v4497
  %v5284 = vadd.f32 %v3718, %v5088
  %v5285 = vadd.f32 %v3721, %v5089
  %v5286 = vadd.f32 %v3726, %v5090
  %v5287 = vadd.f32 %v3729, %v5091
  %v5288 = vadd.f32 %v3734, %v5092
  %v5289 = vadd.f32 %v3737, %v5093
  %v5290 = vadd.f32 %v3742, %v5094
  %v5291 = vadd.f32 %v3745, %v5095
  %v5292 = vadd.f32 %v3750, %v5096
  %v5293 = vadd.f32 %v3753, %v5097
  %v5294 = vadd.f32 %v3758, %v5098
  %v5295 = vadd.f32 %v3761, %v5099
  %v5296 = vadd.f32 %v3766, %v5100
  %v5297 = vadd.f32 %v3769, %v5101
  %v5298 = vadd.f32 %v3774, %v5102
  %v5299 = vadd.f32 %v3777, %v5103
  %v5300 = vadd.f32 %v3782, %v5104
  %v5301 = vadd.f32 %v3785, %v5105
  %v5302 = vadd.f32 %v3790, %v5106
  %v5303 = vadd.f32 %v3793, %v5107
  %v5304 = vadd.f32 %v3798, %v5108
  %v5305 = vadd.f32 %v3801, %v5109
  %v5306 = vadd.f32 %v3806, %v5110
  %v5307 = vadd.f32 %v3809, %v5111
  %v5308 = vadd.f32 %v3814, %v5112
  %v5309 = vadd.f32 %v3817, %v5113
  %v5310 = vadd.f32 %v3822, %v5114
  %v5311 = vadd.f32 %v3825, %v5115
  %v5312 = vadd.f32 %v3830, %v5116
  %v5313 = vadd.f32 %v3833, %v5117
  %v5314 = vadd.f32 %v3838, %v5118
  %v5315 = vadd.f32 %v3841, %v5119
  %v5316 = vadd.f32 %v3846, %v5120
  %v5317 = vadd.f32 %v3849, %v5121
  %v5318 = vadd.f32 %v3854, %v5122
  %v5319 = vadd.f32 %v3857, %v5123
  %v5320 = vadd.f32 %v3862, %v5124
  %v5321 = vadd.f32 %v3865, %v5125
  %v5322 = vadd.f32 %v3870, %v5126
  %v5323 = vadd.f32 %v3873, %v5127
  %v5324 = vadd.f32 %v3878, %v5128
  %v5325 = vadd.f32 %v3881, %v5129
  %v5326 = vadd.f32 %v3886, %v5130
  %v5327 = vadd.f32 %v3889, %v5131
  %v5328 = vadd.f32 %v3894, %v5132
  %v5329 = vadd.f32 %v3897, %v5133
  %v5330 = vadd.f32 %v3902, %v5134
  %v5331 = vadd.f32 %v3905, %v5135
  %v5332 = vadd.f32 %v3910, %v5136
  %v5333 = vadd.f32 %v3913, %v5137
  %v5334 = vadd.f32 %v3918, %v5138
  %v5335 = vadd.f32 %v3921, %v5139
  %v5336 = vadd.f32 %v3926, %v5140
  %v5337 = vadd.f32 %v3929, %v5141
  %v5338 = vadd.f32 %v3934, %v5142
  %v5339 = vadd.f32 %v3937, %v5143
  %v5340 = vadd.f32 %v3942, %v5144
  %v5341 = vadd.f32 %v3945, %v5145
  %v5342 = vadd.f32 %v3950, %v5146
  %v5343 = vadd.f32 %v3953, %v5147
  %v5344 = vadd.f32 %v3958, %v5148
  %v5345 = vadd.f32 %v3961, %v5149
  %v5346 = vadd.f32 %v3966, %v5150
  %v5347 = vadd.f32 %v3969, %v5151
  %v5348 = vadd.f32 %v3974, %v5152
  %v5349 = vadd.f32 %v3977, %v5153
  %v5350 = vadd.f32 %v3982, %v5154
  %v5351 = vadd.f32 %v3985, %v5155
  %v5352 = vadd.f32 %v3990, %v5156
  %v5353 = vadd.f32 %v3993, %v5157
  %v5354 = vadd.f32 %v3998, %v5158
  %v5355 = vadd.f32 %v4001, %v5159
  %v5356 = vadd.f32 %v4006, %v5160
  %v5357 = vadd.f32 %v4009, %v5161
  %v5358 = vadd.f32 %v4014, %v5162
  %v5359 = vadd.f32 %v4017, %v5163
  %v5360 = vadd.f32 %v4022, %v5164
  %v5361 = vadd.f32 %v4025, %v5165
  %v5362 = vadd.f32 %v4030, %v5166
  %v5363 = vadd.f32 %v4033, %v5167
  %v5364 = vadd.f32 %v4038, %v5168
  %v5365 = vadd.f32 %v4041, %v5169
  %v5366 = vadd.f32 %v4046, %v5170
  %v5367 = vadd.f32 %v4049, %v5171
  %v5368 = vadd.f32 %v4054, %v5172
  %v5369 = vadd.f32 %v4057, %v5173
  %v5370 = vadd.f32 %v4062, %v5174
  %v5371 = vadd.f32 %v4065, %v5175
  %v5372 = vadd.f32 %v4070, %v5176
  %v5373 = vadd.f32 %v4073, %v5177
  %v5374 = vadd.f32 %v4078, %v5178
  %v5375 = vadd.f32 %v4081, %v5179
  %v5376 = vadd.f32 %v4086, %v5180
  %v5377 = vadd.f32 %v4089, %v5181
  %v5378 = vadd.f32 %v4094, %v5182
  %v5379 = vadd.f32 %v4097, %v5183
  %v5380 = vadd.f32 %v4102, %v5184
  %v5381 = vadd.f32 %v4105, %v5185
  %v5382 = vadd.f32 %v4110, %v5186
  %v5383 = vadd.f32 %v4113, %v5187
  %v5384 = vadd.f32 %v4118, %v5188
  %v5385 = vadd.f32 %v4121, %v5189
  %v5386 = vadd.f32 %v4126, %v5190
  %v5387 = vadd.f32 %v4129, %v5191
  %v5388 = vadd.f32 %v4134, %v5192
  %v5389 = vadd.f32 %v4137, %v5193
  %v5390 = vadd.f32 %v4142, %v5194
  %v5391 = vadd.f32 %v4145, %v5195
  %v5392 = vadd.f32 %v4150, %v5196
  %v5393 = vadd.f32 %v4153, %v5197
  %v5394 = vadd.f32 %v4158, %v5198
  %v5395 = vadd.f32 %v4161, %v5199
  %v5396 = vadd.f32 %v4166, %v5200
  %v5397 = vadd.f32 %v4169, %v5201
  %v5398 = vadd.f32 %v4174, %v5202
  %v5399 = vadd.f32 %v4177, %v5203
  %v5400 = vadd.f32 %v4182, %v5204
  %v5401 = vadd.f32 %v4185, %v5205
  %v5402 = vadd.f32 %v4190, %v5206
  %v5403 = vadd.f32 %v4193, %v5207
  %v5404 = vadd.f32 %v4198, %v5208
  %v5405 = vadd.f32 %v4201, %v5209
  %v5406 = vadd.f32 %v4206, %v5210
  %v5407 = vadd.f32 %v4209, %v5211
  %v5408 = vadd.f32 %v4214, %v5212
  %v5409 = vadd.f32 %v4217, %v5213
  %v5410 = vadd.f32 %v4222, %v5214
  %v5411 = vadd.f32 %v4225, %v5215
  %v5412 = vadd.f32 %v4230, %v5216
  %v5413 = vadd.f32 %v4233, %v5217
  %v5414 = vadd.f32 %v4238, %v5218
  %v5415 = vadd.f32 %v4241, %v5219
  %v5416 = vadd.f32 %v4246, %v5220
  %v5417 = vadd.f32 %v4249, %v5221
  %v5418 = vadd.f32 %v4254, %v5222
  %v5419 = vadd.f32 %v4257, %v5223
  %v5420 = vadd.f32 %v4262, %v5224
  %v5421 = vadd.f32 %v4265, %v5225
  %v5422 = vadd.f32 %v4270, %v5226
  %v5423 = vadd.f32 %v4273, %v5227
  %v5424 = vadd.f32 %v4278, %v5228
  %v5425 = vadd.f32 %v4281, %v5229
  %v5426 = vadd.f32 %v4286, %v5230
  %v5427 = vadd.f32 %v4289, %v5231
  %v5428 = vadd.f32 %v4294, %v5232
  %v5429 = vadd.f32 %v4297, %v5233
  %v5430 = vadd.f32 %v4302, %v5234
  %v5431 = vadd.f32 %v4305, %v5235
  %v5432 = vadd.f32 %v4310, %v5236
  %v5433 = vadd.f32 %v4313, %v5237
  %v5434 = vadd.f32 %v4318, %v5238
  %v5435 = vadd.f32 %v4321, %v5239
  %v5436 = vadd.f32 %v4326, %v5240
  %v5437 = vadd.f32 %v4329, %v5241
  %v5438 = vadd.f32 %v4334, %v5242
  %v5439 = vadd.f32 %v4337, %v5243
  %v5440 = vadd.f32 %v4342, %v5244
  %v5441 = vadd.f32 %v4345, %v5245
  %v5442 = vadd.f32 %v4350, %v5246
  %v5443 = vadd.f32 %v4353, %v5247
  %v5444 = vadd.f32 %v4358, %v5248
  %v5445 = vadd.f32 %v4361, %v5249
  %v5446 = vadd.f32 %v4366, %v5250
  %v5447 = vadd.f32 %v4369, %v5251
  %v5448 = vadd.f32 %v4374, %v5252
  %v5449 = vadd.f32 %v4377, %v5253
  %v5450 = vadd.f32 %v4382, %v5254
  %v5451 = vadd.f32 %v4385, %v5255
  %v5452 = vadd.f32 %v4390, %v5256
  %v5453 = vadd.f32 %v4393, %v5257
  %v5454 = vadd.f32 %v4398, %v5258
  %v5455 = vadd.f32 %v4401, %v5259
  %v5456 = vadd.f32 %v4406, %v5260
  %v5457 = vadd.f32 %v4409, %v5261
  %v5458 = vadd.f32 %v4414, %v5262
  %v5459 = vadd.f32 %v4417, %v5263
  %v5460 = vadd.f32 %v4422, %v5264
  %v5461 = vadd.f32 %v4425, %v5265
  %v5462 = vadd.f32 %v4430, %v5266
  %v5463 = vadd.f32 %v4433, %v5267
  %v5464 = vadd.f32 %v4438, %v5268
  %v5465 = vadd.f32 %v4441, %v5269
  %v5466 = vadd.f32 %v4446, %v5270
  %v5467 = vadd.f32 %v4449, %v5271
  %v5468 = vadd.f32 %v4454, %v5272
  %v5469 = vadd.f32 %v4457, %v5273
  %v5470 = vadd.f32 %v4462, %v5274
  %v5471 = vadd.f32 %v4465, %v5275
  %v5472 = vadd.f32 %v4470, %v5276
  %v5473 = vadd.f32 %v4473, %v5277
  %v5474 = vadd.f32 %v4478, %v5278
  %v5475 = vadd.f32 %v4481, %v5279
  %v5476 = vadd.f32 %v4486, %v5280
  %v5477 = vadd.f32 %v4489, %v5281
  %v5478 = vadd.f32 %v4494, %v5282
  %v5479 = vadd.f32 %v4497, %v5283
  %v5480 = vmul.f32 %v5284, 0.7978846
  %v5481 = vmul.f32 %v5285, 0.7978846
  %v5482 = vmul.f32 %v5286, 0.7978846
  %v5483 = vmul.f32 %v5287, 0.7978846
  %v5484 = vmul.f32 %v5288, 0.7978846
  %v5485 = vmul.f32 %v5289, 0.7978846
  %v5486 = vmul.f32 %v5290, 0.7978846
  %v5487 = vmul.f32 %v5291, 0.7978846
  %v5488 = vmul.f32 %v5292, 0.7978846
  %v5489 = vmul.f32 %v5293, 0.7978846
  %v5490 = vmul.f32 %v5294, 0.7978846
  %v5491 = vmul.f32 %v5295, 0.7978846
  %v5492 = vmul.f32 %v5296, 0.7978846
  %v5493 = vmul.f32 %v5297, 0.7978846
  %v5494 = vmul.f32 %v5298, 0.7978846
  %v5495 = vmul.f32 %v5299, 0.7978846
  %v5496 = vmul.f32 %v5300, 0.7978846
  %v5497 = vmul.f32 %v5301, 0.7978846
  %v5498 = vmul.f32 %v5302, 0.7978846
  %v5499 = vmul.f32 %v5303, 0.7978846
  %v5500 = vmul.f32 %v5304, 0.7978846
  %v5501 = vmul.f32 %v5305, 0.7978846
  %v5502 = vmul.f32 %v5306, 0.7978846
  %v5503 = vmul.f32 %v5307, 0.7978846
  %v5504 = vmul.f32 %v5308, 0.7978846
  %v5505 = vmul.f32 %v5309, 0.7978846
  %v5506 = vmul.f32 %v5310, 0.7978846
  %v5507 = vmul.f32 %v5311, 0.7978846
  %v5508 = vmul.f32 %v5312, 0.7978846
  %v5509 = vmul.f32 %v5313, 0.7978846
  %v5510 = vmul.f32 %v5314, 0.7978846
  %v5511 = vmul.f32 %v5315, 0.7978846
  %v5512 = vmul.f32 %v5316, 0.7978846
  %v5513 = vmul.f32 %v5317, 0.7978846
  %v5514 = vmul.f32 %v5318, 0.7978846
  %v5515 = vmul.f32 %v5319, 0.7978846
  %v5516 = vmul.f32 %v5320, 0.7978846
  %v5517 = vmul.f32 %v5321, 0.7978846
  %v5518 = vmul.f32 %v5322, 0.7978846
  %v5519 = vmul.f32 %v5323, 0.7978846
  %v5520 = vmul.f32 %v5324, 0.7978846
  %v5521 = vmul.f32 %v5325, 0.7978846
  %v5522 = vmul.f32 %v5326, 0.7978846
  %v5523 = vmul.f32 %v5327, 0.7978846
  %v5524 = vmul.f32 %v5328, 0.7978846
  %v5525 = vmul.f32 %v5329, 0.7978846
  %v5526 = vmul.f32 %v5330, 0.7978846
  %v5527 = vmul.f32 %v5331, 0.7978846
  %v5528 = vmul.f32 %v5332, 0.7978846
  %v5529 = vmul.f32 %v5333, 0.7978846
  %v5530 = vmul.f32 %v5334, 0.7978846
  %v5531 = vmul.f32 %v5335, 0.7978846
  %v5532 = vmul.f32 %v5336, 0.7978846
  %v5533 = vmul.f32 %v5337, 0.7978846
  %v5534 = vmul.f32 %v5338, 0.7978846
  %v5535 = vmul.f32 %v5339, 0.7978846
  %v5536 = vmul.f32 %v5340, 0.7978846
  %v5537 = vmul.f32 %v5341, 0.7978846
  %v5538 = vmul.f32 %v5342, 0.7978846
  %v5539 = vmul.f32 %v5343, 0.7978846
  %v5540 = vmul.f32 %v5344, 0.7978846
  %v5541 = vmul.f32 %v5345, 0.7978846
  %v5542 = vmul.f32 %v5346, 0.7978846
  %v5543 = vmul.f32 %v5347, 0.7978846
  %v5544 = vmul.f32 %v5348, 0.7978846
  %v5545 = vmul.f32 %v5349, 0.7978846
  %v5546 = vmul.f32 %v5350, 0.7978846
  %v5547 = vmul.f32 %v5351, 0.7978846
  %v5548 = vmul.f32 %v5352, 0.7978846
  %v5549 = vmul.f32 %v5353, 0.7978846
  %v5550 = vmul.f32 %v5354, 0.7978846
  %v5551 = vmul.f32 %v5355, 0.7978846
  %v5552 = vmul.f32 %v5356, 0.7978846
  %v5553 = vmul.f32 %v5357, 0.7978846
  %v5554 = vmul.f32 %v5358, 0.7978846
  %v5555 = vmul.f32 %v5359, 0.7978846
  %v5556 = vmul.f32 %v5360, 0.7978846
  %v5557 = vmul.f32 %v5361, 0.7978846
  %v5558 = vmul.f32 %v5362, 0.7978846
  %v5559 = vmul.f32 %v5363, 0.7978846
  %v5560 = vmul.f32 %v5364, 0.7978846
  %v5561 = vmul.f32 %v5365, 0.7978846
  %v5562 = vmul.f32 %v5366, 0.7978846
  %v5563 = vmul.f32 %v5367, 0.7978846
  %v5564 = vmul.f32 %v5368, 0.7978846
  %v5565 = vmul.f32 %v5369, 0.7978846
  %v5566 = vmul.f32 %v5370, 0.7978846
  %v5567 = vmul.f32 %v5371, 0.7978846
  %v5568 = vmul.f32 %v5372, 0.7978846
  %v5569 = vmul.f32 %v5373, 0.7978846
  %v5570 = vmul.f32 %v5374, 0.7978846
  %v5571 = vmul.f32 %v5375, 0.7978846
  %v5572 = vmul.f32 %v5376, 0.7978846
  %v5573 = vmul.f32 %v5377, 0.7978846
  %v5574 = vmul.f32 %v5378, 0.7978846
  %v5575 = vmul.f32 %v5379, 0.7978846
  %v5576 = vmul.f32 %v5380, 0.7978846
  %v5577 = vmul.f32 %v5381, 0.7978846
  %v5578 = vmul.f32 %v5382, 0.7978846
  %v5579 = vmul.f32 %v5383, 0.7978846
  %v5580 = vmul.f32 %v5384, 0.7978846
  %v5581 = vmul.f32 %v5385, 0.7978846
  %v5582 = vmul.f32 %v5386, 0.7978846
  %v5583 = vmul.f32 %v5387, 0.7978846
  %v5584 = vmul.f32 %v5388, 0.7978846
  %v5585 = vmul.f32 %v5389, 0.7978846
  %v5586 = vmul.f32 %v5390, 0.7978846
  %v5587 = vmul.f32 %v5391, 0.7978846
  %v5588 = vmul.f32 %v5392, 0.7978846
  %v5589 = vmul.f32 %v5393, 0.7978846
  %v5590 = vmul.f32 %v5394, 0.7978846
  %v5591 = vmul.f32 %v5395, 0.7978846
  %v5592 = vmul.f32 %v5396, 0.7978846
  %v5593 = vmul.f32 %v5397, 0.7978846
  %v5594 = vmul.f32 %v5398, 0.7978846
  %v5595 = vmul.f32 %v5399, 0.7978846
  %v5596 = vmul.f32 %v5400, 0.7978846
  %v5597 = vmul.f32 %v5401, 0.7978846
  %v5598 = vmul.f32 %v5402, 0.7978846
  %v5599 = vmul.f32 %v5403, 0.7978846
  %v5600 = vmul.f32 %v5404, 0.7978846
  %v5601 = vmul.f32 %v5405, 0.7978846
  %v5602 = vmul.f32 %v5406, 0.7978846
  %v5603 = vmul.f32 %v5407, 0.7978846
  %v5604 = vmul.f32 %v5408, 0.7978846
  %v5605 = vmul.f32 %v5409, 0.7978846
  %v5606 = vmul.f32 %v5410, 0.7978846
  %v5607 = vmul.f32 %v5411, 0.7978846
  %v5608 = vmul.f32 %v5412, 0.7978846
  %v5609 = vmul.f32 %v5413, 0.7978846
  %v5610 = vmul.f32 %v5414, 0.7978846
  %v5611 = vmul.f32 %v5415, 0.7978846
  %v5612 = vmul.f32 %v5416, 0.7978846
  %v5613 = vmul.f32 %v5417, 0.7978846
  %v5614 = vmul.f32 %v5418, 0.7978846
  %v5615 = vmul.f32 %v5419, 0.7978846
  %v5616 = vmul.f32 %v5420, 0.7978846
  %v5617 = vmul.f32 %v5421, 0.7978846
  %v5618 = vmul.f32 %v5422, 0.7978846
  %v5619 = vmul.f32 %v5423, 0.7978846
  %v5620 = vmul.f32 %v5424, 0.7978846
  %v5621 = vmul.f32 %v5425, 0.7978846
  %v5622 = vmul.f32 %v5426, 0.7978846
  %v5623 = vmul.f32 %v5427, 0.7978846
  %v5624 = vmul.f32 %v5428, 0.7978846
  %v5625 = vmul.f32 %v5429, 0.7978846
  %v5626 = vmul.f32 %v5430, 0.7978846
  %v5627 = vmul.f32 %v5431, 0.7978846
  %v5628 = vmul.f32 %v5432, 0.7978846
  %v5629 = vmul.f32 %v5433, 0.7978846
  %v5630 = vmul.f32 %v5434, 0.7978846
  %v5631 = vmul.f32 %v5435, 0.7978846
  %v5632 = vmul.f32 %v5436, 0.7978846
  %v5633 = vmul.f32 %v5437, 0.7978846
  %v5634 = vmul.f32 %v5438, 0.7978846
  %v5635 = vmul.f32 %v5439, 0.7978846
  %v5636 = vmul.f32 %v5440, 0.7978846
  %v5637 = vmul.f32 %v5441, 0.7978846
  %v5638 = vmul.f32 %v5442, 0.7978846
  %v5639 = vmul.f32 %v5443, 0.7978846
  %v5640 = vmul.f32 %v5444, 0.7978846
  %v5641 = vmul.f32 %v5445, 0.7978846
  %v5642 = vmul.f32 %v5446, 0.7978846
  %v5643 = vmul.f32 %v5447, 0.7978846
  %v5644 = vmul.f32 %v5448, 0.7978846
  %v5645 = vmul.f32 %v5449, 0.7978846
  %v5646 = vmul.f32 %v5450, 0.7978846
  %v5647 = vmul.f32 %v5451, 0.7978846
  %v5648 = vmul.f32 %v5452, 0.7978846
  %v5649 = vmul.f32 %v5453, 0.7978846
  %v5650 = vmul.f32 %v5454, 0.7978846
  %v5651 = vmul.f32 %v5455, 0.7978846
  %v5652 = vmul.f32 %v5456, 0.7978846
  %v5653 = vmul.f32 %v5457, 0.7978846
  %v5654 = vmul.f32 %v5458, 0.7978846
  %v5655 = vmul.f32 %v5459, 0.7978846
  %v5656 = vmul.f32 %v5460, 0.7978846
  %v5657 = vmul.f32 %v5461, 0.7978846
  %v5658 = vmul.f32 %v5462, 0.7978846
  %v5659 = vmul.f32 %v5463, 0.7978846
  %v5660 = vmul.f32 %v5464, 0.7978846
  %v5661 = vmul.f32 %v5465, 0.7978846
  %v5662 = vmul.f32 %v5466, 0.7978846
  %v5663 = vmul.f32 %v5467, 0.7978846
  %v5664 = vmul.f32 %v5468, 0.7978846
  %v5665 = vmul.f32 %v5469, 0.7978846
  %v5666 = vmul.f32 %v5470, 0.7978846
  %v5667 = vmul.f32 %v5471, 0.7978846
  %v5668 = vmul.f32 %v5472, 0.7978846
  %v5669 = vmul.f32 %v5473, 0.7978846
  %v5670 = vmul.f32 %v5474, 0.7978846
  %v5671 = vmul.f32 %v5475, 0.7978846
  %v5672 = vmul.f32 %v5476, 0.7978846
  %v5673 = vmul.f32 %v5477, 0.7978846
  %v5674 = vmul.f32 %v5478, 0.7978846
  %v5675 = vmul.f32 %v5479, 0.7978846
  %v5676 = vtanh.pop %v5480
  %v5677 = vtanh.pop %v5481
  %v5678 = vtanh.pop %v5482
  %v5679 = vtanh.pop %v5483
  %v5680 = vtanh.pop %v5484
  %v5681 = vtanh.pop %v5485
  %v5682 = vtanh.pop %v5486
  %v5683 = vtanh.pop %v5487
  %v5684 = vtanh.pop %v5488
  %v5685 = vtanh.pop %v5489
  %v5686 = vtanh.pop %v5490
  %v5687 = vtanh.pop %v5491
  %v5688 = vtanh.pop %v5492
  %v5689 = vtanh.pop %v5493
  %v5690 = vtanh.pop %v5494
  %v5691 = vtanh.pop %v5495
  %v5692 = vtanh.pop %v5496
  %v5693 = vtanh.pop %v5497
  %v5694 = vtanh.pop %v5498
  %v5695 = vtanh.pop %v5499
  %v5696 = vtanh.pop %v5500
  %v5697 = vtanh.pop %v5501
  %v5698 = vtanh.pop %v5502
  %v5699 = vtanh.pop %v5503
  %v5700 = vtanh.pop %v5504
  %v5701 = vtanh.pop %v5505
  %v5702 = vtanh.pop %v5506
  %v5703 = vtanh.pop %v5507
  %v5704 = vtanh.pop %v5508
  %v5705 = vtanh.pop %v5509
  %v5706 = vtanh.pop %v5510
  %v5707 = vtanh.pop %v5511
  %v5708 = vtanh.pop %v5512
  %v5709 = vtanh.pop %v5513
  %v5710 = vtanh.pop %v5514
  %v5711 = vtanh.pop %v5515
  %v5712 = vtanh.pop %v5516
  %v5713 = vtanh.pop %v5517
  %v5714 = vtanh.pop %v5518
  %v5715 = vtanh.pop %v5519
  %v5716 = vtanh.pop %v5520
  %v5717 = vtanh.pop %v5521
  %v5718 = vtanh.pop %v5522
  %v5719 = vtanh.pop %v5523
  %v5720 = vtanh.pop %v5524
  %v5721 = vtanh.pop %v5525
  %v5722 = vtanh.pop %v5526
  %v5723 = vtanh.pop %v5527
  %v5724 = vtanh.pop %v5528
  %v5725 = vtanh.pop %v5529
  %v5726 = vtanh.pop %v5530
  %v5727 = vtanh.pop %v5531
  %v5728 = vtanh.pop %v5532
  %v5729 = vtanh.pop %v5533
  %v5730 = vtanh.pop %v5534
  %v5731 = vtanh.pop %v5535
  %v5732 = vtanh.pop %v5536
  %v5733 = vtanh.pop %v5537
  %v5734 = vtanh.pop %v5538
  %v5735 = vtanh.pop %v5539
  %v5736 = vtanh.pop %v5540
  %v5737 = vtanh.pop %v5541
  %v5738 = vtanh.pop %v5542
  %v5739 = vtanh.pop %v5543
  %v5740 = vtanh.pop %v5544
  %v5741 = vtanh.pop %v5545
  %v5742 = vtanh.pop %v5546
  %v5743 = vtanh.pop %v5547
  %v5744 = vtanh.pop %v5548
  %v5745 = vtanh.pop %v5549
  %v5746 = vtanh.pop %v5550
  %v5747 = vtanh.pop %v5551
  %v5748 = vtanh.pop %v5552
  %v5749 = vtanh.pop %v5553
  %v5750 = vtanh.pop %v5554
  %v5751 = vtanh.pop %v5555
  %v5752 = vtanh.pop %v5556
  %v5753 = vtanh.pop %v5557
  %v5754 = vtanh.pop %v5558
  %v5755 = vtanh.pop %v5559
  %v5756 = vtanh.pop %v5560
  %v5757 = vtanh.pop %v5561
  %v5758 = vtanh.pop %v5562
  %v5759 = vtanh.pop %v5563
  %v5760 = vtanh.pop %v5564
  %v5761 = vtanh.pop %v5565
  %v5762 = vtanh.pop %v5566
  %v5763 = vtanh.pop %v5567
  %v5764 = vtanh.pop %v5568
  %v5765 = vtanh.pop %v5569
  %v5766 = vtanh.pop %v5570
  %v5767 = vtanh.pop %v5571
  %v5768 = vtanh.pop %v5572
  %v5769 = vtanh.pop %v5573
  %v5770 = vtanh.pop %v5574
  %v5771 = vtanh.pop %v5575
  %v5772 = vtanh.pop %v5576
  %v5773 = vtanh.pop %v5577
  %v5774 = vtanh.pop %v5578
  %v5775 = vtanh.pop %v5579
  %v5776 = vtanh.pop %v5580
  %v5777 = vtanh.pop %v5581
  %v5778 = vtanh.pop %v5582
  %v5779 = vtanh.pop %v5583
  %v5780 = vtanh.pop %v5584
  %v5781 = vtanh.pop %v5585
  %v5782 = vtanh.pop %v5586
  %v5783 = vtanh.pop %v5587
  %v5784 = vtanh.pop %v5588
  %v5785 = vtanh.pop %v5589
  %v5786 = vtanh.pop %v5590
  %v5787 = vtanh.pop %v5591
  %v5788 = vtanh.pop %v5592
  %v5789 = vtanh.pop %v5593
  %v5790 = vtanh.pop %v5594
  %v5791 = vtanh.pop %v5595
  %v5792 = vtanh.pop %v5596
  %v5793 = vtanh.pop %v5597
  %v5794 = vtanh.pop %v5598
  %v5795 = vtanh.pop %v5599
  %v5796 = vtanh.pop %v5600
  %v5797 = vtanh.pop %v5601
  %v5798 = vtanh.pop %v5602
  %v5799 = vtanh.pop %v5603
  %v5800 = vtanh.pop %v5604
  %v5801 = vtanh.pop %v5605
  %v5802 = vtanh.pop %v5606
  %v5803 = vtanh.pop %v5607
  %v5804 = vtanh.pop %v5608
  %v5805 = vtanh.pop %v5609
  %v5806 = vtanh.pop %v5610
  %v5807 = vtanh.pop %v5611
  %v5808 = vtanh.pop %v5612
  %v5809 = vtanh.pop %v5613
  %v5810 = vtanh.pop %v5614
  %v5811 = vtanh.pop %v5615
  %v5812 = vtanh.pop %v5616
  %v5813 = vtanh.pop %v5617
  %v5814 = vtanh.pop %v5618
  %v5815 = vtanh.pop %v5619
  %v5816 = vtanh.pop %v5620
  %v5817 = vtanh.pop %v5621
  %v5818 = vtanh.pop %v5622
  %v5819 = vtanh.pop %v5623
  %v5820 = vtanh.pop %v5624
  %v5821 = vtanh.pop %v5625
  %v5822 = vtanh.pop %v5626
  %v5823 = vtanh.pop %v5627
  %v5824 = vtanh.pop %v5628
  %v5825 = vtanh.pop %v5629
  %v5826 = vtanh.pop %v5630
  %v5827 = vtanh.pop %v5631
  %v5828 = vtanh.pop %v5632
  %v5829 = vtanh.pop %v5633
  %v5830 = vtanh.pop %v5634
  %v5831 = vtanh.pop %v5635
  %v5832 = vtanh.pop %v5636
  %v5833 = vtanh.pop %v5637
  %v5834 = vtanh.pop %v5638
  %v5835 = vtanh.pop %v5639
  %v5836 = vtanh.pop %v5640
  %v5837 = vtanh.pop %v5641
  %v5838 = vtanh.pop %v5642
  %v5839 = vtanh.pop %v5643
  %v5840 = vtanh.pop %v5644
  %v5841 = vtanh.pop %v5645
  %v5842 = vtanh.pop %v5646
  %v5843 = vtanh.pop %v5647
  %v5844 = vtanh.pop %v5648
  %v5845 = vtanh.pop %v5649
  %v5846 = vtanh.pop %v5650
  %v5847 = vtanh.pop %v5651
  %v5848 = vtanh.pop %v5652
  %v5849 = vtanh.pop %v5653
  %v5850 = vtanh.pop %v5654
  %v5851 = vtanh.pop %v5655
  %v5852 = vtanh.pop %v5656
  %v5853 = vtanh.pop %v5657
  %v5854 = vtanh.pop %v5658
  %v5855 = vtanh.pop %v5659
  %v5856 = vtanh.pop %v5660
  %v5857 = vtanh.pop %v5661
  %v5858 = vtanh.pop %v5662
  %v5859 = vtanh.pop %v5663
  %v5860 = vtanh.pop %v5664
  %v5861 = vtanh.pop %v5665
  %v5862 = vtanh.pop %v5666
  %v5863 = vtanh.pop %v5667
  %v5864 = vtanh.pop %v5668
  %v5865 = vtanh.pop %v5669
  %v5866 = vtanh.pop %v5670
  %v5867 = vtanh.pop %v5671
  %v5868 = vtanh.pop %v5672
  %v5869 = vtanh.pop %v5673
  %v5870 = vtanh.pop %v5674
  %v5871 = vtanh.pop %v5675
  %v5872 = vadd.f32 %v5676, 1.0
  %v5873 = vadd.f32 %v5677, 1.0
  %v5874 = vadd.f32 %v5678, 1.0
  %v5875 = vadd.f32 %v5679, 1.0
  %v5876 = vadd.f32 %v5680, 1.0
  %v5877 = vadd.f32 %v5681, 1.0
  %v5878 = vadd.f32 %v5682, 1.0
  %v5879 = vadd.f32 %v5683, 1.0
  %v5880 = vadd.f32 %v5684, 1.0
  %v5881 = vadd.f32 %v5685, 1.0
  %v5882 = vadd.f32 %v5686, 1.0
  %v5883 = vadd.f32 %v5687, 1.0
  %v5884 = vadd.f32 %v5688, 1.0
  %v5885 = vadd.f32 %v5689, 1.0
  %v5886 = vadd.f32 %v5690, 1.0
  %v5887 = vadd.f32 %v5691, 1.0
  %v5888 = vadd.f32 %v5692, 1.0
  %v5889 = vadd.f32 %v5693, 1.0
  %v5890 = vadd.f32 %v5694, 1.0
  %v5891 = vadd.f32 %v5695, 1.0
  %v5892 = vadd.f32 %v5696, 1.0
  %v5893 = vadd.f32 %v5697, 1.0
  %v5894 = vadd.f32 %v5698, 1.0
  %v5895 = vadd.f32 %v5699, 1.0
  %v5896 = vadd.f32 %v5700, 1.0
  %v5897 = vadd.f32 %v5701, 1.0
  %v5898 = vadd.f32 %v5702, 1.0
  %v5899 = vadd.f32 %v5703, 1.0
  %v5900 = vadd.f32 %v5704, 1.0
  %v5901 = vadd.f32 %v5705, 1.0
  %v5902 = vadd.f32 %v5706, 1.0
  %v5903 = vadd.f32 %v5707, 1.0
  %v5904 = vadd.f32 %v5708, 1.0
  %v5905 = vadd.f32 %v5709, 1.0
  %v5906 = vadd.f32 %v5710, 1.0
  %v5907 = vadd.f32 %v5711, 1.0
  %v5908 = vadd.f32 %v5712, 1.0
  %v5909 = vadd.f32 %v5713, 1.0
  %v5910 = vadd.f32 %v5714, 1.0
  %v5911 = vadd.f32 %v5715, 1.0
  %v5912 = vadd.f32 %v5716, 1.0
  %v5913 = vadd.f32 %v5717, 1.0
  %v5914 = vadd.f32 %v5718, 1.0
  %v5915 = vadd.f32 %v5719, 1.0
  %v5916 = vadd.f32 %v5720, 1.0
  %v5917 = vadd.f32 %v5721, 1.0
  %v5918 = vadd.f32 %v5722, 1.0
  %v5919 = vadd.f32 %v5723, 1.0
  %v5920 = vadd.f32 %v5724, 1.0
  %v5921 = vadd.f32 %v5725, 1.0
  %v5922 = vadd.f32 %v5726, 1.0
  %v5923 = vadd.f32 %v5727, 1.0
  %v5924 = vadd.f32 %v5728, 1.0
  %v5925 = vadd.f32 %v5729, 1.0
  %v5926 = vadd.f32 %v5730, 1.0
  %v5927 = vadd.f32 %v5731, 1.0
  %v5928 = vadd.f32 %v5732, 1.0
  %v5929 = vadd.f32 %v5733, 1.0
  %v5930 = vadd.f32 %v5734, 1.0
  %v5931 = vadd.f32 %v5735, 1.0
  %v5932 = vadd.f32 %v5736, 1.0
  %v5933 = vadd.f32 %v5737, 1.0
  %v5934 = vadd.f32 %v5738, 1.0
  %v5935 = vadd.f32 %v5739, 1.0
  %v5936 = vadd.f32 %v5740, 1.0
  %v5937 = vadd.f32 %v5741, 1.0
  %v5938 = vadd.f32 %v5742, 1.0
  %v5939 = vadd.f32 %v5743, 1.0
  %v5940 = vadd.f32 %v5744, 1.0
  %v5941 = vadd.f32 %v5745, 1.0
  %v5942 = vadd.f32 %v5746, 1.0
  %v5943 = vadd.f32 %v5747, 1.0
  %v5944 = vadd.f32 %v5748, 1.0
  %v5945 = vadd.f32 %v5749, 1.0
  %v5946 = vadd.f32 %v5750, 1.0
  %v5947 = vadd.f32 %v5751, 1.0
  %v5948 = vadd.f32 %v5752, 1.0
  %v5949 = vadd.f32 %v5753, 1.0
  %v5950 = vadd.f32 %v5754, 1.0
  %v5951 = vadd.f32 %v5755, 1.0
  %v5952 = vadd.f32 %v5756, 1.0
  %v5953 = vadd.f32 %v5757, 1.0
  %v5954 = vadd.f32 %v5758, 1.0
  %v5955 = vadd.f32 %v5759, 1.0
  %v5956 = vadd.f32 %v5760, 1.0
  %v5957 = vadd.f32 %v5761, 1.0
  %v5958 = vadd.f32 %v5762, 1.0
  %v5959 = vadd.f32 %v5763, 1.0
  %v5960 = vadd.f32 %v5764, 1.0
  %v5961 = vadd.f32 %v5765, 1.0
  %v5962 = vadd.f32 %v5766, 1.0
  %v5963 = vadd.f32 %v5767, 1.0
  %v5964 = vadd.f32 %v5768, 1.0
  %v5965 = vadd.f32 %v5769, 1.0
  %v5966 = vadd.f32 %v5770, 1.0
  %v5967 = vadd.f32 %v5771, 1.0
  %v5968 = vadd.f32 %v5772, 1.0
  %v5969 = vadd.f32 %v5773, 1.0
  %v5970 = vadd.f32 %v5774, 1.0
  %v5971 = vadd.f32 %v5775, 1.0
  %v5972 = vadd.f32 %v5776, 1.0
  %v5973 = vadd.f32 %v5777, 1.0
  %v5974 = vadd.f32 %v5778, 1.0
  %v5975 = vadd.f32 %v5779, 1.0
  %v5976 = vadd.f32 %v5780, 1.0
  %v5977 = vadd.f32 %v5781, 1.0
  %v5978 = vadd.f32 %v5782, 1.0
  %v5979 = vadd.f32 %v5783, 1.0
  %v5980 = vadd.f32 %v5784, 1.0
  %v5981 = vadd.f32 %v5785, 1.0
  %v5982 = vadd.f32 %v5786, 1.0
  %v5983 = vadd.f32 %v5787, 1.0
  %v5984 = vadd.f32 %v5788, 1.0
  %v5985 = vadd.f32 %v5789, 1.0
  %v5986 = vadd.f32 %v5790, 1.0
  %v5987 = vadd.f32 %v5791, 1.0
  %v5988 = vadd.f32 %v5792, 1.0
  %v5989 = vadd.f32 %v5793, 1.0
  %v5990 = vadd.f32 %v5794, 1.0
  %v5991 = vadd.f32 %v5795, 1.0
  %v5992 = vadd.f32 %v5796, 1.0
  %v5993 = vadd.f32 %v5797, 1.0
  %v5994 = vadd.f32 %v5798, 1.0
  %v5995 = vadd.f32 %v5799, 1.0
  %v5996 = vadd.f32 %v5800, 1.0
  %v5997 = vadd.f32 %v5801, 1.0
  %v5998 = vadd.f32 %v5802, 1.0
  %v5999 = vadd.f32 %v5803, 1.0
  %v6000 = vadd.f32 %v5804, 1.0
  %v6001 = vadd.f32 %v5805, 1.0
  %v6002 = vadd.f32 %v5806, 1.0
  %v6003 = vadd.f32 %v5807, 1.0
  %v6004 = vadd.f32 %v5808, 1.0
  %v6005 = vadd.f32 %v5809, 1.0
  %v6006 = vadd.f32 %v5810, 1.0
  %v6007 = vadd.f32 %v5811, 1.0
  %v6008 = vadd.f32 %v5812, 1.0
  %v6009 = vadd.f32 %v5813, 1.0
  %v6010 = vadd.f32 %v5814, 1.0
  %v6011 = vadd.f32 %v5815, 1.0
  %v6012 = vadd.f32 %v5816, 1.0
  %v6013 = vadd.f32 %v5817, 1.0
  %v6014 = vadd.f32 %v5818, 1.0
  %v6015 = vadd.f32 %v5819, 1.0
  %v6016 = vadd.f32 %v5820, 1.0
  %v6017 = vadd.f32 %v5821, 1.0
  %v6018 = vadd.f32 %v5822, 1.0
  %v6019 = vadd.f32 %v5823, 1.0
  %v6020 = vadd.f32 %v5824, 1.0
  %v6021 = vadd.f32 %v5825, 1.0
  %v6022 = vadd.f32 %v5826, 1.0
  %v6023 = vadd.f32 %v5827, 1.0
  %v6024 = vadd.f32 %v5828, 1.0
  %v6025 = vadd.f32 %v5829, 1.0
  %v6026 = vadd.f32 %v5830, 1.0
  %v6027 = vadd.f32 %v5831, 1.0
  %v6028 = vadd.f32 %v5832, 1.0
  %v6029 = vadd.f32 %v5833, 1.0
  %v6030 = vadd.f32 %v5834, 1.0
  %v6031 = vadd.f32 %v5835, 1.0
  %v6032 = vadd.f32 %v5836, 1.0
  %v6033 = vadd.f32 %v5837, 1.0
  %v6034 = vadd.f32 %v5838, 1.0
  %v6035 = vadd.f32 %v5839, 1.0
  %v6036 = vadd.f32 %v5840, 1.0
  %v6037 = vadd.f32 %v5841, 1.0
  %v6038 = vadd.f32 %v5842, 1.0
  %v6039 = vadd.f32 %v5843, 1.0
  %v6040 = vadd.f32 %v5844, 1.0
  %v6041 = vadd.f32 %v5845, 1.0
  %v6042 = vadd.f32 %v5846, 1.0
  %v6043 = vadd.f32 %v5847, 1.0
  %v6044 = vadd.f32 %v5848, 1.0
  %v6045 = vadd.f32 %v5849, 1.0
  %v6046 = vadd.f32 %v5850, 1.0
  %v6047 = vadd.f32 %v5851, 1.0
  %v6048 = vadd.f32 %v5852, 1.0
  %v6049 = vadd.f32 %v5853, 1.0
  %v6050 = vadd.f32 %v5854, 1.0
  %v6051 = vadd.f32 %v5855, 1.0
  %v6052 = vadd.f32 %v5856, 1.0
  %v6053 = vadd.f32 %v5857, 1.0
  %v6054 = vadd.f32 %v5858, 1.0
  %v6055 = vadd.f32 %v5859, 1.0
  %v6056 = vadd.f32 %v5860, 1.0
  %v6057 = vadd.f32 %v5861, 1.0
  %v6058 = vadd.f32 %v5862, 1.0
  %v6059 = vadd.f32 %v5863, 1.0
  %v6060 = vadd.f32 %v5864, 1.0
  %v6061 = vadd.f32 %v5865, 1.0
  %v6062 = vadd.f32 %v5866, 1.0
  %v6063 = vadd.f32 %v5867, 1.0
  %v6064 = vadd.f32 %v5868, 1.0
  %v6065 = vadd.f32 %v5869, 1.0
  %v6066 = vadd.f32 %v5870, 1.0
  %v6067 = vadd.f32 %v5871, 1.0
  %v6068 = vmul.f32 %v4500, %v5872
  %v6069 = vmul.f32 %v4501, %v5873
  %v6070 = vmul.f32 %v4502, %v5874
  %v6071 = vmul.f32 %v4503, %v5875
  %v6072 = vmul.f32 %v4504, %v5876
  %v6073 = vmul.f32 %v4505, %v5877
  %v6074 = vmul.f32 %v4506, %v5878
  %v6075 = vmul.f32 %v4507, %v5879
  %v6076 = vmul.f32 %v4508, %v5880
  %v6077 = vmul.f32 %v4509, %v5881
  %v6078 = vmul.f32 %v4510, %v5882
  %v6079 = vmul.f32 %v4511, %v5883
  %v6080 = vmul.f32 %v4512, %v5884
  %v6081 = vmul.f32 %v4513, %v5885
  %v6082 = vmul.f32 %v4514, %v5886
  %v6083 = vmul.f32 %v4515, %v5887
  %v6084 = vmul.f32 %v4516, %v5888
  %v6085 = vmul.f32 %v4517, %v5889
  %v6086 = vmul.f32 %v4518, %v5890
  %v6087 = vmul.f32 %v4519, %v5891
  %v6088 = vmul.f32 %v4520, %v5892
  %v6089 = vmul.f32 %v4521, %v5893
  %v6090 = vmul.f32 %v4522, %v5894
  %v6091 = vmul.f32 %v4523, %v5895
  %v6092 = vmul.f32 %v4524, %v5896
  %v6093 = vmul.f32 %v4525, %v5897
  %v6094 = vmul.f32 %v4526, %v5898
  %v6095 = vmul.f32 %v4527, %v5899
  %v6096 = vmul.f32 %v4528, %v5900
  %v6097 = vmul.f32 %v4529, %v5901
  %v6098 = vmul.f32 %v4530, %v5902
  %v6099 = vmul.f32 %v4531, %v5903
  %v6100 = vmul.f32 %v4532, %v5904
  %v6101 = vmul.f32 %v4533, %v5905
  %v6102 = vmul.f32 %v4534, %v5906
  %v6103 = vmul.f32 %v4535, %v5907
  %v6104 = vmul.f32 %v4536, %v5908
  %v6105 = vmul.f32 %v4537, %v5909
  %v6106 = vmul.f32 %v4538, %v5910
  %v6107 = vmul.f32 %v4539, %v5911
  %v6108 = vmul.f32 %v4540, %v5912
  %v6109 = vmul.f32 %v4541, %v5913
  %v6110 = vmul.f32 %v4542, %v5914
  %v6111 = vmul.f32 %v4543, %v5915
  %v6112 = vmul.f32 %v4544, %v5916
  %v6113 = vmul.f32 %v4545, %v5917
  %v6114 = vmul.f32 %v4546, %v5918
  %v6115 = vmul.f32 %v4547, %v5919
  %v6116 = vmul.f32 %v4548, %v5920
  %v6117 = vmul.f32 %v4549, %v5921
  %v6118 = vmul.f32 %v4550, %v5922
  %v6119 = vmul.f32 %v4551, %v5923
  %v6120 = vmul.f32 %v4552, %v5924
  %v6121 = vmul.f32 %v4553, %v5925
  %v6122 = vmul.f32 %v4554, %v5926
  %v6123 = vmul.f32 %v4555, %v5927
  %v6124 = vmul.f32 %v4556, %v5928
  %v6125 = vmul.f32 %v4557, %v5929
  %v6126 = vmul.f32 %v4558, %v5930
  %v6127 = vmul.f32 %v4559, %v5931
  %v6128 = vmul.f32 %v4560, %v5932
  %v6129 = vmul.f32 %v4561, %v5933
  %v6130 = vmul.f32 %v4562, %v5934
  %v6131 = vmul.f32 %v4563, %v5935
  %v6132 = vmul.f32 %v4564, %v5936
  %v6133 = vmul.f32 %v4565, %v5937
  %v6134 = vmul.f32 %v4566, %v5938
  %v6135 = vmul.f32 %v4567, %v5939
  %v6136 = vmul.f32 %v4568, %v5940
  %v6137 = vmul.f32 %v4569, %v5941
  %v6138 = vmul.f32 %v4570, %v5942
  %v6139 = vmul.f32 %v4571, %v5943
  %v6140 = vmul.f32 %v4572, %v5944
  %v6141 = vmul.f32 %v4573, %v5945
  %v6142 = vmul.f32 %v4574, %v5946
  %v6143 = vmul.f32 %v4575, %v5947
  %v6144 = vmul.f32 %v4576, %v5948
  %v6145 = vmul.f32 %v4577, %v5949
  %v6146 = vmul.f32 %v4578, %v5950
  %v6147 = vmul.f32 %v4579, %v5951
  %v6148 = vmul.f32 %v4580, %v5952
  %v6149 = vmul.f32 %v4581, %v5953
  %v6150 = vmul.f32 %v4582, %v5954
  %v6151 = vmul.f32 %v4583, %v5955
  %v6152 = vmul.f32 %v4584, %v5956
  %v6153 = vmul.f32 %v4585, %v5957
  %v6154 = vmul.f32 %v4586, %v5958
  %v6155 = vmul.f32 %v4587, %v5959
  %v6156 = vmul.f32 %v4588, %v5960
  %v6157 = vmul.f32 %v4589, %v5961
  %v6158 = vmul.f32 %v4590, %v5962
  %v6159 = vmul.f32 %v4591, %v5963
  %v6160 = vmul.f32 %v4592, %v5964
  %v6161 = vmul.f32 %v4593, %v5965
  %v6162 = vmul.f32 %v4594, %v5966
  %v6163 = vmul.f32 %v4595, %v5967
  %v6164 = vmul.f32 %v4596, %v5968
  %v6165 = vmul.f32 %v4597, %v5969
  %v6166 = vmul.f32 %v4598, %v5970
  %v6167 = vmul.f32 %v4599, %v5971
  %v6168 = vmul.f32 %v4600, %v5972
  %v6169 = vmul.f32 %v4601, %v5973
  %v6170 = vmul.f32 %v4602, %v5974
  %v6171 = vmul.f32 %v4603, %v5975
  %v6172 = vmul.f32 %v4604, %v5976
  %v6173 = vmul.f32 %v4605, %v5977
  %v6174 = vmul.f32 %v4606, %v5978
  %v6175 = vmul.f32 %v4607, %v5979
  %v6176 = vmul.f32 %v4608, %v5980
  %v6177 = vmul.f32 %v4609, %v5981
  %v6178 = vmul.f32 %v4610, %v5982
  %v6179 = vmul.f32 %v4611, %v5983
  %v6180 = vmul.f32 %v4612, %v5984
  %v6181 = vmul.f32 %v4613, %v5985
  %v6182 = vmul.f32 %v4614, %v5986
  %v6183 = vmul.f32 %v4615, %v5987
  %v6184 = vmul.f32 %v4616, %v5988
  %v6185 = vmul.f32 %v4617, %v5989
  %v6186 = vmul.f32 %v4618, %v5990
  %v6187 = vmul.f32 %v4619, %v5991
  %v6188 = vmul.f32 %v4620, %v5992
  %v6189 = vmul.f32 %v4621, %v5993
  %v6190 = vmul.f32 %v4622, %v5994
  %v6191 = vmul.f32 %v4623, %v5995
  %v6192 = vmul.f32 %v4624, %v5996
  %v6193 = vmul.f32 %v4625, %v5997
  %v6194 = vmul.f32 %v4626, %v5998
  %v6195 = vmul.f32 %v4627, %v5999
  %v6196 = vmul.f32 %v4628, %v6000
  %v6197 = vmul.f32 %v4629, %v6001
  %v6198 = vmul.f32 %v4630, %v6002
  %v6199 = vmul.f32 %v4631, %v6003
  %v6200 = vmul.f32 %v4632, %v6004
  %v6201 = vmul.f32 %v4633, %v6005
  %v6202 = vmul.f32 %v4634, %v6006
  %v6203 = vmul.f32 %v4635, %v6007
  %v6204 = vmul.f32 %v4636, %v6008
  %v6205 = vmul.f32 %v4637, %v6009
  %v6206 = vmul.f32 %v4638, %v6010
  %v6207 = vmul.f32 %v4639, %v6011
  %v6208 = vmul.f32 %v4640, %v6012
  %v6209 = vmul.f32 %v4641, %v6013
  %v6210 = vmul.f32 %v4642, %v6014
  %v6211 = vmul.f32 %v4643, %v6015
  %v6212 = vmul.f32 %v4644, %v6016
  %v6213 = vmul.f32 %v4645, %v6017
  %v6214 = vmul.f32 %v4646, %v6018
  %v6215 = vmul.f32 %v4647, %v6019
  %v6216 = vmul.f32 %v4648, %v6020
  %v6217 = vmul.f32 %v4649, %v6021
  %v6218 = vmul.f32 %v4650, %v6022
  %v6219 = vmul.f32 %v4651, %v6023
  %v6220 = vmul.f32 %v4652, %v6024
  %v6221 = vmul.f32 %v4653, %v6025
  %v6222 = vmul.f32 %v4654, %v6026
  %v6223 = vmul.f32 %v4655, %v6027
  %v6224 = vmul.f32 %v4656, %v6028
  %v6225 = vmul.f32 %v4657, %v6029
  %v6226 = vmul.f32 %v4658, %v6030
  %v6227 = vmul.f32 %v4659, %v6031
  %v6228 = vmul.f32 %v4660, %v6032
  %v6229 = vmul.f32 %v4661, %v6033
  %v6230 = vmul.f32 %v4662, %v6034
  %v6231 = vmul.f32 %v4663, %v6035
  %v6232 = vmul.f32 %v4664, %v6036
  %v6233 = vmul.f32 %v4665, %v6037
  %v6234 = vmul.f32 %v4666, %v6038
  %v6235 = vmul.f32 %v4667, %v6039
  %v6236 = vmul.f32 %v4668, %v6040
  %v6237 = vmul.f32 %v4669, %v6041
  %v6238 = vmul.f32 %v4670, %v6042
  %v6239 = vmul.f32 %v4671, %v6043
  %v6240 = vmul.f32 %v4672, %v6044
  %v6241 = vmul.f32 %v4673, %v6045
  %v6242 = vmul.f32 %v4674, %v6046
  %v6243 = vmul.f32 %v4675, %v6047
  %v6244 = vmul.f32 %v4676, %v6048
  %v6245 = vmul.f32 %v4677, %v6049
  %v6246 = vmul.f32 %v4678, %v6050
  %v6247 = vmul.f32 %v4679, %v6051
  %v6248 = vmul.f32 %v4680, %v6052
  %v6249 = vmul.f32 %v4681, %v6053
  %v6250 = vmul.f32 %v4682, %v6054
  %v6251 = vmul.f32 %v4683, %v6055
  %v6252 = vmul.f32 %v4684, %v6056
  %v6253 = vmul.f32 %v4685, %v6057
  %v6254 = vmul.f32 %v4686, %v6058
  %v6255 = vmul.f32 %v4687, %v6059
  %v6256 = vmul.f32 %v4688, %v6060
  %v6257 = vmul.f32 %v4689, %v6061
  %v6258 = vmul.f32 %v4690, %v6062
  %v6259 = vmul.f32 %v4691, %v6063
  %v6260 = vmul.f32 %v4692, %v6064
  %v6261 = vmul.f32 %v4693, %v6065
  %v6262 = vmul.f32 %v4694, %v6066
  %v6263 = vmul.f32 %v4695, %v6067
  %v6264 = vpack.c.bf16 %v6069, %v6068
  %v6265 = vpack.c.bf16 %v6071, %v6070
  %v6266 = vpack.c.bf16 %v6073, %v6072
  %v6267 = vpack.c.bf16 %v6075, %v6074
  %v6268 = vpack.c.bf16 %v6077, %v6076
  %v6269 = vpack.c.bf16 %v6079, %v6078
  %v6270 = vpack.c.bf16 %v6081, %v6080
  %v6271 = vpack.c.bf16 %v6083, %v6082
  %v6272 = vpack.c.bf16 %v6085, %v6084
  %v6273 = vpack.c.bf16 %v6087, %v6086
  %v6274 = vpack.c.bf16 %v6089, %v6088
  %v6275 = vpack.c.bf16 %v6091, %v6090
  %v6276 = vpack.c.bf16 %v6093, %v6092
  %v6277 = vpack.c.bf16 %v6095, %v6094
  %v6278 = vpack.c.bf16 %v6097, %v6096
  %v6279 = vpack.c.bf16 %v6099, %v6098
  %v6280 = vpack.c.bf16 %v6101, %v6100
  %v6281 = vpack.c.bf16 %v6103, %v6102
  %v6282 = vpack.c.bf16 %v6105, %v6104
  %v6283 = vpack.c.bf16 %v6107, %v6106
  %v6284 = vpack.c.bf16 %v6109, %v6108
  %v6285 = vpack.c.bf16 %v6111, %v6110
  %v6286 = vpack.c.bf16 %v6113, %v6112
  %v6287 = vpack.c.bf16 %v6115, %v6114
  %v6288 = vpack.c.bf16 %v6117, %v6116
  %v6289 = vpack.c.bf16 %v6119, %v6118
  %v6290 = vpack.c.bf16 %v6121, %v6120
  %v6291 = vpack.c.bf16 %v6123, %v6122
  %v6292 = vpack.c.bf16 %v6125, %v6124
  %v6293 = vpack.c.bf16 %v6127, %v6126
  %v6294 = vpack.c.bf16 %v6129, %v6128
  %v6295 = vpack.c.bf16 %v6131, %v6130
  %v6296 = vpack.c.bf16 %v6133, %v6132
  %v6297 = vpack.c.bf16 %v6135, %v6134
  %v6298 = vpack.c.bf16 %v6137, %v6136
  %v6299 = vpack.c.bf16 %v6139, %v6138
  %v6300 = vpack.c.bf16 %v6141, %v6140
  %v6301 = vpack.c.bf16 %v6143, %v6142
  %v6302 = vpack.c.bf16 %v6145, %v6144
  %v6303 = vpack.c.bf16 %v6147, %v6146
  %v6304 = vpack.c.bf16 %v6149, %v6148
  %v6305 = vpack.c.bf16 %v6151, %v6150
  %v6306 = vpack.c.bf16 %v6153, %v6152
  %v6307 = vpack.c.bf16 %v6155, %v6154
  %v6308 = vpack.c.bf16 %v6157, %v6156
  %v6309 = vpack.c.bf16 %v6159, %v6158
  %v6310 = vpack.c.bf16 %v6161, %v6160
  %v6311 = vpack.c.bf16 %v6163, %v6162
  %v6312 = vpack.c.bf16 %v6165, %v6164
  %v6313 = vpack.c.bf16 %v6167, %v6166
  %v6314 = vpack.c.bf16 %v6169, %v6168
  %v6315 = vpack.c.bf16 %v6171, %v6170
  %v6316 = vpack.c.bf16 %v6173, %v6172
  %v6317 = vpack.c.bf16 %v6175, %v6174
  %v6318 = vpack.c.bf16 %v6177, %v6176
  %v6319 = vpack.c.bf16 %v6179, %v6178
  %v6320 = vpack.c.bf16 %v6181, %v6180
  %v6321 = vpack.c.bf16 %v6183, %v6182
  %v6322 = vpack.c.bf16 %v6185, %v6184
  %v6323 = vpack.c.bf16 %v6187, %v6186
  %v6324 = vpack.c.bf16 %v6189, %v6188
  %v6325 = vpack.c.bf16 %v6191, %v6190
  %v6326 = vpack.c.bf16 %v6193, %v6192
  %v6327 = vpack.c.bf16 %v6195, %v6194
  %v6328 = vpack.c.bf16 %v6197, %v6196
  %v6329 = vpack.c.bf16 %v6199, %v6198
  %v6330 = vpack.c.bf16 %v6201, %v6200
  %v6331 = vpack.c.bf16 %v6203, %v6202
  %v6332 = vpack.c.bf16 %v6205, %v6204
  %v6333 = vpack.c.bf16 %v6207, %v6206
  %v6334 = vpack.c.bf16 %v6209, %v6208
  %v6335 = vpack.c.bf16 %v6211, %v6210
  %v6336 = vpack.c.bf16 %v6213, %v6212
  %v6337 = vpack.c.bf16 %v6215, %v6214
  %v6338 = vpack.c.bf16 %v6217, %v6216
  %v6339 = vpack.c.bf16 %v6219, %v6218
  %v6340 = vpack.c.bf16 %v6221, %v6220
  %v6341 = vpack.c.bf16 %v6223, %v6222
  %v6342 = vpack.c.bf16 %v6225, %v6224
  %v6343 = vpack.c.bf16 %v6227, %v6226
  %v6344 = vpack.c.bf16 %v6229, %v6228
  %v6345 = vpack.c.bf16 %v6231, %v6230
  %v6346 = vpack.c.bf16 %v6233, %v6232
  %v6347 = vpack.c.bf16 %v6235, %v6234
  %v6348 = vpack.c.bf16 %v6237, %v6236
  %v6349 = vpack.c.bf16 %v6239, %v6238
  %v6350 = vpack.c.bf16 %v6241, %v6240
  %v6351 = vpack.c.bf16 %v6243, %v6242
  %v6352 = vpack.c.bf16 %v6245, %v6244
  %v6353 = vpack.c.bf16 %v6247, %v6246
  %v6354 = vpack.c.bf16 %v6249, %v6248
  %v6355 = vpack.c.bf16 %v6251, %v6250
  %v6356 = vpack.c.bf16 %v6253, %v6252
  %v6357 = vpack.c.bf16 %v6255, %v6254
  %v6358 = vpack.c.bf16 %v6257, %v6256
  %v6359 = vpack.c.bf16 %v6259, %v6258
  %v6360 = vpack.c.bf16 %v6261, %v6260
  %v6361 = vpack.c.bf16 %v6263, %v6262
  %v6460 = vunpack.c.l.b16 %v6264
  %v6461 = vunpack.c.h.b16 %v6264
  %v6462 = vunpack.c.l.b16 %v6265
  %v6463 = vunpack.c.h.b16 %v6265
  %v6464 = vunpack.c.l.b16 %v6266
  %v6465 = vunpack.c.h.b16 %v6266
  %v6466 = vunpack.c.l.b16 %v6267
  %v6467 = vunpack.c.h.b16 %v6267
  %v6468 = vunpack.c.l.b16 %v6268
  %v6469 = vunpack.c.h.b16 %v6268
  %v6470 = vunpack.c.l.b16 %v6269
  %v6471 = vunpack.c.h.b16 %v6269
  %v6472 = vunpack.c.l.b16 %v6270
  %v6473 = vunpack.c.h.b16 %v6270
  %v6474 = vunpack.c.l.b16 %v6271
  %v6475 = vunpack.c.h.b16 %v6271
  %v6476 = vunpack.c.l.b16 %v6272
  %v6477 = vunpack.c.h.b16 %v6272
  %v6478 = vunpack.c.l.b16 %v6273
  %v6479 = vunpack.c.h.b16 %v6273
  %v6480 = vunpack.c.l.b16 %v6274
  %v6481 = vunpack.c.h.b16 %v6274
  %v6482 = vunpack.c.l.b16 %v6275
  %v6483 = vunpack.c.h.b16 %v6275
  %v6484 = vunpack.c.l.b16 %v6276
  %v6485 = vunpack.c.h.b16 %v6276
  %v6486 = vunpack.c.l.b16 %v6277
  %v6487 = vunpack.c.h.b16 %v6277
  %v6488 = vunpack.c.l.b16 %v6278
  %v6489 = vunpack.c.h.b16 %v6278
  %v6490 = vunpack.c.l.b16 %v6279
  %v6491 = vunpack.c.h.b16 %v6279
  %v6492 = vunpack.c.l.b16 %v6280
  %v6493 = vunpack.c.h.b16 %v6280
  %v6494 = vunpack.c.l.b16 %v6281
  %v6495 = vunpack.c.h.b16 %v6281
  %v6496 = vunpack.c.l.b16 %v6282
  %v6497 = vunpack.c.h.b16 %v6282
  %v6498 = vunpack.c.l.b16 %v6283
  %v6499 = vunpack.c.h.b16 %v6283
  %v6500 = vunpack.c.l.b16 %v6284
  %v6501 = vunpack.c.h.b16 %v6284
  %v6502 = vunpack.c.l.b16 %v6285
  %v6503 = vunpack.c.h.b16 %v6285
  %v6504 = vunpack.c.l.b16 %v6286
  %v6505 = vunpack.c.h.b16 %v6286
  %v6506 = vunpack.c.l.b16 %v6287
  %v6507 = vunpack.c.h.b16 %v6287
  %v6508 = vunpack.c.l.b16 %v6288
  %v6509 = vunpack.c.h.b16 %v6288
  %v6510 = vunpack.c.l.b16 %v6289
  %v6511 = vunpack.c.h.b16 %v6289
  %v6512 = vunpack.c.l.b16 %v6290
  %v6513 = vunpack.c.h.b16 %v6290
  %v6514 = vunpack.c.l.b16 %v6291
  %v6515 = vunpack.c.h.b16 %v6291
  %v6516 = vunpack.c.l.b16 %v6292
  %v6517 = vunpack.c.h.b16 %v6292
  %v6518 = vunpack.c.l.b16 %v6293
  %v6519 = vunpack.c.h.b16 %v6293
  %v6520 = vunpack.c.l.b16 %v6294
  %v6521 = vunpack.c.h.b16 %v6294
  %v6522 = vunpack.c.l.b16 %v6295
  %v6523 = vunpack.c.h.b16 %v6295
  %v6524 = vunpack.c.l.b16 %v6296
  %v6525 = vunpack.c.h.b16 %v6296
  %v6526 = vunpack.c.l.b16 %v6297
  %v6527 = vunpack.c.h.b16 %v6297
  %v6528 = vunpack.c.l.b16 %v6298
  %v6529 = vunpack.c.h.b16 %v6298
  %v6530 = vunpack.c.l.b16 %v6299
  %v6531 = vunpack.c.h.b16 %v6299
  %v6532 = vunpack.c.l.b16 %v6300
  %v6533 = vunpack.c.h.b16 %v6300
  %v6534 = vunpack.c.l.b16 %v6301
  %v6535 = vunpack.c.h.b16 %v6301
  %v6536 = vunpack.c.l.b16 %v6302
  %v6537 = vunpack.c.h.b16 %v6302
  %v6538 = vunpack.c.l.b16 %v6303
  %v6539 = vunpack.c.h.b16 %v6303
  %v6540 = vunpack.c.l.b16 %v6304
  %v6541 = vunpack.c.h.b16 %v6304
  %v6542 = vunpack.c.l.b16 %v6305
  %v6543 = vunpack.c.h.b16 %v6305
  %v6544 = vunpack.c.l.b16 %v6306
  %v6545 = vunpack.c.h.b16 %v6306
  %v6546 = vunpack.c.l.b16 %v6307
  %v6547 = vunpack.c.h.b16 %v6307
  %v6548 = vunpack.c.l.b16 %v6308
  %v6549 = vunpack.c.h.b16 %v6308
  %v6550 = vunpack.c.l.b16 %v6309
  %v6551 = vunpack.c.h.b16 %v6309
  %v6552 = vunpack.c.l.b16 %v6310
  %v6553 = vunpack.c.h.b16 %v6310
  %v6554 = vunpack.c.l.b16 %v6311
  %v6555 = vunpack.c.h.b16 %v6311
  %v6556 = vunpack.c.l.b16 %v6312
  %v6557 = vunpack.c.h.b16 %v6312
  %v6558 = vunpack.c.l.b16 %v6313
  %v6559 = vunpack.c.h.b16 %v6313
  %v6560 = vunpack.c.l.b16 %v6314
  %v6561 = vunpack.c.h.b16 %v6314
  %v6562 = vunpack.c.l.b16 %v6315
  %v6563 = vunpack.c.h.b16 %v6315
  %v6564 = vunpack.c.l.b16 %v6316
  %v6565 = vunpack.c.h.b16 %v6316
  %v6566 = vunpack.c.l.b16 %v6317
  %v6567 = vunpack.c.h.b16 %v6317
  %v6568 = vunpack.c.l.b16 %v6318
  %v6569 = vunpack.c.h.b16 %v6318
  %v6570 = vunpack.c.l.b16 %v6319
  %v6571 = vunpack.c.h.b16 %v6319
  %v6572 = vunpack.c.l.b16 %v6320
  %v6573 = vunpack.c.h.b16 %v6320
  %v6574 = vunpack.c.l.b16 %v6321
  %v6575 = vunpack.c.h.b16 %v6321
  %v6576 = vunpack.c.l.b16 %v6322
  %v6577 = vunpack.c.h.b16 %v6322
  %v6578 = vunpack.c.l.b16 %v6323
  %v6579 = vunpack.c.h.b16 %v6323
  %v6580 = vunpack.c.l.b16 %v6324
  %v6581 = vunpack.c.h.b16 %v6324
  %v6582 = vunpack.c.l.b16 %v6325
  %v6583 = vunpack.c.h.b16 %v6325
  %v6584 = vunpack.c.l.b16 %v6326
  %v6585 = vunpack.c.h.b16 %v6326
  %v6586 = vunpack.c.l.b16 %v6327
  %v6587 = vunpack.c.h.b16 %v6327
  %v6588 = vunpack.c.l.b16 %v6328
  %v6589 = vunpack.c.h.b16 %v6328
  %v6590 = vunpack.c.l.b16 %v6329
  %v6591 = vunpack.c.h.b16 %v6329
  %v6592 = vunpack.c.l.b16 %v6330
  %v6593 = vunpack.c.h.b16 %v6330
  %v6594 = vunpack.c.l.b16 %v6331
  %v6595 = vunpack.c.h.b16 %v6331
  %v6596 = vunpack.c.l.b16 %v6332
  %v6597 = vunpack.c.h.b16 %v6332
  %v6598 = vunpack.c.l.b16 %v6333
  %v6599 = vunpack.c.h.b16 %v6333
  %v6600 = vunpack.c.l.b16 %v6334
  %v6601 = vunpack.c.h.b16 %v6334
  %v6602 = vunpack.c.l.b16 %v6335
  %v6603 = vunpack.c.h.b16 %v6335
  %v6604 = vunpack.c.l.b16 %v6336
  %v6605 = vunpack.c.h.b16 %v6336
  %v6606 = vunpack.c.l.b16 %v6337
  %v6607 = vunpack.c.h.b16 %v6337
  %v6608 = vunpack.c.l.b16 %v6338
  %v6609 = vunpack.c.h.b16 %v6338
  %v6610 = vunpack.c.l.b16 %v6339
  %v6611 = vunpack.c.h.b16 %v6339
  %v6612 = vunpack.c.l.b16 %v6340
  %v6613 = vunpack.c.h.b16 %v6340
  %v6614 = vunpack.c.l.b16 %v6341
  %v6615 = vunpack.c.h.b16 %v6341
  %v6616 = vunpack.c.l.b16 %v6342
  %v6617 = vunpack.c.h.b16 %v6342
  %v6618 = vunpack.c.l.b16 %v6343
  %v6619 = vunpack.c.h.b16 %v6343
  %v6620 = vunpack.c.l.b16 %v6344
  %v6621 = vunpack.c.h.b16 %v6344
  %v6622 = vunpack.c.l.b16 %v6345
  %v6623 = vunpack.c.h.b16 %v6345
  %v6624 = vunpack.c.l.b16 %v6346
  %v6625 = vunpack.c.h.b16 %v6346
  %v6626 = vunpack.c.l.b16 %v6347
  %v6627 = vunpack.c.h.b16 %v6347
  %v6628 = vunpack.c.l.b16 %v6348
  %v6629 = vunpack.c.h.b16 %v6348
  %v6630 = vunpack.c.l.b16 %v6349
  %v6631 = vunpack.c.h.b16 %v6349
  %v6632 = vunpack.c.l.b16 %v6350
  %v6633 = vunpack.c.h.b16 %v6350
  %v6634 = vunpack.c.l.b16 %v6351
  %v6635 = vunpack.c.h.b16 %v6351
  %v6636 = vunpack.c.l.b16 %v6352
  %v6637 = vunpack.c.h.b16 %v6352
  %v6638 = vunpack.c.l.b16 %v6353
  %v6639 = vunpack.c.h.b16 %v6353
  %v6640 = vunpack.c.l.b16 %v6354
  %v6641 = vunpack.c.h.b16 %v6354
  %v6642 = vunpack.c.l.b16 %v6355
  %v6643 = vunpack.c.h.b16 %v6355
  %v6644 = vunpack.c.l.b16 %v6356
  %v6645 = vunpack.c.h.b16 %v6356
  %v6646 = vunpack.c.l.b16 %v6357
  %v6647 = vunpack.c.h.b16 %v6357
  %v6648 = vunpack.c.l.b16 %v6358
  %v6649 = vunpack.c.h.b16 %v6358
  %v6650 = vunpack.c.l.b16 %v6359
  %v6651 = vunpack.c.h.b16 %v6359
  %v6652 = vunpack.c.l.b16 %v6360
  %v6653 = vunpack.c.h.b16 %v6360
  %v6654 = vunpack.c.l.b16 %v6361
  %v6655 = vunpack.c.h.b16 %v6361
  %v6656 = vpack.c.b16 %v6460, %v6460
  %v6657 = vpack.c.b16 %v6461, %v6461
  %v6658 = vpack.c.b16 %v6462, %v6462
  %v6659 = vpack.c.b16 %v6463, %v6463
  %v6660 = vpack.c.b16 %v6464, %v6464
  %v6661 = vpack.c.b16 %v6465, %v6465
  %v6662 = vpack.c.b16 %v6466, %v6466
  %v6663 = vpack.c.b16 %v6467, %v6467
  %v6664 = vpack.c.b16 %v6468, %v6468
  %v6665 = vpack.c.b16 %v6469, %v6469
  %v6666 = vpack.c.b16 %v6470, %v6470
  %v6667 = vpack.c.b16 %v6471, %v6471
  %v6668 = vpack.c.b16 %v6472, %v6472
  %v6669 = vpack.c.b16 %v6473, %v6473
  %v6670 = vpack.c.b16 %v6474, %v6474
  %v6671 = vpack.c.b16 %v6475, %v6475
  %v6672 = vpack.c.b16 %v6476, %v6476
  %v6673 = vpack.c.b16 %v6477, %v6477
  %v6674 = vpack.c.b16 %v6478, %v6478
  %v6675 = vpack.c.b16 %v6479, %v6479
  %v6676 = vpack.c.b16 %v6480, %v6480
  %v6677 = vpack.c.b16 %v6481, %v6481
  %v6678 = vpack.c.b16 %v6482, %v6482
  %v6679 = vpack.c.b16 %v6483, %v6483
  %v6680 = vpack.c.b16 %v6484, %v6484
  %v6681 = vpack.c.b16 %v6485, %v6485
  %v6682 = vpack.c.b16 %v6486, %v6486
  %v6683 = vpack.c.b16 %v6487, %v6487
  %v6684 = vpack.c.b16 %v6488, %v6488
  %v6685 = vpack.c.b16 %v6489, %v6489
  %v6686 = vpack.c.b16 %v6490, %v6490
  %v6687 = vpack.c.b16 %v6491, %v6491
  %v6688 = vpack.c.b16 %v6492, %v6492
  %v6689 = vpack.c.b16 %v6493, %v6493
  %v6690 = vpack.c.b16 %v6494, %v6494
  %v6691 = vpack.c.b16 %v6495, %v6495
  %v6692 = vpack.c.b16 %v6496, %v6496
  %v6693 = vpack.c.b16 %v6497, %v6497
  %v6694 = vpack.c.b16 %v6498, %v6498
  %v6695 = vpack.c.b16 %v6499, %v6499
  %v6696 = vpack.c.b16 %v6500, %v6500
  %v6697 = vpack.c.b16 %v6501, %v6501
  %v6698 = vpack.c.b16 %v6502, %v6502
  %v6699 = vpack.c.b16 %v6503, %v6503
  %v6700 = vpack.c.b16 %v6504, %v6504
  %v6701 = vpack.c.b16 %v6505, %v6505
  %v6702 = vpack.c.b16 %v6506, %v6506
  %v6703 = vpack.c.b16 %v6507, %v6507
  %v6704 = vpack.c.b16 %v6508, %v6508
  %v6705 = vpack.c.b16 %v6509, %v6509
  %v6706 = vpack.c.b16 %v6510, %v6510
  %v6707 = vpack.c.b16 %v6511, %v6511
  %v6708 = vpack.c.b16 %v6512, %v6512
  %v6709 = vpack.c.b16 %v6513, %v6513
  %v6710 = vpack.c.b16 %v6514, %v6514
  %v6711 = vpack.c.b16 %v6515, %v6515
  %v6712 = vpack.c.b16 %v6516, %v6516
  %v6713 = vpack.c.b16 %v6517, %v6517
  %v6714 = vpack.c.b16 %v6518, %v6518
  %v6715 = vpack.c.b16 %v6519, %v6519
  %v6716 = vpack.c.b16 %v6520, %v6520
  %v6717 = vpack.c.b16 %v6521, %v6521
  %v6718 = vpack.c.b16 %v6522, %v6522
  %v6719 = vpack.c.b16 %v6523, %v6523
  %v6720 = vpack.c.b16 %v6524, %v6524
  %v6721 = vpack.c.b16 %v6525, %v6525
  %v6722 = vpack.c.b16 %v6526, %v6526
  %v6723 = vpack.c.b16 %v6527, %v6527
  %v6724 = vpack.c.b16 %v6528, %v6528
  %v6725 = vpack.c.b16 %v6529, %v6529
  %v6726 = vpack.c.b16 %v6530, %v6530
  %v6727 = vpack.c.b16 %v6531, %v6531
  %v6728 = vpack.c.b16 %v6532, %v6532
  %v6729 = vpack.c.b16 %v6533, %v6533
  %v6730 = vpack.c.b16 %v6534, %v6534
  %v6731 = vpack.c.b16 %v6535, %v6535
  %v6732 = vpack.c.b16 %v6536, %v6536
  %v6733 = vpack.c.b16 %v6537, %v6537
  %v6734 = vpack.c.b16 %v6538, %v6538
  %v6735 = vpack.c.b16 %v6539, %v6539
  %v6736 = vpack.c.b16 %v6540, %v6540
  %v6737 = vpack.c.b16 %v6541, %v6541
  %v6738 = vpack.c.b16 %v6542, %v6542
  %v6739 = vpack.c.b16 %v6543, %v6543
  %v6740 = vpack.c.b16 %v6544, %v6544
  %v6741 = vpack.c.b16 %v6545, %v6545
  %v6742 = vpack.c.b16 %v6546, %v6546
  %v6743 = vpack.c.b16 %v6547, %v6547
  %v6744 = vpack.c.b16 %v6548, %v6548
  %v6745 = vpack.c.b16 %v6549, %v6549
  %v6746 = vpack.c.b16 %v6550, %v6550
  %v6747 = vpack.c.b16 %v6551, %v6551
  %v6748 = vpack.c.b16 %v6552, %v6552
  %v6749 = vpack.c.b16 %v6553, %v6553
  %v6750 = vpack.c.b16 %v6554, %v6554
  %v6751 = vpack.c.b16 %v6555, %v6555
  %v6752 = vpack.c.b16 %v6556, %v6556
  %v6753 = vpack.c.b16 %v6557, %v6557
  %v6754 = vpack.c.b16 %v6558, %v6558
  %v6755 = vpack.c.b16 %v6559, %v6559
  %v6756 = vpack.c.b16 %v6560, %v6560
  %v6757 = vpack.c.b16 %v6561, %v6561
  %v6758 = vpack.c.b16 %v6562, %v6562
  %v6759 = vpack.c.b16 %v6563, %v6563
  %v6760 = vpack.c.b16 %v6564, %v6564
  %v6761 = vpack.c.b16 %v6565, %v6565
  %v6762 = vpack.c.b16 %v6566, %v6566
  %v6763 = vpack.c.b16 %v6567, %v6567
  %v6764 = vpack.c.b16 %v6568, %v6568
  %v6765 = vpack.c.b16 %v6569, %v6569
  %v6766 = vpack.c.b16 %v6570, %v6570
  %v6767 = vpack.c.b16 %v6571, %v6571
  %v6768 = vpack.c.b16 %v6572, %v6572
  %v6769 = vpack.c.b16 %v6573, %v6573
  %v6770 = vpack.c.b16 %v6574, %v6574
  %v6771 = vpack.c.b16 %v6575, %v6575
  %v6772 = vpack.c.b16 %v6576, %v6576
  %v6773 = vpack.c.b16 %v6577, %v6577
  %v6774 = vpack.c.b16 %v6578, %v6578
  %v6775 = vpack.c.b16 %v6579, %v6579
  %v6776 = vpack.c.b16 %v6580, %v6580
  %v6777 = vpack.c.b16 %v6581, %v6581
  %v6778 = vpack.c.b16 %v6582, %v6582
  %v6779 = vpack.c.b16 %v6583, %v6583
  %v6780 = vpack.c.b16 %v6584, %v6584
  %v6781 = vpack.c.b16 %v6585, %v6585
  %v6782 = vpack.c.b16 %v6586, %v6586
  %v6783 = vpack.c.b16 %v6587, %v6587
  %v6784 = vpack.c.b16 %v6588, %v6588
  %v6785 = vpack.c.b16 %v6589, %v6589
  %v6786 = vpack.c.b16 %v6590, %v6590
  %v6787 = vpack.c.b16 %v6591, %v6591
  %v6788 = vpack.c.b16 %v6592, %v6592
  %v6789 = vpack.c.b16 %v6593, %v6593
  %v6790 = vpack.c.b16 %v6594, %v6594
  %v6791 = vpack.c.b16 %v6595, %v6595
  %v6792 = vpack.c.b16 %v6596, %v6596
  %v6793 = vpack.c.b16 %v6597, %v6597
  %v6794 = vpack.c.b16 %v6598, %v6598
  %v6795 = vpack.c.b16 %v6599, %v6599
  %v6796 = vpack.c.b16 %v6600, %v6600
  %v6797 = vpack.c.b16 %v6601, %v6601
  %v6798 = vpack.c.b16 %v6602, %v6602
  %v6799 = vpack.c.b16 %v6603, %v6603
  %v6800 = vpack.c.b16 %v6604, %v6604
  %v6801 = vpack.c.b16 %v6605, %v6605
  %v6802 = vpack.c.b16 %v6606, %v6606
  %v6803 = vpack.c.b16 %v6607, %v6607
  %v6804 = vpack.c.b16 %v6608, %v6608
  %v6805 = vpack.c.b16 %v6609, %v6609
  %v6806 = vpack.c.b16 %v6610, %v6610
  %v6807 = vpack.c.b16 %v6611, %v6611
  %v6808 = vpack.c.b16 %v6612, %v6612
  %v6809 = vpack.c.b16 %v6613, %v6613
  %v6810 = vpack.c.b16 %v6614, %v6614
  %v6811 = vpack.c.b16 %v6615, %v6615
  %v6812 = vpack.c.b16 %v6616, %v6616
  %v6813 = vpack.c.b16 %v6617, %v6617
  %v6814 = vpack.c.b16 %v6618, %v6618
  %v6815 = vpack.c.b16 %v6619, %v6619
  %v6816 = vpack.c.b16 %v6620, %v6620
  %v6817 = vpack.c.b16 %v6621, %v6621
  %v6818 = vpack.c.b16 %v6622, %v6622
  %v6819 = vpack.c.b16 %v6623, %v6623
  %v6820 = vpack.c.b16 %v6624, %v6624
  %v6821 = vpack.c.b16 %v6625, %v6625
  %v6822 = vpack.c.b16 %v6626, %v6626
  %v6823 = vpack.c.b16 %v6627, %v6627
  %v6824 = vpack.c.b16 %v6628, %v6628
  %v6825 = vpack.c.b16 %v6629, %v6629
  %v6826 = vpack.c.b16 %v6630, %v6630
  %v6827 = vpack.c.b16 %v6631, %v6631
  %v6828 = vpack.c.b16 %v6632, %v6632
  %v6829 = vpack.c.b16 %v6633, %v6633
  %v6830 = vpack.c.b16 %v6634, %v6634
  %v6831 = vpack.c.b16 %v6635, %v6635
  %v6832 = vpack.c.b16 %v6636, %v6636
  %v6833 = vpack.c.b16 %v6637, %v6637
  %v6834 = vpack.c.b16 %v6638, %v6638
  %v6835 = vpack.c.b16 %v6639, %v6639
  %v6836 = vpack.c.b16 %v6640, %v6640
  %v6837 = vpack.c.b16 %v6641, %v6641
  %v6838 = vpack.c.b16 %v6642, %v6642
  %v6839 = vpack.c.b16 %v6643, %v6643
  %v6840 = vpack.c.b16 %v6644, %v6644
  %v6841 = vpack.c.b16 %v6645, %v6645
  %v6842 = vpack.c.b16 %v6646, %v6646
  %v6843 = vpack.c.b16 %v6647, %v6647
  %v6844 = vpack.c.b16 %v6648, %v6648
  %v6845 = vpack.c.b16 %v6649, %v6649
  %v6846 = vpack.c.b16 %v6650, %v6650
  %v6847 = vpack.c.b16 %v6651, %v6651
  %v6848 = vpack.c.b16 %v6652, %v6652
  %v6849 = vpack.c.b16 %v6653, %v6653
  %v6850 = vpack.c.b16 %v6654, %v6654
  %v6851 = vpack.c.b16 %v6655, %v6655
  %vm7048 = vcmask 60416
  %7049 = vst.msk [vmem:[%s11] sm:$0xf] %vm7048, %v6656
  %7050 = vst.msk [vmem:[%s11 + $0x4] sm:$0xf] %vm7048, %v6657
  %7051 = vst.msk [vmem:[%s11 + $0x8] sm:$0xf] %vm7048, %v6658
  %7052 = vst.msk [vmem:[%s11 + $0xc] sm:$0xf] %vm7048, %v6659
  %7053 = vst.msk [vmem:[%s11 + $0x10] sm:$0xf] %vm7048, %v6660
  %7054 = vst.msk [vmem:[%s11 + $0x14] sm:$0xf] %vm7048, %v6661
  %7055 = vst.msk [vmem:[%s11 + $0x18] sm:$0xf] %vm7048, %v6662
  %7056 = vst.msk [vmem:[%s11 + $0x1c] sm:$0xf] %vm7048, %v6663
  %7057 = vst.msk [vmem:[%s11 + $0x20] sm:$0xf] %vm7048, %v6664
  %7058 = vst.msk [vmem:[%s11 + $0x24] sm:$0xf] %vm7048, %v6665
  %7059 = vst.msk [vmem:[%s11 + $0x28] sm:$0xf] %vm7048, %v6666
  %7060 = vst.msk [vmem:[%s11 + $0x2c] sm:$0xf] %vm7048, %v6667
  %7061 = vst.msk [vmem:[%s11 + $0x30] sm:$0xf] %vm7048, %v6668
  %7062 = vst.msk [vmem:[%s11 + $0x34] sm:$0xf] %vm7048, %v6669
  %7063 = vst.msk [vmem:[%s11 + $0x38] sm:$0xf] %vm7048, %v6670
  %7064 = vst.msk [vmem:[%s11 + $0x3c] sm:$0xf] %vm7048, %v6671
  %7065 = vst.msk [vmem:[%s11 + $0x40] sm:$0xf] %vm7048, %v6672
  %7066 = vst.msk [vmem:[%s11 + $0x44] sm:$0xf] %vm7048, %v6673
  %7067 = vst.msk [vmem:[%s11 + $0x48] sm:$0xf] %vm7048, %v6674
  %7068 = vst.msk [vmem:[%s11 + $0x4c] sm:$0xf] %vm7048, %v6675
  %7069 = vst.msk [vmem:[%s11 + $0x50] sm:$0xf] %vm7048, %v6676
  %7070 = vst.msk [vmem:[%s11 + $0x54] sm:$0xf] %vm7048, %v6677
  %7071 = vst.msk [vmem:[%s11 + $0x58] sm:$0xf] %vm7048, %v6678
  %7072 = vst.msk [vmem:[%s11 + $0x5c] sm:$0xf] %vm7048, %v6679
  %7073 = vst.msk [vmem:[%s11 + $0x60] sm:$0xf] %vm7048, %v6680
  %7074 = vst.msk [vmem:[%s11 + $0x64] sm:$0xf] %vm7048, %v6681
  %7075 = vst.msk [vmem:[%s11 + $0x68] sm:$0xf] %vm7048, %v6682
  %7076 = vst.msk [vmem:[%s11 + $0x6c] sm:$0xf] %vm7048, %v6683
  %7077 = vst.msk [vmem:[%s11 + $0x70] sm:$0xf] %vm7048, %v6684
  %7078 = vst.msk [vmem:[%s11 + $0x74] sm:$0xf] %vm7048, %v6685
  %7079 = vst.msk [vmem:[%s11 + $0x78] sm:$0xf] %vm7048, %v6686
  %7080 = vst.msk [vmem:[%s11 + $0x7c] sm:$0xf] %vm7048, %v6687
  %7081 = vst.msk [vmem:[%s11 + $0x80] sm:$0xf] %vm7048, %v6688
  %7082 = vst.msk [vmem:[%s11 + $0x84] sm:$0xf] %vm7048, %v6689
  %7083 = vst.msk [vmem:[%s11 + $0x88] sm:$0xf] %vm7048, %v6690
  %7084 = vst.msk [vmem:[%s11 + $0x8c] sm:$0xf] %vm7048, %v6691
  %7085 = vst.msk [vmem:[%s11 + $0x90] sm:$0xf] %vm7048, %v6692
  %7086 = vst.msk [vmem:[%s11 + $0x94] sm:$0xf] %vm7048, %v6693
  %7087 = vst.msk [vmem:[%s11 + $0x98] sm:$0xf] %vm7048, %v6694
  %7088 = vst.msk [vmem:[%s11 + $0x9c] sm:$0xf] %vm7048, %v6695
  %7089 = vst.msk [vmem:[%s11 + $0xa0] sm:$0xf] %vm7048, %v6696
  %7090 = vst.msk [vmem:[%s11 + $0xa4] sm:$0xf] %vm7048, %v6697
  %7091 = vst.msk [vmem:[%s11 + $0xa8] sm:$0xf] %vm7048, %v6698
  %7092 = vst.msk [vmem:[%s11 + $0xac] sm:$0xf] %vm7048, %v6699
  %7093 = vst.msk [vmem:[%s11 + $0xb0] sm:$0xf] %vm7048, %v6700
  %7094 = vst.msk [vmem:[%s11 + $0xb4] sm:$0xf] %vm7048, %v6701
  %7095 = vst.msk [vmem:[%s11 + $0xb8] sm:$0xf] %vm7048, %v6702
  %7096 = vst.msk [vmem:[%s11 + $0xbc] sm:$0xf] %vm7048, %v6703
  %7097 = vst.msk [vmem:[%s11 + $0xc0] sm:$0xf] %vm7048, %v6704
  %7098 = vst.msk [vmem:[%s11 + $0xc4] sm:$0xf] %vm7048, %v6705
  %7099 = vst.msk [vmem:[%s11 + $0xc8] sm:$0xf] %vm7048, %v6706
  %7100 = vst.msk [vmem:[%s11 + $0xcc] sm:$0xf] %vm7048, %v6707
  %7101 = vst.msk [vmem:[%s11 + $0xd0] sm:$0xf] %vm7048, %v6708
  %7102 = vst.msk [vmem:[%s11 + $0xd4] sm:$0xf] %vm7048, %v6709
  %7103 = vst.msk [vmem:[%s11 + $0xd8] sm:$0xf] %vm7048, %v6710
  %7104 = vst.msk [vmem:[%s11 + $0xdc] sm:$0xf] %vm7048, %v6711
  %7105 = vst.msk [vmem:[%s11 + $0xe0] sm:$0xf] %vm7048, %v6712
  %7106 = vst.msk [vmem:[%s11 + $0xe4] sm:$0xf] %vm7048, %v6713
  %7107 = vst.msk [vmem:[%s11 + $0xe8] sm:$0xf] %vm7048, %v6714
  %7108 = vst.msk [vmem:[%s11 + $0xec] sm:$0xf] %vm7048, %v6715
  %7109 = vst.msk [vmem:[%s11 + $0xf0] sm:$0xf] %vm7048, %v6716
  %7110 = vst.msk [vmem:[%s11 + $0xf4] sm:$0xf] %vm7048, %v6717
  %7111 = vst.msk [vmem:[%s11 + $0xf8] sm:$0xf] %vm7048, %v6718
  %7112 = vst.msk [vmem:[%s11 + $0xfc] sm:$0xf] %vm7048, %v6719
  %7113 = vst.msk [vmem:[%s11 + $0x100] sm:$0xf] %vm7048, %v6720
  %7114 = vst.msk [vmem:[%s11 + $0x104] sm:$0xf] %vm7048, %v6721
  %7115 = vst.msk [vmem:[%s11 + $0x108] sm:$0xf] %vm7048, %v6722
  %7116 = vst.msk [vmem:[%s11 + $0x10c] sm:$0xf] %vm7048, %v6723
  %7117 = vst.msk [vmem:[%s11 + $0x110] sm:$0xf] %vm7048, %v6724
  %7118 = vst.msk [vmem:[%s11 + $0x114] sm:$0xf] %vm7048, %v6725
  %7119 = vst.msk [vmem:[%s11 + $0x118] sm:$0xf] %vm7048, %v6726
  %7120 = vst.msk [vmem:[%s11 + $0x11c] sm:$0xf] %vm7048, %v6727
  %7121 = vst.msk [vmem:[%s11 + $0x120] sm:$0xf] %vm7048, %v6728
  %7122 = vst.msk [vmem:[%s11 + $0x124] sm:$0xf] %vm7048, %v6729
  %7123 = vst.msk [vmem:[%s11 + $0x128] sm:$0xf] %vm7048, %v6730
  %7124 = vst.msk [vmem:[%s11 + $0x12c] sm:$0xf] %vm7048, %v6731
  %7125 = vst.msk [vmem:[%s11 + $0x130] sm:$0xf] %vm7048, %v6732
  %7126 = vst.msk [vmem:[%s11 + $0x134] sm:$0xf] %vm7048, %v6733
  %7127 = vst.msk [vmem:[%s11 + $0x138] sm:$0xf] %vm7048, %v6734
  %7128 = vst.msk [vmem:[%s11 + $0x13c] sm:$0xf] %vm7048, %v6735
  %7129 = vst.msk [vmem:[%s11 + $0x140] sm:$0xf] %vm7048, %v6736
  %7130 = vst.msk [vmem:[%s11 + $0x144] sm:$0xf] %vm7048, %v6737
  %7131 = vst.msk [vmem:[%s11 + $0x148] sm:$0xf] %vm7048, %v6738
  %7132 = vst.msk [vmem:[%s11 + $0x14c] sm:$0xf] %vm7048, %v6739
  %7133 = vst.msk [vmem:[%s11 + $0x150] sm:$0xf] %vm7048, %v6740
  %7134 = vst.msk [vmem:[%s11 + $0x154] sm:$0xf] %vm7048, %v6741
  %7135 = vst.msk [vmem:[%s11 + $0x158] sm:$0xf] %vm7048, %v6742
  %7136 = vst.msk [vmem:[%s11 + $0x15c] sm:$0xf] %vm7048, %v6743
  %7137 = vst.msk [vmem:[%s11 + $0x160] sm:$0xf] %vm7048, %v6744
  %7138 = vst.msk [vmem:[%s11 + $0x164] sm:$0xf] %vm7048, %v6745
  %7139 = vst.msk [vmem:[%s11 + $0x168] sm:$0xf] %vm7048, %v6746
  %7140 = vst.msk [vmem:[%s11 + $0x16c] sm:$0xf] %vm7048, %v6747
  %7141 = vst.msk [vmem:[%s11 + $0x170] sm:$0xf] %vm7048, %v6748
  %7142 = vst.msk [vmem:[%s11 + $0x174] sm:$0xf] %vm7048, %v6749
  %7143 = vst.msk [vmem:[%s11 + $0x178] sm:$0xf] %vm7048, %v6750
  %7144 = vst.msk [vmem:[%s11 + $0x17c] sm:$0xf] %vm7048, %v6751
  %7145 = vst.msk [vmem:[%s11 + $0x180] sm:$0xf] %vm7048, %v6752
  %7146 = vst.msk [vmem:[%s11 + $0x184] sm:$0xf] %vm7048, %v6753
  %7147 = vst.msk [vmem:[%s11 + $0x188] sm:$0xf] %vm7048, %v6754
  %7148 = vst.msk [vmem:[%s11 + $0x18c] sm:$0xf] %vm7048, %v6755
  %7149 = vst.msk [vmem:[%s11 + $0x190] sm:$0xf] %vm7048, %v6756
  %7150 = vst.msk [vmem:[%s11 + $0x194] sm:$0xf] %vm7048, %v6757
  %7151 = vst.msk [vmem:[%s11 + $0x198] sm:$0xf] %vm7048, %v6758
  %7152 = vst.msk [vmem:[%s11 + $0x19c] sm:$0xf] %vm7048, %v6759
  %7153 = vst.msk [vmem:[%s11 + $0x1a0] sm:$0xf] %vm7048, %v6760
  %7154 = vst.msk [vmem:[%s11 + $0x1a4] sm:$0xf] %vm7048, %v6761
  %7155 = vst.msk [vmem:[%s11 + $0x1a8] sm:$0xf] %vm7048, %v6762
  %7156 = vst.msk [vmem:[%s11 + $0x1ac] sm:$0xf] %vm7048, %v6763
  %7157 = vst.msk [vmem:[%s11 + $0x1b0] sm:$0xf] %vm7048, %v6764
  %7158 = vst.msk [vmem:[%s11 + $0x1b4] sm:$0xf] %vm7048, %v6765
  %7159 = vst.msk [vmem:[%s11 + $0x1b8] sm:$0xf] %vm7048, %v6766
  %7160 = vst.msk [vmem:[%s11 + $0x1bc] sm:$0xf] %vm7048, %v6767
  %7161 = vst.msk [vmem:[%s11 + $0x1c0] sm:$0xf] %vm7048, %v6768
  %7162 = vst.msk [vmem:[%s11 + $0x1c4] sm:$0xf] %vm7048, %v6769
  %7163 = vst.msk [vmem:[%s11 + $0x1c8] sm:$0xf] %vm7048, %v6770
  %7164 = vst.msk [vmem:[%s11 + $0x1cc] sm:$0xf] %vm7048, %v6771
  %7165 = vst.msk [vmem:[%s11 + $0x1d0] sm:$0xf] %vm7048, %v6772
  %7166 = vst.msk [vmem:[%s11 + $0x1d4] sm:$0xf] %vm7048, %v6773
  %7167 = vst.msk [vmem:[%s11 + $0x1d8] sm:$0xf] %vm7048, %v6774
  %7168 = vst.msk [vmem:[%s11 + $0x1dc] sm:$0xf] %vm7048, %v6775
  %7169 = vst.msk [vmem:[%s11 + $0x1e0] sm:$0xf] %vm7048, %v6776
  %7170 = vst.msk [vmem:[%s11 + $0x1e4] sm:$0xf] %vm7048, %v6777
  %7171 = vst.msk [vmem:[%s11 + $0x1e8] sm:$0xf] %vm7048, %v6778
  %7172 = vst.msk [vmem:[%s11 + $0x1ec] sm:$0xf] %vm7048, %v6779
  %7173 = vst.msk [vmem:[%s11 + $0x1f0] sm:$0xf] %vm7048, %v6780
  %7174 = vst.msk [vmem:[%s11 + $0x1f4] sm:$0xf] %vm7048, %v6781
  %7175 = vst.msk [vmem:[%s11 + $0x1f8] sm:$0xf] %vm7048, %v6782
  %7176 = vst.msk [vmem:[%s11 + $0x1fc] sm:$0xf] %vm7048, %v6783
  %7177 = vst.msk [vmem:[%s11 + $0x200] sm:$0xf] %vm7048, %v6784
  %7178 = vst.msk [vmem:[%s11 + $0x204] sm:$0xf] %vm7048, %v6785
  %7179 = vst.msk [vmem:[%s11 + $0x208] sm:$0xf] %vm7048, %v6786
  %7180 = vst.msk [vmem:[%s11 + $0x20c] sm:$0xf] %vm7048, %v6787
  %7181 = vst.msk [vmem:[%s11 + $0x210] sm:$0xf] %vm7048, %v6788
  %7182 = vst.msk [vmem:[%s11 + $0x214] sm:$0xf] %vm7048, %v6789
  %7183 = vst.msk [vmem:[%s11 + $0x218] sm:$0xf] %vm7048, %v6790
  %7184 = vst.msk [vmem:[%s11 + $0x21c] sm:$0xf] %vm7048, %v6791
  %7185 = vst.msk [vmem:[%s11 + $0x220] sm:$0xf] %vm7048, %v6792
  %7186 = vst.msk [vmem:[%s11 + $0x224] sm:$0xf] %vm7048, %v6793
  %7187 = vst.msk [vmem:[%s11 + $0x228] sm:$0xf] %vm7048, %v6794
  %7188 = vst.msk [vmem:[%s11 + $0x22c] sm:$0xf] %vm7048, %v6795
  %7189 = vst.msk [vmem:[%s11 + $0x230] sm:$0xf] %vm7048, %v6796
  %7190 = vst.msk [vmem:[%s11 + $0x234] sm:$0xf] %vm7048, %v6797
  %7191 = vst.msk [vmem:[%s11 + $0x238] sm:$0xf] %vm7048, %v6798
  %7192 = vst.msk [vmem:[%s11 + $0x23c] sm:$0xf] %vm7048, %v6799
  %7193 = vst.msk [vmem:[%s11 + $0x240] sm:$0xf] %vm7048, %v6800
  %7194 = vst.msk [vmem:[%s11 + $0x244] sm:$0xf] %vm7048, %v6801
  %7195 = vst.msk [vmem:[%s11 + $0x248] sm:$0xf] %vm7048, %v6802
  %7196 = vst.msk [vmem:[%s11 + $0x24c] sm:$0xf] %vm7048, %v6803
  %7197 = vst.msk [vmem:[%s11 + $0x250] sm:$0xf] %vm7048, %v6804
  %7198 = vst.msk [vmem:[%s11 + $0x254] sm:$0xf] %vm7048, %v6805
  %7199 = vst.msk [vmem:[%s11 + $0x258] sm:$0xf] %vm7048, %v6806
  %7200 = vst.msk [vmem:[%s11 + $0x25c] sm:$0xf] %vm7048, %v6807
  %7201 = vst.msk [vmem:[%s11 + $0x260] sm:$0xf] %vm7048, %v6808
  %7202 = vst.msk [vmem:[%s11 + $0x264] sm:$0xf] %vm7048, %v6809
  %7203 = vst.msk [vmem:[%s11 + $0x268] sm:$0xf] %vm7048, %v6810
  %7204 = vst.msk [vmem:[%s11 + $0x26c] sm:$0xf] %vm7048, %v6811
  %7205 = vst.msk [vmem:[%s11 + $0x270] sm:$0xf] %vm7048, %v6812
  %7206 = vst.msk [vmem:[%s11 + $0x274] sm:$0xf] %vm7048, %v6813
  %7207 = vst.msk [vmem:[%s11 + $0x278] sm:$0xf] %vm7048, %v6814
  %7208 = vst.msk [vmem:[%s11 + $0x27c] sm:$0xf] %vm7048, %v6815
  %7209 = vst.msk [vmem:[%s11 + $0x280] sm:$0xf] %vm7048, %v6816
  %7210 = vst.msk [vmem:[%s11 + $0x284] sm:$0xf] %vm7048, %v6817
  %7211 = vst.msk [vmem:[%s11 + $0x288] sm:$0xf] %vm7048, %v6818
  %7212 = vst.msk [vmem:[%s11 + $0x28c] sm:$0xf] %vm7048, %v6819
  %7213 = vst.msk [vmem:[%s11 + $0x290] sm:$0xf] %vm7048, %v6820
  %7214 = vst.msk [vmem:[%s11 + $0x294] sm:$0xf] %vm7048, %v6821
  %7215 = vst.msk [vmem:[%s11 + $0x298] sm:$0xf] %vm7048, %v6822
  %7216 = vst.msk [vmem:[%s11 + $0x29c] sm:$0xf] %vm7048, %v6823
  %7217 = vst.msk [vmem:[%s11 + $0x2a0] sm:$0xf] %vm7048, %v6824
  %7218 = vst.msk [vmem:[%s11 + $0x2a4] sm:$0xf] %vm7048, %v6825
  %7219 = vst.msk [vmem:[%s11 + $0x2a8] sm:$0xf] %vm7048, %v6826
  %7220 = vst.msk [vmem:[%s11 + $0x2ac] sm:$0xf] %vm7048, %v6827
  %7221 = vst.msk [vmem:[%s11 + $0x2b0] sm:$0xf] %vm7048, %v6828
  %7222 = vst.msk [vmem:[%s11 + $0x2b4] sm:$0xf] %vm7048, %v6829
  %7223 = vst.msk [vmem:[%s11 + $0x2b8] sm:$0xf] %vm7048, %v6830
  %7224 = vst.msk [vmem:[%s11 + $0x2bc] sm:$0xf] %vm7048, %v6831
  %7225 = vst.msk [vmem:[%s11 + $0x2c0] sm:$0xf] %vm7048, %v6832
  %7226 = vst.msk [vmem:[%s11 + $0x2c4] sm:$0xf] %vm7048, %v6833
  %7227 = vst.msk [vmem:[%s11 + $0x2c8] sm:$0xf] %vm7048, %v6834
  %7228 = vst.msk [vmem:[%s11 + $0x2cc] sm:$0xf] %vm7048, %v6835
  %7229 = vst.msk [vmem:[%s11 + $0x2d0] sm:$0xf] %vm7048, %v6836
  %7230 = vst.msk [vmem:[%s11 + $0x2d4] sm:$0xf] %vm7048, %v6837
  %7231 = vst.msk [vmem:[%s11 + $0x2d8] sm:$0xf] %vm7048, %v6838
  %7232 = vst.msk [vmem:[%s11 + $0x2dc] sm:$0xf] %vm7048, %v6839
  %7233 = vst.msk [vmem:[%s11 + $0x2e0] sm:$0xf] %vm7048, %v6840
  %7234 = vst.msk [vmem:[%s11 + $0x2e4] sm:$0xf] %vm7048, %v6841
  %7235 = vst.msk [vmem:[%s11 + $0x2e8] sm:$0xf] %vm7048, %v6842
  %7236 = vst.msk [vmem:[%s11 + $0x2ec] sm:$0xf] %vm7048, %v6843
  %7237 = vst.msk [vmem:[%s11 + $0x2f0] sm:$0xf] %vm7048, %v6844
  %7238 = vst.msk [vmem:[%s11 + $0x2f4] sm:$0xf] %vm7048, %v6845
  %7239 = vst.msk [vmem:[%s11 + $0x2f8] sm:$0xf] %vm7048, %v6846
  %7240 = vst.msk [vmem:[%s11 + $0x2fc] sm:$0xf] %vm7048, %v6847
  %7241 = vst.msk [vmem:[%s11 + $0x300] sm:$0xf] %vm7048, %v6848
  %7242 = vst.msk [vmem:[%s11 + $0x304] sm:$0xf] %vm7048, %v6849
  %7243 = vst.msk [vmem:[%s11 + $0x308] sm:$0xf] %vm7048, %v6850
  %7244 = vst.msk [vmem:[%s11 + $0x30c] sm:$0xf] %vm7048, %v6851
  %v7245 = vld [vmem:[%s7] sm:$0xf]
  %v7246 = vld [vmem:[%s7 + $0x4] sm:$0xf]
  %v7247 = vld [vmem:[%s7 + $0x8] sm:$0xf]
  %v7248 = vld [vmem:[%s7 + $0xc] sm:$0xf]
  %v7249 = vld [vmem:[%s8] sm:$0xff]
  %v7250 = vld [vmem:[%s8 + $0x8] sm:$0xff]
  %v7251 = vld [vmem:[%s8 + $0x10] sm:$0xff]
  %v7252 = vld [vmem:[%s8 + $0x18] sm:$0xff]
  %7254 = vset.pattern.permute.xlu0 0
  %7255 = vperm.xlu0 %7254, %v7249
  %v7256 = vpop.permute.xlu0 %7255
  %7259 = vset.pattern.permute.xlu0 0
  %7260 = vperm.xlu0 %7259, %v7250
  %v7261 = vpop.permute.xlu0 %7260
  %7264 = vset.pattern.permute.xlu0 0
  %7265 = vperm.xlu0 %7264, %v7251
  %v7266 = vpop.permute.xlu0 %7265
  %7269 = vset.pattern.permute.xlu0 0
  %7270 = vperm.xlu0 %7269, %v7252
  %v7271 = vpop.permute.xlu0 %7270
  %v7277 = vunpack.c.l.b16 %v7245
  %v7278 = vunpack.c.l.b16 %v7246
  %v7279 = vunpack.c.l.b16 %v7247
  %v7280 = vunpack.c.l.b16 %v7248
  %v7281 = vpack.c.b16 %v7278, %v7277
  %v7282 = vpack.c.b16 %v7280, %v7279
  %v7284 = vsel %vm1317, %v7281, 0
  %v7287 = vsel %vm1317, %v7282, 0
  %7289 = vmatprep.subr.bf16.mxu0 0
  %7290 = vmatpush1.bf16.msra.mxu0 %v1521
  %7291 = vmatprep.subr.bf16.mxu0 0
  %7292 = vmatpush1.bf16.msra.mxu0 %v3681
  %7293 = vmatprep.subr.bf16.mxu0 0
  %7294 = vmatpush1.bf16.msra.mxu0 0
  %7295 = vmatprep.subr.bf16.mxu0 0
  %7296 = vmatpush1.bf16.msra.mxu0 0
  %7297 = vmatprep.subr.bf16.mxu0 0
  %7298 = vmatpush1.bf16.msra.mxu0 0
  %7299 = vmatprep.subr.bf16.mxu0 0
  %7300 = vmatpush1.bf16.msra.mxu0 0
  %7301 = vmatprep.subr.bf16.mxu0 0
  %7302 = vmatpush1.bf16.msra.mxu0 0
  %7303 = vmatprep.subr.bf16.mxu0 0
  %7304 = vmatpush1.bf16.msra.mxu0 0
  %7305 = vmatprep.subr.bf16.mxu0 0
  %7306 = vmatpush1.bf16.msra.mxu0 0
  %7307 = vmatprep.subr.bf16.mxu0 0
  %7308 = vmatpush1.bf16.msra.mxu0 0
  %7309 = vmatprep.subr.bf16.mxu0 0
  %7310 = vmatpush1.bf16.msra.mxu0 0
  %7311 = vmatprep.subr.bf16.mxu0 0
  %7312 = vmatpush1.bf16.msra.mxu0 0
  %7313 = vmatprep.subr.bf16.mxu0 0
  %7314 = vmatpush1.bf16.msra.mxu0 0
  %7315 = vmatprep.subr.bf16.mxu0 0
  %7316 = vmatpush1.bf16.msra.mxu0 0
  %7317 = vmatprep.subr.bf16.mxu0 0
  %7318 = vmatpush1.bf16.msra.mxu0 0
  %7319 = vmatprep.subr.bf16.mxu0 0
  %7320 = vmatpush1.bf16.msra.mxu0 0
  %7321 = vmatprep.mubr.bf16.mxu0 0
  %7322 = vmatmul.mubr.bf16.gmra.mrb[0].mxu0 %v7284
  %v7323 = vpop.f32.mrb[0].mxu0
  %v7324 = vadd.f32 %v7256, %v7323
  %v7325 = vpop.f32.mrb[0].mxu0
  %v7326 = vpop.f32.mrb[0].mxu0
  %v7327 = vadd.f32 %v7261, %v7326
  %v7328 = vpop.f32.mrb[0].mxu0
  %7329 = vmatprep.mubr.bf16.mxu0 0
  %7330 = vmatmul.mubr.bf16.gmra.mrb[0].mxu0 %v7287
  %v7331 = vpop.f32.mrb[0].mxu0
  %v7332 = vadd.f32 %v7266, %v7331
  %v7333 = vpop.f32.mrb[0].mxu0
  %v7334 = vpop.f32.mrb[0].mxu0
  %v7335 = vadd.f32 %v7271, %v7334
  %v7336 = vpop.f32.mrb[0].mxu0
  %7337 = vdwg.mxu0
  %v7338 = vmul.f32 %v7324, 0.5
  %v7339 = vmul.f32 %v7327, 0.5
  %v7340 = vmul.f32 %v7332, 0.5
  %v7341 = vmul.f32 %v7335, 0.5
  %v7342 = vmul.f32 %v7324, 0.044715
  %v7343 = vmul.f32 %v7327, 0.044715
  %v7344 = vmul.f32 %v7332, 0.044715
  %v7345 = vmul.f32 %v7335, 0.044715
  %v7346 = vmul.f32 %v7342, %v7324
  %v7347 = vmul.f32 %v7343, %v7327
  %v7348 = vmul.f32 %v7344, %v7332
  %v7349 = vmul.f32 %v7345, %v7335
  %v7350 = vmul.f32 %v7346, %v7324
  %v7351 = vmul.f32 %v7347, %v7327
  %v7352 = vmul.f32 %v7348, %v7332
  %v7353 = vmul.f32 %v7349, %v7335
  %v7354 = vadd.f32 %v7324, %v7350
  %v7355 = vadd.f32 %v7327, %v7351
  %v7356 = vadd.f32 %v7332, %v7352
  %v7357 = vadd.f32 %v7335, %v7353
  %v7358 = vmul.f32 %v7354, 0.7978846
  %v7359 = vmul.f32 %v7355, 0.7978846
  %v7360 = vmul.f32 %v7356, 0.7978846
  %v7361 = vmul.f32 %v7357, 0.7978846
  %v7362 = vtanh.pop %v7358
  %v7363 = vtanh.pop %v7359
  %v7364 = vtanh.pop %v7360
  %v7365 = vtanh.pop %v7361
  %v7366 = vadd.f32 %v7362, 1.0
  %v7367 = vadd.f32 %v7363, 1.0
  %v7368 = vadd.f32 %v7364, 1.0
  %v7369 = vadd.f32 %v7365, 1.0
  %v7370 = vmul.f32 %v7338, %v7366
  %v7371 = vmul.f32 %v7339, %v7367
  %v7372 = vmul.f32 %v7340, %v7368
  %v7373 = vmul.f32 %v7341, %v7369
  %v7374 = vld [vmem:[%s9] sm:$0xf]
  %v7375 = vld [vmem:[%s9 + $0x4] sm:$0x1]
  %v7376 = vpack.c.bf16 %v7371, %v7370
  %v7377 = vpack.c.bf16 %v7373, %v7372
  %v7378 = vld [vmem:[%s10] sm:$0xff]
  %v7379 = vld [vmem:[%s10 + $0x8] sm:$0x3]
  %7381 = vset.pattern.permute.xlu0 0
  %7382 = vperm.xlu0 %7381, %v7378
  %v7383 = vpop.permute.xlu0 %7382
  %7386 = vset.pattern.permute.xlu0 0
  %7387 = vperm.xlu0 %7386, %v7379
  %v7388 = vpop.permute.xlu0 %7387
  %v7392 = vunpack.c.l.b16 %v7374
  %v7393 = vunpack.c.l.b16 %v7375
  %v7394 = vpack.c.b16 %v7393, %v7392
  %v7396 = vsel %vm974, %v7394, 0
  %7398 = vmatprep.subr.bf16.mxu0 0
  %7399 = vmatpush1.bf16.msra.mxu0 %v7376
  %7400 = vmatprep.subr.bf16.mxu0 0
  %7401 = vmatpush1.bf16.msra.mxu0 %v7377
  %7402 = vmatprep.subr.bf16.mxu0 0
  %7403 = vmatpush1.bf16.msra.mxu0 0
  %7404 = vmatprep.subr.bf16.mxu0 0
  %7405 = vmatpush1.bf16.msra.mxu0 0
  %7406 = vmatprep.subr.bf16.mxu0 0
  %7407 = vmatpush1.bf16.msra.mxu0 0
  %7408 = vmatprep.subr.bf16.mxu0 0
  %7409 = vmatpush1.bf16.msra.mxu0 0
  %7410 = vmatprep.subr.bf16.mxu0 0
  %7411 = vmatpush1.bf16.msra.mxu0 0
  %7412 = vmatprep.subr.bf16.mxu0 0
  %7413 = vmatpush1.bf16.msra.mxu0 0
  %7414 = vmatprep.subr.bf16.mxu0 0
  %7415 = vmatpush1.bf16.msra.mxu0 0
  %7416 = vmatprep.subr.bf16.mxu0 0
  %7417 = vmatpush1.bf16.msra.mxu0 0
  %7418 = vmatprep.subr.bf16.mxu0 0
  %7419 = vmatpush1.bf16.msra.mxu0 0
  %7420 = vmatprep.subr.bf16.mxu0 0
  %7421 = vmatpush1.bf16.msra.mxu0 0
  %7422 = vmatprep.subr.bf16.mxu0 0
  %7423 = vmatpush1.bf16.msra.mxu0 0
  %7424 = vmatprep.subr.bf16.mxu0 0
  %7425 = vmatpush1.bf16.msra.mxu0 0
  %7426 = vmatprep.subr.bf16.mxu0 0
  %7427 = vmatpush1.bf16.msra.mxu0 0
  %7428 = vmatprep.subr.bf16.mxu0 0
  %7429 = vmatpush1.bf16.msra.mxu0 0
  %7430 = vmatprep.mubr.bf16.mxu0 0
  %7431 = vmatmul.mubr.bf16.gmra.mrb[0].mxu0 %v7396
  %v7432 = vpop.f32.mrb[0].mxu0
  %v7433 = vadd.f32 %v7383, %v7432
  %v7434 = vpop.f32.mrb[0].mxu0
  %v7435 = vpop.f32.mrb[0].mxu0
  %v7436 = vadd.f32 %v7388, %v7435
  %v7437 = vpop.f32.mrb[0].mxu0
  %7438 = vdwg.mxu0
  %vm7439 = vcmask 64512
  %7440 = vst.msk [vmem:[%s12] sm:$0xff] %vm7439, %v7433
  %vm7441 = vcmask 58368
  %7442 = vst.msk [vmem:[%s12 + $0x8] sm:$0x3] %vm7441, %v7436
  // Predicated region
  $region46: #{autoencoder_forward.7} parent=0 // pred_check
    _
  $region47: #{autoencoder_forward.7} parent=0 // pred_check_branch
    %7444 = sbr.rel (0) target = $region49
  $region48: #{autoencoder_forward.7} parent=0 // pred_region
    _
  $region49: #{autoencoder_forward.7} parent=0 // pred_fallthru
    _
  // Predicated region
  $region50: #{autoencoder_forward.7} parent=0 // pred_check
    _
  $region51: #{autoencoder_forward.7} parent=0 // pred_check_branch
    %7446 = sbr.rel (0) target = $region53
  $region52: #{autoencoder_forward.7} parent=0 // pred_region
    _
  $region53: #{autoencoder_forward.7} parent=0 // pred_fallthru
    _
  // Predicated region
  $region54: #{autoencoder_forward.7} parent=0 // pred_check
    _
  $region55: #{autoencoder_forward.7} parent=0 // pred_check_branch
    %7448 = sbr.rel (0) target = $region57
  $region56: #{autoencoder_forward.7} parent=0 // pred_region
    _
  $region57: #{autoencoder_forward.7} parent=0 // pred_fallthru
    _
  // Predicated region
  $region58: #{autoencoder_forward.7} parent=0 // pred_check
    _
  $region59: #{autoencoder_forward.7} parent=0 // pred_check_branch
    %7450 = sbr.rel (0) target = $region61
  $region60: #{autoencoder_forward.7} parent=0 // pred_region
    _
  $region61: #{autoencoder_forward.7} parent=0 // pred_fallthru
    _

// kernel: autoencoder_forward.9
$region0: #{autoencoder_forward.9}
  #allocation0 [shape = 'u32[]', space=smem, size = 0x4, offset = 0x4, fixed_abs, tag = 'smem constant byte address 0x4 - core index']
  #allocation1 [shape = 'u32[144,128]{1,0:T(1,128)}', space=vmem, size = 0x12000, scoped, tag = 'internal scratch']
  %s0 = inlined_call_operand.vmem [shape: bf16[4,64], index: 0, kind: input, shape index: {}]
  %s1 = inlined_call_operand.vmem [shape: f32[4,1], index: 1, kind: input, shape index: {}]
  %s2 = inlined_call_operand.vmem [shape: bf16[64,512], index: 2, kind: input, shape index: {}]
  %s3 = inlined_call_operand.vmem [shape: f32[4,512], index: 3, kind: output, shape index: {}]
  %s4 = sld [smem:[#allocation0]]
  $region83: #{autoencoder_forward.9} parent=0
    _
  %s6 = ssub.s32 1, %s4
  %s7 = scalar_select 0, %s6, %s4
  $region1: #{autoencoder_forward.9} parent=0
    #allocation2 [shape = 'u8[65536]{0}', space=vmem, size = 0x10000, scoped, tag = 'input window, operand 2']
    loop: start=0, step=1, limit=4
    $region2: #{autoencoder_forward.9} parent=1 // loop_pre_header
      _
    $region3: #{autoencoder_forward.9} parent=1 // loop_header
      %s9 = sphi 0, %s13
      %p10 = scmp.ge.s32.totalorder %s9, 4
      %s17 = sphi 0, %s17
      %s19 = sphi 0, %s17
      %s20 = sphi 0, %s19
      %s34 = sphi 0, %s20
      %s38 = sphi 0, %s38
      %s40 = sphi 0, %s38
      %s41 = sphi 0, %s40
      %s55 = sphi 0, %s41
      %s61 = sphi 0, %s63
      %s64 = sphi 0, %s61
      %s65 = sphi 0, %s64
      %s81 = sphi 0, %s65
      %s87 = sphi 0, %s89
      %s90 = sphi 0, %s87
      %s91 = sphi 0, %s90
      %s107 = sphi 0, %s91
    $region4: #{autoencoder_forward.9} parent=1 // loop_header_branch
      %12 = sbr.rel (%p10) target = $region8
    $region5: #{autoencoder_forward.9} parent=1 // loop_body
      %s14 = ssub.s32 %s9, 1
      %s15 = ssub.s32 %s9, 2
      %s16 = sadd.s32 %s9, 1
      %s18 = sadd.s32 %s17, 1
      %p21 = scmp.eq.s32.totalorder %s9, 1
      %p22 = scmp.ne.s32.totalorder %s17, %s19
      %p23 = scmp.eq.s32.totalorder %s9, 0
      %p24 = por %p22, %p23
      %p25 = scmp.ne.s32.totalorder %s17, %s19
      %p26 = scmp.eq.s32.totalorder %s14, 1
      %p27 = por %p25, %p26
      %p28 = scmp.ne.s32.totalorder %s19, %s20
      %p29 = scmp.eq.s32.totalorder %s14, 0
      %p30 = por %p28, %p29
      %p31 = scmp.ne.s32.totalorder %s19, %s20
      %p32 = scmp.eq.s32.totalorder %s15, 1
      %p33 = por %p31, %p32
      %p35 = scmp.ne.s32.totalorder %s20, %s34
      %p36 = scmp.eq.s32.totalorder %s15, 0
      %p37 = por %p35, %p36
      %s39 = sadd.s32 %s38, 1
      %p42 = scmp.eq.s32.totalorder %s9, 1
      %p43 = scmp.ne.s32.totalorder %s38, %s40
      %p44 = scmp.eq.s32.totalorder %s9, 0
      %p45 = por %p43, %p44
      %p46 = scmp.ne.s32.totalorder %s38, %s40
      %p47 = scmp.eq.s32.totalorder %s14, 1
      %p48 = por %p46, %p47
      %p49 = scmp.ne.s32.totalorder %s40, %s41
      %p50 = scmp.eq.s32.totalorder %s14, 0
      %p51 = por %p49, %p50
      %p52 = scmp.ne.s32.totalorder %s40, %s41
      %p53 = scmp.eq.s32.totalorder %s15, 1
      %p54 = por %p52, %p53
      %p56 = scmp.ne.s32.totalorder %s41, %s55
      %p57 = scmp.eq.s32.totalorder %s15, 0
      %p58 = por %p56, %p57
      %s59 = ssub.s32 %s9, %s16
      %p60 = scmp.eq.s32.totalorder %s59, 0
      %s62 = sadd.s32 %s61, 1
      %s63 = scalar_select %p60, %s61, %s62
      %p66 = pneg %p60
      %p67 = scmp.eq.s32.totalorder %s9, 1
      %p68 = por %p66, %p67
      %p69 = scmp.ne.s32.totalorder %s61, %s64
      %p70 = scmp.eq.s32.totalorder %s9, 0
      %p71 = por %p69, %p70
      %p72 = scmp.ne.s32.totalorder %s61, %s64
      %p73 = scmp.eq.s32.totalorder %s14, 1
      %p74 = por %p72, %p73
      %p75 = scmp.ne.s32.totalorder %s64, %s65
      %p76 = scmp.eq.s32.totalorder %s14, 0
      %p77 = por %p75, %p76
      %p78 = scmp.ne.s32.totalorder %s64, %s65
      %p79 = scmp.eq.s32.totalorder %s15, 1
      %p80 = por %p78, %p79
      %p82 = scmp.ne.s32.totalorder %s65, %s81
      %p83 = scmp.eq.s32.totalorder %s15, 0
      %p84 = por %p82, %p83
      %s85 = ssub.s32 %s9, %s16
      %p86 = scmp.eq.s32.totalorder %s85, 0
      %s88 = sadd.s32 %s87, 1
      %s89 = scalar_select %p86, %s87, %s88
      %p92 = pneg %p86
      %p93 = scmp.eq.s32.totalorder %s9, 1
      %p94 = por %p92, %p93
      %p95 = scmp.ne.s32.totalorder %s87, %s90
      %p96 = scmp.eq.s32.totalorder %s9, 0
      %p97 = por %p95, %p96
      %p98 = scmp.ne.s32.totalorder %s87, %s90
      %p99 = scmp.eq.s32.totalorder %s14, 1
      %p100 = por %p98, %p99
      %p101 = scmp.ne.s32.totalorder %s90, %s91
      %p102 = scmp.eq.s32.totalorder %s14, 0
      %p103 = por %p101, %p102
      %p104 = scmp.ne.s32.totalorder %s90, %s91
      %p105 = scmp.eq.s32.totalorder %s15, 1
      %p106 = por %p104, %p105
      %p108 = scmp.ne.s32.totalorder %s91, %s107
      %p109 = scmp.eq.s32.totalorder %s15, 0
      %p110 = por %p108, %p109
      %p111 = scmp.le.s32.totalorder 1, %s9
      %p112 = scmp.lt.s32.totalorder %s9, 3
      %p113 = pnand %p111, %p112
      %p114 = pneg %p113
      // Predicated region
      $region9: #{autoencoder_forward.9} parent=5 // pred_check
        _
      $region10: #{autoencoder_forward.9} parent=5 // pred_check_branch
        %116 = sbr.rel (%p113) target = $region12
      $region11: #{autoencoder_forward.9} parent=5 // pred_region
        %s117 = ssub.s32 %s9, 1
        // Predicated region
        $region13: #{autoencoder_forward.9} parent=11 // pred_check
          %p118 = pneg %p30
        $region14: #{autoencoder_forward.9} parent=11 // pred_check_branch
          %120 = sbr.rel (%p118) target = $region16
        $region15: #{autoencoder_forward.9} parent=11 // pred_region
          _
        $region16: #{autoencoder_forward.9} parent=11 // pred_fallthru
          _
        // Predicated region
        $region17: #{autoencoder_forward.9} parent=11 // pred_check
          %p121 = pneg %p51
        $region18: #{autoencoder_forward.9} parent=11 // pred_check_branch
          %123 = sbr.rel (%p121) target = $region20
        $region19: #{autoencoder_forward.9} parent=11 // pred_region
          _
        $region20: #{autoencoder_forward.9} parent=11 // pred_fallthru
          _
      $region12: #{autoencoder_forward.9} parent=5 // pred_fallthru
        _
      %p124 = scmp.lt.s32.totalorder %s9, 2
      // Predicated region
      $region21: #{autoencoder_forward.9} parent=5 // pred_check
        %p125 = pneg %p124
      $region22: #{autoencoder_forward.9} parent=5 // pred_check_branch
        %127 = sbr.rel (%p125) target = $region24
      $region23: #{autoencoder_forward.9} parent=5 // pred_region
        // Predicated region
        $region25: #{autoencoder_forward.9} parent=23 // pred_check
          %p128 = pneg %p71
        $region26: #{autoencoder_forward.9} parent=23 // pred_check_branch
          %130 = sbr.rel (%p128) target = $region28
        $region27: #{autoencoder_forward.9} parent=23 // pred_region
          %s131 = sand.u32 %s61, 1
          %s132 = sand.u32 %s61, 1
          %s133 = smul.addr %s132, 64
          %s134 = scalar_lea.vmem [#allocation2], %s133
          %s135 = smul.u32 2, %s9
          %s136 = smul.addr %s135, 4
          %s137 = scalar_lea.vmem %s2, %s136
          // Predicated region
          $region29: #{autoencoder_forward.9} parent=27 // pred_check
            _
          $region30: #{autoencoder_forward.9} parent=27 // pred_check_branch
            %139 = sbr.rel (0) target = $region32
          $region31: #{autoencoder_forward.9} parent=27 // pred_region
            // Predicated region
            $region33: #{autoencoder_forward.9} parent=31 // pred_check
              _
            $region34: #{autoencoder_forward.9} parent=31 // pred_check_branch
              %141 = sbr.rel (0) target = $region36
            $region35: #{autoencoder_forward.9} parent=31 // pred_region
              // Predicated region
              $region48: #{autoencoder_forward.9} parent=35 // pred_check
                _
              $region49: #{autoencoder_forward.9} parent=35 // pred_check_branch
                %170 = sbr.rel (0) target = $region51
              $region50: #{autoencoder_forward.9} parent=35 // pred_region
                loop: start=0, step=1, limit=1
                $region52: #{autoencoder_forward.9} parent=50 // loop_pre_header
                  _
                $region53: #{autoencoder_forward.9} parent=50 // loop_header
                  %s172 = sphi 0, %s176
                  %p173 = scmp.ge.s32.totalorder %s172, 1
                  %s177 = sphi %s137, %s137
                  %s178 = sphi %s134, %s134
                $region54: #{autoencoder_forward.9} parent=50 // loop_header_branch
                  %175 = sbr.rel (%p173) target = $region58
                $region55: #{autoencoder_forward.9} parent=50 // loop_body
                  %v179 = vld [vmem:[%s177] sm:$0xff]
                  %180 = vst [vmem:[%s178] sm:$0xff] %v179
                  %v181 = vld [vmem:[%s177 + $0x10] sm:$0xff]
                  %182 = vst [vmem:[%s178 + $0x8] sm:$0xff] %v181
                  %v183 = vld [vmem:[%s177 + $0x20] sm:$0xff]
                  %184 = vst [vmem:[%s178 + $0x10] sm:$0xff] %v183
                  %v185 = vld [vmem:[%s177 + $0x30] sm:$0xff]
                  %186 = vst [vmem:[%s178 + $0x18] sm:$0xff] %v185
                  %v187 = vld [vmem:[%s177 + $0x40] sm:$0xff]
                  %188 = vst [vmem:[%s178 + $0x20] sm:$0xff] %v187
                  %v189 = vld [vmem:[%s177 + $0x50] sm:$0xff]
                  %190 = vst [vmem:[%s178 + $0x28] sm:$0xff] %v189
                  %v191 = vld [vmem:[%s177 + $0x60] sm:$0xff]
                  %192 = vst [vmem:[%s178 + $0x30] sm:$0xff] %v191
                  %v193 = vld [vmem:[%s177 + $0x70] sm:$0xff]
                  %194 = vst [vmem:[%s178 + $0x38] sm:$0xff] %v193
                $region56: #{autoencoder_forward.9} parent=50 // loop_footer
                  %s176 = sadd.s32 1, %s172
                $region57: #{autoencoder_forward.9} parent=50 // loop_footer_branch
                  %171 = sbr.rel target = $region53
                $region58: #{autoencoder_forward.9} parent=50 // loop_exit
                  _
              $region51: #{autoencoder_forward.9} parent=35 // pred_fallthru
                _
              // Predicated region
              $region59: #{autoencoder_forward.9} parent=35 // pred_check
                _
              $region60: #{autoencoder_forward.9} parent=35 // pred_check_branch
                %196 = sbr.rel target = $region62
              $region61: #{autoencoder_forward.9} parent=35 // pred_region
                _
              $region62: #{autoencoder_forward.9} parent=35 // pred_fallthru
                _
            $region36: #{autoencoder_forward.9} parent=31 // pred_fallthru
              _
            // Predicated region
            $region37: #{autoencoder_forward.9} parent=31 // pred_check
              _
            $region38: #{autoencoder_forward.9} parent=31 // pred_check_branch
              %143 = sbr.rel target = $region40
            $region39: #{autoencoder_forward.9} parent=31 // pred_region
              loop: start=0, step=1, limit=1
              $region41: #{autoencoder_forward.9} parent=39 // loop_pre_header
                _
              $region42: #{autoencoder_forward.9} parent=39 // loop_header
                %s146 = sphi 0, %s150
                %p147 = scmp.ge.s32.totalorder %s146, 1
                %s151 = sphi %s137, %s137
                %s152 = sphi %s134, %s134
              $region43: #{autoencoder_forward.9} parent=39 // loop_header_branch
                %149 = sbr.rel (%p147) target = $region47
              $region44: #{autoencoder_forward.9} parent=39 // loop_body
                %v153 = vld [vmem:[%s151] sm:$0xff]
                %154 = vst [vmem:[%s152] sm:$0xff] %v153
                %v155 = vld [vmem:[%s151 + $0x10] sm:$0xff]
                %156 = vst [vmem:[%s152 + $0x8] sm:$0xff] %v155
                %v157 = vld [vmem:[%s151 + $0x20] sm:$0xff]
                %158 = vst [vmem:[%s152 + $0x10] sm:$0xff] %v157
                %v159 = vld [vmem:[%s151 + $0x30] sm:$0xff]
                %160 = vst [vmem:[%s152 + $0x18] sm:$0xff] %v159
                %v161 = vld [vmem:[%s151 + $0x40] sm:$0xff]
                %162 = vst [vmem:[%s152 + $0x20] sm:$0xff] %v161
                %v163 = vld [vmem:[%s151 + $0x50] sm:$0xff]
                %164 = vst [vmem:[%s152 + $0x28] sm:$0xff] %v163
                %v165 = vld [vmem:[%s151 + $0x60] sm:$0xff]
                %166 = vst [vmem:[%s152 + $0x30] sm:$0xff] %v165
                %v167 = vld [vmem:[%s151 + $0x70] sm:$0xff]
                %168 = vst [vmem:[%s152 + $0x38] sm:$0xff] %v167
              $region45: #{autoencoder_forward.9} parent=39 // loop_footer
                %s150 = sadd.s32 1, %s146
              $region46: #{autoencoder_forward.9} parent=39 // loop_footer_branch
                %145 = sbr.rel target = $region42
              $region47: #{autoencoder_forward.9} parent=39 // loop_exit
                _
            $region40: #{autoencoder_forward.9} parent=31 // pred_fallthru
              _
          $region32: #{autoencoder_forward.9} parent=27 // pred_fallthru
            _
          %197 = vnop
        $region28: #{autoencoder_forward.9} parent=23 // pred_fallthru
          _
      $region24: #{autoencoder_forward.9} parent=5 // pred_fallthru
        _
      %p198 = scmp.le.s32.totalorder 1, %s9
      %p199 = scmp.lt.s32.totalorder %s9, 3
      %p200 = pnand %p198, %p199
      %p201 = pneg %p200
      // Predicated region
      $region63: #{autoencoder_forward.9} parent=5 // pred_check
        _
      $region64: #{autoencoder_forward.9} parent=5 // pred_check_branch
        %203 = sbr.rel (%p200) target = $region66
      $region65: #{autoencoder_forward.9} parent=5 // pred_region
        %s204 = ssub.s32 %s9, 1
        %s205 = sand.u32 %s64, 1
        %s206 = sand.u32 %s64, 1
        %s207 = smul.addr %s206, 64
        %s208 = scalar_lea.vmem [#allocation2], %s207
        // Predicated region
        $region67: #{autoencoder_forward.9} parent=65 // pred_check
          %p209 = pneg %p77
        $region68: #{autoencoder_forward.9} parent=65 // pred_check_branch
          %211 = sbr.rel (%p209) target = $region70
        $region69: #{autoencoder_forward.9} parent=65 // pred_region
          _
        $region70: #{autoencoder_forward.9} parent=65 // pred_fallthru
          _
        %p212 = pneg %p30
        %p213 = pneg %p27
        %p214 = pneg %p51
        %p215 = pneg %p48
        %s216 = sand.u32 %s64, 1
        %s217 = sand.u32 %s64, 1
        %s218 = smul.addr %s217, 64
        %s219 = scalar_lea.vmem [#allocation2], %s218
        %p220 = pneg %p77
        %p221 = pneg %p74
        %p222 = pneg %p103
        %p223 = pneg %p100
        %s224 = smul.u32 2, %s14
        %p225 = scmp.lt.s32.totalorder %s224, 3
        %s226 = scalar_select %p225, %s224, 3
        %s227 = smul.addr %s226, 4
        %s228 = scalar_lea.vmem %s3, %s227
        %s229 = smul.u32 2, %s14
        %s230 = smul.u32 2, %s14
        %p231 = scmp.lt.s32.totalorder %s230, 3
        %s232 = scalar_select %p231, %s230, 3
        %s233 = smul.addr %s232, 4
        %s234 = scalar_lea.vmem %s3, %s233
        %s235 = smul.u32 2, %s14
        %v237 = vld [vmem:[%s0] sm:$0x3]
        %v238 = vld [vmem:[%s208] sm:$0xff]
        %v239 = vld [vmem:[%s208 + $0x8] sm:$0xff]
        %v240 = vld [vmem:[%s208 + $0x10] sm:$0xff]
        %v241 = vld [vmem:[%s208 + $0x18] sm:$0xff]
        %v242 = vld [vmem:[%s208 + $0x20] sm:$0xff]
        %v243 = vld [vmem:[%s208 + $0x28] sm:$0xff]
        %v244 = vld [vmem:[%s208 + $0x30] sm:$0xff]
        %v245 = vld [vmem:[%s208 + $0x38] sm:$0xff]
        %v246 = vld [vmem:[%s1] sm:$0xf]
        %248 = vset.pattern.permute.xlu0 0
        %249 = vperm.xlu0 %248, %v246
        %v250 = vpop.permute.xlu0 %249
        %v260 = vunpack.c.l.b16 %v238
        %v261 = vunpack.c.h.b16 %v238
        %v262 = vunpack.c.l.b16 %v239
        %v263 = vunpack.c.h.b16 %v239
        %v264 = vunpack.c.l.b16 %v240
        %v265 = vunpack.c.h.b16 %v240
        %v266 = vunpack.c.l.b16 %v241
        %v267 = vunpack.c.h.b16 %v241
        %v268 = vunpack.c.l.b16 %v242
        %v269 = vunpack.c.h.b16 %v242
        %v270 = vunpack.c.l.b16 %v243
        %v271 = vunpack.c.h.b16 %v243
        %v272 = vunpack.c.l.b16 %v244
        %v273 = vunpack.c.h.b16 %v244
        %v274 = vunpack.c.l.b16 %v245
        %v275 = vunpack.c.h.b16 %v245
        %v276 = vpack.c.b16 %v262, %v260
        %v277 = vpack.c.b16 %v263, %v261
        %v278 = vpack.c.b16 %v266, %v264
        %v279 = vpack.c.b16 %v267, %v265
        %v280 = vpack.c.b16 %v270, %v268
        %v281 = vpack.c.b16 %v271, %v269
        %v282 = vpack.c.b16 %v274, %v272
        %v283 = vpack.c.b16 %v275, %v273
        %vm292 = vcmask 523264
        %v294 = vsel %vm292, %v237, 0
        %296 = vmatprep.subr.bf16.mxu0 %v277
        %297 = vmatpush1.bf16.msra.mxu0 %v276
        %298 = vmatprep.subr.bf16.mxu0 %v279
        %299 = vmatpush1.bf16.msra.mxu0 %v278
        %300 = vmatprep.subr.bf16.mxu0 %v281
        %301 = vmatpush1.bf16.msra.mxu0 %v280
        %302 = vmatprep.subr.bf16.mxu0 %v283
        %303 = vmatpush1.bf16.msra.mxu0 %v282
        %304 = vmatprep.subr.bf16.mxu0 0
        %305 = vmatpush1.bf16.msra.mxu0 0
        %306 = vmatprep.subr.bf16.mxu0 0
        %307 = vmatpush1.bf16.msra.mxu0 0
        %308 = vmatprep.subr.bf16.mxu0 0
        %309 = vmatpush1.bf16.msra.mxu0 0
        %310 = vmatprep.subr.bf16.mxu0 0
        %311 = vmatpush1.bf16.msra.mxu0 0
        %312 = vmatprep.subr.bf16.mxu0 0
        %313 = vmatpush1.bf16.msra.mxu0 0
        %314 = vmatprep.subr.bf16.mxu0 0
        %315 = vmatpush1.bf16.msra.mxu0 0
        %316 = vmatprep.subr.bf16.mxu0 0
        %317 = vmatpush1.bf16.msra.mxu0 0
        %318 = vmatprep.subr.bf16.mxu0 0
        %319 = vmatpush1.bf16.msra.mxu0 0
        %320 = vmatprep.subr.bf16.mxu0 0
        %321 = vmatpush1.bf16.msra.mxu0 0
        %322 = vmatprep.subr.bf16.mxu0 0
        %323 = vmatpush1.bf16.msra.mxu0 0
        %324 = vmatprep.subr.bf16.mxu0 0
        %325 = vmatpush1.bf16.msra.mxu0 0
        %326 = vmatprep.subr.bf16.mxu0 0
        %327 = vmatpush1.bf16.msra.mxu0 0
        %328 = vmatprep.mubr.bf16.mxu0 0
        %329 = vmatmul.mubr.bf16.gmra.mrb[0].mxu0 %v294
        %v330 = vpop.f32.mrb[0].mxu0
        %v331 = vadd.f32 %v250, %v330
        %v332 = vpop.f32.mrb[0].mxu0
        %v333 = vadd.f32 %v250, %v332
        %v334 = vpop.f32.mrb[0].mxu0
        %v335 = vpop.f32.mrb[0].mxu0
        %336 = vdwg.mxu0
        %v337 = vxor.u32 %v331, 2147483648
        %v338 = vxor.u32 %v333, 2147483648
        %v339 = vmul.f32 %v337, 1.442695
        %v340 = vpow.pop %v339
        %v341 = vmul.f32 %v338, 1.442695
        %v342 = vpow.pop %v341
        %v343 = vadd.f32 %v340, 1.0
        %v344 = vadd.f32 %v342, 1.0
        %v345 = vrcp.pop %v343
        %v346 = vmul.f32 1.0, %v345
        %v347 = vrcp.pop %v344
        %v348 = vmul.f32 1.0, %v347
        %v351 = vcombine.low %v346, %v348
        %353 = vst [vmem:[%s234] sm:$0xff] %v351
        %s354 = smul.u32 2, %s14
        %p355 = scmp.lt.s32.totalorder %s354, 3
        %s356 = scalar_select %p355, %s354, 3
        %s357 = smul.addr %s356, 4
        %s358 = scalar_lea.vmem %s3, %s357
        // Predicated region
        $region71: #{autoencoder_forward.9} parent=65 // pred_check
          %p359 = pneg %p100
        $region72: #{autoencoder_forward.9} parent=65 // pred_check_branch
          %361 = sbr.rel (%p359) target = $region74
        $region73: #{autoencoder_forward.9} parent=65 // pred_region
          %s362 = smul.u32 2, %s14
        $region74: #{autoencoder_forward.9} parent=65 // pred_fallthru
          _
      $region66: #{autoencoder_forward.9} parent=5 // pred_fallthru
        _
      %p363 = scmp.le.s32.totalorder 2, %s9
      // Predicated region
      $region75: #{autoencoder_forward.9} parent=5 // pred_check
        %p364 = pneg %p363
      $region76: #{autoencoder_forward.9} parent=5 // pred_check_branch
        %366 = sbr.rel (%p364) target = $region78
      $region77: #{autoencoder_forward.9} parent=5 // pred_region
        %s367 = ssub.s32 %s9, 2
        // Predicated region
        $region79: #{autoencoder_forward.9} parent=77 // pred_check
          %p368 = pneg %p106
        $region80: #{autoencoder_forward.9} parent=77 // pred_check_branch
          %370 = sbr.rel (%p368) target = $region82
        $region81: #{autoencoder_forward.9} parent=77 // pred_region
          %s371 = smul.u32 2, %s15
          %p372 = scmp.lt.s32.totalorder %s371, 3
          %s373 = scalar_select %p372, %s371, 3
          %s374 = smul.addr %s373, 4
          %s375 = scalar_lea.vmem %s3, %s374
        $region82: #{autoencoder_forward.9} parent=77 // pred_fallthru
          _
      $region78: #{autoencoder_forward.9} parent=5 // pred_fallthru
        _
    $region6: #{autoencoder_forward.9} parent=1 // loop_footer
      %s13 = sadd.s32 1, %s9
    $region7: #{autoencoder_forward.9} parent=1 // loop_footer_branch
      %8 = sbr.rel target = $region3
    $region8: #{autoencoder_forward.9} parent=1 // loop_exit
      _

</llo_original>
